<compile_context>
chip_gen: v5e
topology: v5e:2x2
jax: 0.10.0
libtpu: 0.0.40
codegen_flags: <defaults>
</compile_context>

<pallas_src>
import functools

import jax
import jax.numpy as jnp
from jax import lax
from jax.experimental import pallas as pl
from jax.experimental.pallas import tpu as pltpu

_LN_EPS = 1e-5


# -----------------------------------------------------------------------------
# Tiling helper (fixed per perf review: never fall back to a huge non-divisible
# full dimension unless the dim is genuinely small / indivisible).
# -----------------------------------------------------------------------------
def _pick_row_tile(m, pref, mult=16):
    """Largest multiple-of-`mult` divisor of m that is <= pref; full m if none."""
    if m <= pref:
        return m
    t = (min(pref, m) // mult) * mult
    while t >= mult:
        if m % t == 0:
            return t
        t -= mult
    return m  # indivisible small-ish dim: single full block


# -----------------------------------------------------------------------------
# Fused MHA block: QKV projection + per-head attention + out-proj + residual + LN
# grid = (batch,);   all weights are bf16, math/accumulation fp32, output bf16.
# -----------------------------------------------------------------------------
def _mha_res_ln_kernel(xq_ref, xkv_ref, wq_ref, bq_ref, wkv_ref, bkv_ref,
                       wout_ref, bout_ref, g_ref, beta_ref, o_ref,
                       *, num_heads, eps):
    hdk = wq_ref.shape[1]
    dk = hdk // num_heads
    scale = 1.0 / (float(dk) ** 0.5)

    xq = xq_ref[0]                      # (Sq, D) bf16
    xkv = xkv_ref[0]                    # (Sk, D) bf16

    # Projections (bf16 MXU inputs, fp32 accumulation).
    q = jnp.dot(xq, wq_ref[...], preferred_element_type=jnp.float32) + bq_ref[...]
    kv = jnp.dot(xkv, wkv_ref[...], preferred_element_type=jnp.float32) + bkv_ref[...]
    k = kv[:, :hdk]
    v = kv[:, hdk:]

    # Per-head attention, statically unrolled inside the kernel (no HBM transposes).
    # TODO(synk): switch to a KV-blocked online-softmax loop for long sequences.
    outs = []
    for h in range(num_heads):
        sl = slice(h * dk, (h + 1) * dk)
        qh = q[:, sl].astype(jnp.bfloat16)          # (Sq, dk)
        kh = k[:, sl].astype(jnp.bfloat16)          # (Sk, dk)
        vh = v[:, sl].astype(jnp.bfloat16)          # (Sk, dk)
        s = lax.dot_general(qh, kh, (((1,), (1,)), ((), ())),
                            preferred_element_type=jnp.float32) * scale
        s = s - jnp.max(s, axis=-1, keepdims=True)   # numerically-stable softmax
        e = jnp.exp(s)
        p = e * pl.reciprocal(jnp.sum(e, axis=-1, keepdims=True), approx=True)
        outs.append(lax.dot_general(p.astype(jnp.bfloat16), vh,
                                    (((1,), (0,)), ((), ())),
                                    preferred_element_type=jnp.float32))
    att = jnp.concatenate(outs, axis=-1).astype(jnp.bfloat16)   # (Sq, H*dk)

    # Output projection + residual + LayerNorm (fp32).
    y = jnp.dot(att, wout_ref[...], preferred_element_type=jnp.float32) + bout_ref[...]
    r = xq.astype(jnp.float32) + y
    mean = jnp.mean(r, axis=-1, keepdims=True)
    var = jnp.mean((r - mean) ** 2, axis=-1, keepdims=True)      # biased, like PyTorch
    o_ref[0] = ((r - mean) * lax.rsqrt(var + eps) * g_ref[...]
                + beta_ref[...]).astype(o_ref.dtype)


def multi_head_attention_ln(p, ln, q_in, kv_in, num_heads):
    """q_in: (B, Sq, D) bf16, kv_in: (B, Sk, D) bf16 -> (B, Sq, D) bf16."""
    B, Sq, D = q_in.shape
    _, Sk, _ = kv_in.shape
    hdk = p["wq"].shape[1]
    return pl.pallas_call(
        functools.partial(_mha_res_ln_kernel, num_heads=num_heads, eps=_LN_EPS),
        out_shape=jax.ShapeDtypeStruct((B, Sq, D), jnp.bfloat16),
        grid=(B,),
        in_specs=[
            pl.BlockSpec((1, Sq, D), lambda b: (b, 0, 0)),
            pl.BlockSpec((1, Sk, D), lambda b: (b, 0, 0)),
            pl.BlockSpec((D, hdk), lambda b: (0, 0)),        # weights: constant block
            pl.BlockSpec((1, hdk), lambda b: (0, 0)),        # -> not re-DMAed per step
            pl.BlockSpec((D, 2 * hdk), lambda b: (0, 0)),
            pl.BlockSpec((1, 2 * hdk), lambda b: (0, 0)),
            pl.BlockSpec((hdk, D), lambda b: (0, 0)),
            pl.BlockSpec((1, D), lambda b: (0, 0)),
            pl.BlockSpec((1, D), lambda b: (0, 0)),
            pl.BlockSpec((1, D), lambda b: (0, 0)),
        ],
        out_specs=pl.BlockSpec((1, Sq, D), lambda b: (b, 0, 0)),
        compiler_params=pltpu.CompilerParams(dimension_semantics=("parallel",)),
    )(q_in, kv_in, p["wq"], p["bq"].reshape(1, -1), p["wkv"], p["bkv"].reshape(1, -1),
      p["wout"], p["bout"].reshape(1, -1), ln["g"].reshape(1, -1), ln["b"].reshape(1, -1))


# -----------------------------------------------------------------------------
# Fused feed-forward block: FF1 + ReLU + FF2 + residual + LayerNorm
# grid over flattened (B*S) rows; dim_ff hidden never leaves VMEM.
# -----------------------------------------------------------------------------
def _ffn_res_ln_kernel(x_ref, w1_ref, b1_ref, w2_ref, b2_ref, g_ref, beta_ref,
                       o_ref, *, eps):
    x = x_ref[...]                                              # (tm, D) bf16
    h = jnp.dot(x, w1_ref[...], preferred_element_type=jnp.float32) + b1_ref[...]
    h = jnp.maximum(h, 0.0).astype(jnp.bfloat16)                # ReLU, back to bf16 for MXU
    y = jnp.dot(h, w2_ref[...], preferred_element_type=jnp.float32) + b2_ref[...]
    r = x.astype(jnp.float32) + y
    mean = jnp.mean(r, axis=-1, keepdims=True)
    var = jnp.mean((r - mean) ** 2, axis=-1, keepdims=True)
    o_ref[...] = ((r - mean) * lax.rsqrt(var + eps) * g_ref[...]
                  + beta_ref[...]).astype(o_ref.dtype)


def feed_forward_ln(p1, p2, ln, x):
    """x: (B, S, D) bf16 -> (B, S, D) bf16."""
    B, S, D = x.shape
    F = p1["w"].shape[1]
    M = B * S
    tm = _pick_row_tile(M, 512)
    # TODO(synk): K-block the dim_ff contraction (fp32 VMEM accumulator) for very
    #             large dim_ff on v7x (64 MiB VMEM); full-F blocks are fine here.
    out = pl.pallas_call(
        functools.partial(_ffn_res_ln_kernel, eps=_LN_EPS),
        out_shape=jax.ShapeDtypeStruct((M, D), jnp.bfloat16),
        grid=(M // tm,),
        in_specs=[
            pl.BlockSpec((tm, D), lambda i: (i, 0)),
            pl.BlockSpec((D, F), lambda i: (0, 0)),
            pl.BlockSpec((1, F), lambda i: (0, 0)),
            pl.BlockSpec((F, D), lambda i: (0, 0)),
            pl.BlockSpec((1, D), lambda i: (0, 0)),
            pl.BlockSpec((1, D), lambda i: (0, 0)),
            pl.BlockSpec((1, D), lambda i: (0, 0)),
        ],
        out_specs=pl.BlockSpec((tm, D), lambda i: (i, 0)),
        compiler_params=pltpu.CompilerParams(dimension_semantics=("parallel",)),
    )(x.reshape(M, D), p1["w"], p1["b"].reshape(1, -1), p2["w"], p2["b"].reshape(1, -1),
      ln["g"].reshape(1, -1), ln["b"].reshape(1, -1))
    return out.reshape(B, S, D)


# -----------------------------------------------------------------------------
# Fused final Linear + softmax (exact divide so output rows sum to 1)
# -----------------------------------------------------------------------------
def _linear_softmax_kernel(x_ref, w_ref, b_ref, o_ref):
    y = jnp.dot(x_ref[...], w_ref[...], preferred_element_type=jnp.float32) + b_ref[...]
    y = y - jnp.max(y, axis=-1, keepdims=True)
    e = jnp.exp(y)
    o_ref[...] = e / jnp.sum(e, axis=-1, keepdims=True)


def final_linear_softmax(p, x):
    """x: (B, S, D) bf16 -> (B, S, N) fp32 probabilities."""
    B, S, D = x.shape
    N = p["w"].shape[1]
    M = B * S
    tm = _pick_row_tile(M, 256)
    # TODO(synk): block over N/K (two-pass softmax) for very large dim_model on v7x.
    out = pl.pallas_call(
        _linear_softmax_kernel,
        out_shape=jax.ShapeDtypeStruct((M, N), jnp.float32),
        grid=(M // tm,),
        in_specs=[
            pl.BlockSpec((tm, D), lambda i: (i, 0)),
            pl.BlockSpec((D, N), lambda i: (0, 0)),
            pl.BlockSpec((1, N), lambda i: (0, 0)),
        ],
        out_specs=pl.BlockSpec((tm, N), lambda i: (i, 0)),
        compiler_params=pltpu.CompilerParams(dimension_semantics=("parallel",)),
    )(x.reshape(M, D), p["w"], p["b"].reshape(1, -1))
    return out.reshape(B, S, N)


# -----------------------------------------------------------------------------
# Parameter init (mimics nn.Linear / nn.LayerNorm defaults; weights pre-cast bf16)
# -----------------------------------------------------------------------------
def init_linear(key, din, dout):
    kw, kb = jax.random.split(key)
    bound = 1.0 / (din ** 0.5)
    return {
        "w": jax.random.uniform(kw, (din, dout), jnp.float32, -bound, bound
                                ).astype(jnp.bfloat16),
        "b": jax.random.uniform(kb, (dout,), jnp.float32, -bound, bound),
    }


def init_layernorm(dim):
    return {"g": jnp.ones((dim,), jnp.float32), "b": jnp.zeros((dim,), jnp.float32)}


def init_mha(key, num_heads, dim_in, dim_qk):
    # per-head Q / K / V Linear layers fused column-wise: wq (D, H*dk), wkv (D, 2*H*dk)
    hdk = num_heads * dim_qk
    kq, kkv, ko = jax.random.split(key, 3)
    q = init_linear(kq, dim_in, hdk)
    kv = init_linear(kkv, dim_in, 2 * hdk)
    out = init_linear(ko, hdk, dim_in)
    return {"wq": q["w"], "bq": q["b"], "wkv": kv["w"], "bkv": kv["b"],
            "wout": out["w"], "bout": out["b"]}


def init_encoder_layer(key, dim_model, num_heads, dim_ff):
    dim_qk = max(dim_model // num_heads, 1)
    k1, k2, k3 = jax.random.split(key, 3)
    return {
        "attn": init_mha(k1, num_heads, dim_model, dim_qk),
        "attn_ln": init_layernorm(dim_model),
        "ff1": init_linear(k2, dim_model, dim_ff),
        "ff2": init_linear(k3, dim_ff, dim_model),
        "ff_ln": init_layernorm(dim_model),
    }


def init_decoder_layer(key, dim_model, num_heads, dim_ff):
    dim_qk = max(dim_model // num_heads, 1)
    k1, k2, k3, k4 = jax.random.split(key, 4)
    return {
        "attn1": init_mha(k1, num_heads, dim_model, dim_qk),
        "attn1_ln": init_layernorm(dim_model),
        "attn2": init_mha(k2, num_heads, dim_model, dim_qk),
        "attn2_ln": init_layernorm(dim_model),
        "ff1": init_linear(k3, dim_model, dim_ff),
        "ff2": init_linear(k4, dim_ff, dim_model),
        "ff_ln": init_layernorm(dim_model),
    }


def init_transformer(key, num_enc, num_dec, dim_model, num_heads, dim_ff):
    keys = jax.random.split(key, num_enc + num_dec + 1)
    enc = [init_encoder_layer(keys[i], dim_model, num_heads, dim_ff) for i in range(num_enc)]
    dec = [init_decoder_layer(keys[num_enc + i], dim_model, num_heads, dim_ff)
           for i in range(num_dec)]
    final = init_linear(keys[-1], dim_model, dim_model)
    return {"encoder": enc, "decoder": dec, "final": final}


# -----------------------------------------------------------------------------
# Forward pass
# -----------------------------------------------------------------------------
def position_encoding(seq_len, dim_model):
    # Matches the PyTorch spec exactly (per-index exponent + where(even, sin, cos)).
    pos = jnp.arange(seq_len, dtype=jnp.float32).reshape(1, -1, 1)
    dim = jnp.arange(dim_model, dtype=jnp.float32).reshape(1, 1, -1)
    phase = pos / (10000.0 ** (dim / dim_model))
    return jnp.where(dim.astype(jnp.int32) % 2 == 0, jnp.sin(phase), jnp.cos(phase))


def encoder_layer(p, src, num_heads):
    src = multi_head_attention_ln(p["attn"], p["attn_ln"], src, src, num_heads)
    return feed_forward_ln(p["ff1"], p["ff2"], p["ff_ln"], src)


def decoder_layer(p, tgt, memory, num_heads):
    tgt = multi_head_attention_ln(p["attn1"], p["attn1_ln"], tgt, tgt, num_heads)
    tgt = multi_head_attention_ln(p["attn2"], p["attn2_ln"], tgt, memory, num_heads)
    return feed_forward_ln(p["ff1"], p["ff2"], p["ff_ln"], tgt)


def transformer_forward(params, src, tgt, num_heads):
    _, Ss, D = src.shape
    src = (src + position_encoding(Ss, D)).astype(jnp.bfloat16)  # bf16 residual stream
    for layer in params["encoder"]:
        src = encoder_layer(layer, src, num_heads)
    memory = src

    _, St, _ = tgt.shape
    tgt = (tgt + position_encoding(St, D)).astype(jnp.bfloat16)
    for layer in params["decoder"]:
        tgt = decoder_layer(layer, tgt, memory, num_heads)
    return final_linear_softmax(params["final"], tgt)


# -----------------------------------------------------------------------------
if __name__ == "__main__":
    B = 2
    S_SRC = 8
    S_TGT = 8
    DIM_MODEL = 32
    NUM_HEADS = 4          # -> dim_q = dim_k = 8
    DIM_FF = 64
    NUM_ENC_LAYERS = 2
    NUM_DEC_LAYERS = 2

    root = jax.random.PRNGKey(0)
    k_params, k_src, k_tgt = jax.random.split(root, 3)

    params = init_transformer(k_params, NUM_ENC_LAYERS, NUM_DEC_LAYERS,
                              DIM_MODEL, NUM_HEADS, DIM_FF)

    src = jax.random.normal(k_src, (B, S_SRC, DIM_MODEL), jnp.float32)
    tgt = jax.random.normal(k_tgt, (B, S_TGT, DIM_MODEL), jnp.float32)

    fwd = jax.jit(functools.partial(transformer_forward, num_heads=NUM_HEADS))
    out = jax.block_until_ready(fwd(params, src, tgt))

    assert out.shape == (B, S_TGT, DIM_MODEL)
    # rows of the final softmax must sum to 1
    assert bool(jnp.all(jnp.abs(jnp.sum(out, axis=-1) - 1.0) < 1e-4))
    print("KERNEL_OK")
</pallas_src>

<mosaic_0001>
module attributes {stable_mosaic.version = 11 : i64} {
  func.func @_mha_res_ln_kernel(%arg0: i32, %arg1: memref<1x8x32xbf16, #tpu.memory_space<vmem>>, %arg2: memref<1x8x32xbf16, #tpu.memory_space<vmem>>, %arg3: memref<32x32xbf16, #tpu.memory_space<vmem>>, %arg4: memref<1x32xf32, #tpu.memory_space<vmem>>, %arg5: memref<32x64xbf16, #tpu.memory_space<vmem>>, %arg6: memref<1x64xf32, #tpu.memory_space<vmem>>, %arg7: memref<32x32xbf16, #tpu.memory_space<vmem>>, %arg8: memref<1x32xf32, #tpu.memory_space<vmem>>, %arg9: memref<1x32xf32, #tpu.memory_space<vmem>>, %arg10: memref<1x32xf32, #tpu.memory_space<vmem>>, %arg11: memref<1x8x32xbf16, #tpu.memory_space<vmem>>) attributes {dimension_semantics = [#tpu.dimension_semantics<parallel>], iteration_bounds = array<i64: 2>, scalar_prefetch = 0 : i64, scratch_operands = 0 : i64, tpu.core_type = #tpu.core_type<tc>, window_params = [{transform_indices = @transform_0, window_bounds = array<i64: 1, 8, 32>}, {transform_indices = @transform_1, window_bounds = array<i64: 1, 8, 32>}, {pipeline_mode = #tpu.pipeline_mode<synchronous>, transform_indices = @transform_2, window_bounds = array<i64: 32, 32>}, {pipeline_mode = #tpu.pipeline_mode<synchronous>, transform_indices = @transform_3, window_bounds = array<i64: 1, 32>}, {pipeline_mode = #tpu.pipeline_mode<synchronous>, transform_indices = @transform_4, window_bounds = array<i64: 32, 64>}, {pipeline_mode = #tpu.pipeline_mode<synchronous>, transform_indices = @transform_5, window_bounds = array<i64: 1, 64>}, {pipeline_mode = #tpu.pipeline_mode<synchronous>, transform_indices = @transform_6, window_bounds = array<i64: 32, 32>}, {pipeline_mode = #tpu.pipeline_mode<synchronous>, transform_indices = @transform_7, window_bounds = array<i64: 1, 32>}, {pipeline_mode = #tpu.pipeline_mode<synchronous>, transform_indices = @transform_8, window_bounds = array<i64: 1, 32>}, {pipeline_mode = #tpu.pipeline_mode<synchronous>, transform_indices = @transform_9, window_bounds = array<i64: 1, 32>}, {transform_indices = @transform_10, window_bounds = array<i64: 1, 8, 32>}]} {
    %c0 = arith.constant 0 : index
    %c0_0 = arith.constant 0 : index
    %c0_1 = arith.constant 0 : index
    %0 = vector.load %arg1[%c0, %c0_0, %c0_1] : memref<1x8x32xbf16, #tpu.memory_space<vmem>>, vector<1x8x32xbf16>
    %1 = vector.shape_cast %0 : vector<1x8x32xbf16> to vector<8x32xbf16>
    %c0_2 = arith.constant 0 : index
    %c0_3 = arith.constant 0 : index
    %c0_4 = arith.constant 0 : index
    %2 = vector.load %arg2[%c0_2, %c0_3, %c0_4] : memref<1x8x32xbf16, #tpu.memory_space<vmem>>, vector<1x8x32xbf16>
    %3 = vector.shape_cast %2 : vector<1x8x32xbf16> to vector<8x32xbf16>
    %c0_5 = arith.constant 0 : index
    %c0_6 = arith.constant 0 : index
    %4 = vector.load %arg3[%c0_5, %c0_6] : memref<32x32xbf16, #tpu.memory_space<vmem>>, vector<32x32xbf16>
    %cst = arith.constant dense<0.000000e+00> : vector<8x32xf32>
    %5 = tpu.matmul %1, %4, %cst {dimension_numbers = #tpu.dot_dimension_numbers<[1], [0], [0], [1], [0, 0, 1, 1], [], []>} : vector<8x32xbf16>, vector<32x32xbf16>, vector<8x32xf32> -> vector<8x32xf32>
    %c0_7 = arith.constant 0 : index
    %c0_8 = arith.constant 0 : index
    %6 = vector.load %arg4[%c0_7, %c0_8] : memref<1x32xf32, #tpu.memory_space<vmem>>, vector<1x32xf32>
    %7 = vector.broadcast %6 : vector<1x32xf32> to vector<8x32xf32>
    %8 = arith.addf %5, %7 : vector<8x32xf32>
    %c0_9 = arith.constant 0 : index
    %c0_10 = arith.constant 0 : index
    %9 = vector.load %arg5[%c0_9, %c0_10] : memref<32x64xbf16, #tpu.memory_space<vmem>>, vector<32x64xbf16>
    %cst_11 = arith.constant dense<0.000000e+00> : vector<8x64xf32>
    %10 = tpu.matmul %3, %9, %cst_11 {dimension_numbers = #tpu.dot_dimension_numbers<[1], [0], [0], [1], [0, 0, 1, 1], [], []>} : vector<8x32xbf16>, vector<32x64xbf16>, vector<8x64xf32> -> vector<8x64xf32>
    %c0_12 = arith.constant 0 : index
    %c0_13 = arith.constant 0 : index
    %11 = vector.load %arg6[%c0_12, %c0_13] : memref<1x64xf32, #tpu.memory_space<vmem>>, vector<1x64xf32>
    %12 = vector.broadcast %11 : vector<1x64xf32> to vector<8x64xf32>
    %13 = arith.addf %10, %12 : vector<8x64xf32>
    %14 = vector.extract_strided_slice %13 {offsets = [0, 0], sizes = [8, 32], strides = [1, 1]} : vector<8x64xf32> to vector<8x32xf32>
    %15 = vector.extract_strided_slice %13 {offsets = [0, 32], sizes = [8, 32], strides = [1, 1]} : vector<8x64xf32> to vector<8x32xf32>
    %16 = vector.extract_strided_slice %8 {offsets = [0, 0], sizes = [8, 8], strides = [1, 1]} : vector<8x32xf32> to vector<8x8xf32>
    %17 = arith.truncf %16 : vector<8x8xf32> to vector<8x8xbf16>
    %18 = vector.extract_strided_slice %14 {offsets = [0, 0], sizes = [8, 8], strides = [1, 1]} : vector<8x32xf32> to vector<8x8xf32>
    %19 = arith.truncf %18 : vector<8x8xf32> to vector<8x8xbf16>
    %20 = vector.extract_strided_slice %15 {offsets = [0, 0], sizes = [8, 8], strides = [1, 1]} : vector<8x32xf32> to vector<8x8xf32>
    %21 = arith.truncf %20 : vector<8x8xf32> to vector<8x8xbf16>
    %cst_14 = arith.constant dense<0.000000e+00> : vector<8x8xf32>
    %22 = tpu.matmul %17, %19, %cst_14 {dimension_numbers = #tpu.dot_dimension_numbers<[1], [1], [0], [0], [0, 0, 1, 0], [], []>} : vector<8x8xbf16>, vector<8x8xbf16>, vector<8x8xf32> -> vector<8x8xf32>
    %cst_15 = arith.constant 0.353553385 : f32
    %23 = vector.broadcast %cst_15 : f32 to vector<8x8xf32>
    %24 = arith.mulf %22, %23 : vector<8x8xf32>
    %cst_16 = arith.constant dense<0xFF800000> : vector<8xf32>
    %25 = vector.multi_reduction <maximumf>, %24, %cst_16 [1] : vector<8x8xf32> to vector<8xf32>
    %26 = vector.shape_cast %25 : vector<8xf32> to vector<8x1xf32>
    %27 = vector.broadcast %26 : vector<8x1xf32> to vector<8x8xf32>
    %28 = arith.subf %24, %27 : vector<8x8xf32>
    %29 = math.exp %28 : vector<8x8xf32>
    %cst_17 = arith.constant dense<0.000000e+00> : vector<8xf32>
    %30 = vector.multi_reduction <add>, %29, %cst_17 [1] : vector<8x8xf32> to vector<8xf32>
    %31 = vector.shape_cast %30 : vector<8xf32> to vector<8x1xf32>
    %32 = tpu.reciprocal %31 {approx = true} : vector<8x1xf32> -> vector<8x1xf32>
    %33 = vector.broadcast %32 : vector<8x1xf32> to vector<8x8xf32>
    %34 = arith.mulf %29, %33 : vector<8x8xf32>
    %35 = arith.truncf %34 : vector<8x8xf32> to vector<8x8xbf16>
    %cst_18 = arith.constant dense<0.000000e+00> : vector<8x8xf32>
    %36 = tpu.matmul %35, %21, %cst_18 {dimension_numbers = #tpu.dot_dimension_numbers<[1], [0], [0], [1], [0, 0, 1, 1], [], []>} : vector<8x8xbf16>, vector<8x8xbf16>, vector<8x8xf32> -> vector<8x8xf32>
    %37 = vector.extract_strided_slice %8 {offsets = [0, 8], sizes = [8, 8], strides = [1, 1]} : vector<8x32xf32> to vector<8x8xf32>
    %38 = arith.truncf %37 : vector<8x8xf32> to vector<8x8xbf16>
    %39 = vector.extract_strided_slice %14 {offsets = [0, 8], sizes = [8, 8], strides = [1, 1]} : vector<8x32xf32> to vector<8x8xf32>
    %40 = arith.truncf %39 : vector<8x8xf32> to vector<8x8xbf16>
    %41 = vector.extract_strided_slice %15 {offsets = [0, 8], sizes = [8, 8], strides = [1, 1]} : vector<8x32xf32> to vector<8x8xf32>
    %42 = arith.truncf %41 : vector<8x8xf32> to vector<8x8xbf16>
    %cst_19 = arith.constant dense<0.000000e+00> : vector<8x8xf32>
    %43 = tpu.matmul %38, %40, %cst_19 {dimension_numbers = #tpu.dot_dimension_numbers<[1], [1], [0], [0], [0, 0, 1, 0], [], []>} : vector<8x8xbf16>, vector<8x8xbf16>, vector<8x8xf32> -> vector<8x8xf32>
    %cst_20 = arith.constant 0.353553385 : f32
    %44 = vector.broadcast %cst_20 : f32 to vector<8x8xf32>
    %45 = arith.mulf %43, %44 : vector<8x8xf32>
    %cst_21 = arith.constant dense<0xFF800000> : vector<8xf32>
    %46 = vector.multi_reduction <maximumf>, %45, %cst_21 [1] : vector<8x8xf32> to vector<8xf32>
    %47 = vector.shape_cast %46 : vector<8xf32> to vector<8x1xf32>
    %48 = vector.broadcast %47 : vector<8x1xf32> to vector<8x8xf32>
    %49 = arith.subf %45, %48 : vector<8x8xf32>
    %50 = math.exp %49 : vector<8x8xf32>
    %cst_22 = arith.constant dense<0.000000e+00> : vector<8xf32>
    %51 = vector.multi_reduction <add>, %50, %cst_22 [1] : vector<8x8xf32> to vector<8xf32>
    %52 = vector.shape_cast %51 : vector<8xf32> to vector<8x1xf32>
    %53 = tpu.reciprocal %52 {approx = true} : vector<8x1xf32> -> vector<8x1xf32>
    %54 = vector.broadcast %53 : vector<8x1xf32> to vector<8x8xf32>
    %55 = arith.mulf %50, %54 : vector<8x8xf32>
    %56 = arith.truncf %55 : vector<8x8xf32> to vector<8x8xbf16>
    %cst_23 = arith.constant dense<0.000000e+00> : vector<8x8xf32>
    %57 = tpu.matmul %56, %42, %cst_23 {dimension_numbers = #tpu.dot_dimension_numbers<[1], [0], [0], [1], [0, 0, 1, 1], [], []>} : vector<8x8xbf16>, vector<8x8xbf16>, vector<8x8xf32> -> vector<8x8xf32>
    %58 = vector.extract_strided_slice %8 {offsets = [0, 16], sizes = [8, 8], strides = [1, 1]} : vector<8x32xf32> to vector<8x8xf32>
    %59 = arith.truncf %58 : vector<8x8xf32> to vector<8x8xbf16>
    %60 = vector.extract_strided_slice %14 {offsets = [0, 16], sizes = [8, 8], strides = [1, 1]} : vector<8x32xf32> to vector<8x8xf32>
    %61 = arith.truncf %60 : vector<8x8xf32> to vector<8x8xbf16>
    %62 = vector.extract_strided_slice %15 {offsets = [0, 16], sizes = [8, 8], strides = [1, 1]} : vector<8x32xf32> to vector<8x8xf32>
    %63 = arith.truncf %62 : vector<8x8xf32> to vector<8x8xbf16>
    %cst_24 = arith.constant dense<0.000000e+00> : vector<8x8xf32>
    %64 = tpu.matmul %59, %61, %cst_24 {dimension_numbers = #tpu.dot_dimension_numbers<[1], [1], [0], [0], [0, 0, 1, 0], [], []>} : vector<8x8xbf16>, vector<8x8xbf16>, vector<8x8xf32> -> vector<8x8xf32>
    %cst_25 = arith.constant 0.353553385 : f32
    %65 = vector.broadcast %cst_25 : f32 to vector<8x8xf32>
    %66 = arith.mulf %64, %65 : vector<8x8xf32>
    %cst_26 = arith.constant dense<0xFF800000> : vector<8xf32>
    %67 = vector.multi_reduction <maximumf>, %66, %cst_26 [1] : vector<8x8xf32> to vector<8xf32>
    %68 = vector.shape_cast %67 : vector<8xf32> to vector<8x1xf32>
    %69 = vector.broadcast %68 : vector<8x1xf32> to vector<8x8xf32>
    %70 = arith.subf %66, %69 : vector<8x8xf32>
    %71 = math.exp %70 : vector<8x8xf32>
    %cst_27 = arith.constant dense<0.000000e+00> : vector<8xf32>
    %72 = vector.multi_reduction <add>, %71, %cst_27 [1] : vector<8x8xf32> to vector<8xf32>
    %73 = vector.shape_cast %72 : vector<8xf32> to vector<8x1xf32>
    %74 = tpu.reciprocal %73 {approx = true} : vector<8x1xf32> -> vector<8x1xf32>
    %75 = vector.broadcast %74 : vector<8x1xf32> to vector<8x8xf32>
    %76 = arith.mulf %71, %75 : vector<8x8xf32>
    %77 = arith.truncf %76 : vector<8x8xf32> to vector<8x8xbf16>
    %cst_28 = arith.constant dense<0.000000e+00> : vector<8x8xf32>
    %78 = tpu.matmul %77, %63, %cst_28 {dimension_numbers = #tpu.dot_dimension_numbers<[1], [0], [0], [1], [0, 0, 1, 1], [], []>} : vector<8x8xbf16>, vector<8x8xbf16>, vector<8x8xf32> -> vector<8x8xf32>
    %79 = vector.extract_strided_slice %8 {offsets = [0, 24], sizes = [8, 8], strides = [1, 1]} : vector<8x32xf32> to vector<8x8xf32>
    %80 = arith.truncf %79 : vector<8x8xf32> to vector<8x8xbf16>
    %81 = vector.extract_strided_slice %14 {offsets = [0, 24], sizes = [8, 8], strides = [1, 1]} : vector<8x32xf32> to vector<8x8xf32>
    %82 = arith.truncf %81 : vector<8x8xf32> to vector<8x8xbf16>
    %83 = vector.extract_strided_slice %15 {offsets = [0, 24], sizes = [8, 8], strides = [1, 1]} : vector<8x32xf32> to vector<8x8xf32>
    %84 = arith.truncf %83 : vector<8x8xf32> to vector<8x8xbf16>
    %cst_29 = arith.constant dense<0.000000e+00> : vector<8x8xf32>
    %85 = tpu.matmul %80, %82, %cst_29 {dimension_numbers = #tpu.dot_dimension_numbers<[1], [1], [0], [0], [0, 0, 1, 0], [], []>} : vector<8x8xbf16>, vector<8x8xbf16>, vector<8x8xf32> -> vector<8x8xf32>
    %cst_30 = arith.constant 0.353553385 : f32
    %86 = vector.broadcast %cst_30 : f32 to vector<8x8xf32>
    %87 = arith.mulf %85, %86 : vector<8x8xf32>
    %cst_31 = arith.constant dense<0xFF800000> : vector<8xf32>
    %88 = vector.multi_reduction <maximumf>, %87, %cst_31 [1] : vector<8x8xf32> to vector<8xf32>
    %89 = vector.shape_cast %88 : vector<8xf32> to vector<8x1xf32>
    %90 = vector.broadcast %89 : vector<8x1xf32> to vector<8x8xf32>
    %91 = arith.subf %87, %90 : vector<8x8xf32>
    %92 = math.exp %91 : vector<8x8xf32>
    %cst_32 = arith.constant dense<0.000000e+00> : vector<8xf32>
    %93 = vector.multi_reduction <add>, %92, %cst_32 [1] : vector<8x8xf32> to vector<8xf32>
    %94 = vector.shape_cast %93 : vector<8xf32> to vector<8x1xf32>
    %95 = tpu.reciprocal %94 {approx = true} : vector<8x1xf32> -> vector<8x1xf32>
    %96 = vector.broadcast %95 : vector<8x1xf32> to vector<8x8xf32>
    %97 = arith.mulf %92, %96 : vector<8x8xf32>
    %98 = arith.truncf %97 : vector<8x8xf32> to vector<8x8xbf16>
    %cst_33 = arith.constant dense<0.000000e+00> : vector<8x8xf32>
    %99 = tpu.matmul %98, %84, %cst_33 {dimension_numbers = #tpu.dot_dimension_numbers<[1], [0], [0], [1], [0, 0, 1, 1], [], []>} : vector<8x8xbf16>, vector<8x8xbf16>, vector<8x8xf32> -> vector<8x8xf32>
    %100 = tpu.concatenate %36, %57, %78, %99 in 1 : vector<8x8xf32>, vector<8x8xf32>, vector<8x8xf32>, vector<8x8xf32> -> vector<8x32xf32>
    %101 = arith.truncf %100 : vector<8x32xf32> to vector<8x32xbf16>
    %c0_34 = arith.constant 0 : index
    %c0_35 = arith.constant 0 : index
    %102 = vector.load %arg7[%c0_34, %c0_35] : memref<32x32xbf16, #tpu.memory_space<vmem>>, vector<32x32xbf16>
    %cst_36 = arith.constant dense<0.000000e+00> : vector<8x32xf32>
    %103 = tpu.matmul %101, %102, %cst_36 {dimension_numbers = #tpu.dot_dimension_numbers<[1], [0], [0], [1], [0, 0, 1, 1], [], []>} : vector<8x32xbf16>, vector<32x32xbf16>, vector<8x32xf32> -> vector<8x32xf32>
    %c0_37 = arith.constant 0 : index
    %c0_38 = arith.constant 0 : index
    %104 = vector.load %arg8[%c0_37, %c0_38] : memref<1x32xf32, #tpu.memory_space<vmem>>, vector<1x32xf32>
    %105 = vector.broadcast %104 : vector<1x32xf32> to vector<8x32xf32>
    %106 = arith.addf %103, %105 : vector<8x32xf32>
    %107 = arith.extf %1 : vector<8x32xbf16> to vector<8x32xf32>
    %108 = arith.addf %107, %106 : vector<8x32xf32>
    %cst_39 = arith.constant dense<0.000000e+00> : vector<8xf32>
    %109 = vector.multi_reduction <add>, %108, %cst_39 [1] : vector<8x32xf32> to vector<8xf32>
    %110 = vector.shape_cast %109 : vector<8xf32> to vector<8x1xf32>
    %cst_40 = arith.constant 3.200000e+01 : f32
    %111 = vector.broadcast %cst_40 : f32 to vector<8x1xf32>
    %112 = arith.divf %110, %111 : vector<8x1xf32>
    %113 = vector.broadcast %112 : vector<8x1xf32> to vector<8x32xf32>
    %114 = arith.subf %108, %113 : vector<8x32xf32>
    %115 = arith.mulf %114, %114 : vector<8x32xf32>
    %cst_41 = arith.constant dense<0.000000e+00> : vector<8xf32>
    %116 = vector.multi_reduction <add>, %115, %cst_41 [1] : vector<8x32xf32> to vector<8xf32>
    %117 = vector.shape_cast %116 : vector<8xf32> to vector<8x1xf32>
    %cst_42 = arith.constant 3.200000e+01 : f32
    %118 = vector.broadcast %cst_42 : f32 to vector<8x1xf32>
    %119 = arith.divf %117, %118 : vector<8x1xf32>
    %120 = vector.broadcast %112 : vector<8x1xf32> to vector<8x32xf32>
    %121 = arith.subf %108, %120 : vector<8x32xf32>
    %cst_43 = arith.constant 9.99999974E-6 : f32
    %122 = vector.broadcast %cst_43 : f32 to vector<8x1xf32>
    %123 = arith.addf %119, %122 : vector<8x1xf32>
    %124 = math.rsqrt %123 : vector<8x1xf32>
    %125 = vector.broadcast %124 : vector<8x1xf32> to vector<8x32xf32>
    %126 = arith.mulf %121, %125 : vector<8x32xf32>
    %c0_44 = arith.constant 0 : index
    %c0_45 = arith.constant 0 : index
    %127 = vector.load %arg9[%c0_44, %c0_45] : memref<1x32xf32, #tpu.memory_space<vmem>>, vector<1x32xf32>
    %128 = vector.broadcast %127 : vector<1x32xf32> to vector<8x32xf32>
    %129 = arith.mulf %126, %128 : vector<8x32xf32>
    %c0_46 = arith.constant 0 : index
    %c0_47 = arith.constant 0 : index
    %130 = vector.load %arg10[%c0_46, %c0_47] : memref<1x32xf32, #tpu.memory_space<vmem>>, vector<1x32xf32>
    %131 = vector.broadcast %130 : vector<1x32xf32> to vector<8x32xf32>
    %132 = arith.addf %129, %131 : vector<8x32xf32>
    %133 = arith.truncf %132 : vector<8x32xf32> to vector<8x32xbf16>
    %c0_48 = arith.constant 0 : index
    %c0_49 = arith.constant 0 : index
    %c0_50 = arith.constant 0 : index
    %134 = vector.load %arg11[%c0_48, %c0_49, %c0_50] : memref<1x8x32xbf16, #tpu.memory_space<vmem>>, vector<1x8x32xbf16>
    %135 = vector.shape_cast %134 : vector<1x8x32xbf16> to vector<8x32xbf16>
    %136 = vector.shape_cast %133 : vector<8x32xbf16> to vector<1x8x32xbf16>
    tpu.vector_store %arg11[%c0_48, %c0_49, %c0_50], %136 {strides = array<i32>} : memref<1x8x32xbf16, #tpu.memory_space<vmem>>, vector<1x8x32xbf16>,
    return
  }
  func.func @transform_0(%arg0: i32) -> (i32, i32, i32) {
    %c0_i32 = arith.constant 0 : i32
    %c0_i32_0 = arith.constant 0 : i32
    %c0_i32_1 = arith.constant 0 : i32
    return %arg0, %c0_i32, %c0_i32_0 : i32, i32, i32
  }
  func.func @transform_1(%arg0: i32) -> (i32, i32, i32) {
    %c0_i32 = arith.constant 0 : i32
    %c0_i32_0 = arith.constant 0 : i32
    %c0_i32_1 = arith.constant 0 : i32
    return %arg0, %c0_i32, %c0_i32_0 : i32, i32, i32
  }
  func.func @transform_2(%arg0: i32) -> (i32, i32) {
    %c0_i32 = arith.constant 0 : i32
    %c0_i32_0 = arith.constant 0 : i32
    %c0_i32_1 = arith.constant 0 : i32
    return %c0_i32, %c0_i32_0 : i32, i32
  }
  func.func @transform_3(%arg0: i32) -> (i32, i32) {
    %c0_i32 = arith.constant 0 : i32
    %c0_i32_0 = arith.constant 0 : i32
    %c0_i32_1 = arith.constant 0 : i32
    return %c0_i32, %c0_i32_0 : i32, i32
  }
  func.func @transform_4(%arg0: i32) -> (i32, i32) {
    %c0_i32 = arith.constant 0 : i32
    %c0_i32_0 = arith.constant 0 : i32
    %c0_i32_1 = arith.constant 0 : i32
    return %c0_i32, %c0_i32_0 : i32, i32
  }
  func.func @transform_5(%arg0: i32) -> (i32, i32) {
    %c0_i32 = arith.constant 0 : i32
    %c0_i32_0 = arith.constant 0 : i32
    %c0_i32_1 = arith.constant 0 : i32
    return %c0_i32, %c0_i32_0 : i32, i32
  }
  func.func @transform_6(%arg0: i32) -> (i32, i32) {
    %c0_i32 = arith.constant 0 : i32
    %c0_i32_0 = arith.constant 0 : i32
    %c0_i32_1 = arith.constant 0 : i32
    return %c0_i32, %c0_i32_0 : i32, i32
  }
  func.func @transform_7(%arg0: i32) -> (i32, i32) {
    %c0_i32 = arith.constant 0 : i32
    %c0_i32_0 = arith.constant 0 : i32
    %c0_i32_1 = arith.constant 0 : i32
    return %c0_i32, %c0_i32_0 : i32, i32
  }
  func.func @transform_8(%arg0: i32) -> (i32, i32) {
    %c0_i32 = arith.constant 0 : i32
    %c0_i32_0 = arith.constant 0 : i32
    %c0_i32_1 = arith.constant 0 : i32
    return %c0_i32, %c0_i32_0 : i32, i32
  }
  func.func @transform_9(%arg0: i32) -> (i32, i32) {
    %c0_i32 = arith.constant 0 : i32
    %c0_i32_0 = arith.constant 0 : i32
    %c0_i32_1 = arith.constant 0 : i32
    return %c0_i32, %c0_i32_0 : i32, i32
  }
  func.func @transform_10(%arg0: i32) -> (i32, i32, i32) {
    %c0_i32 = arith.constant 0 : i32
    %c0_i32_0 = arith.constant 0 : i32
    %c0_i32_1 = arith.constant 0 : i32
    return %arg0, %c0_i32, %c0_i32_0 : i32, i32, i32
  }
}

module attributes {stable_mosaic.version = 11 : i64} {
  func.func @_ffn_res_ln_kernel(%arg0: i32, %arg1: memref<16x32xbf16, #tpu.memory_space<vmem>>, %arg2: memref<32x64xbf16, #tpu.memory_space<vmem>>, %arg3: memref<1x64xf32, #tpu.memory_space<vmem>>, %arg4: memref<64x32xbf16, #tpu.memory_space<vmem>>, %arg5: memref<1x32xf32, #tpu.memory_space<vmem>>, %arg6: memref<1x32xf32, #tpu.memory_space<vmem>>, %arg7: memref<1x32xf32, #tpu.memory_space<vmem>>, %arg8: memref<16x32xbf16, #tpu.memory_space<vmem>>) attributes {dimension_semantics = [#tpu.dimension_semantics<parallel>], iteration_bounds = array<i64: 1>, scalar_prefetch = 0 : i64, scratch_operands = 0 : i64, tpu.core_type = #tpu.core_type<tc>, window_params = [{transform_indices = @transform_0, window_bounds = array<i64: 16, 32>}, {pipeline_mode = #tpu.pipeline_mode<synchronous>, transform_indices = @transform_1, window_bounds = array<i64: 32, 64>}, {pipeline_mode = #tpu.pipeline_mode<synchronous>, transform_indices = @transform_2, window_bounds = array<i64: 1, 64>}, {pipeline_mode = #tpu.pipeline_mode<synchronous>, transform_indices = @transform_3, window_bounds = array<i64: 64, 32>}, {pipeline_mode = #tpu.pipeline_mode<synchronous>, transform_indices = @transform_4, window_bounds = array<i64: 1, 32>}, {pipeline_mode = #tpu.pipeline_mode<synchronous>, transform_indices = @transform_5, window_bounds = array<i64: 1, 32>}, {pipeline_mode = #tpu.pipeline_mode<synchronous>, transform_indices = @transform_6, window_bounds = array<i64: 1, 32>}, {transform_indices = @transform_7, window_bounds = array<i64: 16, 32>}]} {
    %c0 = arith.constant 0 : index
    %c0_0 = arith.constant 0 : index
    %0 = vector.load %arg1[%c0, %c0_0] : memref<16x32xbf16, #tpu.memory_space<vmem>>, vector<16x32xbf16>
    %c0_1 = arith.constant 0 : index
    %c0_2 = arith.constant 0 : index
    %1 = vector.load %arg2[%c0_1, %c0_2] : memref<32x64xbf16, #tpu.memory_space<vmem>>, vector<32x64xbf16>
    %cst = arith.constant dense<0.000000e+00> : vector<16x64xf32>
    %2 = tpu.matmul %0, %1, %cst {dimension_numbers = #tpu.dot_dimension_numbers<[1], [0], [0], [1], [0, 0, 1, 1], [], []>} : vector<16x32xbf16>, vector<32x64xbf16>, vector<16x64xf32> -> vector<16x64xf32>
    %c0_3 = arith.constant 0 : index
    %c0_4 = arith.constant 0 : index
    %3 = vector.load %arg3[%c0_3, %c0_4] : memref<1x64xf32, #tpu.memory_space<vmem>>, vector<1x64xf32>
    %4 = vector.broadcast %3 : vector<1x64xf32> to vector<16x64xf32>
    %5 = arith.addf %2, %4 : vector<16x64xf32>
    %cst_5 = arith.constant 0.000000e+00 : f32
    %6 = vector.broadcast %cst_5 : f32 to vector<16x64xf32>
    %7 = arith.maximumf %5, %6 : vector<16x64xf32>
    %8 = arith.truncf %7 : vector<16x64xf32> to vector<16x64xbf16>
    %c0_6 = arith.constant 0 : index
    %c0_7 = arith.constant 0 : index
    %9 = vector.load %arg4[%c0_6, %c0_7] : memref<64x32xbf16, #tpu.memory_space<vmem>>, vector<64x32xbf16>
    %cst_8 = arith.constant dense<0.000000e+00> : vector<16x32xf32>
    %10 = tpu.matmul %8, %9, %cst_8 {dimension_numbers = #tpu.dot_dimension_numbers<[1], [0], [0], [1], [0, 0, 1, 1], [], []>} : vector<16x64xbf16>, vector<64x32xbf16>, vector<16x32xf32> -> vector<16x32xf32>
    %c0_9 = arith.constant 0 : index
    %c0_10 = arith.constant 0 : index
    %11 = vector.load %arg5[%c0_9, %c0_10] : memref<1x32xf32, #tpu.memory_space<vmem>>, vector<1x32xf32>
    %12 = vector.broadcast %11 : vector<1x32xf32> to vector<16x32xf32>
    %13 = arith.addf %10, %12 : vector<16x32xf32>
    %14 = arith.extf %0 : vector<16x32xbf16> to vector<16x32xf32>
    %15 = arith.addf %14, %13 : vector<16x32xf32>
    %cst_11 = arith.constant dense<0.000000e+00> : vector<16xf32>
    %16 = vector.multi_reduction <add>, %15, %cst_11 [1] : vector<16x32xf32> to vector<16xf32>
    %17 = vector.shape_cast %16 : vector<16xf32> to vector<16x1xf32>
    %cst_12 = arith.constant 3.200000e+01 : f32
    %18 = vector.broadcast %cst_12 : f32 to vector<16x1xf32>
    %19 = arith.divf %17, %18 : vector<16x1xf32>
    %20 = vector.broadcast %19 : vector<16x1xf32> to vector<16x32xf32>
    %21 = arith.subf %15, %20 : vector<16x32xf32>
    %22 = arith.mulf %21, %21 : vector<16x32xf32>
    %cst_13 = arith.constant dense<0.000000e+00> : vector<16xf32>
    %23 = vector.multi_reduction <add>, %22, %cst_13 [1] : vector<16x32xf32> to vector<16xf32>
    %24 = vector.shape_cast %23 : vector<16xf32> to vector<16x1xf32>
    %cst_14 = arith.constant 3.200000e+01 : f32
    %25 = vector.broadcast %cst_14 : f32 to vector<16x1xf32>
    %26 = arith.divf %24, %25 : vector<16x1xf32>
    %27 = vector.broadcast %19 : vector<16x1xf32> to vector<16x32xf32>
    %28 = arith.subf %15, %27 : vector<16x32xf32>
    %cst_15 = arith.constant 9.99999974E-6 : f32
    %29 = vector.broadcast %cst_15 : f32 to vector<16x1xf32>
    %30 = arith.addf %26, %29 : vector<16x1xf32>
    %31 = math.rsqrt %30 : vector<16x1xf32>
    %32 = vector.broadcast %31 : vector<16x1xf32> to vector<16x32xf32>
    %33 = arith.mulf %28, %32 : vector<16x32xf32>
    %c0_16 = arith.constant 0 : index
    %c0_17 = arith.constant 0 : index
    %34 = vector.load %arg6[%c0_16, %c0_17] : memref<1x32xf32, #tpu.memory_space<vmem>>, vector<1x32xf32>
    %35 = vector.broadcast %34 : vector<1x32xf32> to vector<16x32xf32>
    %36 = arith.mulf %33, %35 : vector<16x32xf32>
    %c0_18 = arith.constant 0 : index
    %c0_19 = arith.constant 0 : index
    %37 = vector.load %arg7[%c0_18, %c0_19] : memref<1x32xf32, #tpu.memory_space<vmem>>, vector<1x32xf32>
    %38 = vector.broadcast %37 : vector<1x32xf32> to vector<16x32xf32>
    %39 = arith.addf %36, %38 : vector<16x32xf32>
    %40 = arith.truncf %39 : vector<16x32xf32> to vector<16x32xbf16>
    %c0_20 = arith.constant 0 : index
    %c0_21 = arith.constant 0 : index
    %41 = vector.load %arg8[%c0_20, %c0_21] : memref<16x32xbf16, #tpu.memory_space<vmem>>, vector<16x32xbf16>
    tpu.vector_store %arg8[%c0_20, %c0_21], %40 {strides = array<i32>} : memref<16x32xbf16, #tpu.memory_space<vmem>>, vector<16x32xbf16>,
    return
  }
  func.func @transform_0(%arg0: i32) -> (i32, i32) {
    %c0_i32 = arith.constant 0 : i32
    %c0_i32_0 = arith.constant 0 : i32
    return %arg0, %c0_i32 : i32, i32
  }
  func.func @transform_1(%arg0: i32) -> (i32, i32) {
    %c0_i32 = arith.constant 0 : i32
    %c0_i32_0 = arith.constant 0 : i32
    %c0_i32_1 = arith.constant 0 : i32
    return %c0_i32, %c0_i32_0 : i32, i32
  }
  func.func @transform_2(%arg0: i32) -> (i32, i32) {
    %c0_i32 = arith.constant 0 : i32
    %c0_i32_0 = arith.constant 0 : i32
    %c0_i32_1 = arith.constant 0 : i32
    return %c0_i32, %c0_i32_0 : i32, i32
  }
  func.func @transform_3(%arg0: i32) -> (i32, i32) {
    %c0_i32 = arith.constant 0 : i32
    %c0_i32_0 = arith.constant 0 : i32
    %c0_i32_1 = arith.constant 0 : i32
    return %c0_i32, %c0_i32_0 : i32, i32
  }
  func.func @transform_4(%arg0: i32) -> (i32, i32) {
    %c0_i32 = arith.constant 0 : i32
    %c0_i32_0 = arith.constant 0 : i32
    %c0_i32_1 = arith.constant 0 : i32
    return %c0_i32, %c0_i32_0 : i32, i32
  }
  func.func @transform_5(%arg0: i32) -> (i32, i32) {
    %c0_i32 = arith.constant 0 : i32
    %c0_i32_0 = arith.constant 0 : i32
    %c0_i32_1 = arith.constant 0 : i32
    return %c0_i32, %c0_i32_0 : i32, i32
  }
  func.func @transform_6(%arg0: i32) -> (i32, i32) {
    %c0_i32 = arith.constant 0 : i32
    %c0_i32_0 = arith.constant 0 : i32
    %c0_i32_1 = arith.constant 0 : i32
    return %c0_i32, %c0_i32_0 : i32, i32
  }
  func.func @transform_7(%arg0: i32) -> (i32, i32) {
    %c0_i32 = arith.constant 0 : i32
    %c0_i32_0 = arith.constant 0 : i32
    return %arg0, %c0_i32 : i32, i32
  }
}

module attributes {stable_mosaic.version = 11 : i64} {
  func.func @_mha_res_ln_kernel(%arg0: i32, %arg1: memref<1x8x32xbf16, #tpu.memory_space<vmem>>, %arg2: memref<1x8x32xbf16, #tpu.memory_space<vmem>>, %arg3: memref<32x32xbf16, #tpu.memory_space<vmem>>, %arg4: memref<1x32xf32, #tpu.memory_space<vmem>>, %arg5: memref<32x64xbf16, #tpu.memory_space<vmem>>, %arg6: memref<1x64xf32, #tpu.memory_space<vmem>>, %arg7: memref<32x32xbf16, #tpu.memory_space<vmem>>, %arg8: memref<1x32xf32, #tpu.memory_space<vmem>>, %arg9: memref<1x32xf32, #tpu.memory_space<vmem>>, %arg10: memref<1x32xf32, #tpu.memory_space<vmem>>, %arg11: memref<1x8x32xbf16, #tpu.memory_space<vmem>>) attributes {dimension_semantics = [#tpu.dimension_semantics<parallel>], iteration_bounds = array<i64: 2>, scalar_prefetch = 0 : i64, scratch_operands = 0 : i64, tpu.core_type = #tpu.core_type<tc>, window_params = [{transform_indices = @transform_0, window_bounds = array<i64: 1, 8, 32>}, {transform_indices = @transform_1, window_bounds = array<i64: 1, 8, 32>}, {pipeline_mode = #tpu.pipeline_mode<synchronous>, transform_indices = @transform_2, window_bounds = array<i64: 32, 32>}, {pipeline_mode = #tpu.pipeline_mode<synchronous>, transform_indices = @transform_3, window_bounds = array<i64: 1, 32>}, {pipeline_mode = #tpu.pipeline_mode<synchronous>, transform_indices = @transform_4, window_bounds = array<i64: 32, 64>}, {pipeline_mode = #tpu.pipeline_mode<synchronous>, transform_indices = @transform_5, window_bounds = array<i64: 1, 64>}, {pipeline_mode = #tpu.pipeline_mode<synchronous>, transform_indices = @transform_6, window_bounds = array<i64: 32, 32>}, {pipeline_mode = #tpu.pipeline_mode<synchronous>, transform_indices = @transform_7, window_bounds = array<i64: 1, 32>}, {pipeline_mode = #tpu.pipeline_mode<synchronous>, transform_indices = @transform_8, window_bounds = array<i64: 1, 32>}, {pipeline_mode = #tpu.pipeline_mode<synchronous>, transform_indices = @transform_9, window_bounds = array<i64: 1, 32>}, {transform_indices = @transform_10, window_bounds = array<i64: 1, 8, 32>}]} {
    %c0 = arith.constant 0 : index
    %c0_0 = arith.constant 0 : index
    %c0_1 = arith.constant 0 : index
    %0 = vector.load %arg1[%c0, %c0_0, %c0_1] : memref<1x8x32xbf16, #tpu.memory_space<vmem>>, vector<1x8x32xbf16>
    %1 = vector.shape_cast %0 : vector<1x8x32xbf16> to vector<8x32xbf16>
    %c0_2 = arith.constant 0 : index
    %c0_3 = arith.constant 0 : index
    %c0_4 = arith.constant 0 : index
    %2 = vector.load %arg2[%c0_2, %c0_3, %c0_4] : memref<1x8x32xbf16, #tpu.memory_space<vmem>>, vector<1x8x32xbf16>
    %3 = vector.shape_cast %2 : vector<1x8x32xbf16> to vector<8x32xbf16>
    %c0_5 = arith.constant 0 : index
    %c0_6 = arith.constant 0 : index
    %4 = vector.load %arg3[%c0_5, %c0_6] : memref<32x32xbf16, #tpu.memory_space<vmem>>, vector<32x32xbf16>
    %cst = arith.constant dense<0.000000e+00> : vector<8x32xf32>
    %5 = tpu.matmul %1, %4, %cst {dimension_numbers = #tpu.dot_dimension_numbers<[1], [0], [0], [1], [0, 0, 1, 1], [], []>} : vector<8x32xbf16>, vector<32x32xbf16>, vector<8x32xf32> -> vector<8x32xf32>
    %c0_7 = arith.constant 0 : index
    %c0_8 = arith.constant 0 : index
    %6 = vector.load %arg4[%c0_7, %c0_8] : memref<1x32xf32, #tpu.memory_space<vmem>>, vector<1x32xf32>
    %7 = vector.broadcast %6 : vector<1x32xf32> to vector<8x32xf32>
    %8 = arith.addf %5, %7 : vector<8x32xf32>
    %c0_9 = arith.constant 0 : index
    %c0_10 = arith.constant 0 : index
    %9 = vector.load %arg5[%c0_9, %c0_10] : memref<32x64xbf16, #tpu.memory_space<vmem>>, vector<32x64xbf16>
    %cst_11 = arith.constant dense<0.000000e+00> : vector<8x64xf32>
    %10 = tpu.matmul %3, %9, %cst_11 {dimension_numbers = #tpu.dot_dimension_numbers<[1], [0], [0], [1], [0, 0, 1, 1], [], []>} : vector<8x32xbf16>, vector<32x64xbf16>, vector<8x64xf32> -> vector<8x64xf32>
    %c0_12 = arith.constant 0 : index
    %c0_13 = arith.constant 0 : index
    %11 = vector.load %arg6[%c0_12, %c0_13] : memref<1x64xf32, #tpu.memory_space<vmem>>, vector<1x64xf32>
    %12 = vector.broadcast %11 : vector<1x64xf32> to vector<8x64xf32>
    %13 = arith.addf %10, %12 : vector<8x64xf32>
    %14 = vector.extract_strided_slice %13 {offsets = [0, 0], sizes = [8, 32], strides = [1, 1]} : vector<8x64xf32> to vector<8x32xf32>
    %15 = vector.extract_strided_slice %13 {offsets = [0, 32], sizes = [8, 32], strides = [1, 1]} : vector<8x64xf32> to vector<8x32xf32>
    %16 = vector.extract_strided_slice %8 {offsets = [0, 0], sizes = [8, 8], strides = [1, 1]} : vector<8x32xf32> to vector<8x8xf32>
    %17 = arith.truncf %16 : vector<8x8xf32> to vector<8x8xbf16>
    %18 = vector.extract_strided_slice %14 {offsets = [0, 0], sizes = [8, 8], strides = [1, 1]} : vector<8x32xf32> to vector<8x8xf32>
    %19 = arith.truncf %18 : vector<8x8xf32> to vector<8x8xbf16>
    %20 = vector.extract_strided_slice %15 {offsets = [0, 0], sizes = [8, 8], strides = [1, 1]} : vector<8x32xf32> to vector<8x8xf32>
    %21 = arith.truncf %20 : vector<8x8xf32> to vector<8x8xbf16>
    %cst_14 = arith.constant dense<0.000000e+00> : vector<8x8xf32>
    %22 = tpu.matmul %17, %19, %cst_14 {dimension_numbers = #tpu.dot_dimension_numbers<[1], [1], [0], [0], [0, 0, 1, 0], [], []>} : vector<8x8xbf16>, vector<8x8xbf16>, vector<8x8xf32> -> vector<8x8xf32>
    %cst_15 = arith.constant 0.353553385 : f32
    %23 = vector.broadcast %cst_15 : f32 to vector<8x8xf32>
    %24 = arith.mulf %22, %23 : vector<8x8xf32>
    %cst_16 = arith.constant dense<0xFF800000> : vector<8xf32>
    %25 = vector.multi_reduction <maximumf>, %24, %cst_16 [1] : vector<8x8xf32> to vector<8xf32>
    %26 = vector.shape_cast %25 : vector<8xf32> to vector<8x1xf32>
    %27 = vector.broadcast %26 : vector<8x1xf32> to vector<8x8xf32>
    %28 = arith.subf %24, %27 : vector<8x8xf32>
    %29 = math.exp %28 : vector<8x8xf32>
    %cst_17 = arith.constant dense<0.000000e+00> : vector<8xf32>
    %30 = vector.multi_reduction <add>, %29, %cst_17 [1] : vector<8x8xf32> to vector<8xf32>
    %31 = vector.shape_cast %30 : vector<8xf32> to vector<8x1xf32>
    %32 = tpu.reciprocal %31 {approx = true} : vector<8x1xf32> -> vector<8x1xf32>
    %33 = vector.broadcast %32 : vector<8x1xf32> to vector<8x8xf32>
    %34 = arith.mulf %29, %33 : vector<8x8xf32>
    %35 = arith.truncf %34 : vector<8x8xf32> to vector<8x8xbf16>
    %cst_18 = arith.constant dense<0.000000e+00> : vector<8x8xf32>
    %36 = tpu.matmul %35, %21, %cst_18 {dimension_numbers = #tpu.dot_dimension_numbers<[1], [0], [0], [1], [0, 0, 1, 1], [], []>} : vector<8x8xbf16>, vector<8x8xbf16>, vector<8x8xf32> -> vector<8x8xf32>
    %37 = vector.extract_strided_slice %8 {offsets = [0, 8], sizes = [8, 8], strides = [1, 1]} : vector<8x32xf32> to vector<8x8xf32>
    %38 = arith.truncf %37 : vector<8x8xf32> to vector<8x8xbf16>
    %39 = vector.extract_strided_slice %14 {offsets = [0, 8], sizes = [8, 8], strides = [1, 1]} : vector<8x32xf32> to vector<8x8xf32>
    %40 = arith.truncf %39 : vector<8x8xf32> to vector<8x8xbf16>
    %41 = vector.extract_strided_slice %15 {offsets = [0, 8], sizes = [8, 8], strides = [1, 1]} : vector<8x32xf32> to vector<8x8xf32>
    %42 = arith.truncf %41 : vector<8x8xf32> to vector<8x8xbf16>
    %cst_19 = arith.constant dense<0.000000e+00> : vector<8x8xf32>
    %43 = tpu.matmul %38, %40, %cst_19 {dimension_numbers = #tpu.dot_dimension_numbers<[1], [1], [0], [0], [0, 0, 1, 0], [], []>} : vector<8x8xbf16>, vector<8x8xbf16>, vector<8x8xf32> -> vector<8x8xf32>
    %cst_20 = arith.constant 0.353553385 : f32
    %44 = vector.broadcast %cst_20 : f32 to vector<8x8xf32>
    %45 = arith.mulf %43, %44 : vector<8x8xf32>
    %cst_21 = arith.constant dense<0xFF800000> : vector<8xf32>
    %46 = vector.multi_reduction <maximumf>, %45, %cst_21 [1] : vector<8x8xf32> to vector<8xf32>
    %47 = vector.shape_cast %46 : vector<8xf32> to vector<8x1xf32>
    %48 = vector.broadcast %47 : vector<8x1xf32> to vector<8x8xf32>
    %49 = arith.subf %45, %48 : vector<8x8xf32>
    %50 = math.exp %49 : vector<8x8xf32>
    %cst_22 = arith.constant dense<0.000000e+00> : vector<8xf32>
    %51 = vector.multi_reduction <add>, %50, %cst_22 [1] : vector<8x8xf32> to vector<8xf32>
    %52 = vector.shape_cast %51 : vector<8xf32> to vector<8x1xf32>
    %53 = tpu.reciprocal %52 {approx = true} : vector<8x1xf32> -> vector<8x1xf32>
    %54 = vector.broadcast %53 : vector<8x1xf32> to vector<8x8xf32>
    %55 = arith.mulf %50, %54 : vector<8x8xf32>
    %56 = arith.truncf %55 : vector<8x8xf32> to vector<8x8xbf16>
    %cst_23 = arith.constant dense<0.000000e+00> : vector<8x8xf32>
    %57 = tpu.matmul %56, %42, %cst_23 {dimension_numbers = #tpu.dot_dimension_numbers<[1], [0], [0], [1], [0, 0, 1, 1], [], []>} : vector<8x8xbf16>, vector<8x8xbf16>, vector<8x8xf32> -> vector<8x8xf32>
    %58 = vector.extract_strided_slice %8 {offsets = [0, 16], sizes = [8, 8], strides = [1, 1]} : vector<8x32xf32> to vector<8x8xf32>
    %59 = arith.truncf %58 : vector<8x8xf32> to vector<8x8xbf16>
    %60 = vector.extract_strided_slice %14 {offsets = [0, 16], sizes = [8, 8], strides = [1, 1]} : vector<8x32xf32> to vector<8x8xf32>
    %61 = arith.truncf %60 : vector<8x8xf32> to vector<8x8xbf16>
    %62 = vector.extract_strided_slice %15 {offsets = [0, 16], sizes = [8, 8], strides = [1, 1]} : vector<8x32xf32> to vector<8x8xf32>
    %63 = arith.truncf %62 : vector<8x8xf32> to vector<8x8xbf16>
    %cst_24 = arith.constant dense<0.000000e+00> : vector<8x8xf32>
    %64 = tpu.matmul %59, %61, %cst_24 {dimension_numbers = #tpu.dot_dimension_numbers<[1], [1], [0], [0], [0, 0, 1, 0], [], []>} : vector<8x8xbf16>, vector<8x8xbf16>, vector<8x8xf32> -> vector<8x8xf32>
    %cst_25 = arith.constant 0.353553385 : f32
    %65 = vector.broadcast %cst_25 : f32 to vector<8x8xf32>
    %66 = arith.mulf %64, %65 : vector<8x8xf32>
    %cst_26 = arith.constant dense<0xFF800000> : vector<8xf32>
    %67 = vector.multi_reduction <maximumf>, %66, %cst_26 [1] : vector<8x8xf32> to vector<8xf32>
    %68 = vector.shape_cast %67 : vector<8xf32> to vector<8x1xf32>
    %69 = vector.broadcast %68 : vector<8x1xf32> to vector<8x8xf32>
    %70 = arith.subf %66, %69 : vector<8x8xf32>
    %71 = math.exp %70 : vector<8x8xf32>
    %cst_27 = arith.constant dense<0.000000e+00> : vector<8xf32>
    %72 = vector.multi_reduction <add>, %71, %cst_27 [1] : vector<8x8xf32> to vector<8xf32>
    %73 = vector.shape_cast %72 : vector<8xf32> to vector<8x1xf32>
    %74 = tpu.reciprocal %73 {approx = true} : vector<8x1xf32> -> vector<8x1xf32>
    %75 = vector.broadcast %74 : vector<8x1xf32> to vector<8x8xf32>
    %76 = arith.mulf %71, %75 : vector<8x8xf32>
    %77 = arith.truncf %76 : vector<8x8xf32> to vector<8x8xbf16>
    %cst_28 = arith.constant dense<0.000000e+00> : vector<8x8xf32>
    %78 = tpu.matmul %77, %63, %cst_28 {dimension_numbers = #tpu.dot_dimension_numbers<[1], [0], [0], [1], [0, 0, 1, 1], [], []>} : vector<8x8xbf16>, vector<8x8xbf16>, vector<8x8xf32> -> vector<8x8xf32>
    %79 = vector.extract_strided_slice %8 {offsets = [0, 24], sizes = [8, 8], strides = [1, 1]} : vector<8x32xf32> to vector<8x8xf32>
    %80 = arith.truncf %79 : vector<8x8xf32> to vector<8x8xbf16>
    %81 = vector.extract_strided_slice %14 {offsets = [0, 24], sizes = [8, 8], strides = [1, 1]} : vector<8x32xf32> to vector<8x8xf32>
    %82 = arith.truncf %81 : vector<8x8xf32> to vector<8x8xbf16>
    %83 = vector.extract_strided_slice %15 {offsets = [0, 24], sizes = [8, 8], strides = [1, 1]} : vector<8x32xf32> to vector<8x8xf32>
    %84 = arith.truncf %83 : vector<8x8xf32> to vector<8x8xbf16>
    %cst_29 = arith.constant dense<0.000000e+00> : vector<8x8xf32>
    %85 = tpu.matmul %80, %82, %cst_29 {dimension_numbers = #tpu.dot_dimension_numbers<[1], [1], [0], [0], [0, 0, 1, 0], [], []>} : vector<8x8xbf16>, vector<8x8xbf16>, vector<8x8xf32> -> vector<8x8xf32>
    %cst_30 = arith.constant 0.353553385 : f32
    %86 = vector.broadcast %cst_30 : f32 to vector<8x8xf32>
    %87 = arith.mulf %85, %86 : vector<8x8xf32>
    %cst_31 = arith.constant dense<0xFF800000> : vector<8xf32>
    %88 = vector.multi_reduction <maximumf>, %87, %cst_31 [1] : vector<8x8xf32> to vector<8xf32>
    %89 = vector.shape_cast %88 : vector<8xf32> to vector<8x1xf32>
    %90 = vector.broadcast %89 : vector<8x1xf32> to vector<8x8xf32>
    %91 = arith.subf %87, %90 : vector<8x8xf32>
    %92 = math.exp %91 : vector<8x8xf32>
    %cst_32 = arith.constant dense<0.000000e+00> : vector<8xf32>
    %93 = vector.multi_reduction <add>, %92, %cst_32 [1] : vector<8x8xf32> to vector<8xf32>
    %94 = vector.shape_cast %93 : vector<8xf32> to vector<8x1xf32>
    %95 = tpu.reciprocal %94 {approx = true} : vector<8x1xf32> -> vector<8x1xf32>
    %96 = vector.broadcast %95 : vector<8x1xf32> to vector<8x8xf32>
    %97 = arith.mulf %92, %96 : vector<8x8xf32>
    %98 = arith.truncf %97 : vector<8x8xf32> to vector<8x8xbf16>
    %cst_33 = arith.constant dense<0.000000e+00> : vector<8x8xf32>
    %99 = tpu.matmul %98, %84, %cst_33 {dimension_numbers = #tpu.dot_dimension_numbers<[1], [0], [0], [1], [0, 0, 1, 1], [], []>} : vector<8x8xbf16>, vector<8x8xbf16>, vector<8x8xf32> -> vector<8x8xf32>
    %100 = tpu.concatenate %36, %57, %78, %99 in 1 : vector<8x8xf32>, vector<8x8xf32>, vector<8x8xf32>, vector<8x8xf32> -> vector<8x32xf32>
    %101 = arith.truncf %100 : vector<8x32xf32> to vector<8x32xbf16>
    %c0_34 = arith.constant 0 : index
    %c0_35 = arith.constant 0 : index
    %102 = vector.load %arg7[%c0_34, %c0_35] : memref<32x32xbf16, #tpu.memory_space<vmem>>, vector<32x32xbf16>
    %cst_36 = arith.constant dense<0.000000e+00> : vector<8x32xf32>
    %103 = tpu.matmul %101, %102, %cst_36 {dimension_numbers = #tpu.dot_dimension_numbers<[1], [0], [0], [1], [0, 0, 1, 1], [], []>} : vector<8x32xbf16>, vector<32x32xbf16>, vector<8x32xf32> -> vector<8x32xf32>
    %c0_37 = arith.constant 0 : index
    %c0_38 = arith.constant 0 : index
    %104 = vector.load %arg8[%c0_37, %c0_38] : memref<1x32xf32, #tpu.memory_space<vmem>>, vector<1x32xf32>
    %105 = vector.broadcast %104 : vector<1x32xf32> to vector<8x32xf32>
    %106 = arith.addf %103, %105 : vector<8x32xf32>
    %107 = arith.extf %1 : vector<8x32xbf16> to vector<8x32xf32>
    %108 = arith.addf %107, %106 : vector<8x32xf32>
    %cst_39 = arith.constant dense<0.000000e+00> : vector<8xf32>
    %109 = vector.multi_reduction <add>, %108, %cst_39 [1] : vector<8x32xf32> to vector<8xf32>
    %110 = vector.shape_cast %109 : vector<8xf32> to vector<8x1xf32>
    %cst_40 = arith.constant 3.200000e+01 : f32
    %111 = vector.broadcast %cst_40 : f32 to vector<8x1xf32>
    %112 = arith.divf %110, %111 : vector<8x1xf32>
    %113 = vector.broadcast %112 : vector<8x1xf32> to vector<8x32xf32>
    %114 = arith.subf %108, %113 : vector<8x32xf32>
    %115 = arith.mulf %114, %114 : vector<8x32xf32>
    %cst_41 = arith.constant dense<0.000000e+00> : vector<8xf32>
    %116 = vector.multi_reduction <add>, %115, %cst_41 [1] : vector<8x32xf32> to vector<8xf32>
    %117 = vector.shape_cast %116 : vector<8xf32> to vector<8x1xf32>
    %cst_42 = arith.constant 3.200000e+01 : f32
    %118 = vector.broadcast %cst_42 : f32 to vector<8x1xf32>
    %119 = arith.divf %117, %118 : vector<8x1xf32>
    %120 = vector.broadcast %112 : vector<8x1xf32> to vector<8x32xf32>
    %121 = arith.subf %108, %120 : vector<8x32xf32>
    %cst_43 = arith.constant 9.99999974E-6 : f32
    %122 = vector.broadcast %cst_43 : f32 to vector<8x1xf32>
    %123 = arith.addf %119, %122 : vector<8x1xf32>
    %124 = math.rsqrt %123 : vector<8x1xf32>
    %125 = vector.broadcast %124 : vector<8x1xf32> to vector<8x32xf32>
    %126 = arith.mulf %121, %125 : vector<8x32xf32>
    %c0_44 = arith.constant 0 : index
    %c0_45 = arith.constant 0 : index
    %127 = vector.load %arg9[%c0_44, %c0_45] : memref<1x32xf32, #tpu.memory_space<vmem>>, vector<1x32xf32>
    %128 = vector.broadcast %127 : vector<1x32xf32> to vector<8x32xf32>
    %129 = arith.mulf %126, %128 : vector<8x32xf32>
    %c0_46 = arith.constant 0 : index
    %c0_47 = arith.constant 0 : index
    %130 = vector.load %arg10[%c0_46, %c0_47] : memref<1x32xf32, #tpu.memory_space<vmem>>, vector<1x32xf32>
    %131 = vector.broadcast %130 : vector<1x32xf32> to vector<8x32xf32>
    %132 = arith.addf %129, %131 : vector<8x32xf32>
    %133 = arith.truncf %132 : vector<8x32xf32> to vector<8x32xbf16>
    %c0_48 = arith.constant 0 : index
    %c0_49 = arith.constant 0 : index
    %c0_50 = arith.constant 0 : index
    %134 = vector.load %arg11[%c0_48, %c0_49, %c0_50] : memref<1x8x32xbf16, #tpu.memory_space<vmem>>, vector<1x8x32xbf16>
    %135 = vector.shape_cast %134 : vector<1x8x32xbf16> to vector<8x32xbf16>
    %136 = vector.shape_cast %133 : vector<8x32xbf16> to vector<1x8x32xbf16>
    tpu.vector_store %arg11[%c0_48, %c0_49, %c0_50], %136 {strides = array<i32>} : memref<1x8x32xbf16, #tpu.memory_space<vmem>>, vector<1x8x32xbf16>,
    return
  }
  func.func @transform_0(%arg0: i32) -> (i32, i32, i32) {
    %c0_i32 = arith.constant 0 : i32
    %c0_i32_0 = arith.constant 0 : i32
    %c0_i32_1 = arith.constant 0 : i32
    return %arg0, %c0_i32, %c0_i32_0 : i32, i32, i32
  }
  func.func @transform_1(%arg0: i32) -> (i32, i32, i32) {
    %c0_i32 = arith.constant 0 : i32
    %c0_i32_0 = arith.constant 0 : i32
    %c0_i32_1 = arith.constant 0 : i32
    return %arg0, %c0_i32, %c0_i32_0 : i32, i32, i32
  }
  func.func @transform_2(%arg0: i32) -> (i32, i32) {
    %c0_i32 = arith.constant 0 : i32
    %c0_i32_0 = arith.constant 0 : i32
    %c0_i32_1 = arith.constant 0 : i32
    return %c0_i32, %c0_i32_0 : i32, i32
  }
  func.func @transform_3(%arg0: i32) -> (i32, i32) {
    %c0_i32 = arith.constant 0 : i32
    %c0_i32_0 = arith.constant 0 : i32
    %c0_i32_1 = arith.constant 0 : i32
    return %c0_i32, %c0_i32_0 : i32, i32
  }
  func.func @transform_4(%arg0: i32) -> (i32, i32) {
    %c0_i32 = arith.constant 0 : i32
    %c0_i32_0 = arith.constant 0 : i32
    %c0_i32_1 = arith.constant 0 : i32
    return %c0_i32, %c0_i32_0 : i32, i32
  }
  func.func @transform_5(%arg0: i32) -> (i32, i32) {
    %c0_i32 = arith.constant 0 : i32
    %c0_i32_0 = arith.constant 0 : i32
    %c0_i32_1 = arith.constant 0 : i32
    return %c0_i32, %c0_i32_0 : i32, i32
  }
  func.func @transform_6(%arg0: i32) -> (i32, i32) {
    %c0_i32 = arith.constant 0 : i32
    %c0_i32_0 = arith.constant 0 : i32
    %c0_i32_1 = arith.constant 0 : i32
    return %c0_i32, %c0_i32_0 : i32, i32
  }
  func.func @transform_7(%arg0: i32) -> (i32, i32) {
    %c0_i32 = arith.constant 0 : i32
    %c0_i32_0 = arith.constant 0 : i32
    %c0_i32_1 = arith.constant 0 : i32
    return %c0_i32, %c0_i32_0 : i32, i32
  }
  func.func @transform_8(%arg0: i32) -> (i32, i32) {
    %c0_i32 = arith.constant 0 : i32
    %c0_i32_0 = arith.constant 0 : i32
    %c0_i32_1 = arith.constant 0 : i32
    return %c0_i32, %c0_i32_0 : i32, i32
  }
  func.func @transform_9(%arg0: i32) -> (i32, i32) {
    %c0_i32 = arith.constant 0 : i32
    %c0_i32_0 = arith.constant 0 : i32
    %c0_i32_1 = arith.constant 0 : i32
    return %c0_i32, %c0_i32_0 : i32, i32
  }
  func.func @transform_10(%arg0: i32) -> (i32, i32, i32) {
    %c0_i32 = arith.constant 0 : i32
    %c0_i32_0 = arith.constant 0 : i32
    %c0_i32_1 = arith.constant 0 : i32
    return %arg0, %c0_i32, %c0_i32_0 : i32, i32, i32
  }
}

module attributes {stable_mosaic.version = 11 : i64} {
  func.func @_mha_res_ln_kernel(%arg0: i32, %arg1: memref<1x8x32xbf16, #tpu.memory_space<vmem>>, %arg2: memref<1x8x32xbf16, #tpu.memory_space<vmem>>, %arg3: memref<32x32xbf16, #tpu.memory_space<vmem>>, %arg4: memref<1x32xf32, #tpu.memory_space<vmem>>, %arg5: memref<32x64xbf16, #tpu.memory_space<vmem>>, %arg6: memref<1x64xf32, #tpu.memory_space<vmem>>, %arg7: memref<32x32xbf16, #tpu.memory_space<vmem>>, %arg8: memref<1x32xf32, #tpu.memory_space<vmem>>, %arg9: memref<1x32xf32, #tpu.memory_space<vmem>>, %arg10: memref<1x32xf32, #tpu.memory_space<vmem>>, %arg11: memref<1x8x32xbf16, #tpu.memory_space<vmem>>) attributes {dimension_semantics = [#tpu.dimension_semantics<parallel>], iteration_bounds = array<i64: 2>, scalar_prefetch = 0 : i64, scratch_operands = 0 : i64, tpu.core_type = #tpu.core_type<tc>, window_params = [{transform_indices = @transform_0, window_bounds = array<i64: 1, 8, 32>}, {transform_indices = @transform_1, window_bounds = array<i64: 1, 8, 32>}, {pipeline_mode = #tpu.pipeline_mode<synchronous>, transform_indices = @transform_2, window_bounds = array<i64: 32, 32>}, {pipeline_mode = #tpu.pipeline_mode<synchronous>, transform_indices = @transform_3, window_bounds = array<i64: 1, 32>}, {pipeline_mode = #tpu.pipeline_mode<synchronous>, transform_indices = @transform_4, window_bounds = array<i64: 32, 64>}, {pipeline_mode = #tpu.pipeline_mode<synchronous>, transform_indices = @transform_5, window_bounds = array<i64: 1, 64>}, {pipeline_mode = #tpu.pipeline_mode<synchronous>, transform_indices = @transform_6, window_bounds = array<i64: 32, 32>}, {pipeline_mode = #tpu.pipeline_mode<synchronous>, transform_indices = @transform_7, window_bounds = array<i64: 1, 32>}, {pipeline_mode = #tpu.pipeline_mode<synchronous>, transform_indices = @transform_8, window_bounds = array<i64: 1, 32>}, {pipeline_mode = #tpu.pipeline_mode<synchronous>, transform_indices = @transform_9, window_bounds = array<i64: 1, 32>}, {transform_indices = @transform_10, window_bounds = array<i64: 1, 8, 32>}]} {
    %c0 = arith.constant 0 : index
    %c0_0 = arith.constant 0 : index
    %c0_1 = arith.constant 0 : index
    %0 = vector.load %arg1[%c0, %c0_0, %c0_1] : memref<1x8x32xbf16, #tpu.memory_space<vmem>>, vector<1x8x32xbf16>
    %1 = vector.shape_cast %0 : vector<1x8x32xbf16> to vector<8x32xbf16>
    %c0_2 = arith.constant 0 : index
    %c0_3 = arith.constant 0 : index
    %c0_4 = arith.constant 0 : index
    %2 = vector.load %arg2[%c0_2, %c0_3, %c0_4] : memref<1x8x32xbf16, #tpu.memory_space<vmem>>, vector<1x8x32xbf16>
    %3 = vector.shape_cast %2 : vector<1x8x32xbf16> to vector<8x32xbf16>
    %c0_5 = arith.constant 0 : index
    %c0_6 = arith.constant 0 : index
    %4 = vector.load %arg3[%c0_5, %c0_6] : memref<32x32xbf16, #tpu.memory_space<vmem>>, vector<32x32xbf16>
    %cst = arith.constant dense<0.000000e+00> : vector<8x32xf32>
    %5 = tpu.matmul %1, %4, %cst {dimension_numbers = #tpu.dot_dimension_numbers<[1], [0], [0], [1], [0, 0, 1, 1], [], []>} : vector<8x32xbf16>, vector<32x32xbf16>, vector<8x32xf32> -> vector<8x32xf32>
    %c0_7 = arith.constant 0 : index
    %c0_8 = arith.constant 0 : index
    %6 = vector.load %arg4[%c0_7, %c0_8] : memref<1x32xf32, #tpu.memory_space<vmem>>, vector<1x32xf32>
    %7 = vector.broadcast %6 : vector<1x32xf32> to vector<8x32xf32>
    %8 = arith.addf %5, %7 : vector<8x32xf32>
    %c0_9 = arith.constant 0 : index
    %c0_10 = arith.constant 0 : index
    %9 = vector.load %arg5[%c0_9, %c0_10] : memref<32x64xbf16, #tpu.memory_space<vmem>>, vector<32x64xbf16>
    %cst_11 = arith.constant dense<0.000000e+00> : vector<8x64xf32>
    %10 = tpu.matmul %3, %9, %cst_11 {dimension_numbers = #tpu.dot_dimension_numbers<[1], [0], [0], [1], [0, 0, 1, 1], [], []>} : vector<8x32xbf16>, vector<32x64xbf16>, vector<8x64xf32> -> vector<8x64xf32>
    %c0_12 = arith.constant 0 : index
    %c0_13 = arith.constant 0 : index
    %11 = vector.load %arg6[%c0_12, %c0_13] : memref<1x64xf32, #tpu.memory_space<vmem>>, vector<1x64xf32>
    %12 = vector.broadcast %11 : vector<1x64xf32> to vector<8x64xf32>
    %13 = arith.addf %10, %12 : vector<8x64xf32>
    %14 = vector.extract_strided_slice %13 {offsets = [0, 0], sizes = [8, 32], strides = [1, 1]} : vector<8x64xf32> to vector<8x32xf32>
    %15 = vector.extract_strided_slice %13 {offsets = [0, 32], sizes = [8, 32], strides = [1, 1]} : vector<8x64xf32> to vector<8x32xf32>
    %16 = vector.extract_strided_slice %8 {offsets = [0, 0], sizes = [8, 8], strides = [1, 1]} : vector<8x32xf32> to vector<8x8xf32>
    %17 = arith.truncf %16 : vector<8x8xf32> to vector<8x8xbf16>
    %18 = vector.extract_strided_slice %14 {offsets = [0, 0], sizes = [8, 8], strides = [1, 1]} : vector<8x32xf32> to vector<8x8xf32>
    %19 = arith.truncf %18 : vector<8x8xf32> to vector<8x8xbf16>
    %20 = vector.extract_strided_slice %15 {offsets = [0, 0], sizes = [8, 8], strides = [1, 1]} : vector<8x32xf32> to vector<8x8xf32>
    %21 = arith.truncf %20 : vector<8x8xf32> to vector<8x8xbf16>
    %cst_14 = arith.constant dense<0.000000e+00> : vector<8x8xf32>
    %22 = tpu.matmul %17, %19, %cst_14 {dimension_numbers = #tpu.dot_dimension_numbers<[1], [1], [0], [0], [0, 0, 1, 0], [], []>} : vector<8x8xbf16>, vector<8x8xbf16>, vector<8x8xf32> -> vector<8x8xf32>
    %cst_15 = arith.constant 0.353553385 : f32
    %23 = vector.broadcast %cst_15 : f32 to vector<8x8xf32>
    %24 = arith.mulf %22, %23 : vector<8x8xf32>
    %cst_16 = arith.constant dense<0xFF800000> : vector<8xf32>
    %25 = vector.multi_reduction <maximumf>, %24, %cst_16 [1] : vector<8x8xf32> to vector<8xf32>
    %26 = vector.shape_cast %25 : vector<8xf32> to vector<8x1xf32>
    %27 = vector.broadcast %26 : vector<8x1xf32> to vector<8x8xf32>
    %28 = arith.subf %24, %27 : vector<8x8xf32>
    %29 = math.exp %28 : vector<8x8xf32>
    %cst_17 = arith.constant dense<0.000000e+00> : vector<8xf32>
    %30 = vector.multi_reduction <add>, %29, %cst_17 [1] : vector<8x8xf32> to vector<8xf32>
    %31 = vector.shape_cast %30 : vector<8xf32> to vector<8x1xf32>
    %32 = tpu.reciprocal %31 {approx = true} : vector<8x1xf32> -> vector<8x1xf32>
    %33 = vector.broadcast %32 : vector<8x1xf32> to vector<8x8xf32>
    %34 = arith.mulf %29, %33 : vector<8x8xf32>
    %35 = arith.truncf %34 : vector<8x8xf32> to vector<8x8xbf16>
    %cst_18 = arith.constant dense<0.000000e+00> : vector<8x8xf32>
    %36 = tpu.matmul %35, %21, %cst_18 {dimension_numbers = #tpu.dot_dimension_numbers<[1], [0], [0], [1], [0, 0, 1, 1], [], []>} : vector<8x8xbf16>, vector<8x8xbf16>, vector<8x8xf32> -> vector<8x8xf32>
    %37 = vector.extract_strided_slice %8 {offsets = [0, 8], sizes = [8, 8], strides = [1, 1]} : vector<8x32xf32> to vector<8x8xf32>
    %38 = arith.truncf %37 : vector<8x8xf32> to vector<8x8xbf16>
    %39 = vector.extract_strided_slice %14 {offsets = [0, 8], sizes = [8, 8], strides = [1, 1]} : vector<8x32xf32> to vector<8x8xf32>
    %40 = arith.truncf %39 : vector<8x8xf32> to vector<8x8xbf16>
    %41 = vector.extract_strided_slice %15 {offsets = [0, 8], sizes = [8, 8], strides = [1, 1]} : vector<8x32xf32> to vector<8x8xf32>
    %42 = arith.truncf %41 : vector<8x8xf32> to vector<8x8xbf16>
    %cst_19 = arith.constant dense<0.000000e+00> : vector<8x8xf32>
    %43 = tpu.matmul %38, %40, %cst_19 {dimension_numbers = #tpu.dot_dimension_numbers<[1], [1], [0], [0], [0, 0, 1, 0], [], []>} : vector<8x8xbf16>, vector<8x8xbf16>, vector<8x8xf32> -> vector<8x8xf32>
    %cst_20 = arith.constant 0.353553385 : f32
    %44 = vector.broadcast %cst_20 : f32 to vector<8x8xf32>
    %45 = arith.mulf %43, %44 : vector<8x8xf32>
    %cst_21 = arith.constant dense<0xFF800000> : vector<8xf32>
    %46 = vector.multi_reduction <maximumf>, %45, %cst_21 [1] : vector<8x8xf32> to vector<8xf32>
    %47 = vector.shape_cast %46 : vector<8xf32> to vector<8x1xf32>
    %48 = vector.broadcast %47 : vector<8x1xf32> to vector<8x8xf32>
    %49 = arith.subf %45, %48 : vector<8x8xf32>
    %50 = math.exp %49 : vector<8x8xf32>
    %cst_22 = arith.constant dense<0.000000e+00> : vector<8xf32>
    %51 = vector.multi_reduction <add>, %50, %cst_22 [1] : vector<8x8xf32> to vector<8xf32>
    %52 = vector.shape_cast %51 : vector<8xf32> to vector<8x1xf32>
    %53 = tpu.reciprocal %52 {approx = true} : vector<8x1xf32> -> vector<8x1xf32>
    %54 = vector.broadcast %53 : vector<8x1xf32> to vector<8x8xf32>
    %55 = arith.mulf %50, %54 : vector<8x8xf32>
    %56 = arith.truncf %55 : vector<8x8xf32> to vector<8x8xbf16>
    %cst_23 = arith.constant dense<0.000000e+00> : vector<8x8xf32>
    %57 = tpu.matmul %56, %42, %cst_23 {dimension_numbers = #tpu.dot_dimension_numbers<[1], [0], [0], [1], [0, 0, 1, 1], [], []>} : vector<8x8xbf16>, vector<8x8xbf16>, vector<8x8xf32> -> vector<8x8xf32>
    %58 = vector.extract_strided_slice %8 {offsets = [0, 16], sizes = [8, 8], strides = [1, 1]} : vector<8x32xf32> to vector<8x8xf32>
    %59 = arith.truncf %58 : vector<8x8xf32> to vector<8x8xbf16>
    %60 = vector.extract_strided_slice %14 {offsets = [0, 16], sizes = [8, 8], strides = [1, 1]} : vector<8x32xf32> to vector<8x8xf32>
    %61 = arith.truncf %60 : vector<8x8xf32> to vector<8x8xbf16>
    %62 = vector.extract_strided_slice %15 {offsets = [0, 16], sizes = [8, 8], strides = [1, 1]} : vector<8x32xf32> to vector<8x8xf32>
    %63 = arith.truncf %62 : vector<8x8xf32> to vector<8x8xbf16>
    %cst_24 = arith.constant dense<0.000000e+00> : vector<8x8xf32>
    %64 = tpu.matmul %59, %61, %cst_24 {dimension_numbers = #tpu.dot_dimension_numbers<[1], [1], [0], [0], [0, 0, 1, 0], [], []>} : vector<8x8xbf16>, vector<8x8xbf16>, vector<8x8xf32> -> vector<8x8xf32>
    %cst_25 = arith.constant 0.353553385 : f32
    %65 = vector.broadcast %cst_25 : f32 to vector<8x8xf32>
    %66 = arith.mulf %64, %65 : vector<8x8xf32>
    %cst_26 = arith.constant dense<0xFF800000> : vector<8xf32>
    %67 = vector.multi_reduction <maximumf>, %66, %cst_26 [1] : vector<8x8xf32> to vector<8xf32>
    %68 = vector.shape_cast %67 : vector<8xf32> to vector<8x1xf32>
    %69 = vector.broadcast %68 : vector<8x1xf32> to vector<8x8xf32>
    %70 = arith.subf %66, %69 : vector<8x8xf32>
    %71 = math.exp %70 : vector<8x8xf32>
    %cst_27 = arith.constant dense<0.000000e+00> : vector<8xf32>
    %72 = vector.multi_reduction <add>, %71, %cst_27 [1] : vector<8x8xf32> to vector<8xf32>
    %73 = vector.shape_cast %72 : vector<8xf32> to vector<8x1xf32>
    %74 = tpu.reciprocal %73 {approx = true} : vector<8x1xf32> -> vector<8x1xf32>
    %75 = vector.broadcast %74 : vector<8x1xf32> to vector<8x8xf32>
    %76 = arith.mulf %71, %75 : vector<8x8xf32>
    %77 = arith.truncf %76 : vector<8x8xf32> to vector<8x8xbf16>
    %cst_28 = arith.constant dense<0.000000e+00> : vector<8x8xf32>
    %78 = tpu.matmul %77, %63, %cst_28 {dimension_numbers = #tpu.dot_dimension_numbers<[1], [0], [0], [1], [0, 0, 1, 1], [], []>} : vector<8x8xbf16>, vector<8x8xbf16>, vector<8x8xf32> -> vector<8x8xf32>
    %79 = vector.extract_strided_slice %8 {offsets = [0, 24], sizes = [8, 8], strides = [1, 1]} : vector<8x32xf32> to vector<8x8xf32>
    %80 = arith.truncf %79 : vector<8x8xf32> to vector<8x8xbf16>
    %81 = vector.extract_strided_slice %14 {offsets = [0, 24], sizes = [8, 8], strides = [1, 1]} : vector<8x32xf32> to vector<8x8xf32>
    %82 = arith.truncf %81 : vector<8x8xf32> to vector<8x8xbf16>
    %83 = vector.extract_strided_slice %15 {offsets = [0, 24], sizes = [8, 8], strides = [1, 1]} : vector<8x32xf32> to vector<8x8xf32>
    %84 = arith.truncf %83 : vector<8x8xf32> to vector<8x8xbf16>
    %cst_29 = arith.constant dense<0.000000e+00> : vector<8x8xf32>
    %85 = tpu.matmul %80, %82, %cst_29 {dimension_numbers = #tpu.dot_dimension_numbers<[1], [1], [0], [0], [0, 0, 1, 0], [], []>} : vector<8x8xbf16>, vector<8x8xbf16>, vector<8x8xf32> -> vector<8x8xf32>
    %cst_30 = arith.constant 0.353553385 : f32
    %86 = vector.broadcast %cst_30 : f32 to vector<8x8xf32>
    %87 = arith.mulf %85, %86 : vector<8x8xf32>
    %cst_31 = arith.constant dense<0xFF800000> : vector<8xf32>
    %88 = vector.multi_reduction <maximumf>, %87, %cst_31 [1] : vector<8x8xf32> to vector<8xf32>
    %89 = vector.shape_cast %88 : vector<8xf32> to vector<8x1xf32>
    %90 = vector.broadcast %89 : vector<8x1xf32> to vector<8x8xf32>
    %91 = arith.subf %87, %90 : vector<8x8xf32>
    %92 = math.exp %91 : vector<8x8xf32>
    %cst_32 = arith.constant dense<0.000000e+00> : vector<8xf32>
    %93 = vector.multi_reduction <add>, %92, %cst_32 [1] : vector<8x8xf32> to vector<8xf32>
    %94 = vector.shape_cast %93 : vector<8xf32> to vector<8x1xf32>
    %95 = tpu.reciprocal %94 {approx = true} : vector<8x1xf32> -> vector<8x1xf32>
    %96 = vector.broadcast %95 : vector<8x1xf32> to vector<8x8xf32>
    %97 = arith.mulf %92, %96 : vector<8x8xf32>
    %98 = arith.truncf %97 : vector<8x8xf32> to vector<8x8xbf16>
    %cst_33 = arith.constant dense<0.000000e+00> : vector<8x8xf32>
    %99 = tpu.matmul %98, %84, %cst_33 {dimension_numbers = #tpu.dot_dimension_numbers<[1], [0], [0], [1], [0, 0, 1, 1], [], []>} : vector<8x8xbf16>, vector<8x8xbf16>, vector<8x8xf32> -> vector<8x8xf32>
    %100 = tpu.concatenate %36, %57, %78, %99 in 1 : vector<8x8xf32>, vector<8x8xf32>, vector<8x8xf32>, vector<8x8xf32> -> vector<8x32xf32>
    %101 = arith.truncf %100 : vector<8x32xf32> to vector<8x32xbf16>
    %c0_34 = arith.constant 0 : index
    %c0_35 = arith.constant 0 : index
    %102 = vector.load %arg7[%c0_34, %c0_35] : memref<32x32xbf16, #tpu.memory_space<vmem>>, vector<32x32xbf16>
    %cst_36 = arith.constant dense<0.000000e+00> : vector<8x32xf32>
    %103 = tpu.matmul %101, %102, %cst_36 {dimension_numbers = #tpu.dot_dimension_numbers<[1], [0], [0], [1], [0, 0, 1, 1], [], []>} : vector<8x32xbf16>, vector<32x32xbf16>, vector<8x32xf32> -> vector<8x32xf32>
    %c0_37 = arith.constant 0 : index
    %c0_38 = arith.constant 0 : index
    %104 = vector.load %arg8[%c0_37, %c0_38] : memref<1x32xf32, #tpu.memory_space<vmem>>, vector<1x32xf32>
    %105 = vector.broadcast %104 : vector<1x32xf32> to vector<8x32xf32>
    %106 = arith.addf %103, %105 : vector<8x32xf32>
    %107 = arith.extf %1 : vector<8x32xbf16> to vector<8x32xf32>
    %108 = arith.addf %107, %106 : vector<8x32xf32>
    %cst_39 = arith.constant dense<0.000000e+00> : vector<8xf32>
    %109 = vector.multi_reduction <add>, %108, %cst_39 [1] : vector<8x32xf32> to vector<8xf32>
    %110 = vector.shape_cast %109 : vector<8xf32> to vector<8x1xf32>
    %cst_40 = arith.constant 3.200000e+01 : f32
    %111 = vector.broadcast %cst_40 : f32 to vector<8x1xf32>
    %112 = arith.divf %110, %111 : vector<8x1xf32>
    %113 = vector.broadcast %112 : vector<8x1xf32> to vector<8x32xf32>
    %114 = arith.subf %108, %113 : vector<8x32xf32>
    %115 = arith.mulf %114, %114 : vector<8x32xf32>
    %cst_41 = arith.constant dense<0.000000e+00> : vector<8xf32>
    %116 = vector.multi_reduction <add>, %115, %cst_41 [1] : vector<8x32xf32> to vector<8xf32>
    %117 = vector.shape_cast %116 : vector<8xf32> to vector<8x1xf32>
    %cst_42 = arith.constant 3.200000e+01 : f32
    %118 = vector.broadcast %cst_42 : f32 to vector<8x1xf32>
    %119 = arith.divf %117, %118 : vector<8x1xf32>
    %120 = vector.broadcast %112 : vector<8x1xf32> to vector<8x32xf32>
    %121 = arith.subf %108, %120 : vector<8x32xf32>
    %cst_43 = arith.constant 9.99999974E-6 : f32
    %122 = vector.broadcast %cst_43 : f32 to vector<8x1xf32>
    %123 = arith.addf %119, %122 : vector<8x1xf32>
    %124 = math.rsqrt %123 : vector<8x1xf32>
    %125 = vector.broadcast %124 : vector<8x1xf32> to vector<8x32xf32>
    %126 = arith.mulf %121, %125 : vector<8x32xf32>
    %c0_44 = arith.constant 0 : index
    %c0_45 = arith.constant 0 : index
    %127 = vector.load %arg9[%c0_44, %c0_45] : memref<1x32xf32, #tpu.memory_space<vmem>>, vector<1x32xf32>
    %128 = vector.broadcast %127 : vector<1x32xf32> to vector<8x32xf32>
    %129 = arith.mulf %126, %128 : vector<8x32xf32>
    %c0_46 = arith.constant 0 : index
    %c0_47 = arith.constant 0 : index
    %130 = vector.load %arg10[%c0_46, %c0_47] : memref<1x32xf32, #tpu.memory_space<vmem>>, vector<1x32xf32>
    %131 = vector.broadcast %130 : vector<1x32xf32> to vector<8x32xf32>
    %132 = arith.addf %129, %131 : vector<8x32xf32>
    %133 = arith.truncf %132 : vector<8x32xf32> to vector<8x32xbf16>
    %c0_48 = arith.constant 0 : index
    %c0_49 = arith.constant 0 : index
    %c0_50 = arith.constant 0 : index
    %134 = vector.load %arg11[%c0_48, %c0_49, %c0_50] : memref<1x8x32xbf16, #tpu.memory_space<vmem>>, vector<1x8x32xbf16>
    %135 = vector.shape_cast %134 : vector<1x8x32xbf16> to vector<8x32xbf16>
    %136 = vector.shape_cast %133 : vector<8x32xbf16> to vector<1x8x32xbf16>
    tpu.vector_store %arg11[%c0_48, %c0_49, %c0_50], %136 {strides = array<i32>} : memref<1x8x32xbf16, #tpu.memory_space<vmem>>, vector<1x8x32xbf16>,
    return
  }
  func.func @transform_0(%arg0: i32) -> (i32, i32, i32) {
    %c0_i32 = arith.constant 0 : i32
    %c0_i32_0 = arith.constant 0 : i32
    %c0_i32_1 = arith.constant 0 : i32
    return %arg0, %c0_i32, %c0_i32_0 : i32, i32, i32
  }
  func.func @transform_1(%arg0: i32) -> (i32, i32, i32) {
    %c0_i32 = arith.constant 0 : i32
    %c0_i32_0 = arith.constant 0 : i32
    %c0_i32_1 = arith.constant 0 : i32
    return %arg0, %c0_i32, %c0_i32_0 : i32, i32, i32
  }
  func.func @transform_2(%arg0: i32) -> (i32, i32) {
    %c0_i32 = arith.constant 0 : i32
    %c0_i32_0 = arith.constant 0 : i32
    %c0_i32_1 = arith.constant 0 : i32
    return %c0_i32, %c0_i32_0 : i32, i32
  }
  func.func @transform_3(%arg0: i32) -> (i32, i32) {
    %c0_i32 = arith.constant 0 : i32
    %c0_i32_0 = arith.constant 0 : i32
    %c0_i32_1 = arith.constant 0 : i32
    return %c0_i32, %c0_i32_0 : i32, i32
  }
  func.func @transform_4(%arg0: i32) -> (i32, i32) {
    %c0_i32 = arith.constant 0 : i32
    %c0_i32_0 = arith.constant 0 : i32
    %c0_i32_1 = arith.constant 0 : i32
    return %c0_i32, %c0_i32_0 : i32, i32
  }
  func.func @transform_5(%arg0: i32) -> (i32, i32) {
    %c0_i32 = arith.constant 0 : i32
    %c0_i32_0 = arith.constant 0 : i32
    %c0_i32_1 = arith.constant 0 : i32
    return %c0_i32, %c0_i32_0 : i32, i32
  }
  func.func @transform_6(%arg0: i32) -> (i32, i32) {
    %c0_i32 = arith.constant 0 : i32
    %c0_i32_0 = arith.constant 0 : i32
    %c0_i32_1 = arith.constant 0 : i32
    return %c0_i32, %c0_i32_0 : i32, i32
  }
  func.func @transform_7(%arg0: i32) -> (i32, i32) {
    %c0_i32 = arith.constant 0 : i32
    %c0_i32_0 = arith.constant 0 : i32
    %c0_i32_1 = arith.constant 0 : i32
    return %c0_i32, %c0_i32_0 : i32, i32
  }
  func.func @transform_8(%arg0: i32) -> (i32, i32) {
    %c0_i32 = arith.constant 0 : i32
    %c0_i32_0 = arith.constant 0 : i32
    %c0_i32_1 = arith.constant 0 : i32
    return %c0_i32, %c0_i32_0 : i32, i32
  }
  func.func @transform_9(%arg0: i32) -> (i32, i32) {
    %c0_i32 = arith.constant 0 : i32
    %c0_i32_0 = arith.constant 0 : i32
    %c0_i32_1 = arith.constant 0 : i32
    return %c0_i32, %c0_i32_0 : i32, i32
  }
  func.func @transform_10(%arg0: i32) -> (i32, i32, i32) {
    %c0_i32 = arith.constant 0 : i32
    %c0_i32_0 = arith.constant 0 : i32
    %c0_i32_1 = arith.constant 0 : i32
    return %arg0, %c0_i32, %c0_i32_0 : i32, i32, i32
  }
}

module attributes {stable_mosaic.version = 11 : i64} {
  func.func @_mha_res_ln_kernel(%arg0: i32, %arg1: memref<1x8x32xbf16, #tpu.memory_space<vmem>>, %arg2: memref<1x8x32xbf16, #tpu.memory_space<vmem>>, %arg3: memref<32x32xbf16, #tpu.memory_space<vmem>>, %arg4: memref<1x32xf32, #tpu.memory_space<vmem>>, %arg5: memref<32x64xbf16, #tpu.memory_space<vmem>>, %arg6: memref<1x64xf32, #tpu.memory_space<vmem>>, %arg7: memref<32x32xbf16, #tpu.memory_space<vmem>>, %arg8: memref<1x32xf32, #tpu.memory_space<vmem>>, %arg9: memref<1x32xf32, #tpu.memory_space<vmem>>, %arg10: memref<1x32xf32, #tpu.memory_space<vmem>>, %arg11: memref<1x8x32xbf16, #tpu.memory_space<vmem>>) attributes {dimension_semantics = [#tpu.dimension_semantics<parallel>], iteration_bounds = array<i64: 2>, scalar_prefetch = 0 : i64, scratch_operands = 0 : i64, tpu.core_type = #tpu.core_type<tc>, window_params = [{transform_indices = @transform_0, window_bounds = array<i64: 1, 8, 32>}, {transform_indices = @transform_1, window_bounds = array<i64: 1, 8, 32>}, {pipeline_mode = #tpu.pipeline_mode<synchronous>, transform_indices = @transform_2, window_bounds = array<i64: 32, 32>}, {pipeline_mode = #tpu.pipeline_mode<synchronous>, transform_indices = @transform_3, window_bounds = array<i64: 1, 32>}, {pipeline_mode = #tpu.pipeline_mode<synchronous>, transform_indices = @transform_4, window_bounds = array<i64: 32, 64>}, {pipeline_mode = #tpu.pipeline_mode<synchronous>, transform_indices = @transform_5, window_bounds = array<i64: 1, 64>}, {pipeline_mode = #tpu.pipeline_mode<synchronous>, transform_indices = @transform_6, window_bounds = array<i64: 32, 32>}, {pipeline_mode = #tpu.pipeline_mode<synchronous>, transform_indices = @transform_7, window_bounds = array<i64: 1, 32>}, {pipeline_mode = #tpu.pipeline_mode<synchronous>, transform_indices = @transform_8, window_bounds = array<i64: 1, 32>}, {pipeline_mode = #tpu.pipeline_mode<synchronous>, transform_indices = @transform_9, window_bounds = array<i64: 1, 32>}, {transform_indices = @transform_10, window_bounds = array<i64: 1, 8, 32>}]} {
    %c0 = arith.constant 0 : index
    %c0_0 = arith.constant 0 : index
    %c0_1 = arith.constant 0 : index
    %0 = vector.load %arg1[%c0, %c0_0, %c0_1] : memref<1x8x32xbf16, #tpu.memory_space<vmem>>, vector<1x8x32xbf16>
    %1 = vector.shape_cast %0 : vector<1x8x32xbf16> to vector<8x32xbf16>
    %c0_2 = arith.constant 0 : index
    %c0_3 = arith.constant 0 : index
    %c0_4 = arith.constant 0 : index
    %2 = vector.load %arg2[%c0_2, %c0_3, %c0_4] : memref<1x8x32xbf16, #tpu.memory_space<vmem>>, vector<1x8x32xbf16>
    %3 = vector.shape_cast %2 : vector<1x8x32xbf16> to vector<8x32xbf16>
    %c0_5 = arith.constant 0 : index
    %c0_6 = arith.constant 0 : index
    %4 = vector.load %arg3[%c0_5, %c0_6] : memref<32x32xbf16, #tpu.memory_space<vmem>>, vector<32x32xbf16>
    %cst = arith.constant dense<0.000000e+00> : vector<8x32xf32>
    %5 = tpu.matmul %1, %4, %cst {dimension_numbers = #tpu.dot_dimension_numbers<[1], [0], [0], [1], [0, 0, 1, 1], [], []>} : vector<8x32xbf16>, vector<32x32xbf16>, vector<8x32xf32> -> vector<8x32xf32>
    %c0_7 = arith.constant 0 : index
    %c0_8 = arith.constant 0 : index
    %6 = vector.load %arg4[%c0_7, %c0_8] : memref<1x32xf32, #tpu.memory_space<vmem>>, vector<1x32xf32>
    %7 = vector.broadcast %6 : vector<1x32xf32> to vector<8x32xf32>
    %8 = arith.addf %5, %7 : vector<8x32xf32>
    %c0_9 = arith.constant 0 : index
    %c0_10 = arith.constant 0 : index
    %9 = vector.load %arg5[%c0_9, %c0_10] : memref<32x64xbf16, #tpu.memory_space<vmem>>, vector<32x64xbf16>
    %cst_11 = arith.constant dense<0.000000e+00> : vector<8x64xf32>
    %10 = tpu.matmul %3, %9, %cst_11 {dimension_numbers = #tpu.dot_dimension_numbers<[1], [0], [0], [1], [0, 0, 1, 1], [], []>} : vector<8x32xbf16>, vector<32x64xbf16>, vector<8x64xf32> -> vector<8x64xf32>
    %c0_12 = arith.constant 0 : index
    %c0_13 = arith.constant 0 : index
    %11 = vector.load %arg6[%c0_12, %c0_13] : memref<1x64xf32, #tpu.memory_space<vmem>>, vector<1x64xf32>
    %12 = vector.broadcast %11 : vector<1x64xf32> to vector<8x64xf32>
    %13 = arith.addf %10, %12 : vector<8x64xf32>
    %14 = vector.extract_strided_slice %13 {offsets = [0, 0], sizes = [8, 32], strides = [1, 1]} : vector<8x64xf32> to vector<8x32xf32>
    %15 = vector.extract_strided_slice %13 {offsets = [0, 32], sizes = [8, 32], strides = [1, 1]} : vector<8x64xf32> to vector<8x32xf32>
    %16 = vector.extract_strided_slice %8 {offsets = [0, 0], sizes = [8, 8], strides = [1, 1]} : vector<8x32xf32> to vector<8x8xf32>
    %17 = arith.truncf %16 : vector<8x8xf32> to vector<8x8xbf16>
    %18 = vector.extract_strided_slice %14 {offsets = [0, 0], sizes = [8, 8], strides = [1, 1]} : vector<8x32xf32> to vector<8x8xf32>
    %19 = arith.truncf %18 : vector<8x8xf32> to vector<8x8xbf16>
    %20 = vector.extract_strided_slice %15 {offsets = [0, 0], sizes = [8, 8], strides = [1, 1]} : vector<8x32xf32> to vector<8x8xf32>
    %21 = arith.truncf %20 : vector<8x8xf32> to vector<8x8xbf16>
    %cst_14 = arith.constant dense<0.000000e+00> : vector<8x8xf32>
    %22 = tpu.matmul %17, %19, %cst_14 {dimension_numbers = #tpu.dot_dimension_numbers<[1], [1], [0], [0], [0, 0, 1, 0], [], []>} : vector<8x8xbf16>, vector<8x8xbf16>, vector<8x8xf32> -> vector<8x8xf32>
    %cst_15 = arith.constant 0.353553385 : f32
    %23 = vector.broadcast %cst_15 : f32 to vector<8x8xf32>
    %24 = arith.mulf %22, %23 : vector<8x8xf32>
    %cst_16 = arith.constant dense<0xFF800000> : vector<8xf32>
    %25 = vector.multi_reduction <maximumf>, %24, %cst_16 [1] : vector<8x8xf32> to vector<8xf32>
    %26 = vector.shape_cast %25 : vector<8xf32> to vector<8x1xf32>
    %27 = vector.broadcast %26 : vector<8x1xf32> to vector<8x8xf32>
    %28 = arith.subf %24, %27 : vector<8x8xf32>
    %29 = math.exp %28 : vector<8x8xf32>
    %cst_17 = arith.constant dense<0.000000e+00> : vector<8xf32>
    %30 = vector.multi_reduction <add>, %29, %cst_17 [1] : vector<8x8xf32> to vector<8xf32>
    %31 = vector.shape_cast %30 : vector<8xf32> to vector<8x1xf32>
    %32 = tpu.reciprocal %31 {approx = true} : vector<8x1xf32> -> vector<8x1xf32>
    %33 = vector.broadcast %32 : vector<8x1xf32> to vector<8x8xf32>
    %34 = arith.mulf %29, %33 : vector<8x8xf32>
    %35 = arith.truncf %34 : vector<8x8xf32> to vector<8x8xbf16>
    %cst_18 = arith.constant dense<0.000000e+00> : vector<8x8xf32>
    %36 = tpu.matmul %35, %21, %cst_18 {dimension_numbers = #tpu.dot_dimension_numbers<[1], [0], [0], [1], [0, 0, 1, 1], [], []>} : vector<8x8xbf16>, vector<8x8xbf16>, vector<8x8xf32> -> vector<8x8xf32>
    %37 = vector.extract_strided_slice %8 {offsets = [0, 8], sizes = [8, 8], strides = [1, 1]} : vector<8x32xf32> to vector<8x8xf32>
    %38 = arith.truncf %37 : vector<8x8xf32> to vector<8x8xbf16>
    %39 = vector.extract_strided_slice %14 {offsets = [0, 8], sizes = [8, 8], strides = [1, 1]} : vector<8x32xf32> to vector<8x8xf32>
    %40 = arith.truncf %39 : vector<8x8xf32> to vector<8x8xbf16>
    %41 = vector.extract_strided_slice %15 {offsets = [0, 8], sizes = [8, 8], strides = [1, 1]} : vector<8x32xf32> to vector<8x8xf32>
    %42 = arith.truncf %41 : vector<8x8xf32> to vector<8x8xbf16>
    %cst_19 = arith.constant dense<0.000000e+00> : vector<8x8xf32>
    %43 = tpu.matmul %38, %40, %cst_19 {dimension_numbers = #tpu.dot_dimension_numbers<[1], [1], [0], [0], [0, 0, 1, 0], [], []>} : vector<8x8xbf16>, vector<8x8xbf16>, vector<8x8xf32> -> vector<8x8xf32>
    %cst_20 = arith.constant 0.353553385 : f32
    %44 = vector.broadcast %cst_20 : f32 to vector<8x8xf32>
    %45 = arith.mulf %43, %44 : vector<8x8xf32>
    %cst_21 = arith.constant dense<0xFF800000> : vector<8xf32>
    %46 = vector.multi_reduction <maximumf>, %45, %cst_21 [1] : vector<8x8xf32> to vector<8xf32>
    %47 = vector.shape_cast %46 : vector<8xf32> to vector<8x1xf32>
    %48 = vector.broadcast %47 : vector<8x1xf32> to vector<8x8xf32>
    %49 = arith.subf %45, %48 : vector<8x8xf32>
    %50 = math.exp %49 : vector<8x8xf32>
    %cst_22 = arith.constant dense<0.000000e+00> : vector<8xf32>
    %51 = vector.multi_reduction <add>, %50, %cst_22 [1] : vector<8x8xf32> to vector<8xf32>
    %52 = vector.shape_cast %51 : vector<8xf32> to vector<8x1xf32>
    %53 = tpu.reciprocal %52 {approx = true} : vector<8x1xf32> -> vector<8x1xf32>
    %54 = vector.broadcast %53 : vector<8x1xf32> to vector<8x8xf32>
    %55 = arith.mulf %50, %54 : vector<8x8xf32>
    %56 = arith.truncf %55 : vector<8x8xf32> to vector<8x8xbf16>
    %cst_23 = arith.constant dense<0.000000e+00> : vector<8x8xf32>
    %57 = tpu.matmul %56, %42, %cst_23 {dimension_numbers = #tpu.dot_dimension_numbers<[1], [0], [0], [1], [0, 0, 1, 1], [], []>} : vector<8x8xbf16>, vector<8x8xbf16>, vector<8x8xf32> -> vector<8x8xf32>
    %58 = vector.extract_strided_slice %8 {offsets = [0, 16], sizes = [8, 8], strides = [1, 1]} : vector<8x32xf32> to vector<8x8xf32>
    %59 = arith.truncf %58 : vector<8x8xf32> to vector<8x8xbf16>
    %60 = vector.extract_strided_slice %14 {offsets = [0, 16], sizes = [8, 8], strides = [1, 1]} : vector<8x32xf32> to vector<8x8xf32>
    %61 = arith.truncf %60 : vector<8x8xf32> to vector<8x8xbf16>
    %62 = vector.extract_strided_slice %15 {offsets = [0, 16], sizes = [8, 8], strides = [1, 1]} : vector<8x32xf32> to vector<8x8xf32>
    %63 = arith.truncf %62 : vector<8x8xf32> to vector<8x8xbf16>
    %cst_24 = arith.constant dense<0.000000e+00> : vector<8x8xf32>
    %64 = tpu.matmul %59, %61, %cst_24 {dimension_numbers = #tpu.dot_dimension_numbers<[1], [1], [0], [0], [0, 0, 1, 0], [], []>} : vector<8x8xbf16>, vector<8x8xbf16>, vector<8x8xf32> -> vector<8x8xf32>
    %cst_25 = arith.constant 0.353553385 : f32
    %65 = vector.broadcast %cst_25 : f32 to vector<8x8xf32>
    %66 = arith.mulf %64, %65 : vector<8x8xf32>
    %cst_26 = arith.constant dense<0xFF800000> : vector<8xf32>
    %67 = vector.multi_reduction <maximumf>, %66, %cst_26 [1] : vector<8x8xf32> to vector<8xf32>
    %68 = vector.shape_cast %67 : vector<8xf32> to vector<8x1xf32>
    %69 = vector.broadcast %68 : vector<8x1xf32> to vector<8x8xf32>
    %70 = arith.subf %66, %69 : vector<8x8xf32>
    %71 = math.exp %70 : vector<8x8xf32>
    %cst_27 = arith.constant dense<0.000000e+00> : vector<8xf32>
    %72 = vector.multi_reduction <add>, %71, %cst_27 [1] : vector<8x8xf32> to vector<8xf32>
    %73 = vector.shape_cast %72 : vector<8xf32> to vector<8x1xf32>
    %74 = tpu.reciprocal %73 {approx = true} : vector<8x1xf32> -> vector<8x1xf32>
    %75 = vector.broadcast %74 : vector<8x1xf32> to vector<8x8xf32>
    %76 = arith.mulf %71, %75 : vector<8x8xf32>
    %77 = arith.truncf %76 : vector<8x8xf32> to vector<8x8xbf16>
    %cst_28 = arith.constant dense<0.000000e+00> : vector<8x8xf32>
    %78 = tpu.matmul %77, %63, %cst_28 {dimension_numbers = #tpu.dot_dimension_numbers<[1], [0], [0], [1], [0, 0, 1, 1], [], []>} : vector<8x8xbf16>, vector<8x8xbf16>, vector<8x8xf32> -> vector<8x8xf32>
    %79 = vector.extract_strided_slice %8 {offsets = [0, 24], sizes = [8, 8], strides = [1, 1]} : vector<8x32xf32> to vector<8x8xf32>
    %80 = arith.truncf %79 : vector<8x8xf32> to vector<8x8xbf16>
    %81 = vector.extract_strided_slice %14 {offsets = [0, 24], sizes = [8, 8], strides = [1, 1]} : vector<8x32xf32> to vector<8x8xf32>
    %82 = arith.truncf %81 : vector<8x8xf32> to vector<8x8xbf16>
    %83 = vector.extract_strided_slice %15 {offsets = [0, 24], sizes = [8, 8], strides = [1, 1]} : vector<8x32xf32> to vector<8x8xf32>
    %84 = arith.truncf %83 : vector<8x8xf32> to vector<8x8xbf16>
    %cst_29 = arith.constant dense<0.000000e+00> : vector<8x8xf32>
    %85 = tpu.matmul %80, %82, %cst_29 {dimension_numbers = #tpu.dot_dimension_numbers<[1], [1], [0], [0], [0, 0, 1, 0], [], []>} : vector<8x8xbf16>, vector<8x8xbf16>, vector<8x8xf32> -> vector<8x8xf32>
    %cst_30 = arith.constant 0.353553385 : f32
    %86 = vector.broadcast %cst_30 : f32 to vector<8x8xf32>
    %87 = arith.mulf %85, %86 : vector<8x8xf32>
    %cst_31 = arith.constant dense<0xFF800000> : vector<8xf32>
    %88 = vector.multi_reduction <maximumf>, %87, %cst_31 [1] : vector<8x8xf32> to vector<8xf32>
    %89 = vector.shape_cast %88 : vector<8xf32> to vector<8x1xf32>
    %90 = vector.broadcast %89 : vector<8x1xf32> to vector<8x8xf32>
    %91 = arith.subf %87, %90 : vector<8x8xf32>
    %92 = math.exp %91 : vector<8x8xf32>
    %cst_32 = arith.constant dense<0.000000e+00> : vector<8xf32>
    %93 = vector.multi_reduction <add>, %92, %cst_32 [1] : vector<8x8xf32> to vector<8xf32>
    %94 = vector.shape_cast %93 : vector<8xf32> to vector<8x1xf32>
    %95 = tpu.reciprocal %94 {approx = true} : vector<8x1xf32> -> vector<8x1xf32>
    %96 = vector.broadcast %95 : vector<8x1xf32> to vector<8x8xf32>
    %97 = arith.mulf %92, %96 : vector<8x8xf32>
    %98 = arith.truncf %97 : vector<8x8xf32> to vector<8x8xbf16>
    %cst_33 = arith.constant dense<0.000000e+00> : vector<8x8xf32>
    %99 = tpu.matmul %98, %84, %cst_33 {dimension_numbers = #tpu.dot_dimension_numbers<[1], [0], [0], [1], [0, 0, 1, 1], [], []>} : vector<8x8xbf16>, vector<8x8xbf16>, vector<8x8xf32> -> vector<8x8xf32>
    %100 = tpu.concatenate %36, %57, %78, %99 in 1 : vector<8x8xf32>, vector<8x8xf32>, vector<8x8xf32>, vector<8x8xf32> -> vector<8x32xf32>
    %101 = arith.truncf %100 : vector<8x32xf32> to vector<8x32xbf16>
    %c0_34 = arith.constant 0 : index
    %c0_35 = arith.constant 0 : index
    %102 = vector.load %arg7[%c0_34, %c0_35] : memref<32x32xbf16, #tpu.memory_space<vmem>>, vector<32x32xbf16>
    %cst_36 = arith.constant dense<0.000000e+00> : vector<8x32xf32>
    %103 = tpu.matmul %101, %102, %cst_36 {dimension_numbers = #tpu.dot_dimension_numbers<[1], [0], [0], [1], [0, 0, 1, 1], [], []>} : vector<8x32xbf16>, vector<32x32xbf16>, vector<8x32xf32> -> vector<8x32xf32>
    %c0_37 = arith.constant 0 : index
    %c0_38 = arith.constant 0 : index
    %104 = vector.load %arg8[%c0_37, %c0_38] : memref<1x32xf32, #tpu.memory_space<vmem>>, vector<1x32xf32>
    %105 = vector.broadcast %104 : vector<1x32xf32> to vector<8x32xf32>
    %106 = arith.addf %103, %105 : vector<8x32xf32>
    %107 = arith.extf %1 : vector<8x32xbf16> to vector<8x32xf32>
    %108 = arith.addf %107, %106 : vector<8x32xf32>
    %cst_39 = arith.constant dense<0.000000e+00> : vector<8xf32>
    %109 = vector.multi_reduction <add>, %108, %cst_39 [1] : vector<8x32xf32> to vector<8xf32>
    %110 = vector.shape_cast %109 : vector<8xf32> to vector<8x1xf32>
    %cst_40 = arith.constant 3.200000e+01 : f32
    %111 = vector.broadcast %cst_40 : f32 to vector<8x1xf32>
    %112 = arith.divf %110, %111 : vector<8x1xf32>
    %113 = vector.broadcast %112 : vector<8x1xf32> to vector<8x32xf32>
    %114 = arith.subf %108, %113 : vector<8x32xf32>
    %115 = arith.mulf %114, %114 : vector<8x32xf32>
    %cst_41 = arith.constant dense<0.000000e+00> : vector<8xf32>
    %116 = vector.multi_reduction <add>, %115, %cst_41 [1] : vector<8x32xf32> to vector<8xf32>
    %117 = vector.shape_cast %116 : vector<8xf32> to vector<8x1xf32>
    %cst_42 = arith.constant 3.200000e+01 : f32
    %118 = vector.broadcast %cst_42 : f32 to vector<8x1xf32>
    %119 = arith.divf %117, %118 : vector<8x1xf32>
    %120 = vector.broadcast %112 : vector<8x1xf32> to vector<8x32xf32>
    %121 = arith.subf %108, %120 : vector<8x32xf32>
    %cst_43 = arith.constant 9.99999974E-6 : f32
    %122 = vector.broadcast %cst_43 : f32 to vector<8x1xf32>
    %123 = arith.addf %119, %122 : vector<8x1xf32>
    %124 = math.rsqrt %123 : vector<8x1xf32>
    %125 = vector.broadcast %124 : vector<8x1xf32> to vector<8x32xf32>
    %126 = arith.mulf %121, %125 : vector<8x32xf32>
    %c0_44 = arith.constant 0 : index
    %c0_45 = arith.constant 0 : index
    %127 = vector.load %arg9[%c0_44, %c0_45] : memref<1x32xf32, #tpu.memory_space<vmem>>, vector<1x32xf32>
    %128 = vector.broadcast %127 : vector<1x32xf32> to vector<8x32xf32>
    %129 = arith.mulf %126, %128 : vector<8x32xf32>
    %c0_46 = arith.constant 0 : index
    %c0_47 = arith.constant 0 : index
    %130 = vector.load %arg10[%c0_46, %c0_47] : memref<1x32xf32, #tpu.memory_space<vmem>>, vector<1x32xf32>
    %131 = vector.broadcast %130 : vector<1x32xf32> to vector<8x32xf32>
    %132 = arith.addf %129, %131 : vector<8x32xf32>
    %133 = arith.truncf %132 : vector<8x32xf32> to vector<8x32xbf16>
    %c0_48 = arith.constant 0 : index
    %c0_49 = arith.constant 0 : index
    %c0_50 = arith.constant 0 : index
    %134 = vector.load %arg11[%c0_48, %c0_49, %c0_50] : memref<1x8x32xbf16, #tpu.memory_space<vmem>>, vector<1x8x32xbf16>
    %135 = vector.shape_cast %134 : vector<1x8x32xbf16> to vector<8x32xbf16>
    %136 = vector.shape_cast %133 : vector<8x32xbf16> to vector<1x8x32xbf16>
    tpu.vector_store %arg11[%c0_48, %c0_49, %c0_50], %136 {strides = array<i32>} : memref<1x8x32xbf16, #tpu.memory_space<vmem>>, vector<1x8x32xbf16>,
    return
  }
  func.func @transform_0(%arg0: i32) -> (i32, i32, i32) {
    %c0_i32 = arith.constant 0 : i32
    %c0_i32_0 = arith.constant 0 : i32
    %c0_i32_1 = arith.constant 0 : i32
    return %arg0, %c0_i32, %c0_i32_0 : i32, i32, i32
  }
  func.func @transform_1(%arg0: i32) -> (i32, i32, i32) {
    %c0_i32 = arith.constant 0 : i32
    %c0_i32_0 = arith.constant 0 : i32
    %c0_i32_1 = arith.constant 0 : i32
    return %arg0, %c0_i32, %c0_i32_0 : i32, i32, i32
  }
  func.func @transform_2(%arg0: i32) -> (i32, i32) {
    %c0_i32 = arith.constant 0 : i32
    %c0_i32_0 = arith.constant 0 : i32
    %c0_i32_1 = arith.constant 0 : i32
    return %c0_i32, %c0_i32_0 : i32, i32
  }
  func.func @transform_3(%arg0: i32) -> (i32, i32) {
    %c0_i32 = arith.constant 0 : i32
    %c0_i32_0 = arith.constant 0 : i32
    %c0_i32_1 = arith.constant 0 : i32
    return %c0_i32, %c0_i32_0 : i32, i32
  }
  func.func @transform_4(%arg0: i32) -> (i32, i32) {
    %c0_i32 = arith.constant 0 : i32
    %c0_i32_0 = arith.constant 0 : i32
    %c0_i32_1 = arith.constant 0 : i32
    return %c0_i32, %c0_i32_0 : i32, i32
  }
  func.func @transform_5(%arg0: i32) -> (i32, i32) {
    %c0_i32 = arith.constant 0 : i32
    %c0_i32_0 = arith.constant 0 : i32
    %c0_i32_1 = arith.constant 0 : i32
    return %c0_i32, %c0_i32_0 : i32, i32
  }
  func.func @transform_6(%arg0: i32) -> (i32, i32) {
    %c0_i32 = arith.constant 0 : i32
    %c0_i32_0 = arith.constant 0 : i32
    %c0_i32_1 = arith.constant 0 : i32
    return %c0_i32, %c0_i32_0 : i32, i32
  }
  func.func @transform_7(%arg0: i32) -> (i32, i32) {
    %c0_i32 = arith.constant 0 : i32
    %c0_i32_0 = arith.constant 0 : i32
    %c0_i32_1 = arith.constant 0 : i32
    return %c0_i32, %c0_i32_0 : i32, i32
  }
  func.func @transform_8(%arg0: i32) -> (i32, i32) {
    %c0_i32 = arith.constant 0 : i32
    %c0_i32_0 = arith.constant 0 : i32
    %c0_i32_1 = arith.constant 0 : i32
    return %c0_i32, %c0_i32_0 : i32, i32
  }
  func.func @transform_9(%arg0: i32) -> (i32, i32) {
    %c0_i32 = arith.constant 0 : i32
    %c0_i32_0 = arith.constant 0 : i32
    %c0_i32_1 = arith.constant 0 : i32
    return %c0_i32, %c0_i32_0 : i32, i32
  }
  func.func @transform_10(%arg0: i32) -> (i32, i32, i32) {
    %c0_i32 = arith.constant 0 : i32
    %c0_i32_0 = arith.constant 0 : i32
    %c0_i32_1 = arith.constant 0 : i32
    return %arg0, %c0_i32, %c0_i32_0 : i32, i32, i32
  }
}

module attributes {stable_mosaic.version = 11 : i64} {
  func.func @_ffn_res_ln_kernel(%arg0: i32, %arg1: memref<16x32xbf16, #tpu.memory_space<vmem>>, %arg2: memref<32x64xbf16, #tpu.memory_space<vmem>>, %arg3: memref<1x64xf32, #tpu.memory_space<vmem>>, %arg4: memref<64x32xbf16, #tpu.memory_space<vmem>>, %arg5: memref<1x32xf32, #tpu.memory_space<vmem>>, %arg6: memref<1x32xf32, #tpu.memory_space<vmem>>, %arg7: memref<1x32xf32, #tpu.memory_space<vmem>>, %arg8: memref<16x32xbf16, #tpu.memory_space<vmem>>) attributes {dimension_semantics = [#tpu.dimension_semantics<parallel>], iteration_bounds = array<i64: 1>, scalar_prefetch = 0 : i64, scratch_operands = 0 : i64, tpu.core_type = #tpu.core_type<tc>, window_params = [{transform_indices = @transform_0, window_bounds = array<i64: 16, 32>}, {pipeline_mode = #tpu.pipeline_mode<synchronous>, transform_indices = @transform_1, window_bounds = array<i64: 32, 64>}, {pipeline_mode = #tpu.pipeline_mode<synchronous>, transform_indices = @transform_2, window_bounds = array<i64: 1, 64>}, {pipeline_mode = #tpu.pipeline_mode<synchronous>, transform_indices = @transform_3, window_bounds = array<i64: 64, 32>}, {pipeline_mode = #tpu.pipeline_mode<synchronous>, transform_indices = @transform_4, window_bounds = array<i64: 1, 32>}, {pipeline_mode = #tpu.pipeline_mode<synchronous>, transform_indices = @transform_5, window_bounds = array<i64: 1, 32>}, {pipeline_mode = #tpu.pipeline_mode<synchronous>, transform_indices = @transform_6, window_bounds = array<i64: 1, 32>}, {transform_indices = @transform_7, window_bounds = array<i64: 16, 32>}]} {
    %c0 = arith.constant 0 : index
    %c0_0 = arith.constant 0 : index
    %0 = vector.load %arg1[%c0, %c0_0] : memref<16x32xbf16, #tpu.memory_space<vmem>>, vector<16x32xbf16>
    %c0_1 = arith.constant 0 : index
    %c0_2 = arith.constant 0 : index
    %1 = vector.load %arg2[%c0_1, %c0_2] : memref<32x64xbf16, #tpu.memory_space<vmem>>, vector<32x64xbf16>
    %cst = arith.constant dense<0.000000e+00> : vector<16x64xf32>
    %2 = tpu.matmul %0, %1, %cst {dimension_numbers = #tpu.dot_dimension_numbers<[1], [0], [0], [1], [0, 0, 1, 1], [], []>} : vector<16x32xbf16>, vector<32x64xbf16>, vector<16x64xf32> -> vector<16x64xf32>
    %c0_3 = arith.constant 0 : index
    %c0_4 = arith.constant 0 : index
    %3 = vector.load %arg3[%c0_3, %c0_4] : memref<1x64xf32, #tpu.memory_space<vmem>>, vector<1x64xf32>
    %4 = vector.broadcast %3 : vector<1x64xf32> to vector<16x64xf32>
    %5 = arith.addf %2, %4 : vector<16x64xf32>
    %cst_5 = arith.constant 0.000000e+00 : f32
    %6 = vector.broadcast %cst_5 : f32 to vector<16x64xf32>
    %7 = arith.maximumf %5, %6 : vector<16x64xf32>
    %8 = arith.truncf %7 : vector<16x64xf32> to vector<16x64xbf16>
    %c0_6 = arith.constant 0 : index
    %c0_7 = arith.constant 0 : index
    %9 = vector.load %arg4[%c0_6, %c0_7] : memref<64x32xbf16, #tpu.memory_space<vmem>>, vector<64x32xbf16>
    %cst_8 = arith.constant dense<0.000000e+00> : vector<16x32xf32>
    %10 = tpu.matmul %8, %9, %cst_8 {dimension_numbers = #tpu.dot_dimension_numbers<[1], [0], [0], [1], [0, 0, 1, 1], [], []>} : vector<16x64xbf16>, vector<64x32xbf16>, vector<16x32xf32> -> vector<16x32xf32>
    %c0_9 = arith.constant 0 : index
    %c0_10 = arith.constant 0 : index
    %11 = vector.load %arg5[%c0_9, %c0_10] : memref<1x32xf32, #tpu.memory_space<vmem>>, vector<1x32xf32>
    %12 = vector.broadcast %11 : vector<1x32xf32> to vector<16x32xf32>
    %13 = arith.addf %10, %12 : vector<16x32xf32>
    %14 = arith.extf %0 : vector<16x32xbf16> to vector<16x32xf32>
    %15 = arith.addf %14, %13 : vector<16x32xf32>
    %cst_11 = arith.constant dense<0.000000e+00> : vector<16xf32>
    %16 = vector.multi_reduction <add>, %15, %cst_11 [1] : vector<16x32xf32> to vector<16xf32>
    %17 = vector.shape_cast %16 : vector<16xf32> to vector<16x1xf32>
    %cst_12 = arith.constant 3.200000e+01 : f32
    %18 = vector.broadcast %cst_12 : f32 to vector<16x1xf32>
    %19 = arith.divf %17, %18 : vector<16x1xf32>
    %20 = vector.broadcast %19 : vector<16x1xf32> to vector<16x32xf32>
    %21 = arith.subf %15, %20 : vector<16x32xf32>
    %22 = arith.mulf %21, %21 : vector<16x32xf32>
    %cst_13 = arith.constant dense<0.000000e+00> : vector<16xf32>
    %23 = vector.multi_reduction <add>, %22, %cst_13 [1] : vector<16x32xf32> to vector<16xf32>
    %24 = vector.shape_cast %23 : vector<16xf32> to vector<16x1xf32>
    %cst_14 = arith.constant 3.200000e+01 : f32
    %25 = vector.broadcast %cst_14 : f32 to vector<16x1xf32>
    %26 = arith.divf %24, %25 : vector<16x1xf32>
    %27 = vector.broadcast %19 : vector<16x1xf32> to vector<16x32xf32>
    %28 = arith.subf %15, %27 : vector<16x32xf32>
    %cst_15 = arith.constant 9.99999974E-6 : f32
    %29 = vector.broadcast %cst_15 : f32 to vector<16x1xf32>
    %30 = arith.addf %26, %29 : vector<16x1xf32>
    %31 = math.rsqrt %30 : vector<16x1xf32>
    %32 = vector.broadcast %31 : vector<16x1xf32> to vector<16x32xf32>
    %33 = arith.mulf %28, %32 : vector<16x32xf32>
    %c0_16 = arith.constant 0 : index
    %c0_17 = arith.constant 0 : index
    %34 = vector.load %arg6[%c0_16, %c0_17] : memref<1x32xf32, #tpu.memory_space<vmem>>, vector<1x32xf32>
    %35 = vector.broadcast %34 : vector<1x32xf32> to vector<16x32xf32>
    %36 = arith.mulf %33, %35 : vector<16x32xf32>
    %c0_18 = arith.constant 0 : index
    %c0_19 = arith.constant 0 : index
    %37 = vector.load %arg7[%c0_18, %c0_19] : memref<1x32xf32, #tpu.memory_space<vmem>>, vector<1x32xf32>
    %38 = vector.broadcast %37 : vector<1x32xf32> to vector<16x32xf32>
    %39 = arith.addf %36, %38 : vector<16x32xf32>
    %40 = arith.truncf %39 : vector<16x32xf32> to vector<16x32xbf16>
    %c0_20 = arith.constant 0 : index
    %c0_21 = arith.constant 0 : index
    %41 = vector.load %arg8[%c0_20, %c0_21] : memref<16x32xbf16, #tpu.memory_space<vmem>>, vector<16x32xbf16>
    tpu.vector_store %arg8[%c0_20, %c0_21], %40 {strides = array<i32>} : memref<16x32xbf16, #tpu.memory_space<vmem>>, vector<16x32xbf16>,
    return
  }
  func.func @transform_0(%arg0: i32) -> (i32, i32) {
    %c0_i32 = arith.constant 0 : i32
    %c0_i32_0 = arith.constant 0 : i32
    return %arg0, %c0_i32 : i32, i32
  }
  func.func @transform_1(%arg0: i32) -> (i32, i32) {
    %c0_i32 = arith.constant 0 : i32
    %c0_i32_0 = arith.constant 0 : i32
    %c0_i32_1 = arith.constant 0 : i32
    return %c0_i32, %c0_i32_0 : i32, i32
  }
  func.func @transform_2(%arg0: i32) -> (i32, i32) {
    %c0_i32 = arith.constant 0 : i32
    %c0_i32_0 = arith.constant 0 : i32
    %c0_i32_1 = arith.constant 0 : i32
    return %c0_i32, %c0_i32_0 : i32, i32
  }
  func.func @transform_3(%arg0: i32) -> (i32, i32) {
    %c0_i32 = arith.constant 0 : i32
    %c0_i32_0 = arith.constant 0 : i32
    %c0_i32_1 = arith.constant 0 : i32
    return %c0_i32, %c0_i32_0 : i32, i32
  }
  func.func @transform_4(%arg0: i32) -> (i32, i32) {
    %c0_i32 = arith.constant 0 : i32
    %c0_i32_0 = arith.constant 0 : i32
    %c0_i32_1 = arith.constant 0 : i32
    return %c0_i32, %c0_i32_0 : i32, i32
  }
  func.func @transform_5(%arg0: i32) -> (i32, i32) {
    %c0_i32 = arith.constant 0 : i32
    %c0_i32_0 = arith.constant 0 : i32
    %c0_i32_1 = arith.constant 0 : i32
    return %c0_i32, %c0_i32_0 : i32, i32
  }
  func.func @transform_6(%arg0: i32) -> (i32, i32) {
    %c0_i32 = arith.constant 0 : i32
    %c0_i32_0 = arith.constant 0 : i32
    %c0_i32_1 = arith.constant 0 : i32
    return %c0_i32, %c0_i32_0 : i32, i32
  }
  func.func @transform_7(%arg0: i32) -> (i32, i32) {
    %c0_i32 = arith.constant 0 : i32
    %c0_i32_0 = arith.constant 0 : i32
    return %arg0, %c0_i32 : i32, i32
  }
}

module attributes {stable_mosaic.version = 11 : i64} {
  func.func @_mha_res_ln_kernel(%arg0: i32, %arg1: memref<1x8x32xbf16, #tpu.memory_space<vmem>>, %arg2: memref<1x8x32xbf16, #tpu.memory_space<vmem>>, %arg3: memref<32x32xbf16, #tpu.memory_space<vmem>>, %arg4: memref<1x32xf32, #tpu.memory_space<vmem>>, %arg5: memref<32x64xbf16, #tpu.memory_space<vmem>>, %arg6: memref<1x64xf32, #tpu.memory_space<vmem>>, %arg7: memref<32x32xbf16, #tpu.memory_space<vmem>>, %arg8: memref<1x32xf32, #tpu.memory_space<vmem>>, %arg9: memref<1x32xf32, #tpu.memory_space<vmem>>, %arg10: memref<1x32xf32, #tpu.memory_space<vmem>>, %arg11: memref<1x8x32xbf16, #tpu.memory_space<vmem>>) attributes {dimension_semantics = [#tpu.dimension_semantics<parallel>], iteration_bounds = array<i64: 2>, scalar_prefetch = 0 : i64, scratch_operands = 0 : i64, tpu.core_type = #tpu.core_type<tc>, window_params = [{transform_indices = @transform_0, window_bounds = array<i64: 1, 8, 32>}, {transform_indices = @transform_1, window_bounds = array<i64: 1, 8, 32>}, {pipeline_mode = #tpu.pipeline_mode<synchronous>, transform_indices = @transform_2, window_bounds = array<i64: 32, 32>}, {pipeline_mode = #tpu.pipeline_mode<synchronous>, transform_indices = @transform_3, window_bounds = array<i64: 1, 32>}, {pipeline_mode = #tpu.pipeline_mode<synchronous>, transform_indices = @transform_4, window_bounds = array<i64: 32, 64>}, {pipeline_mode = #tpu.pipeline_mode<synchronous>, transform_indices = @transform_5, window_bounds = array<i64: 1, 64>}, {pipeline_mode = #tpu.pipeline_mode<synchronous>, transform_indices = @transform_6, window_bounds = array<i64: 32, 32>}, {pipeline_mode = #tpu.pipeline_mode<synchronous>, transform_indices = @transform_7, window_bounds = array<i64: 1, 32>}, {pipeline_mode = #tpu.pipeline_mode<synchronous>, transform_indices = @transform_8, window_bounds = array<i64: 1, 32>}, {pipeline_mode = #tpu.pipeline_mode<synchronous>, transform_indices = @transform_9, window_bounds = array<i64: 1, 32>}, {transform_indices = @transform_10, window_bounds = array<i64: 1, 8, 32>}]} {
    %c0 = arith.constant 0 : index
    %c0_0 = arith.constant 0 : index
    %c0_1 = arith.constant 0 : index
    %0 = vector.load %arg1[%c0, %c0_0, %c0_1] : memref<1x8x32xbf16, #tpu.memory_space<vmem>>, vector<1x8x32xbf16>
    %1 = vector.shape_cast %0 : vector<1x8x32xbf16> to vector<8x32xbf16>
    %c0_2 = arith.constant 0 : index
    %c0_3 = arith.constant 0 : index
    %c0_4 = arith.constant 0 : index
    %2 = vector.load %arg2[%c0_2, %c0_3, %c0_4] : memref<1x8x32xbf16, #tpu.memory_space<vmem>>, vector<1x8x32xbf16>
    %3 = vector.shape_cast %2 : vector<1x8x32xbf16> to vector<8x32xbf16>
    %c0_5 = arith.constant 0 : index
    %c0_6 = arith.constant 0 : index
    %4 = vector.load %arg3[%c0_5, %c0_6] : memref<32x32xbf16, #tpu.memory_space<vmem>>, vector<32x32xbf16>
    %cst = arith.constant dense<0.000000e+00> : vector<8x32xf32>
    %5 = tpu.matmul %1, %4, %cst {dimension_numbers = #tpu.dot_dimension_numbers<[1], [0], [0], [1], [0, 0, 1, 1], [], []>} : vector<8x32xbf16>, vector<32x32xbf16>, vector<8x32xf32> -> vector<8x32xf32>
    %c0_7 = arith.constant 0 : index
    %c0_8 = arith.constant 0 : index
    %6 = vector.load %arg4[%c0_7, %c0_8] : memref<1x32xf32, #tpu.memory_space<vmem>>, vector<1x32xf32>
    %7 = vector.broadcast %6 : vector<1x32xf32> to vector<8x32xf32>
    %8 = arith.addf %5, %7 : vector<8x32xf32>
    %c0_9 = arith.constant 0 : index
    %c0_10 = arith.constant 0 : index
    %9 = vector.load %arg5[%c0_9, %c0_10] : memref<32x64xbf16, #tpu.memory_space<vmem>>, vector<32x64xbf16>
    %cst_11 = arith.constant dense<0.000000e+00> : vector<8x64xf32>
    %10 = tpu.matmul %3, %9, %cst_11 {dimension_numbers = #tpu.dot_dimension_numbers<[1], [0], [0], [1], [0, 0, 1, 1], [], []>} : vector<8x32xbf16>, vector<32x64xbf16>, vector<8x64xf32> -> vector<8x64xf32>
    %c0_12 = arith.constant 0 : index
    %c0_13 = arith.constant 0 : index
    %11 = vector.load %arg6[%c0_12, %c0_13] : memref<1x64xf32, #tpu.memory_space<vmem>>, vector<1x64xf32>
    %12 = vector.broadcast %11 : vector<1x64xf32> to vector<8x64xf32>
    %13 = arith.addf %10, %12 : vector<8x64xf32>
    %14 = vector.extract_strided_slice %13 {offsets = [0, 0], sizes = [8, 32], strides = [1, 1]} : vector<8x64xf32> to vector<8x32xf32>
    %15 = vector.extract_strided_slice %13 {offsets = [0, 32], sizes = [8, 32], strides = [1, 1]} : vector<8x64xf32> to vector<8x32xf32>
    %16 = vector.extract_strided_slice %8 {offsets = [0, 0], sizes = [8, 8], strides = [1, 1]} : vector<8x32xf32> to vector<8x8xf32>
    %17 = arith.truncf %16 : vector<8x8xf32> to vector<8x8xbf16>
    %18 = vector.extract_strided_slice %14 {offsets = [0, 0], sizes = [8, 8], strides = [1, 1]} : vector<8x32xf32> to vector<8x8xf32>
    %19 = arith.truncf %18 : vector<8x8xf32> to vector<8x8xbf16>
    %20 = vector.extract_strided_slice %15 {offsets = [0, 0], sizes = [8, 8], strides = [1, 1]} : vector<8x32xf32> to vector<8x8xf32>
    %21 = arith.truncf %20 : vector<8x8xf32> to vector<8x8xbf16>
    %cst_14 = arith.constant dense<0.000000e+00> : vector<8x8xf32>
    %22 = tpu.matmul %17, %19, %cst_14 {dimension_numbers = #tpu.dot_dimension_numbers<[1], [1], [0], [0], [0, 0, 1, 0], [], []>} : vector<8x8xbf16>, vector<8x8xbf16>, vector<8x8xf32> -> vector<8x8xf32>
    %cst_15 = arith.constant 0.353553385 : f32
    %23 = vector.broadcast %cst_15 : f32 to vector<8x8xf32>
    %24 = arith.mulf %22, %23 : vector<8x8xf32>
    %cst_16 = arith.constant dense<0xFF800000> : vector<8xf32>
    %25 = vector.multi_reduction <maximumf>, %24, %cst_16 [1] : vector<8x8xf32> to vector<8xf32>
    %26 = vector.shape_cast %25 : vector<8xf32> to vector<8x1xf32>
    %27 = vector.broadcast %26 : vector<8x1xf32> to vector<8x8xf32>
    %28 = arith.subf %24, %27 : vector<8x8xf32>
    %29 = math.exp %28 : vector<8x8xf32>
    %cst_17 = arith.constant dense<0.000000e+00> : vector<8xf32>
    %30 = vector.multi_reduction <add>, %29, %cst_17 [1] : vector<8x8xf32> to vector<8xf32>
    %31 = vector.shape_cast %30 : vector<8xf32> to vector<8x1xf32>
    %32 = tpu.reciprocal %31 {approx = true} : vector<8x1xf32> -> vector<8x1xf32>
    %33 = vector.broadcast %32 : vector<8x1xf32> to vector<8x8xf32>
    %34 = arith.mulf %29, %33 : vector<8x8xf32>
    %35 = arith.truncf %34 : vector<8x8xf32> to vector<8x8xbf16>
    %cst_18 = arith.constant dense<0.000000e+00> : vector<8x8xf32>
    %36 = tpu.matmul %35, %21, %cst_18 {dimension_numbers = #tpu.dot_dimension_numbers<[1], [0], [0], [1], [0, 0, 1, 1], [], []>} : vector<8x8xbf16>, vector<8x8xbf16>, vector<8x8xf32> -> vector<8x8xf32>
    %37 = vector.extract_strided_slice %8 {offsets = [0, 8], sizes = [8, 8], strides = [1, 1]} : vector<8x32xf32> to vector<8x8xf32>
    %38 = arith.truncf %37 : vector<8x8xf32> to vector<8x8xbf16>
    %39 = vector.extract_strided_slice %14 {offsets = [0, 8], sizes = [8, 8], strides = [1, 1]} : vector<8x32xf32> to vector<8x8xf32>
    %40 = arith.truncf %39 : vector<8x8xf32> to vector<8x8xbf16>
    %41 = vector.extract_strided_slice %15 {offsets = [0, 8], sizes = [8, 8], strides = [1, 1]} : vector<8x32xf32> to vector<8x8xf32>
    %42 = arith.truncf %41 : vector<8x8xf32> to vector<8x8xbf16>
    %cst_19 = arith.constant dense<0.000000e+00> : vector<8x8xf32>
    %43 = tpu.matmul %38, %40, %cst_19 {dimension_numbers = #tpu.dot_dimension_numbers<[1], [1], [0], [0], [0, 0, 1, 0], [], []>} : vector<8x8xbf16>, vector<8x8xbf16>, vector<8x8xf32> -> vector<8x8xf32>
    %cst_20 = arith.constant 0.353553385 : f32
    %44 = vector.broadcast %cst_20 : f32 to vector<8x8xf32>
    %45 = arith.mulf %43, %44 : vector<8x8xf32>
    %cst_21 = arith.constant dense<0xFF800000> : vector<8xf32>
    %46 = vector.multi_reduction <maximumf>, %45, %cst_21 [1] : vector<8x8xf32> to vector<8xf32>
    %47 = vector.shape_cast %46 : vector<8xf32> to vector<8x1xf32>
    %48 = vector.broadcast %47 : vector<8x1xf32> to vector<8x8xf32>
    %49 = arith.subf %45, %48 : vector<8x8xf32>
    %50 = math.exp %49 : vector<8x8xf32>
    %cst_22 = arith.constant dense<0.000000e+00> : vector<8xf32>
    %51 = vector.multi_reduction <add>, %50, %cst_22 [1] : vector<8x8xf32> to vector<8xf32>
    %52 = vector.shape_cast %51 : vector<8xf32> to vector<8x1xf32>
    %53 = tpu.reciprocal %52 {approx = true} : vector<8x1xf32> -> vector<8x1xf32>
    %54 = vector.broadcast %53 : vector<8x1xf32> to vector<8x8xf32>
    %55 = arith.mulf %50, %54 : vector<8x8xf32>
    %56 = arith.truncf %55 : vector<8x8xf32> to vector<8x8xbf16>
    %cst_23 = arith.constant dense<0.000000e+00> : vector<8x8xf32>
    %57 = tpu.matmul %56, %42, %cst_23 {dimension_numbers = #tpu.dot_dimension_numbers<[1], [0], [0], [1], [0, 0, 1, 1], [], []>} : vector<8x8xbf16>, vector<8x8xbf16>, vector<8x8xf32> -> vector<8x8xf32>
    %58 = vector.extract_strided_slice %8 {offsets = [0, 16], sizes = [8, 8], strides = [1, 1]} : vector<8x32xf32> to vector<8x8xf32>
    %59 = arith.truncf %58 : vector<8x8xf32> to vector<8x8xbf16>
    %60 = vector.extract_strided_slice %14 {offsets = [0, 16], sizes = [8, 8], strides = [1, 1]} : vector<8x32xf32> to vector<8x8xf32>
    %61 = arith.truncf %60 : vector<8x8xf32> to vector<8x8xbf16>
    %62 = vector.extract_strided_slice %15 {offsets = [0, 16], sizes = [8, 8], strides = [1, 1]} : vector<8x32xf32> to vector<8x8xf32>
    %63 = arith.truncf %62 : vector<8x8xf32> to vector<8x8xbf16>
    %cst_24 = arith.constant dense<0.000000e+00> : vector<8x8xf32>
    %64 = tpu.matmul %59, %61, %cst_24 {dimension_numbers = #tpu.dot_dimension_numbers<[1], [1], [0], [0], [0, 0, 1, 0], [], []>} : vector<8x8xbf16>, vector<8x8xbf16>, vector<8x8xf32> -> vector<8x8xf32>
    %cst_25 = arith.constant 0.353553385 : f32
    %65 = vector.broadcast %cst_25 : f32 to vector<8x8xf32>
    %66 = arith.mulf %64, %65 : vector<8x8xf32>
    %cst_26 = arith.constant dense<0xFF800000> : vector<8xf32>
    %67 = vector.multi_reduction <maximumf>, %66, %cst_26 [1] : vector<8x8xf32> to vector<8xf32>
    %68 = vector.shape_cast %67 : vector<8xf32> to vector<8x1xf32>
    %69 = vector.broadcast %68 : vector<8x1xf32> to vector<8x8xf32>
    %70 = arith.subf %66, %69 : vector<8x8xf32>
    %71 = math.exp %70 : vector<8x8xf32>
    %cst_27 = arith.constant dense<0.000000e+00> : vector<8xf32>
    %72 = vector.multi_reduction <add>, %71, %cst_27 [1] : vector<8x8xf32> to vector<8xf32>
    %73 = vector.shape_cast %72 : vector<8xf32> to vector<8x1xf32>
    %74 = tpu.reciprocal %73 {approx = true} : vector<8x1xf32> -> vector<8x1xf32>
    %75 = vector.broadcast %74 : vector<8x1xf32> to vector<8x8xf32>
    %76 = arith.mulf %71, %75 : vector<8x8xf32>
    %77 = arith.truncf %76 : vector<8x8xf32> to vector<8x8xbf16>
    %cst_28 = arith.constant dense<0.000000e+00> : vector<8x8xf32>
    %78 = tpu.matmul %77, %63, %cst_28 {dimension_numbers = #tpu.dot_dimension_numbers<[1], [0], [0], [1], [0, 0, 1, 1], [], []>} : vector<8x8xbf16>, vector<8x8xbf16>, vector<8x8xf32> -> vector<8x8xf32>
    %79 = vector.extract_strided_slice %8 {offsets = [0, 24], sizes = [8, 8], strides = [1, 1]} : vector<8x32xf32> to vector<8x8xf32>
    %80 = arith.truncf %79 : vector<8x8xf32> to vector<8x8xbf16>
    %81 = vector.extract_strided_slice %14 {offsets = [0, 24], sizes = [8, 8], strides = [1, 1]} : vector<8x32xf32> to vector<8x8xf32>
    %82 = arith.truncf %81 : vector<8x8xf32> to vector<8x8xbf16>
    %83 = vector.extract_strided_slice %15 {offsets = [0, 24], sizes = [8, 8], strides = [1, 1]} : vector<8x32xf32> to vector<8x8xf32>
    %84 = arith.truncf %83 : vector<8x8xf32> to vector<8x8xbf16>
    %cst_29 = arith.constant dense<0.000000e+00> : vector<8x8xf32>
    %85 = tpu.matmul %80, %82, %cst_29 {dimension_numbers = #tpu.dot_dimension_numbers<[1], [1], [0], [0], [0, 0, 1, 0], [], []>} : vector<8x8xbf16>, vector<8x8xbf16>, vector<8x8xf32> -> vector<8x8xf32>
    %cst_30 = arith.constant 0.353553385 : f32
    %86 = vector.broadcast %cst_30 : f32 to vector<8x8xf32>
    %87 = arith.mulf %85, %86 : vector<8x8xf32>
    %cst_31 = arith.constant dense<0xFF800000> : vector<8xf32>
    %88 = vector.multi_reduction <maximumf>, %87, %cst_31 [1] : vector<8x8xf32> to vector<8xf32>
    %89 = vector.shape_cast %88 : vector<8xf32> to vector<8x1xf32>
    %90 = vector.broadcast %89 : vector<8x1xf32> to vector<8x8xf32>
    %91 = arith.subf %87, %90 : vector<8x8xf32>
    %92 = math.exp %91 : vector<8x8xf32>
    %cst_32 = arith.constant dense<0.000000e+00> : vector<8xf32>
    %93 = vector.multi_reduction <add>, %92, %cst_32 [1] : vector<8x8xf32> to vector<8xf32>
    %94 = vector.shape_cast %93 : vector<8xf32> to vector<8x1xf32>
    %95 = tpu.reciprocal %94 {approx = true} : vector<8x1xf32> -> vector<8x1xf32>
    %96 = vector.broadcast %95 : vector<8x1xf32> to vector<8x8xf32>
    %97 = arith.mulf %92, %96 : vector<8x8xf32>
    %98 = arith.truncf %97 : vector<8x8xf32> to vector<8x8xbf16>
    %cst_33 = arith.constant dense<0.000000e+00> : vector<8x8xf32>
    %99 = tpu.matmul %98, %84, %cst_33 {dimension_numbers = #tpu.dot_dimension_numbers<[1], [0], [0], [1], [0, 0, 1, 1], [], []>} : vector<8x8xbf16>, vector<8x8xbf16>, vector<8x8xf32> -> vector<8x8xf32>
    %100 = tpu.concatenate %36, %57, %78, %99 in 1 : vector<8x8xf32>, vector<8x8xf32>, vector<8x8xf32>, vector<8x8xf32> -> vector<8x32xf32>
    %101 = arith.truncf %100 : vector<8x32xf32> to vector<8x32xbf16>
    %c0_34 = arith.constant 0 : index
    %c0_35 = arith.constant 0 : index
    %102 = vector.load %arg7[%c0_34, %c0_35] : memref<32x32xbf16, #tpu.memory_space<vmem>>, vector<32x32xbf16>
    %cst_36 = arith.constant dense<0.000000e+00> : vector<8x32xf32>
    %103 = tpu.matmul %101, %102, %cst_36 {dimension_numbers = #tpu.dot_dimension_numbers<[1], [0], [0], [1], [0, 0, 1, 1], [], []>} : vector<8x32xbf16>, vector<32x32xbf16>, vector<8x32xf32> -> vector<8x32xf32>
    %c0_37 = arith.constant 0 : index
    %c0_38 = arith.constant 0 : index
    %104 = vector.load %arg8[%c0_37, %c0_38] : memref<1x32xf32, #tpu.memory_space<vmem>>, vector<1x32xf32>
    %105 = vector.broadcast %104 : vector<1x32xf32> to vector<8x32xf32>
    %106 = arith.addf %103, %105 : vector<8x32xf32>
    %107 = arith.extf %1 : vector<8x32xbf16> to vector<8x32xf32>
    %108 = arith.addf %107, %106 : vector<8x32xf32>
    %cst_39 = arith.constant dense<0.000000e+00> : vector<8xf32>
    %109 = vector.multi_reduction <add>, %108, %cst_39 [1] : vector<8x32xf32> to vector<8xf32>
    %110 = vector.shape_cast %109 : vector<8xf32> to vector<8x1xf32>
    %cst_40 = arith.constant 3.200000e+01 : f32
    %111 = vector.broadcast %cst_40 : f32 to vector<8x1xf32>
    %112 = arith.divf %110, %111 : vector<8x1xf32>
    %113 = vector.broadcast %112 : vector<8x1xf32> to vector<8x32xf32>
    %114 = arith.subf %108, %113 : vector<8x32xf32>
    %115 = arith.mulf %114, %114 : vector<8x32xf32>
    %cst_41 = arith.constant dense<0.000000e+00> : vector<8xf32>
    %116 = vector.multi_reduction <add>, %115, %cst_41 [1] : vector<8x32xf32> to vector<8xf32>
    %117 = vector.shape_cast %116 : vector<8xf32> to vector<8x1xf32>
    %cst_42 = arith.constant 3.200000e+01 : f32
    %118 = vector.broadcast %cst_42 : f32 to vector<8x1xf32>
    %119 = arith.divf %117, %118 : vector<8x1xf32>
    %120 = vector.broadcast %112 : vector<8x1xf32> to vector<8x32xf32>
    %121 = arith.subf %108, %120 : vector<8x32xf32>
    %cst_43 = arith.constant 9.99999974E-6 : f32
    %122 = vector.broadcast %cst_43 : f32 to vector<8x1xf32>
    %123 = arith.addf %119, %122 : vector<8x1xf32>
    %124 = math.rsqrt %123 : vector<8x1xf32>
    %125 = vector.broadcast %124 : vector<8x1xf32> to vector<8x32xf32>
    %126 = arith.mulf %121, %125 : vector<8x32xf32>
    %c0_44 = arith.constant 0 : index
    %c0_45 = arith.constant 0 : index
    %127 = vector.load %arg9[%c0_44, %c0_45] : memref<1x32xf32, #tpu.memory_space<vmem>>, vector<1x32xf32>
    %128 = vector.broadcast %127 : vector<1x32xf32> to vector<8x32xf32>
    %129 = arith.mulf %126, %128 : vector<8x32xf32>
    %c0_46 = arith.constant 0 : index
    %c0_47 = arith.constant 0 : index
    %130 = vector.load %arg10[%c0_46, %c0_47] : memref<1x32xf32, #tpu.memory_space<vmem>>, vector<1x32xf32>
    %131 = vector.broadcast %130 : vector<1x32xf32> to vector<8x32xf32>
    %132 = arith.addf %129, %131 : vector<8x32xf32>
    %133 = arith.truncf %132 : vector<8x32xf32> to vector<8x32xbf16>
    %c0_48 = arith.constant 0 : index
    %c0_49 = arith.constant 0 : index
    %c0_50 = arith.constant 0 : index
    %134 = vector.load %arg11[%c0_48, %c0_49, %c0_50] : memref<1x8x32xbf16, #tpu.memory_space<vmem>>, vector<1x8x32xbf16>
    %135 = vector.shape_cast %134 : vector<1x8x32xbf16> to vector<8x32xbf16>
    %136 = vector.shape_cast %133 : vector<8x32xbf16> to vector<1x8x32xbf16>
    tpu.vector_store %arg11[%c0_48, %c0_49, %c0_50], %136 {strides = array<i32>} : memref<1x8x32xbf16, #tpu.memory_space<vmem>>, vector<1x8x32xbf16>,
    return
  }
  func.func @transform_0(%arg0: i32) -> (i32, i32, i32) {
    %c0_i32 = arith.constant 0 : i32
    %c0_i32_0 = arith.constant 0 : i32
    %c0_i32_1 = arith.constant 0 : i32
    return %arg0, %c0_i32, %c0_i32_0 : i32, i32, i32
  }
  func.func @transform_1(%arg0: i32) -> (i32, i32, i32) {
    %c0_i32 = arith.constant 0 : i32
    %c0_i32_0 = arith.constant 0 : i32
    %c0_i32_1 = arith.constant 0 : i32
    return %arg0, %c0_i32, %c0_i32_0 : i32, i32, i32
  }
  func.func @transform_2(%arg0: i32) -> (i32, i32) {
    %c0_i32 = arith.constant 0 : i32
    %c0_i32_0 = arith.constant 0 : i32
    %c0_i32_1 = arith.constant 0 : i32
    return %c0_i32, %c0_i32_0 : i32, i32
  }
  func.func @transform_3(%arg0: i32) -> (i32, i32) {
    %c0_i32 = arith.constant 0 : i32
    %c0_i32_0 = arith.constant 0 : i32
    %c0_i32_1 = arith.constant 0 : i32
    return %c0_i32, %c0_i32_0 : i32, i32
  }
  func.func @transform_4(%arg0: i32) -> (i32, i32) {
    %c0_i32 = arith.constant 0 : i32
    %c0_i32_0 = arith.constant 0 : i32
    %c0_i32_1 = arith.constant 0 : i32
    return %c0_i32, %c0_i32_0 : i32, i32
  }
  func.func @transform_5(%arg0: i32) -> (i32, i32) {
    %c0_i32 = arith.constant 0 : i32
    %c0_i32_0 = arith.constant 0 : i32
    %c0_i32_1 = arith.constant 0 : i32
    return %c0_i32, %c0_i32_0 : i32, i32
  }
  func.func @transform_6(%arg0: i32) -> (i32, i32) {
    %c0_i32 = arith.constant 0 : i32
    %c0_i32_0 = arith.constant 0 : i32
    %c0_i32_1 = arith.constant 0 : i32
    return %c0_i32, %c0_i32_0 : i32, i32
  }
  func.func @transform_7(%arg0: i32) -> (i32, i32) {
    %c0_i32 = arith.constant 0 : i32
    %c0_i32_0 = arith.constant 0 : i32
    %c0_i32_1 = arith.constant 0 : i32
    return %c0_i32, %c0_i32_0 : i32, i32
  }
  func.func @transform_8(%arg0: i32) -> (i32, i32) {
    %c0_i32 = arith.constant 0 : i32
    %c0_i32_0 = arith.constant 0 : i32
    %c0_i32_1 = arith.constant 0 : i32
    return %c0_i32, %c0_i32_0 : i32, i32
  }
  func.func @transform_9(%arg0: i32) -> (i32, i32) {
    %c0_i32 = arith.constant 0 : i32
    %c0_i32_0 = arith.constant 0 : i32
    %c0_i32_1 = arith.constant 0 : i32
    return %c0_i32, %c0_i32_0 : i32, i32
  }
  func.func @transform_10(%arg0: i32) -> (i32, i32, i32) {
    %c0_i32 = arith.constant 0 : i32
    %c0_i32_0 = arith.constant 0 : i32
    %c0_i32_1 = arith.constant 0 : i32
    return %arg0, %c0_i32, %c0_i32_0 : i32, i32, i32
  }
}

module attributes {stable_mosaic.version = 11 : i64} {
  func.func @_linear_softmax_kernel(%arg0: i32, %arg1: memref<16x32xbf16, #tpu.memory_space<vmem>>, %arg2: memref<32x32xbf16, #tpu.memory_space<vmem>>, %arg3: memref<1x32xf32, #tpu.memory_space<vmem>>, %arg4: memref<16x32xf32, #tpu.memory_space<vmem>>) attributes {dimension_semantics = [#tpu.dimension_semantics<parallel>], iteration_bounds = array<i64: 1>, scalar_prefetch = 0 : i64, scratch_operands = 0 : i64, tpu.core_type = #tpu.core_type<tc>, window_params = [{transform_indices = @transform_0, window_bounds = array<i64: 16, 32>}, {pipeline_mode = #tpu.pipeline_mode<synchronous>, transform_indices = @transform_1, window_bounds = array<i64: 32, 32>}, {pipeline_mode = #tpu.pipeline_mode<synchronous>, transform_indices = @transform_2, window_bounds = array<i64: 1, 32>}, {transform_indices = @transform_3, window_bounds = array<i64: 16, 32>}]} {
    %c0 = arith.constant 0 : index
    %c0_0 = arith.constant 0 : index
    %0 = vector.load %arg1[%c0, %c0_0] : memref<16x32xbf16, #tpu.memory_space<vmem>>, vector<16x32xbf16>
    %c0_1 = arith.constant 0 : index
    %c0_2 = arith.constant 0 : index
    %1 = vector.load %arg2[%c0_1, %c0_2] : memref<32x32xbf16, #tpu.memory_space<vmem>>, vector<32x32xbf16>
    %cst = arith.constant dense<0.000000e+00> : vector<16x32xf32>
    %2 = tpu.matmul %0, %1, %cst {dimension_numbers = #tpu.dot_dimension_numbers<[1], [0], [0], [1], [0, 0, 1, 1], [], []>} : vector<16x32xbf16>, vector<32x32xbf16>, vector<16x32xf32> -> vector<16x32xf32>
    %c0_3 = arith.constant 0 : index
    %c0_4 = arith.constant 0 : index
    %3 = vector.load %arg3[%c0_3, %c0_4] : memref<1x32xf32, #tpu.memory_space<vmem>>, vector<1x32xf32>
    %4 = vector.broadcast %3 : vector<1x32xf32> to vector<16x32xf32>
    %5 = arith.addf %2, %4 : vector<16x32xf32>
    %cst_5 = arith.constant dense<0xFF800000> : vector<16xf32>
    %6 = vector.multi_reduction <maximumf>, %5, %cst_5 [1] : vector<16x32xf32> to vector<16xf32>
    %7 = vector.shape_cast %6 : vector<16xf32> to vector<16x1xf32>
    %8 = vector.broadcast %7 : vector<16x1xf32> to vector<16x32xf32>
    %9 = arith.subf %5, %8 : vector<16x32xf32>
    %10 = math.exp %9 : vector<16x32xf32>
    %cst_6 = arith.constant dense<0.000000e+00> : vector<16xf32>
    %11 = vector.multi_reduction <add>, %10, %cst_6 [1] : vector<16x32xf32> to vector<16xf32>
    %12 = vector.shape_cast %11 : vector<16xf32> to vector<16x1xf32>
    %13 = vector.broadcast %12 : vector<16x1xf32> to vector<16x32xf32>
    %14 = arith.divf %10, %13 : vector<16x32xf32>
    %c0_7 = arith.constant 0 : index
    %c0_8 = arith.constant 0 : index
    %15 = vector.load %arg4[%c0_7, %c0_8] : memref<16x32xf32, #tpu.memory_space<vmem>>, vector<16x32xf32>
    tpu.vector_store %arg4[%c0_7, %c0_8], %14 {strides = array<i32>} : memref<16x32xf32, #tpu.memory_space<vmem>>, vector<16x32xf32>,
    return
  }
  func.func @transform_0(%arg0: i32) -> (i32, i32) {
    %c0_i32 = arith.constant 0 : i32
    %c0_i32_0 = arith.constant 0 : i32
    return %arg0, %c0_i32 : i32, i32
  }
  func.func @transform_1(%arg0: i32) -> (i32, i32) {
    %c0_i32 = arith.constant 0 : i32
    %c0_i32_0 = arith.constant 0 : i32
    %c0_i32_1 = arith.constant 0 : i32
    return %c0_i32, %c0_i32_0 : i32, i32
  }
  func.func @transform_2(%arg0: i32) -> (i32, i32) {
    %c0_i32 = arith.constant 0 : i32
    %c0_i32_0 = arith.constant 0 : i32
    %c0_i32_1 = arith.constant 0 : i32
    return %c0_i32, %c0_i32_0 : i32, i32
  }
  func.func @transform_3(%arg0: i32) -> (i32, i32) {
    %c0_i32 = arith.constant 0 : i32
    %c0_i32_0 = arith.constant 0 : i32
    return %arg0, %c0_i32 : i32, i32
  }
}

module attributes {stable_mosaic.version = 11 : i64} {
  func.func @_mha_res_ln_kernel(%arg0: i32, %arg1: memref<1x8x32xbf16, #tpu.memory_space<vmem>>, %arg2: memref<1x8x32xbf16, #tpu.memory_space<vmem>>, %arg3: memref<32x32xbf16, #tpu.memory_space<vmem>>, %arg4: memref<1x32xf32, #tpu.memory_space<vmem>>, %arg5: memref<32x64xbf16, #tpu.memory_space<vmem>>, %arg6: memref<1x64xf32, #tpu.memory_space<vmem>>, %arg7: memref<32x32xbf16, #tpu.memory_space<vmem>>, %arg8: memref<1x32xf32, #tpu.memory_space<vmem>>, %arg9: memref<1x32xf32, #tpu.memory_space<vmem>>, %arg10: memref<1x32xf32, #tpu.memory_space<vmem>>, %arg11: memref<1x8x32xbf16, #tpu.memory_space<vmem>>) attributes {dimension_semantics = [#tpu.dimension_semantics<parallel>], iteration_bounds = array<i64: 2>, scalar_prefetch = 0 : i64, scratch_operands = 0 : i64, tpu.core_type = #tpu.core_type<tc>, window_params = [{transform_indices = @transform_0, window_bounds = array<i64: 1, 8, 32>}, {transform_indices = @transform_1, window_bounds = array<i64: 1, 8, 32>}, {pipeline_mode = #tpu.pipeline_mode<synchronous>, transform_indices = @transform_2, window_bounds = array<i64: 32, 32>}, {pipeline_mode = #tpu.pipeline_mode<synchronous>, transform_indices = @transform_3, window_bounds = array<i64: 1, 32>}, {pipeline_mode = #tpu.pipeline_mode<synchronous>, transform_indices = @transform_4, window_bounds = array<i64: 32, 64>}, {pipeline_mode = #tpu.pipeline_mode<synchronous>, transform_indices = @transform_5, window_bounds = array<i64: 1, 64>}, {pipeline_mode = #tpu.pipeline_mode<synchronous>, transform_indices = @transform_6, window_bounds = array<i64: 32, 32>}, {pipeline_mode = #tpu.pipeline_mode<synchronous>, transform_indices = @transform_7, window_bounds = array<i64: 1, 32>}, {pipeline_mode = #tpu.pipeline_mode<synchronous>, transform_indices = @transform_8, window_bounds = array<i64: 1, 32>}, {pipeline_mode = #tpu.pipeline_mode<synchronous>, transform_indices = @transform_9, window_bounds = array<i64: 1, 32>}, {transform_indices = @transform_10, window_bounds = array<i64: 1, 8, 32>}]} {
    %c0 = arith.constant 0 : index
    %c0_0 = arith.constant 0 : index
    %c0_1 = arith.constant 0 : index
    %0 = vector.load %arg1[%c0, %c0_0, %c0_1] : memref<1x8x32xbf16, #tpu.memory_space<vmem>>, vector<1x8x32xbf16>
    %1 = vector.shape_cast %0 : vector<1x8x32xbf16> to vector<8x32xbf16>
    %c0_2 = arith.constant 0 : index
    %c0_3 = arith.constant 0 : index
    %c0_4 = arith.constant 0 : index
    %2 = vector.load %arg2[%c0_2, %c0_3, %c0_4] : memref<1x8x32xbf16, #tpu.memory_space<vmem>>, vector<1x8x32xbf16>
    %3 = vector.shape_cast %2 : vector<1x8x32xbf16> to vector<8x32xbf16>
    %c0_5 = arith.constant 0 : index
    %c0_6 = arith.constant 0 : index
    %4 = vector.load %arg3[%c0_5, %c0_6] : memref<32x32xbf16, #tpu.memory_space<vmem>>, vector<32x32xbf16>
    %cst = arith.constant dense<0.000000e+00> : vector<8x32xf32>
    %5 = tpu.matmul %1, %4, %cst {dimension_numbers = #tpu.dot_dimension_numbers<[1], [0], [0], [1], [0, 0, 1, 1], [], []>} : vector<8x32xbf16>, vector<32x32xbf16>, vector<8x32xf32> -> vector<8x32xf32>
    %c0_7 = arith.constant 0 : index
    %c0_8 = arith.constant 0 : index
    %6 = vector.load %arg4[%c0_7, %c0_8] : memref<1x32xf32, #tpu.memory_space<vmem>>, vector<1x32xf32>
    %7 = vector.broadcast %6 : vector<1x32xf32> to vector<8x32xf32>
    %8 = arith.addf %5, %7 : vector<8x32xf32>
    %c0_9 = arith.constant 0 : index
    %c0_10 = arith.constant 0 : index
    %9 = vector.load %arg5[%c0_9, %c0_10] : memref<32x64xbf16, #tpu.memory_space<vmem>>, vector<32x64xbf16>
    %cst_11 = arith.constant dense<0.000000e+00> : vector<8x64xf32>
    %10 = tpu.matmul %3, %9, %cst_11 {dimension_numbers = #tpu.dot_dimension_numbers<[1], [0], [0], [1], [0, 0, 1, 1], [], []>} : vector<8x32xbf16>, vector<32x64xbf16>, vector<8x64xf32> -> vector<8x64xf32>
    %c0_12 = arith.constant 0 : index
    %c0_13 = arith.constant 0 : index
    %11 = vector.load %arg6[%c0_12, %c0_13] : memref<1x64xf32, #tpu.memory_space<vmem>>, vector<1x64xf32>
    %12 = vector.broadcast %11 : vector<1x64xf32> to vector<8x64xf32>
    %13 = arith.addf %10, %12 : vector<8x64xf32>
    %14 = vector.extract_strided_slice %13 {offsets = [0, 0], sizes = [8, 32], strides = [1, 1]} : vector<8x64xf32> to vector<8x32xf32>
    %15 = vector.extract_strided_slice %13 {offsets = [0, 32], sizes = [8, 32], strides = [1, 1]} : vector<8x64xf32> to vector<8x32xf32>
    %16 = vector.extract_strided_slice %8 {offsets = [0, 0], sizes = [8, 8], strides = [1, 1]} : vector<8x32xf32> to vector<8x8xf32>
    %17 = arith.truncf %16 : vector<8x8xf32> to vector<8x8xbf16>
    %18 = vector.extract_strided_slice %14 {offsets = [0, 0], sizes = [8, 8], strides = [1, 1]} : vector<8x32xf32> to vector<8x8xf32>
    %19 = arith.truncf %18 : vector<8x8xf32> to vector<8x8xbf16>
    %20 = vector.extract_strided_slice %15 {offsets = [0, 0], sizes = [8, 8], strides = [1, 1]} : vector<8x32xf32> to vector<8x8xf32>
    %21 = arith.truncf %20 : vector<8x8xf32> to vector<8x8xbf16>
    %cst_14 = arith.constant dense<0.000000e+00> : vector<8x8xf32>
    %22 = tpu.matmul %17, %19, %cst_14 {dimension_numbers = #tpu.dot_dimension_numbers<[1], [1], [0], [0], [0, 0, 1, 0], [], []>} : vector<8x8xbf16>, vector<8x8xbf16>, vector<8x8xf32> -> vector<8x8xf32>
    %cst_15 = arith.constant 0.353553385 : f32
    %23 = vector.broadcast %cst_15 : f32 to vector<8x8xf32>
    %24 = arith.mulf %22, %23 : vector<8x8xf32>
    %cst_16 = arith.constant dense<0xFF800000> : vector<8xf32>
    %25 = vector.multi_reduction <maximumf>, %24, %cst_16 [1] : vector<8x8xf32> to vector<8xf32>
    %26 = vector.shape_cast %25 : vector<8xf32> to vector<8x1xf32>
    %27 = vector.broadcast %26 : vector<8x1xf32> to vector<8x8xf32>
    %28 = arith.subf %24, %27 : vector<8x8xf32>
    %29 = math.exp %28 : vector<8x8xf32>
    %cst_17 = arith.constant dense<0.000000e+00> : vector<8xf32>
    %30 = vector.multi_reduction <add>, %29, %cst_17 [1] : vector<8x8xf32> to vector<8xf32>
    %31 = vector.shape_cast %30 : vector<8xf32> to vector<8x1xf32>
    %32 = tpu.reciprocal %31 {approx = true} : vector<8x1xf32> -> vector<8x1xf32>
    %33 = vector.broadcast %32 : vector<8x1xf32> to vector<8x8xf32>
    %34 = arith.mulf %29, %33 : vector<8x8xf32>
    %35 = arith.truncf %34 : vector<8x8xf32> to vector<8x8xbf16>
    %cst_18 = arith.constant dense<0.000000e+00> : vector<8x8xf32>
    %36 = tpu.matmul %35, %21, %cst_18 {dimension_numbers = #tpu.dot_dimension_numbers<[1], [0], [0], [1], [0, 0, 1, 1], [], []>} : vector<8x8xbf16>, vector<8x8xbf16>, vector<8x8xf32> -> vector<8x8xf32>
    %37 = vector.extract_strided_slice %8 {offsets = [0, 8], sizes = [8, 8], strides = [1, 1]} : vector<8x32xf32> to vector<8x8xf32>
    %38 = arith.truncf %37 : vector<8x8xf32> to vector<8x8xbf16>
    %39 = vector.extract_strided_slice %14 {offsets = [0, 8], sizes = [8, 8], strides = [1, 1]} : vector<8x32xf32> to vector<8x8xf32>
    %40 = arith.truncf %39 : vector<8x8xf32> to vector<8x8xbf16>
    %41 = vector.extract_strided_slice %15 {offsets = [0, 8], sizes = [8, 8], strides = [1, 1]} : vector<8x32xf32> to vector<8x8xf32>
    %42 = arith.truncf %41 : vector<8x8xf32> to vector<8x8xbf16>
    %cst_19 = arith.constant dense<0.000000e+00> : vector<8x8xf32>
    %43 = tpu.matmul %38, %40, %cst_19 {dimension_numbers = #tpu.dot_dimension_numbers<[1], [1], [0], [0], [0, 0, 1, 0], [], []>} : vector<8x8xbf16>, vector<8x8xbf16>, vector<8x8xf32> -> vector<8x8xf32>
    %cst_20 = arith.constant 0.353553385 : f32
    %44 = vector.broadcast %cst_20 : f32 to vector<8x8xf32>
    %45 = arith.mulf %43, %44 : vector<8x8xf32>
    %cst_21 = arith.constant dense<0xFF800000> : vector<8xf32>
    %46 = vector.multi_reduction <maximumf>, %45, %cst_21 [1] : vector<8x8xf32> to vector<8xf32>
    %47 = vector.shape_cast %46 : vector<8xf32> to vector<8x1xf32>
    %48 = vector.broadcast %47 : vector<8x1xf32> to vector<8x8xf32>
    %49 = arith.subf %45, %48 : vector<8x8xf32>
    %50 = math.exp %49 : vector<8x8xf32>
    %cst_22 = arith.constant dense<0.000000e+00> : vector<8xf32>
    %51 = vector.multi_reduction <add>, %50, %cst_22 [1] : vector<8x8xf32> to vector<8xf32>
    %52 = vector.shape_cast %51 : vector<8xf32> to vector<8x1xf32>
    %53 = tpu.reciprocal %52 {approx = true} : vector<8x1xf32> -> vector<8x1xf32>
    %54 = vector.broadcast %53 : vector<8x1xf32> to vector<8x8xf32>
    %55 = arith.mulf %50, %54 : vector<8x8xf32>
    %56 = arith.truncf %55 : vector<8x8xf32> to vector<8x8xbf16>
    %cst_23 = arith.constant dense<0.000000e+00> : vector<8x8xf32>
    %57 = tpu.matmul %56, %42, %cst_23 {dimension_numbers = #tpu.dot_dimension_numbers<[1], [0], [0], [1], [0, 0, 1, 1], [], []>} : vector<8x8xbf16>, vector<8x8xbf16>, vector<8x8xf32> -> vector<8x8xf32>
    %58 = vector.extract_strided_slice %8 {offsets = [0, 16], sizes = [8, 8], strides = [1, 1]} : vector<8x32xf32> to vector<8x8xf32>
    %59 = arith.truncf %58 : vector<8x8xf32> to vector<8x8xbf16>
    %60 = vector.extract_strided_slice %14 {offsets = [0, 16], sizes = [8, 8], strides = [1, 1]} : vector<8x32xf32> to vector<8x8xf32>
    %61 = arith.truncf %60 : vector<8x8xf32> to vector<8x8xbf16>
    %62 = vector.extract_strided_slice %15 {offsets = [0, 16], sizes = [8, 8], strides = [1, 1]} : vector<8x32xf32> to vector<8x8xf32>
    %63 = arith.truncf %62 : vector<8x8xf32> to vector<8x8xbf16>
    %cst_24 = arith.constant dense<0.000000e+00> : vector<8x8xf32>
    %64 = tpu.matmul %59, %61, %cst_24 {dimension_numbers = #tpu.dot_dimension_numbers<[1], [1], [0], [0], [0, 0, 1, 0], [], []>} : vector<8x8xbf16>, vector<8x8xbf16>, vector<8x8xf32> -> vector<8x8xf32>
    %cst_25 = arith.constant 0.353553385 : f32
    %65 = vector.broadcast %cst_25 : f32 to vector<8x8xf32>
    %66 = arith.mulf %64, %65 : vector<8x8xf32>
    %cst_26 = arith.constant dense<0xFF800000> : vector<8xf32>
    %67 = vector.multi_reduction <maximumf>, %66, %cst_26 [1] : vector<8x8xf32> to vector<8xf32>
    %68 = vector.shape_cast %67 : vector<8xf32> to vector<8x1xf32>
    %69 = vector.broadcast %68 : vector<8x1xf32> to vector<8x8xf32>
    %70 = arith.subf %66, %69 : vector<8x8xf32>
    %71 = math.exp %70 : vector<8x8xf32>
    %cst_27 = arith.constant dense<0.000000e+00> : vector<8xf32>
    %72 = vector.multi_reduction <add>, %71, %cst_27 [1] : vector<8x8xf32> to vector<8xf32>
    %73 = vector.shape_cast %72 : vector<8xf32> to vector<8x1xf32>
    %74 = tpu.reciprocal %73 {approx = true} : vector<8x1xf32> -> vector<8x1xf32>
    %75 = vector.broadcast %74 : vector<8x1xf32> to vector<8x8xf32>
    %76 = arith.mulf %71, %75 : vector<8x8xf32>
    %77 = arith.truncf %76 : vector<8x8xf32> to vector<8x8xbf16>
    %cst_28 = arith.constant dense<0.000000e+00> : vector<8x8xf32>
    %78 = tpu.matmul %77, %63, %cst_28 {dimension_numbers = #tpu.dot_dimension_numbers<[1], [0], [0], [1], [0, 0, 1, 1], [], []>} : vector<8x8xbf16>, vector<8x8xbf16>, vector<8x8xf32> -> vector<8x8xf32>
    %79 = vector.extract_strided_slice %8 {offsets = [0, 24], sizes = [8, 8], strides = [1, 1]} : vector<8x32xf32> to vector<8x8xf32>
    %80 = arith.truncf %79 : vector<8x8xf32> to vector<8x8xbf16>
    %81 = vector.extract_strided_slice %14 {offsets = [0, 24], sizes = [8, 8], strides = [1, 1]} : vector<8x32xf32> to vector<8x8xf32>
    %82 = arith.truncf %81 : vector<8x8xf32> to vector<8x8xbf16>
    %83 = vector.extract_strided_slice %15 {offsets = [0, 24], sizes = [8, 8], strides = [1, 1]} : vector<8x32xf32> to vector<8x8xf32>
    %84 = arith.truncf %83 : vector<8x8xf32> to vector<8x8xbf16>
    %cst_29 = arith.constant dense<0.000000e+00> : vector<8x8xf32>
    %85 = tpu.matmul %80, %82, %cst_29 {dimension_numbers = #tpu.dot_dimension_numbers<[1], [1], [0], [0], [0, 0, 1, 0], [], []>} : vector<8x8xbf16>, vector<8x8xbf16>, vector<8x8xf32> -> vector<8x8xf32>
    %cst_30 = arith.constant 0.353553385 : f32
    %86 = vector.broadcast %cst_30 : f32 to vector<8x8xf32>
    %87 = arith.mulf %85, %86 : vector<8x8xf32>
    %cst_31 = arith.constant dense<0xFF800000> : vector<8xf32>
    %88 = vector.multi_reduction <maximumf>, %87, %cst_31 [1] : vector<8x8xf32> to vector<8xf32>
    %89 = vector.shape_cast %88 : vector<8xf32> to vector<8x1xf32>
    %90 = vector.broadcast %89 : vector<8x1xf32> to vector<8x8xf32>
    %91 = arith.subf %87, %90 : vector<8x8xf32>
    %92 = math.exp %91 : vector<8x8xf32>
    %cst_32 = arith.constant dense<0.000000e+00> : vector<8xf32>
    %93 = vector.multi_reduction <add>, %92, %cst_32 [1] : vector<8x8xf32> to vector<8xf32>
    %94 = vector.shape_cast %93 : vector<8xf32> to vector<8x1xf32>
    %95 = tpu.reciprocal %94 {approx = true} : vector<8x1xf32> -> vector<8x1xf32>
    %96 = vector.broadcast %95 : vector<8x1xf32> to vector<8x8xf32>
    %97 = arith.mulf %92, %96 : vector<8x8xf32>
    %98 = arith.truncf %97 : vector<8x8xf32> to vector<8x8xbf16>
    %cst_33 = arith.constant dense<0.000000e+00> : vector<8x8xf32>
    %99 = tpu.matmul %98, %84, %cst_33 {dimension_numbers = #tpu.dot_dimension_numbers<[1], [0], [0], [1], [0, 0, 1, 1], [], []>} : vector<8x8xbf16>, vector<8x8xbf16>, vector<8x8xf32> -> vector<8x8xf32>
    %100 = tpu.concatenate %36, %57, %78, %99 in 1 : vector<8x8xf32>, vector<8x8xf32>, vector<8x8xf32>, vector<8x8xf32> -> vector<8x32xf32>
    %101 = arith.truncf %100 : vector<8x32xf32> to vector<8x32xbf16>
    %c0_34 = arith.constant 0 : index
    %c0_35 = arith.constant 0 : index
    %102 = vector.load %arg7[%c0_34, %c0_35] : memref<32x32xbf16, #tpu.memory_space<vmem>>, vector<32x32xbf16>
    %cst_36 = arith.constant dense<0.000000e+00> : vector<8x32xf32>
    %103 = tpu.matmul %101, %102, %cst_36 {dimension_numbers = #tpu.dot_dimension_numbers<[1], [0], [0], [1], [0, 0, 1, 1], [], []>} : vector<8x32xbf16>, vector<32x32xbf16>, vector<8x32xf32> -> vector<8x32xf32>
    %c0_37 = arith.constant 0 : index
    %c0_38 = arith.constant 0 : index
    %104 = vector.load %arg8[%c0_37, %c0_38] : memref<1x32xf32, #tpu.memory_space<vmem>>, vector<1x32xf32>
    %105 = vector.broadcast %104 : vector<1x32xf32> to vector<8x32xf32>
    %106 = arith.addf %103, %105 : vector<8x32xf32>
    %107 = arith.extf %1 : vector<8x32xbf16> to vector<8x32xf32>
    %108 = arith.addf %107, %106 : vector<8x32xf32>
    %cst_39 = arith.constant dense<0.000000e+00> : vector<8xf32>
    %109 = vector.multi_reduction <add>, %108, %cst_39 [1] : vector<8x32xf32> to vector<8xf32>
    %110 = vector.shape_cast %109 : vector<8xf32> to vector<8x1xf32>
    %cst_40 = arith.constant 3.200000e+01 : f32
    %111 = vector.broadcast %cst_40 : f32 to vector<8x1xf32>
    %112 = arith.divf %110, %111 : vector<8x1xf32>
    %113 = vector.broadcast %112 : vector<8x1xf32> to vector<8x32xf32>
    %114 = arith.subf %108, %113 : vector<8x32xf32>
    %115 = arith.mulf %114, %114 : vector<8x32xf32>
    %cst_41 = arith.constant dense<0.000000e+00> : vector<8xf32>
    %116 = vector.multi_reduction <add>, %115, %cst_41 [1] : vector<8x32xf32> to vector<8xf32>
    %117 = vector.shape_cast %116 : vector<8xf32> to vector<8x1xf32>
    %cst_42 = arith.constant 3.200000e+01 : f32
    %118 = vector.broadcast %cst_42 : f32 to vector<8x1xf32>
    %119 = arith.divf %117, %118 : vector<8x1xf32>
    %120 = vector.broadcast %112 : vector<8x1xf32> to vector<8x32xf32>
    %121 = arith.subf %108, %120 : vector<8x32xf32>
    %cst_43 = arith.constant 9.99999974E-6 : f32
    %122 = vector.broadcast %cst_43 : f32 to vector<8x1xf32>
    %123 = arith.addf %119, %122 : vector<8x1xf32>
    %124 = math.rsqrt %123 : vector<8x1xf32>
    %125 = vector.broadcast %124 : vector<8x1xf32> to vector<8x32xf32>
    %126 = arith.mulf %121, %125 : vector<8x32xf32>
    %c0_44 = arith.constant 0 : index
    %c0_45 = arith.constant 0 : index
    %127 = vector.load %arg9[%c0_44, %c0_45] : memref<1x32xf32, #tpu.memory_space<vmem>>, vector<1x32xf32>
    %128 = vector.broadcast %127 : vector<1x32xf32> to vector<8x32xf32>
    %129 = arith.mulf %126, %128 : vector<8x32xf32>
    %c0_46 = arith.constant 0 : index
    %c0_47 = arith.constant 0 : index
    %130 = vector.load %arg10[%c0_46, %c0_47] : memref<1x32xf32, #tpu.memory_space<vmem>>, vector<1x32xf32>
    %131 = vector.broadcast %130 : vector<1x32xf32> to vector<8x32xf32>
    %132 = arith.addf %129, %131 : vector<8x32xf32>
    %133 = arith.truncf %132 : vector<8x32xf32> to vector<8x32xbf16>
    %c0_48 = arith.constant 0 : index
    %c0_49 = arith.constant 0 : index
    %c0_50 = arith.constant 0 : index
    %134 = vector.load %arg11[%c0_48, %c0_49, %c0_50] : memref<1x8x32xbf16, #tpu.memory_space<vmem>>, vector<1x8x32xbf16>
    %135 = vector.shape_cast %134 : vector<1x8x32xbf16> to vector<8x32xbf16>
    %136 = vector.shape_cast %133 : vector<8x32xbf16> to vector<1x8x32xbf16>
    tpu.vector_store %arg11[%c0_48, %c0_49, %c0_50], %136 {strides = array<i32>} : memref<1x8x32xbf16, #tpu.memory_space<vmem>>, vector<1x8x32xbf16>,
    return
  }
  func.func @transform_0(%arg0: i32) -> (i32, i32, i32) {
    %c0_i32 = arith.constant 0 : i32
    %c0_i32_0 = arith.constant 0 : i32
    %c0_i32_1 = arith.constant 0 : i32
    return %arg0, %c0_i32, %c0_i32_0 : i32, i32, i32
  }
  func.func @transform_1(%arg0: i32) -> (i32, i32, i32) {
    %c0_i32 = arith.constant 0 : i32
    %c0_i32_0 = arith.constant 0 : i32
    %c0_i32_1 = arith.constant 0 : i32
    return %arg0, %c0_i32, %c0_i32_0 : i32, i32, i32
  }
  func.func @transform_2(%arg0: i32) -> (i32, i32) {
    %c0_i32 = arith.constant 0 : i32
    %c0_i32_0 = arith.constant 0 : i32
    %c0_i32_1 = arith.constant 0 : i32
    return %c0_i32, %c0_i32_0 : i32, i32
  }
  func.func @transform_3(%arg0: i32) -> (i32, i32) {
    %c0_i32 = arith.constant 0 : i32
    %c0_i32_0 = arith.constant 0 : i32
    %c0_i32_1 = arith.constant 0 : i32
    return %c0_i32, %c0_i32_0 : i32, i32
  }
  func.func @transform_4(%arg0: i32) -> (i32, i32) {
    %c0_i32 = arith.constant 0 : i32
    %c0_i32_0 = arith.constant 0 : i32
    %c0_i32_1 = arith.constant 0 : i32
    return %c0_i32, %c0_i32_0 : i32, i32
  }
  func.func @transform_5(%arg0: i32) -> (i32, i32) {
    %c0_i32 = arith.constant 0 : i32
    %c0_i32_0 = arith.constant 0 : i32
    %c0_i32_1 = arith.constant 0 : i32
    return %c0_i32, %c0_i32_0 : i32, i32
  }
  func.func @transform_6(%arg0: i32) -> (i32, i32) {
    %c0_i32 = arith.constant 0 : i32
    %c0_i32_0 = arith.constant 0 : i32
    %c0_i32_1 = arith.constant 0 : i32
    return %c0_i32, %c0_i32_0 : i32, i32
  }
  func.func @transform_7(%arg0: i32) -> (i32, i32) {
    %c0_i32 = arith.constant 0 : i32
    %c0_i32_0 = arith.constant 0 : i32
    %c0_i32_1 = arith.constant 0 : i32
    return %c0_i32, %c0_i32_0 : i32, i32
  }
  func.func @transform_8(%arg0: i32) -> (i32, i32) {
    %c0_i32 = arith.constant 0 : i32
    %c0_i32_0 = arith.constant 0 : i32
    %c0_i32_1 = arith.constant 0 : i32
    return %c0_i32, %c0_i32_0 : i32, i32
  }
  func.func @transform_9(%arg0: i32) -> (i32, i32) {
    %c0_i32 = arith.constant 0 : i32
    %c0_i32_0 = arith.constant 0 : i32
    %c0_i32_1 = arith.constant 0 : i32
    return %c0_i32, %c0_i32_0 : i32, i32
  }
  func.func @transform_10(%arg0: i32) -> (i32, i32, i32) {
    %c0_i32 = arith.constant 0 : i32
    %c0_i32_0 = arith.constant 0 : i32
    %c0_i32_1 = arith.constant 0 : i32
    return %arg0, %c0_i32, %c0_i32_0 : i32, i32, i32
  }
}

</mosaic_0001>

<llo_original>
// kernel: transformer_forward.15
$region0: #{transformer_forward.15}
  #allocation0 [shape = 'u32[]', space=smem, size = 0x4, offset = 0x4, fixed_abs, tag = 'smem constant byte address 0x4 - core index']
  #allocation1 [shape = 'u32[72,128]{1,0:T(1,128)}', space=vmem, size = 0x9000, scoped, tag = 'internal scratch']
  %s0 = inlined_call_operand.vmem [shape: bf16[2,8,32], index: 0, kind: input, shape index: {}, may-alias: {0,1}]
  %s1 = inlined_call_operand.vmem [shape: bf16[2,8,32], index: 1, kind: input, shape index: {}, may-alias: {0,1}]
  %s2 = inlined_call_operand.vmem [shape: bf16[32,32], index: 2, kind: input, shape index: {}]
  %s3 = inlined_call_operand.vmem [shape: f32[1,32], index: 3, kind: input, shape index: {}]
  %s4 = inlined_call_operand.vmem [shape: bf16[32,64], index: 4, kind: input, shape index: {}]
  %s5 = inlined_call_operand.vmem [shape: f32[1,64], index: 5, kind: input, shape index: {}]
  %s6 = inlined_call_operand.vmem [shape: bf16[32,32], index: 6, kind: input, shape index: {}]
  %s7 = inlined_call_operand.vmem [shape: f32[1,32], index: 7, kind: input, shape index: {}]
  %s8 = inlined_call_operand.vmem [shape: f32[1,32], index: 8, kind: input, shape index: {}]
  %s9 = inlined_call_operand.vmem [shape: f32[1,32], index: 9, kind: input, shape index: {}]
  %s10 = inlined_call_operand.vmem [shape: bf16[2,8,32], index: 10, kind: output, shape index: {}]
  %s11 = sld [smem:[#allocation0]]
  $region73: #{transformer_forward.15} parent=0
    _
  %s13 = ssub.s32 1, %s11
  %s14 = scalar_select 0, %s13, %s11
  loop: start=0, step=1, limit=4
  $region2: #{transformer_forward.15} parent=0 // loop_pre_header
    _
  $region3: #{transformer_forward.15} parent=0 // loop_header
    %s16 = sphi 0, %s20
    %p17 = scmp.ge.s32.totalorder %s16, 4
    %s26 = sphi 0, %s28
    %s29 = sphi 0, %s26
    %s30 = sphi 0, %s29
    %s46 = sphi 0, %s30
    %s52 = sphi 0, %s54
    %s55 = sphi 0, %s52
    %s56 = sphi 0, %s55
    %s72 = sphi 0, %s56
    %s76 = sphi 0, %s76
    %s78 = sphi 0, %s76
    %s79 = sphi 0, %s78
    %s93 = sphi 0, %s79
    %s97 = sphi 0, %s97
    %s99 = sphi 0, %s97
    %s100 = sphi 0, %s99
    %s114 = sphi 0, %s100
    %s118 = sphi 0, %s118
    %s120 = sphi 0, %s118
    %s121 = sphi 0, %s120
    %s135 = sphi 0, %s121
    %s139 = sphi 0, %s139
    %s141 = sphi 0, %s139
    %s142 = sphi 0, %s141
    %s156 = sphi 0, %s142
    %s160 = sphi 0, %s160
    %s162 = sphi 0, %s160
    %s163 = sphi 0, %s162
    %s177 = sphi 0, %s163
    %s181 = sphi 0, %s181
    %s183 = sphi 0, %s181
    %s184 = sphi 0, %s183
    %s198 = sphi 0, %s184
    %s202 = sphi 0, %s202
    %s204 = sphi 0, %s202
    %s205 = sphi 0, %s204
    %s219 = sphi 0, %s205
    %s223 = sphi 0, %s223
    %s225 = sphi 0, %s223
    %s226 = sphi 0, %s225
    %s240 = sphi 0, %s226
    %s246 = sphi 0, %s248
    %s249 = sphi 0, %s246
    %s250 = sphi 0, %s249
    %s266 = sphi 0, %s250
  $region4: #{transformer_forward.15} parent=0 // loop_header_branch
    %19 = sbr.rel (%p17) target = $region8
  $region5: #{transformer_forward.15} parent=0 // loop_body
    %s21 = ssub.s32 %s16, 1
    %s22 = ssub.s32 %s16, 2
    %s23 = sadd.s32 %s16, 1
    %s24 = ssub.s32 %s16, %s23
    %p25 = scmp.eq.s32.totalorder %s24, 0
    %s27 = sadd.s32 %s26, 1
    %s28 = scalar_select %p25, %s26, %s27
    %p31 = pneg %p25
    %p32 = scmp.eq.s32.totalorder %s16, 1
    %p33 = por %p31, %p32
    %p34 = scmp.ne.s32.totalorder %s26, %s29
    %p35 = scmp.eq.s32.totalorder %s16, 0
    %p36 = por %p34, %p35
    %p37 = scmp.ne.s32.totalorder %s26, %s29
    %p38 = scmp.eq.s32.totalorder %s21, 1
    %p39 = por %p37, %p38
    %p40 = scmp.ne.s32.totalorder %s29, %s30
    %p41 = scmp.eq.s32.totalorder %s21, 0
    %p42 = por %p40, %p41
    %p43 = scmp.ne.s32.totalorder %s29, %s30
    %p44 = scmp.eq.s32.totalorder %s22, 1
    %p45 = por %p43, %p44
    %p47 = scmp.ne.s32.totalorder %s30, %s46
    %p48 = scmp.eq.s32.totalorder %s22, 0
    %p49 = por %p47, %p48
    %s50 = ssub.s32 %s16, %s23
    %p51 = scmp.eq.s32.totalorder %s50, 0
    %s53 = sadd.s32 %s52, 1
    %s54 = scalar_select %p51, %s52, %s53
    %p57 = pneg %p51
    %p58 = scmp.eq.s32.totalorder %s16, 1
    %p59 = por %p57, %p58
    %p60 = scmp.ne.s32.totalorder %s52, %s55
    %p61 = scmp.eq.s32.totalorder %s16, 0
    %p62 = por %p60, %p61
    %p63 = scmp.ne.s32.totalorder %s52, %s55
    %p64 = scmp.eq.s32.totalorder %s21, 1
    %p65 = por %p63, %p64
    %p66 = scmp.ne.s32.totalorder %s55, %s56
    %p67 = scmp.eq.s32.totalorder %s21, 0
    %p68 = por %p66, %p67
    %p69 = scmp.ne.s32.totalorder %s55, %s56
    %p70 = scmp.eq.s32.totalorder %s22, 1
    %p71 = por %p69, %p70
    %p73 = scmp.ne.s32.totalorder %s56, %s72
    %p74 = scmp.eq.s32.totalorder %s22, 0
    %p75 = por %p73, %p74
    %s77 = sadd.s32 %s76, 1
    %p80 = scmp.eq.s32.totalorder %s16, 1
    %p81 = scmp.ne.s32.totalorder %s76, %s78
    %p82 = scmp.eq.s32.totalorder %s16, 0
    %p83 = por %p81, %p82
    %p84 = scmp.ne.s32.totalorder %s76, %s78
    %p85 = scmp.eq.s32.totalorder %s21, 1
    %p86 = por %p84, %p85
    %p87 = scmp.ne.s32.totalorder %s78, %s79
    %p88 = scmp.eq.s32.totalorder %s21, 0
    %p89 = por %p87, %p88
    %p90 = scmp.ne.s32.totalorder %s78, %s79
    %p91 = scmp.eq.s32.totalorder %s22, 1
    %p92 = por %p90, %p91
    %p94 = scmp.ne.s32.totalorder %s79, %s93
    %p95 = scmp.eq.s32.totalorder %s22, 0
    %p96 = por %p94, %p95
    %s98 = sadd.s32 %s97, 1
    %p101 = scmp.eq.s32.totalorder %s16, 1
    %p102 = scmp.ne.s32.totalorder %s97, %s99
    %p103 = scmp.eq.s32.totalorder %s16, 0
    %p104 = por %p102, %p103
    %p105 = scmp.ne.s32.totalorder %s97, %s99
    %p106 = scmp.eq.s32.totalorder %s21, 1
    %p107 = por %p105, %p106
    %p108 = scmp.ne.s32.totalorder %s99, %s100
    %p109 = scmp.eq.s32.totalorder %s21, 0
    %p110 = por %p108, %p109
    %p111 = scmp.ne.s32.totalorder %s99, %s100
    %p112 = scmp.eq.s32.totalorder %s22, 1
    %p113 = por %p111, %p112
    %p115 = scmp.ne.s32.totalorder %s100, %s114
    %p116 = scmp.eq.s32.totalorder %s22, 0
    %p117 = por %p115, %p116
    %s119 = sadd.s32 %s118, 1
    %p122 = scmp.eq.s32.totalorder %s16, 1
    %p123 = scmp.ne.s32.totalorder %s118, %s120
    %p124 = scmp.eq.s32.totalorder %s16, 0
    %p125 = por %p123, %p124
    %p126 = scmp.ne.s32.totalorder %s118, %s120
    %p127 = scmp.eq.s32.totalorder %s21, 1
    %p128 = por %p126, %p127
    %p129 = scmp.ne.s32.totalorder %s120, %s121
    %p130 = scmp.eq.s32.totalorder %s21, 0
    %p131 = por %p129, %p130
    %p132 = scmp.ne.s32.totalorder %s120, %s121
    %p133 = scmp.eq.s32.totalorder %s22, 1
    %p134 = por %p132, %p133
    %p136 = scmp.ne.s32.totalorder %s121, %s135
    %p137 = scmp.eq.s32.totalorder %s22, 0
    %p138 = por %p136, %p137
    %s140 = sadd.s32 %s139, 1
    %p143 = scmp.eq.s32.totalorder %s16, 1
    %p144 = scmp.ne.s32.totalorder %s139, %s141
    %p145 = scmp.eq.s32.totalorder %s16, 0
    %p146 = por %p144, %p145
    %p147 = scmp.ne.s32.totalorder %s139, %s141
    %p148 = scmp.eq.s32.totalorder %s21, 1
    %p149 = por %p147, %p148
    %p150 = scmp.ne.s32.totalorder %s141, %s142
    %p151 = scmp.eq.s32.totalorder %s21, 0
    %p152 = por %p150, %p151
    %p153 = scmp.ne.s32.totalorder %s141, %s142
    %p154 = scmp.eq.s32.totalorder %s22, 1
    %p155 = por %p153, %p154
    %p157 = scmp.ne.s32.totalorder %s142, %s156
    %p158 = scmp.eq.s32.totalorder %s22, 0
    %p159 = por %p157, %p158
    %s161 = sadd.s32 %s160, 1
    %p164 = scmp.eq.s32.totalorder %s16, 1
    %p165 = scmp.ne.s32.totalorder %s160, %s162
    %p166 = scmp.eq.s32.totalorder %s16, 0
    %p167 = por %p165, %p166
    %p168 = scmp.ne.s32.totalorder %s160, %s162
    %p169 = scmp.eq.s32.totalorder %s21, 1
    %p170 = por %p168, %p169
    %p171 = scmp.ne.s32.totalorder %s162, %s163
    %p172 = scmp.eq.s32.totalorder %s21, 0
    %p173 = por %p171, %p172
    %p174 = scmp.ne.s32.totalorder %s162, %s163
    %p175 = scmp.eq.s32.totalorder %s22, 1
    %p176 = por %p174, %p175
    %p178 = scmp.ne.s32.totalorder %s163, %s177
    %p179 = scmp.eq.s32.totalorder %s22, 0
    %p180 = por %p178, %p179
    %s182 = sadd.s32 %s181, 1
    %p185 = scmp.eq.s32.totalorder %s16, 1
    %p186 = scmp.ne.s32.totalorder %s181, %s183
    %p187 = scmp.eq.s32.totalorder %s16, 0
    %p188 = por %p186, %p187
    %p189 = scmp.ne.s32.totalorder %s181, %s183
    %p190 = scmp.eq.s32.totalorder %s21, 1
    %p191 = por %p189, %p190
    %p192 = scmp.ne.s32.totalorder %s183, %s184
    %p193 = scmp.eq.s32.totalorder %s21, 0
    %p194 = por %p192, %p193
    %p195 = scmp.ne.s32.totalorder %s183, %s184
    %p196 = scmp.eq.s32.totalorder %s22, 1
    %p197 = por %p195, %p196
    %p199 = scmp.ne.s32.totalorder %s184, %s198
    %p200 = scmp.eq.s32.totalorder %s22, 0
    %p201 = por %p199, %p200
    %s203 = sadd.s32 %s202, 1
    %p206 = scmp.eq.s32.totalorder %s16, 1
    %p207 = scmp.ne.s32.totalorder %s202, %s204
    %p208 = scmp.eq.s32.totalorder %s16, 0
    %p209 = por %p207, %p208
    %p210 = scmp.ne.s32.totalorder %s202, %s204
    %p211 = scmp.eq.s32.totalorder %s21, 1
    %p212 = por %p210, %p211
    %p213 = scmp.ne.s32.totalorder %s204, %s205
    %p214 = scmp.eq.s32.totalorder %s21, 0
    %p215 = por %p213, %p214
    %p216 = scmp.ne.s32.totalorder %s204, %s205
    %p217 = scmp.eq.s32.totalorder %s22, 1
    %p218 = por %p216, %p217
    %p220 = scmp.ne.s32.totalorder %s205, %s219
    %p221 = scmp.eq.s32.totalorder %s22, 0
    %p222 = por %p220, %p221
    %s224 = sadd.s32 %s223, 1
    %p227 = scmp.eq.s32.totalorder %s16, 1
    %p228 = scmp.ne.s32.totalorder %s223, %s225
    %p229 = scmp.eq.s32.totalorder %s16, 0
    %p230 = por %p228, %p229
    %p231 = scmp.ne.s32.totalorder %s223, %s225
    %p232 = scmp.eq.s32.totalorder %s21, 1
    %p233 = por %p231, %p232
    %p234 = scmp.ne.s32.totalorder %s225, %s226
    %p235 = scmp.eq.s32.totalorder %s21, 0
    %p236 = por %p234, %p235
    %p237 = scmp.ne.s32.totalorder %s225, %s226
    %p238 = scmp.eq.s32.totalorder %s22, 1
    %p239 = por %p237, %p238
    %p241 = scmp.ne.s32.totalorder %s226, %s240
    %p242 = scmp.eq.s32.totalorder %s22, 0
    %p243 = por %p241, %p242
    %s244 = ssub.s32 %s16, %s23
    %p245 = scmp.eq.s32.totalorder %s244, 0
    %s247 = sadd.s32 %s246, 1
    %s248 = scalar_select %p245, %s246, %s247
    %p251 = pneg %p245
    %p252 = scmp.eq.s32.totalorder %s16, 1
    %p253 = por %p251, %p252
    %p254 = scmp.ne.s32.totalorder %s246, %s249
    %p255 = scmp.eq.s32.totalorder %s16, 0
    %p256 = por %p254, %p255
    %p257 = scmp.ne.s32.totalorder %s246, %s249
    %p258 = scmp.eq.s32.totalorder %s21, 1
    %p259 = por %p257, %p258
    %p260 = scmp.ne.s32.totalorder %s249, %s250
    %p261 = scmp.eq.s32.totalorder %s21, 0
    %p262 = por %p260, %p261
    %p263 = scmp.ne.s32.totalorder %s249, %s250
    %p264 = scmp.eq.s32.totalorder %s22, 1
    %p265 = por %p263, %p264
    %p267 = scmp.ne.s32.totalorder %s250, %s266
    %p268 = scmp.eq.s32.totalorder %s22, 0
    %p269 = por %p267, %p268
    %p270 = scmp.le.s32.totalorder 1, %s16
    %p271 = scmp.lt.s32.totalorder %s16, 3
    %p272 = pnand %p270, %p271
    %p273 = pneg %p272
    // Predicated region
    $region9: #{transformer_forward.15} parent=5 // pred_check
      _
    $region10: #{transformer_forward.15} parent=5 // pred_check_branch
      %275 = sbr.rel (%p272) target = $region12
    $region11: #{transformer_forward.15} parent=5 // pred_region
      %s276 = ssub.s32 %s16, 1
      // Predicated region
      $region13: #{transformer_forward.15} parent=11 // pred_check
        %p277 = pneg %p89
      $region14: #{transformer_forward.15} parent=11 // pred_check_branch
        %279 = sbr.rel (%p277) target = $region16
      $region15: #{transformer_forward.15} parent=11 // pred_region
        _
      $region16: #{transformer_forward.15} parent=11 // pred_fallthru
        _
      // Predicated region
      $region17: #{transformer_forward.15} parent=11 // pred_check
        %p280 = pneg %p110
      $region18: #{transformer_forward.15} parent=11 // pred_check_branch
        %282 = sbr.rel (%p280) target = $region20
      $region19: #{transformer_forward.15} parent=11 // pred_region
        _
      $region20: #{transformer_forward.15} parent=11 // pred_fallthru
        _
      // Predicated region
      $region21: #{transformer_forward.15} parent=11 // pred_check
        %p283 = pneg %p131
      $region22: #{transformer_forward.15} parent=11 // pred_check_branch
        %285 = sbr.rel (%p283) target = $region24
      $region23: #{transformer_forward.15} parent=11 // pred_region
        _
      $region24: #{transformer_forward.15} parent=11 // pred_fallthru
        _
      // Predicated region
      $region25: #{transformer_forward.15} parent=11 // pred_check
        %p286 = pneg %p152
      $region26: #{transformer_forward.15} parent=11 // pred_check_branch
        %288 = sbr.rel (%p286) target = $region28
      $region27: #{transformer_forward.15} parent=11 // pred_region
        _
      $region28: #{transformer_forward.15} parent=11 // pred_fallthru
        _
      // Predicated region
      $region29: #{transformer_forward.15} parent=11 // pred_check
        %p289 = pneg %p173
      $region30: #{transformer_forward.15} parent=11 // pred_check_branch
        %291 = sbr.rel (%p289) target = $region32
      $region31: #{transformer_forward.15} parent=11 // pred_region
        _
      $region32: #{transformer_forward.15} parent=11 // pred_fallthru
        _
      // Predicated region
      $region33: #{transformer_forward.15} parent=11 // pred_check
        %p292 = pneg %p194
      $region34: #{transformer_forward.15} parent=11 // pred_check_branch
        %294 = sbr.rel (%p292) target = $region36
      $region35: #{transformer_forward.15} parent=11 // pred_region
        _
      $region36: #{transformer_forward.15} parent=11 // pred_fallthru
        _
      // Predicated region
      $region37: #{transformer_forward.15} parent=11 // pred_check
        %p295 = pneg %p215
      $region38: #{transformer_forward.15} parent=11 // pred_check_branch
        %297 = sbr.rel (%p295) target = $region40
      $region39: #{transformer_forward.15} parent=11 // pred_region
        _
      $region40: #{transformer_forward.15} parent=11 // pred_fallthru
        _
      // Predicated region
      $region41: #{transformer_forward.15} parent=11 // pred_check
        %p298 = pneg %p236
      $region42: #{transformer_forward.15} parent=11 // pred_check_branch
        %300 = sbr.rel (%p298) target = $region44
      $region43: #{transformer_forward.15} parent=11 // pred_region
        _
      $region44: #{transformer_forward.15} parent=11 // pred_fallthru
        _
    $region12: #{transformer_forward.15} parent=5 // pred_fallthru
      _
    %p301 = scmp.lt.s32.totalorder %s16, 2
    // Predicated region
    $region45: #{transformer_forward.15} parent=5 // pred_check
      %p302 = pneg %p301
    $region46: #{transformer_forward.15} parent=5 // pred_check_branch
      %304 = sbr.rel (%p302) target = $region48
    $region47: #{transformer_forward.15} parent=5 // pred_region
      // Predicated region
      $region49: #{transformer_forward.15} parent=47 // pred_check
        %p305 = pneg %p36
      $region50: #{transformer_forward.15} parent=47 // pred_check_branch
        %307 = sbr.rel (%p305) target = $region52
      $region51: #{transformer_forward.15} parent=47 // pred_region
        %p308 = scmp.lt.s32.totalorder %s16, 1
        %s309 = scalar_select %p308, %s16, 1
        %s310 = smul.addr %s309, 4
        %s311 = scalar_lea.vmem %s0, %s310
      $region52: #{transformer_forward.15} parent=47 // pred_fallthru
        _
      // Predicated region
      $region53: #{transformer_forward.15} parent=47 // pred_check
        %p312 = pneg %p62
      $region54: #{transformer_forward.15} parent=47 // pred_check_branch
        %314 = sbr.rel (%p312) target = $region56
      $region55: #{transformer_forward.15} parent=47 // pred_region
        %p315 = scmp.lt.s32.totalorder %s16, 1
        %s316 = scalar_select %p315, %s16, 1
        %s317 = smul.addr %s316, 4
        %s318 = scalar_lea.vmem %s1, %s317
      $region56: #{transformer_forward.15} parent=47 // pred_fallthru
        _
    $region48: #{transformer_forward.15} parent=5 // pred_fallthru
      _
    %p319 = scmp.le.s32.totalorder 1, %s16
    %p320 = scmp.lt.s32.totalorder %s16, 3
    %p321 = pnand %p319, %p320
    %p322 = pneg %p321
    // Predicated region
    $region57: #{transformer_forward.15} parent=5 // pred_check
      _
    $region58: #{transformer_forward.15} parent=5 // pred_check_branch
      %324 = sbr.rel (%p321) target = $region60
    $region59: #{transformer_forward.15} parent=5 // pred_region
      %s325 = ssub.s32 %s16, 1
      %p326 = scmp.lt.s32.totalorder %s21, 1
      %s327 = scalar_select %p326, %s21, 1
      %s328 = smul.addr %s327, 4
      %s329 = scalar_lea.vmem %s0, %s328
      %p330 = pneg %p42
      %p331 = pneg %p39
      %p332 = scmp.lt.s32.totalorder %s21, 1
      %s333 = scalar_select %p332, %s21, 1
      %s334 = smul.addr %s333, 4
      %s335 = scalar_lea.vmem %s1, %s334
      %p336 = pneg %p68
      %p337 = pneg %p65
      %p338 = pneg %p89
      %p339 = pneg %p86
      %p340 = pneg %p110
      %p341 = pneg %p107
      %p342 = pneg %p131
      %p343 = pneg %p128
      %p344 = pneg %p152
      %p345 = pneg %p149
      %p346 = pneg %p173
      %p347 = pneg %p170
      %p348 = pneg %p194
      %p349 = pneg %p191
      %p350 = pneg %p215
      %p351 = pneg %p212
      %p352 = pneg %p236
      %p353 = pneg %p233
      %p354 = pneg %p262
      %p355 = pneg %p259
      %p356 = scmp.lt.s32.totalorder %s21, 1
      %s357 = scalar_select %p356, %s21, 1
      %s358 = smul.addr %s357, 4
      %s359 = scalar_lea.vmem %s10, %s358
      %p360 = scmp.lt.s32.totalorder %s21, 1
      %s361 = scalar_select %p360, %s21, 1
      %s362 = smul.addr %s361, 4
      %s363 = scalar_lea.vmem %s0, %s362
      %p364 = scmp.lt.s32.totalorder %s21, 1
      %s365 = scalar_select %p364, %s21, 1
      %s366 = smul.addr %s365, 4
      %s367 = scalar_lea.vmem %s1, %s366
      %p368 = scmp.lt.s32.totalorder %s21, 1
      %s369 = scalar_select %p368, %s21, 1
      %s370 = smul.addr %s369, 4
      %s371 = scalar_lea.vmem %s10, %s370
      %v373 = vld [vmem:[%s363] sm:$0xf]
      %v374 = vld [vmem:[%s367] sm:$0xf]
      %v375 = vld [vmem:[%s2] sm:$0xf]
      %v376 = vld [vmem:[%s2 + $0x4] sm:$0xf]
      %v377 = vld [vmem:[%s2 + $0x8] sm:$0xf]
      %v378 = vld [vmem:[%s2 + $0xc] sm:$0xf]
      %v379 = vld [vmem:[%s3] sm:$0x1]
      %v381 = vperm.slane %v379, 0
      %v387 = vunpack.c.l.b16 %v375
      %v388 = vunpack.c.l.b16 %v376
      %v389 = vunpack.c.l.b16 %v377
      %v390 = vunpack.c.l.b16 %v378
      %v391 = vpack.c.b16 %v388, %v387
      %v392 = vpack.c.b16 %v390, %v389
      %vm395 = vcmask 261120
      %v397 = vsel %vm395, %v373, 0
      %399 = vmatpush.bf16.msra.mxu0 0
      %400 = vmatpush.bf16.msra.mxu0 0
      %401 = vmatpush.bf16.msra.mxu0 0
      %402 = vmatpush.bf16.msra.mxu0 0
      %403 = vmatpush.bf16.msra.mxu0 0
      %404 = vmatpush.bf16.msra.mxu0 0
      %405 = vmatpush.bf16.msra.mxu0 %v392
      %406 = vmatpush.bf16.msra.mxu0 %v391
      %407 = vmatmul.bf16.gmra.mxu0 %v397
      %v408 = vpop.f32.mrf.mxu0
      %v409 = vadd.f32 %v381, %v408
      %v410 = vpop.f32.mrf.mxu0
      %411 = vdwg.mxu0
      %v412 = vld [vmem:[%s4] sm:$0xf]
      %v413 = vld [vmem:[%s4 + $0x4] sm:$0xf]
      %v414 = vld [vmem:[%s4 + $0x8] sm:$0xf]
      %v415 = vld [vmem:[%s4 + $0xc] sm:$0xf]
      %v416 = vld [vmem:[%s5] sm:$0x1]
      %v418 = vperm.slane %v416, 0
      %v424 = vunpack.c.l.b16 %v412
      %v425 = vunpack.c.l.b16 %v413
      %v426 = vunpack.c.l.b16 %v414
      %v427 = vunpack.c.l.b16 %v415
      %v428 = vpack.c.b16 %v425, %v424
      %v429 = vpack.c.b16 %v427, %v426
      %v433 = vsel %vm395, %v374, 0
      %435 = vmatpush.bf16.msra.mxu0 0
      %436 = vmatpush.bf16.msra.mxu0 0
      %437 = vmatpush.bf16.msra.mxu0 0
      %438 = vmatpush.bf16.msra.mxu0 0
      %439 = vmatpush.bf16.msra.mxu0 0
      %440 = vmatpush.bf16.msra.mxu0 0
      %441 = vmatpush.bf16.msra.mxu0 %v429
      %442 = vmatpush.bf16.msra.mxu0 %v428
      %443 = vmatmul.bf16.gmra.mxu0 %v433
      %v444 = vpop.f32.mrf.mxu0
      %v445 = vadd.f32 %v418, %v444
      %v446 = vpop.f32.mrf.mxu0
      %447 = vdwg.mxu0
      %v448 = vpack.c.bf16 %v409, %v409
      %v449 = vpack.c.bf16 %v445, %v445
      %vm450 = vcmask 64512
      %v452 = vsel %vm450, %v448, 0
      %v455 = vsel %vm450, %v449, 0
      %457 = vmatpush.bf16.xpose.msra.mxu0 0
      %458 = vmatpush.bf16.xpose.msra.mxu0 0
      %459 = vmatpush.bf16.xpose.msra.mxu0 0
      %460 = vmatpush.bf16.xpose.msra.mxu0 0
      %461 = vmatpush.bf16.xpose.msra.mxu0 0
      %462 = vmatpush.bf16.xpose.msra.mxu0 0
      %463 = vmatpush.bf16.xpose.msra.mxu0 0
      %464 = vmatpush.bf16.xpose.msra.mxu0 %v455
      %465 = vmatmul.bf16.gmra.mxu0 %v452
      %v466 = vpop.f32.mrf.mxu0
      %v467 = vadd.f32 0.0, %v466
      %v468 = vpop.f32.mrf.mxu0
      %469 = vdwg.mxu0
      %v470 = vmul.f32 %v467, 0.35355338
      %v471 = vsel %vm450, %v470, -inf
      %472 = vmax.xlane.f32.xlu0 %v471
      %v473 = vpop.xlane.xlu0 %472
      %v474 = vsub.f32 %v470, %v473
      %v475 = vmul.f32 %v474, 1.442695
      %v476 = vpow.pop %v475
      %v477 = vsel %vm450, %v476, 0.0
      %478 = vadd.xlane.f32.xlu0 %v477
      %v479 = vpop.xlane.xlu0 %478
      %v480 = vrcp.pop %v479
      %v481 = vmul.f32 %v476, %v480
      %v482 = vpack.c.bf16 %v481, %v481
      %484 = vrot.lane.b32.xlu0 %v449, 96
      %v485 = vpop.permute.xlu0 %484
      %v487 = vsel %vm450, %v482, 0
      %vm489 = vcmask 1043456
      %v491 = vsel %vm489, %v485, 0
      %493 = vmatpush.bf16.msra.mxu0 0
      %494 = vmatpush.bf16.msra.mxu0 0
      %495 = vmatpush.bf16.msra.mxu0 0
      %496 = vmatpush.bf16.msra.mxu0 0
      %497 = vmatpush.bf16.msra.mxu0 0
      %498 = vmatpush.bf16.msra.mxu0 0
      %499 = vmatpush.bf16.msra.mxu0 0
      %500 = vmatpush.bf16.msra.mxu0 %v491
      %501 = vmatmul.bf16.gmra.mxu0 %v487
      %v502 = vpop.f32.mrf.mxu0
      %v503 = vadd.f32 0.0, %v502
      %v504 = vpop.f32.mrf.mxu0
      %505 = vdwg.mxu0
      %507 = vrot.lane.b32.xlu0 %v448, 120
      %v508 = vpop.permute.xlu0 %507
      %509 = vrot.lane.b32.xlu0 %v449, 120
      %v510 = vpop.permute.xlu0 %509
      %v512 = vsel %vm450, %v508, 0
      %v515 = vsel %vm450, %v510, 0
      %517 = vmatpush.bf16.xpose.msra.mxu0 0
      %518 = vmatpush.bf16.xpose.msra.mxu0 0
      %519 = vmatpush.bf16.xpose.msra.mxu0 0
      %520 = vmatpush.bf16.xpose.msra.mxu0 0
      %521 = vmatpush.bf16.xpose.msra.mxu0 0
      %522 = vmatpush.bf16.xpose.msra.mxu0 0
      %523 = vmatpush.bf16.xpose.msra.mxu0 0
      %524 = vmatpush.bf16.xpose.msra.mxu0 %v515
      %525 = vmatmul.bf16.gmra.mxu0 %v512
      %v526 = vpop.f32.mrf.mxu0
      %v527 = vadd.f32 0.0, %v526
      %v528 = vpop.f32.mrf.mxu0
      %529 = vdwg.mxu0
      %v530 = vmul.f32 %v527, 0.35355338
      %v531 = vsel %vm450, %v530, -inf
      %532 = vmax.xlane.f32.xlu0 %v531
      %v533 = vpop.xlane.xlu0 %532
      %v534 = vsub.f32 %v530, %v533
      %v535 = vmul.f32 %v534, 1.442695
      %v536 = vpow.pop %v535
      %v537 = vsel %vm450, %v536, 0.0
      %538 = vadd.xlane.f32.xlu0 %v537
      %v539 = vpop.xlane.xlu0 %538
      %v540 = vrcp.pop %v539
      %v541 = vmul.f32 %v536, %v540
      %v542 = vpack.c.bf16 %v541, %v541
      %543 = vrot.lane.b32.xlu0 %v449, 88
      %v544 = vpop.permute.xlu0 %543
      %v546 = vsel %vm450, %v542, 0
      %v549 = vsel %vm489, %v544, 0
      %551 = vmatpush.bf16.msra.mxu0 0
      %552 = vmatpush.bf16.msra.mxu0 0
      %553 = vmatpush.bf16.msra.mxu0 0
      %554 = vmatpush.bf16.msra.mxu0 0
      %555 = vmatpush.bf16.msra.mxu0 0
      %556 = vmatpush.bf16.msra.mxu0 0
      %557 = vmatpush.bf16.msra.mxu0 0
      %558 = vmatpush.bf16.msra.mxu0 %v549
      %559 = vmatmul.bf16.gmra.mxu0 %v546
      %v560 = vpop.f32.mrf.mxu0
      %v561 = vadd.f32 0.0, %v560
      %v562 = vpop.f32.mrf.mxu0
      %563 = vdwg.mxu0
      %564 = vrot.lane.b32.xlu0 %v448, 112
      %v565 = vpop.permute.xlu0 %564
      %566 = vrot.lane.b32.xlu0 %v449, 112
      %v567 = vpop.permute.xlu0 %566
      %v569 = vsel %vm450, %v565, 0
      %v572 = vsel %vm450, %v567, 0
      %574 = vmatpush.bf16.xpose.msra.mxu0 0
      %575 = vmatpush.bf16.xpose.msra.mxu0 0
      %576 = vmatpush.bf16.xpose.msra.mxu0 0
      %577 = vmatpush.bf16.xpose.msra.mxu0 0
      %578 = vmatpush.bf16.xpose.msra.mxu0 0
      %579 = vmatpush.bf16.xpose.msra.mxu0 0
      %580 = vmatpush.bf16.xpose.msra.mxu0 0
      %581 = vmatpush.bf16.xpose.msra.mxu0 %v572
      %582 = vmatmul.bf16.gmra.mxu0 %v569
      %v583 = vpop.f32.mrf.mxu0
      %v584 = vadd.f32 0.0, %v583
      %v585 = vpop.f32.mrf.mxu0
      %586 = vdwg.mxu0
      %v587 = vmul.f32 %v584, 0.35355338
      %v588 = vsel %vm450, %v587, -inf
      %589 = vmax.xlane.f32.xlu0 %v588
      %v590 = vpop.xlane.xlu0 %589
      %v591 = vsub.f32 %v587, %v590
      %v592 = vmul.f32 %v591, 1.442695
      %v593 = vpow.pop %v592
      %v594 = vsel %vm450, %v593, 0.0
      %595 = vadd.xlane.f32.xlu0 %v594
      %v596 = vpop.xlane.xlu0 %595
      %v597 = vrcp.pop %v596
      %v598 = vmul.f32 %v593, %v597
      %v599 = vpack.c.bf16 %v598, %v598
      %600 = vrot.lane.b32.xlu0 %v449, 80
      %v601 = vpop.permute.xlu0 %600
      %v603 = vsel %vm450, %v599, 0
      %v606 = vsel %vm489, %v601, 0
      %608 = vmatpush.bf16.msra.mxu0 0
      %609 = vmatpush.bf16.msra.mxu0 0
      %610 = vmatpush.bf16.msra.mxu0 0
      %611 = vmatpush.bf16.msra.mxu0 0
      %612 = vmatpush.bf16.msra.mxu0 0
      %613 = vmatpush.bf16.msra.mxu0 0
      %614 = vmatpush.bf16.msra.mxu0 0
      %615 = vmatpush.bf16.msra.mxu0 %v606
      %616 = vmatmul.bf16.gmra.mxu0 %v603
      %v617 = vpop.f32.mrf.mxu0
      %v618 = vadd.f32 0.0, %v617
      %v619 = vpop.f32.mrf.mxu0
      %620 = vdwg.mxu0
      %621 = vrot.lane.b32.xlu0 %v448, 104
      %v622 = vpop.permute.xlu0 %621
      %623 = vrot.lane.b32.xlu0 %v449, 104
      %v624 = vpop.permute.xlu0 %623
      %v626 = vsel %vm450, %v622, 0
      %v629 = vsel %vm450, %v624, 0
      %631 = vmatpush.bf16.xpose.msra.mxu0 0
      %632 = vmatpush.bf16.xpose.msra.mxu0 0
      %633 = vmatpush.bf16.xpose.msra.mxu0 0
      %634 = vmatpush.bf16.xpose.msra.mxu0 0
      %635 = vmatpush.bf16.xpose.msra.mxu0 0
      %636 = vmatpush.bf16.xpose.msra.mxu0 0
      %637 = vmatpush.bf16.xpose.msra.mxu0 0
      %638 = vmatpush.bf16.xpose.msra.mxu0 %v629
      %639 = vmatmul.bf16.gmra.mxu0 %v626
      %v640 = vpop.f32.mrf.mxu0
      %v641 = vadd.f32 0.0, %v640
      %v642 = vpop.f32.mrf.mxu0
      %643 = vdwg.mxu0
      %v644 = vmul.f32 %v641, 0.35355338
      %v645 = vsel %vm450, %v644, -inf
      %646 = vmax.xlane.f32.xlu0 %v645
      %v647 = vpop.xlane.xlu0 %646
      %v648 = vsub.f32 %v644, %v647
      %v649 = vmul.f32 %v648, 1.442695
      %v650 = vpow.pop %v649
      %v651 = vsel %vm450, %v650, 0.0
      %652 = vadd.xlane.f32.xlu0 %v651
      %v653 = vpop.xlane.xlu0 %652
      %v654 = vrcp.pop %v653
      %v655 = vmul.f32 %v650, %v654
      %v656 = vpack.c.bf16 %v655, %v655
      %657 = vrot.lane.b32.xlu0 %v449, 72
      %v658 = vpop.permute.xlu0 %657
      %v660 = vsel %vm450, %v656, 0
      %v663 = vsel %vm489, %v658, 0
      %665 = vmatpush.bf16.msra.mxu0 0
      %666 = vmatpush.bf16.msra.mxu0 0
      %667 = vmatpush.bf16.msra.mxu0 0
      %668 = vmatpush.bf16.msra.mxu0 0
      %669 = vmatpush.bf16.msra.mxu0 0
      %670 = vmatpush.bf16.msra.mxu0 0
      %671 = vmatpush.bf16.msra.mxu0 0
      %672 = vmatpush.bf16.msra.mxu0 %v663
      %673 = vmatmul.bf16.gmra.mxu0 %v660
      %v674 = vpop.f32.mrf.mxu0
      %v675 = vadd.f32 0.0, %v674
      %v676 = vpop.f32.mrf.mxu0
      %677 = vdwg.mxu0
      %679 = vrot.lane.b32.xlu0 %v561, 8
      %v680 = vpop.permute.xlu0 %679
      %683 = vrot.lane.b32.xlu0 %v618, 16
      %v684 = vpop.permute.xlu0 %683
      %687 = vrot.lane.b32.xlu0 %v675, 24
      %v688 = vpop.permute.xlu0 %687
      %v690 = vsel %vm450, %v503, %v680
      %vm691 = vcmask 130048
      %v692 = vsel %vm691, %v690, %v684
      %vm693 = vcmask 195584
      %v694 = vsel %vm693, %v692, %v688
      %v695 = vpack.c.bf16 %v694, %v694
      %v696 = vld [vmem:[%s6] sm:$0xf]
      %v697 = vld [vmem:[%s6 + $0x4] sm:$0xf]
      %v698 = vld [vmem:[%s6 + $0x8] sm:$0xf]
      %v699 = vld [vmem:[%s6 + $0xc] sm:$0xf]
      %v700 = vld [vmem:[%s7] sm:$0x1]
      %v702 = vperm.slane %v700, 0
      %v708 = vunpack.c.l.b16 %v696
      %v709 = vunpack.c.l.b16 %v697
      %v710 = vunpack.c.l.b16 %v698
      %v711 = vunpack.c.l.b16 %v699
      %v712 = vpack.c.b16 %v709, %v708
      %v713 = vpack.c.b16 %v711, %v710
      %v717 = vsel %vm395, %v695, 0
      %719 = vmatpush.bf16.msra.mxu0 0
      %720 = vmatpush.bf16.msra.mxu0 0
      %721 = vmatpush.bf16.msra.mxu0 0
      %722 = vmatpush.bf16.msra.mxu0 0
      %723 = vmatpush.bf16.msra.mxu0 0
      %724 = vmatpush.bf16.msra.mxu0 0
      %725 = vmatpush.bf16.msra.mxu0 %v713
      %726 = vmatpush.bf16.msra.mxu0 %v712
      %727 = vmatmul.bf16.gmra.mxu0 %v717
      %v728 = vpop.f32.mrf.mxu0
      %v729 = vadd.f32 %v702, %v728
      %v730 = vpop.f32.mrf.mxu0
      %731 = vdwg.mxu0
      %v732 = vunpack.c.l.bf16 %v373
      %v733 = vadd.f32 %v732, %v729
      %v734 = vsel %vm395, %v733, 0.0
      %735 = vadd.xlane.f32.xlu0 %v734
      %v736 = vpop.xlane.xlu0 %735
      %v737 = vrcp.pop 32.0
      %v738 = vmul.f32 32.0, %v737
      %v739 = vsub.f32 1.0, %v738
      %v740 = vmul.f32 %v737, %v739
      %v741 = vadd.f32 %v737, %v740
      %vm742 = vweird.f32 %v737
      %v743 = vsel %vm742, %v737, %v741
      %v744 = vmul.f32 %v736, %v743
      %v745 = vsub.f32 %v733, %v744
      %v746 = vmul.f32 %v745, %v745
      %v747 = vsel %vm395, %v746, 0.0
      %748 = vadd.xlane.f32.xlu0 %v747
      %v749 = vpop.xlane.xlu0 %748
      %v750 = vmul.f32 %v749, %v743
      %v751 = vadd.f32 %v750, 1e-05
      %v752 = vrsqrt.pop %v751
      %v753 = vmul.f32 %v752, %v751
      %v754 = vmul.f32 %v753, %v752
      %v755 = vmul.f32 0.5, %v754
      %v756 = vsub.f32 1.5, %v755
      %v757 = vmul.f32 %v752, %v756
      %vm758 = vweird.f32 %v751
      %vm759 = vweird.f32 %v752
      %vm760 = vmor %vm758, %vm759
      %v761 = vsel %vm760, %v752, %v757
      %v762 = vmul.f32 %v745, %v761
      %v763 = vld [vmem:[%s8] sm:$0x1]
      %v765 = vperm.slane %v763, 0
      %v767 = vmul.f32 %v762, %v765
      %v768 = vld [vmem:[%s9] sm:$0x1]
      %v770 = vperm.slane %v768, 0
      %v772 = vadd.f32 %v767, %v770
      %v773 = vpack.c.bf16 %v772, %v772
      %vm774 = vcmask 257024
      %775 = vst.msk [vmem:[%s371] sm:$0xf] %vm774, %v773
      %p776 = scmp.lt.s32.totalorder %s21, 1
      %s777 = scalar_select %p776, %s21, 1
      %s778 = smul.addr %s777, 4
      %s779 = scalar_lea.vmem %s10, %s778
      // Predicated region
      $region61: #{transformer_forward.15} parent=59 // pred_check
        %p780 = pneg %p259
      $region62: #{transformer_forward.15} parent=59 // pred_check_branch
        %782 = sbr.rel (%p780) target = $region64
      $region63: #{transformer_forward.15} parent=59 // pred_region
        _
      $region64: #{transformer_forward.15} parent=59 // pred_fallthru
        _
    $region60: #{transformer_forward.15} parent=5 // pred_fallthru
      _
    %p783 = scmp.le.s32.totalorder 2, %s16
    // Predicated region
    $region65: #{transformer_forward.15} parent=5 // pred_check
      %p784 = pneg %p783
    $region66: #{transformer_forward.15} parent=5 // pred_check_branch
      %786 = sbr.rel (%p784) target = $region68
    $region67: #{transformer_forward.15} parent=5 // pred_region
      %s787 = ssub.s32 %s16, 2
      // Predicated region
      $region69: #{transformer_forward.15} parent=67 // pred_check
        %p788 = pneg %p265
      $region70: #{transformer_forward.15} parent=67 // pred_check_branch
        %790 = sbr.rel (%p788) target = $region72
      $region71: #{transformer_forward.15} parent=67 // pred_region
        %p791 = scmp.lt.s32.totalorder %s22, 1
        %s792 = scalar_select %p791, %s22, 1
        %s793 = smul.addr %s792, 4
        %s794 = scalar_lea.vmem %s10, %s793
      $region72: #{transformer_forward.15} parent=67 // pred_fallthru
        _
    $region68: #{transformer_forward.15} parent=5 // pred_fallthru
      _
  $region6: #{transformer_forward.15} parent=0 // loop_footer
    %s20 = sadd.s32 1, %s16
  $region7: #{transformer_forward.15} parent=0 // loop_footer_branch
    %15 = sbr.rel target = $region3
  $region8: #{transformer_forward.15} parent=0 // loop_exit
    _

// kernel: transformer_forward.12
$region0: #{transformer_forward.12}
  #allocation0 [shape = 'u32[]', space=smem, size = 0x4, offset = 0x4, fixed_abs, tag = 'smem constant byte address 0x4 - core index']
  #allocation1 [shape = 'u32[72,128]{1,0:T(1,128)}', space=vmem, size = 0x9000, scoped, tag = 'internal scratch']
  %s0 = inlined_call_operand.vmem [shape: bf16[16,32], index: 0, kind: input, shape index: {}]
  %s1 = inlined_call_operand.vmem [shape: bf16[32,64], index: 1, kind: input, shape index: {}]
  %s2 = inlined_call_operand.hbm [shape: f32[1,64], index: 2, kind: input, shape index: {}]
  %s3 = inlined_call_operand.vmem [shape: bf16[64,32], index: 3, kind: input, shape index: {}]
  %s4 = inlined_call_operand.hbm [shape: f32[1,32], index: 4, kind: input, shape index: {}]
  %s5 = inlined_call_operand.hbm [shape: f32[1,32], index: 5, kind: input, shape index: {}]
  %s6 = inlined_call_operand.hbm [shape: f32[1,32], index: 6, kind: input, shape index: {}]
  %s7 = inlined_call_operand.vmem [shape: bf16[16,32], index: 7, kind: output, shape index: {}]
  %s8 = sld [smem:[#allocation0]]
  $region54: #{transformer_forward.12} parent=0
    _
  %s10 = ssub.s32 1, %s8
  %s11 = scalar_select 0, %s10, %s8
  $region1: #{transformer_forward.12} parent=0
    #allocation2 [shape = 'u8[512]{0}', space=vmem, size = 0x400, scoped, tag = 'input window, operand 2, single buffered']
    #allocation3 [shape = 's32[1]{0}', space=sflag, size = 0x4, scoped, tag = 'scoped memory for transformer_forward.12']
    #allocation4 [shape = 'u8[512]{0}', space=vmem, size = 0x400, scoped, tag = 'input window, operand 4, single buffered']
    #allocation5 [shape = 's32[1]{0}', space=sflag, size = 0x4, scoped, tag = 'scoped memory for transformer_forward.12']
    #allocation6 [shape = 'u8[512]{0}', space=vmem, size = 0x400, scoped, tag = 'input window, operand 5, single buffered']
    #allocation7 [shape = 'u8[512]{0}', space=vmem, size = 0x400, scoped, tag = 'input window, operand 6, single buffered']
    #allocation8 [shape = 's32[1]{0}', space=sflag, size = 0x4, scoped, tag = 'scoped memory for transformer_forward.12']
    %12 = vsyncpa [#allocation3], 0
    %13 = vsyncpa [#allocation5], 0
    %14 = vsyncpa [#allocation8], 0
    // Predicated region
    $region2: #{transformer_forward.12} parent=1 // pred_check
      _
    $region3: #{transformer_forward.12} parent=1 // pred_check_branch
      %16 = sbr.rel (0) target = $region5
    $region4: #{transformer_forward.12} parent=1 // pred_region
      _
    $region5: #{transformer_forward.12} parent=1 // pred_fallthru
      _
    // Predicated region
    $region6: #{transformer_forward.12} parent=1 // pred_check
      _
    $region7: #{transformer_forward.12} parent=1 // pred_check_branch
      %18 = sbr.rel (0) target = $region9
    $region8: #{transformer_forward.12} parent=1 // pred_region
      _
    $region9: #{transformer_forward.12} parent=1 // pred_fallthru
      _
    // Predicated region
    $region10: #{transformer_forward.12} parent=1 // pred_check
      _
    $region11: #{transformer_forward.12} parent=1 // pred_check_branch
      %20 = sbr.rel (0) target = $region13
    $region12: #{transformer_forward.12} parent=1 // pred_region
      %22 = vsyncadd [#allocation3], 0
      %s24 = sshll.u32 %s2, 4
      %s25 = int_to_ptr.hbm [resolvable:$true] %s24
      %s26 = sshll.u32 [#allocation2], 4
      %s27 = int_to_ptr.vmem [resolvable:$true] %s26
      %29 = dma.hbm_to_vmem [thread:$0]  %s25, 16, %s27, [#allocation3]
    $region13: #{transformer_forward.12} parent=1 // pred_fallthru
      _
    // Predicated region
    $region14: #{transformer_forward.12} parent=1 // pred_check
      _
    $region15: #{transformer_forward.12} parent=1 // pred_check_branch
      %31 = sbr.rel (0) target = $region17
    $region16: #{transformer_forward.12} parent=1 // pred_region
      _
    $region17: #{transformer_forward.12} parent=1 // pred_fallthru
      _
    // Predicated region
    $region18: #{transformer_forward.12} parent=1 // pred_check
      _
    $region19: #{transformer_forward.12} parent=1 // pred_check_branch
      %33 = sbr.rel (0) target = $region21
    $region20: #{transformer_forward.12} parent=1 // pred_region
      %35 = vsyncadd [#allocation5], 0
      %s37 = sshll.u32 %s4, 4
      %s38 = int_to_ptr.hbm [resolvable:$true] %s37
      %s39 = sshll.u32 [#allocation4], 4
      %s40 = int_to_ptr.vmem [resolvable:$true] %s39
      %42 = dma.hbm_to_vmem [thread:$0]  %s38, 16, %s40, [#allocation5]
    $region21: #{transformer_forward.12} parent=1 // pred_fallthru
      _
    // Predicated region
    $region22: #{transformer_forward.12} parent=1 // pred_check
      _
    $region23: #{transformer_forward.12} parent=1 // pred_check_branch
      %44 = sbr.rel (0) target = $region25
    $region24: #{transformer_forward.12} parent=1 // pred_region
      %46 = vsyncadd [#allocation5], 0
      %s48 = sshll.u32 %s5, 4
      %s49 = int_to_ptr.hbm [resolvable:$true] %s48
      %s50 = sshll.u32 [#allocation6], 4
      %s51 = int_to_ptr.vmem [resolvable:$true] %s50
      %53 = dma.hbm_to_vmem [thread:$0]  %s49, 16, %s51, [#allocation5]
    $region25: #{transformer_forward.12} parent=1 // pred_fallthru
      _
    // Predicated region
    $region26: #{transformer_forward.12} parent=1 // pred_check
      _
    $region27: #{transformer_forward.12} parent=1 // pred_check_branch
      %55 = sbr.rel (0) target = $region29
    $region28: #{transformer_forward.12} parent=1 // pred_region
      %57 = vsyncadd [#allocation8], 0
      %s59 = sshll.u32 %s6, 4
      %s60 = int_to_ptr.hbm [resolvable:$true] %s59
      %s61 = sshll.u32 [#allocation7], 4
      %s62 = int_to_ptr.vmem [resolvable:$true] %s61
      %64 = dma.hbm_to_vmem [thread:$0]  %s60, 16, %s62, [#allocation8]
    $region29: #{transformer_forward.12} parent=1 // pred_fallthru
      _
    // Predicated region
    $region30: #{transformer_forward.12} parent=1 // pred_check
      _
    $region31: #{transformer_forward.12} parent=1 // pred_check_branch
      %66 = sbr.rel (0) target = $region33
    $region32: #{transformer_forward.12} parent=1 // pred_region
      %68 = dma.done [#allocation3], 16
    $region33: #{transformer_forward.12} parent=1 // pred_fallthru
      _
    // Predicated region
    $region34: #{transformer_forward.12} parent=1 // pred_check
      _
    $region35: #{transformer_forward.12} parent=1 // pred_check_branch
      %70 = sbr.rel (0) target = $region37
    $region36: #{transformer_forward.12} parent=1 // pred_region
      %72 = dma.done [#allocation5], 16
    $region37: #{transformer_forward.12} parent=1 // pred_fallthru
      _
    // Predicated region
    $region38: #{transformer_forward.12} parent=1 // pred_check
      _
    $region39: #{transformer_forward.12} parent=1 // pred_check_branch
      %74 = sbr.rel (0) target = $region41
    $region40: #{transformer_forward.12} parent=1 // pred_region
      %76 = dma.done [#allocation5], 16
    $region41: #{transformer_forward.12} parent=1 // pred_fallthru
      _
    // Predicated region
    $region42: #{transformer_forward.12} parent=1 // pred_check
      _
    $region43: #{transformer_forward.12} parent=1 // pred_check_branch
      %78 = sbr.rel (0) target = $region45
    $region44: #{transformer_forward.12} parent=1 // pred_region
      %80 = dma.done [#allocation8], 16
    $region45: #{transformer_forward.12} parent=1 // pred_fallthru
      _
    %v82 = vld [vmem:[%s0] sm:$0xf]
    %v83 = vld [vmem:[%s0 + $0x4] sm:$0xf]
    %v84 = vld [vmem:[%s1] sm:$0xf]
    %v85 = vld [vmem:[%s1 + $0x4] sm:$0xf]
    %v86 = vld [vmem:[%s1 + $0x8] sm:$0xf]
    %v87 = vld [vmem:[%s1 + $0xc] sm:$0xf]
    %v88 = vld [vmem:[#allocation2] sm:$0x1]
    %v90 = vperm.slane %v88, 0
    %v94 = vunpack.c.l.b16 %v82
    %v95 = vunpack.c.l.b16 %v83
    %v96 = vpack.c.b16 %v95, %v94
    %v101 = vunpack.c.l.b16 %v84
    %v102 = vunpack.c.l.b16 %v85
    %v103 = vunpack.c.l.b16 %v86
    %v104 = vunpack.c.l.b16 %v87
    %v105 = vpack.c.b16 %v102, %v101
    %v106 = vpack.c.b16 %v104, %v103
    %vm109 = vcmask 261120
    %v111 = vsel %vm109, %v96, 0
    %113 = vmatpush.bf16.msra.mxu0 0
    %114 = vmatpush.bf16.msra.mxu0 0
    %115 = vmatpush.bf16.msra.mxu0 0
    %116 = vmatpush.bf16.msra.mxu0 0
    %117 = vmatpush.bf16.msra.mxu0 0
    %118 = vmatpush.bf16.msra.mxu0 0
    %119 = vmatpush.bf16.msra.mxu0 %v106
    %120 = vmatpush.bf16.msra.mxu0 %v105
    %121 = vmatmul.bf16.gmra.mxu0 %v111
    %v122 = vpop.f32.mrf.mxu0
    %v123 = vadd.f32 %v90, %v122
    %v124 = vpop.f32.mrf.mxu0
    %v125 = vadd.f32 %v90, %v124
    %126 = vdwg.mxu0
    %v127 = vmax.f32 %v123, 0.0
    %v128 = vmax.f32 %v125, 0.0
    %v129 = vpack.c.bf16 %v128, %v127
    %v130 = vld [vmem:[%s3] sm:$0xf]
    %v131 = vld [vmem:[%s3 + $0x4] sm:$0xf]
    %v132 = vld [vmem:[%s3 + $0x8] sm:$0xf]
    %v133 = vld [vmem:[%s3 + $0xc] sm:$0xf]
    %v134 = vld [vmem:[%s3 + $0x10] sm:$0xf]
    %v135 = vld [vmem:[%s3 + $0x14] sm:$0xf]
    %v136 = vld [vmem:[%s3 + $0x18] sm:$0xf]
    %v137 = vld [vmem:[%s3 + $0x1c] sm:$0xf]
    %v138 = vld [vmem:[#allocation4] sm:$0x1]
    %v140 = vperm.slane %v138, 0
    %v150 = vunpack.c.l.b16 %v130
    %v151 = vunpack.c.l.b16 %v131
    %v152 = vunpack.c.l.b16 %v132
    %v153 = vunpack.c.l.b16 %v133
    %v154 = vunpack.c.l.b16 %v134
    %v155 = vunpack.c.l.b16 %v135
    %v156 = vunpack.c.l.b16 %v136
    %v157 = vunpack.c.l.b16 %v137
    %v158 = vpack.c.b16 %v151, %v150
    %v159 = vpack.c.b16 %v153, %v152
    %v160 = vpack.c.b16 %v155, %v154
    %v161 = vpack.c.b16 %v157, %v156
    %vm166 = vcmask 523264
    %v168 = vsel %vm166, %v129, 0
    %170 = vmatpush.bf16.msra.mxu0 0
    %171 = vmatpush.bf16.msra.mxu0 0
    %172 = vmatpush.bf16.msra.mxu0 0
    %173 = vmatpush.bf16.msra.mxu0 0
    %174 = vmatpush.bf16.msra.mxu0 %v161
    %175 = vmatpush.bf16.msra.mxu0 %v160
    %176 = vmatpush.bf16.msra.mxu0 %v159
    %177 = vmatpush.bf16.msra.mxu0 %v158
    %178 = vmatmul.bf16.gmra.mxu0 %v168
    %v179 = vpop.f32.mrf.mxu0
    %v180 = vadd.f32 %v140, %v179
    %v181 = vpop.f32.mrf.mxu0
    %v182 = vadd.f32 %v140, %v181
    %183 = vdwg.mxu0
    %v184 = vunpack.c.l.bf16 %v82
    %v185 = vunpack.c.l.bf16 %v83
    %v186 = vadd.f32 %v184, %v180
    %v187 = vadd.f32 %v185, %v182
    %v188 = vsel %vm109, %v186, 0.0
    %189 = vadd.xlane.f32.xlu0 %v188
    %v190 = vpop.xlane.xlu0 %189
    %v191 = vsel %vm109, %v187, 0.0
    %192 = vadd.xlane.f32.xlu0 %v191
    %v193 = vpop.xlane.xlu0 %192
    %v194 = vrcp.pop 32.0
    %v195 = vmul.f32 32.0, %v194
    %v196 = vsub.f32 1.0, %v195
    %v197 = vmul.f32 %v194, %v196
    %v198 = vadd.f32 %v194, %v197
    %vm199 = vweird.f32 %v194
    %v200 = vsel %vm199, %v194, %v198
    %v201 = vmul.f32 %v190, %v200
    %v202 = vmul.f32 %v193, %v200
    %v203 = vsub.f32 %v186, %v201
    %v204 = vsub.f32 %v187, %v202
    %v205 = vmul.f32 %v203, %v203
    %v206 = vmul.f32 %v204, %v204
    %v207 = vsel %vm109, %v205, 0.0
    %208 = vadd.xlane.f32.xlu0 %v207
    %v209 = vpop.xlane.xlu0 %208
    %v210 = vsel %vm109, %v206, 0.0
    %211 = vadd.xlane.f32.xlu0 %v210
    %v212 = vpop.xlane.xlu0 %211
    %v213 = vmul.f32 %v209, %v200
    %v214 = vmul.f32 %v212, %v200
    %v215 = vadd.f32 %v213, 1e-05
    %v216 = vadd.f32 %v214, 1e-05
    %v217 = vrsqrt.pop %v215
    %v218 = vmul.f32 %v217, %v215
    %v219 = vmul.f32 %v218, %v217
    %v220 = vmul.f32 0.5, %v219
    %v221 = vsub.f32 1.5, %v220
    %v222 = vmul.f32 %v217, %v221
    %vm223 = vweird.f32 %v215
    %vm224 = vweird.f32 %v217
    %vm225 = vmor %vm223, %vm224
    %v226 = vsel %vm225, %v217, %v222
    %v227 = vrsqrt.pop %v216
    %v228 = vmul.f32 %v227, %v216
    %v229 = vmul.f32 %v228, %v227
    %v230 = vmul.f32 0.5, %v229
    %v231 = vsub.f32 1.5, %v230
    %v232 = vmul.f32 %v227, %v231
    %vm233 = vweird.f32 %v216
    %vm234 = vweird.f32 %v227
    %vm235 = vmor %vm233, %vm234
    %v236 = vsel %vm235, %v227, %v232
    %v237 = vmul.f32 %v203, %v226
    %v238 = vmul.f32 %v204, %v236
    %v239 = vld [vmem:[#allocation6] sm:$0x1]
    %v241 = vperm.slane %v239, 0
    %v243 = vmul.f32 %v237, %v241
    %v244 = vmul.f32 %v238, %v241
    %v245 = vld [vmem:[#allocation7] sm:$0x1]
    %v247 = vperm.slane %v245, 0
    %v249 = vadd.f32 %v243, %v247
    %v250 = vadd.f32 %v244, %v247
    %v251 = vpack.c.bf16 %v249, %v249
    %v252 = vpack.c.bf16 %v250, %v250
    %vm253 = vcmask 257024
    %254 = vst.msk [vmem:[%s7] sm:$0xf] %vm253, %v251
    %255 = vst.msk [vmem:[%s7 + $0x4] sm:$0xf] %vm253, %v252
    // Predicated region
    $region46: #{transformer_forward.12} parent=1 // pred_check
      _
    $region47: #{transformer_forward.12} parent=1 // pred_check_branch
      %257 = sbr.rel (0) target = $region49
    $region48: #{transformer_forward.12} parent=1 // pred_region
      _
    $region49: #{transformer_forward.12} parent=1 // pred_fallthru
      _
    // Predicated region
    $region50: #{transformer_forward.12} parent=1 // pred_check
      _
    $region51: #{transformer_forward.12} parent=1 // pred_check_branch
      %259 = sbr.rel (0) target = $region53
    $region52: #{transformer_forward.12} parent=1 // pred_region
      _
    $region53: #{transformer_forward.12} parent=1 // pred_fallthru
      _
    %260 = vsyncpa [#allocation3], 1
    %261 = vsyncpa [#allocation5], 1
    %262 = vsyncpa [#allocation8], 1

// kernel: transformer_forward.13
$region0: #{transformer_forward.13}
  #allocation0 [shape = 'u32[]', space=smem, size = 0x4, offset = 0x4, fixed_abs, tag = 'smem constant byte address 0x4 - core index']
  #allocation1 [shape = 'u32[72,128]{1,0:T(1,128)}', space=vmem, size = 0x9000, scoped, tag = 'internal scratch']
  %s0 = inlined_call_operand.vmem [shape: bf16[2,8,32], index: 0, kind: input, shape index: {}, may-alias: {0,1}]
  %s1 = inlined_call_operand.vmem [shape: bf16[2,8,32], index: 1, kind: input, shape index: {}, may-alias: {0,1}]
  %s2 = inlined_call_operand.vmem [shape: bf16[32,32], index: 2, kind: input, shape index: {}]
  %s3 = inlined_call_operand.hbm [shape: f32[1,32], index: 3, kind: input, shape index: {}]
  %s4 = inlined_call_operand.vmem [shape: bf16[32,64], index: 4, kind: input, shape index: {}]
  %s5 = inlined_call_operand.hbm [shape: f32[1,64], index: 5, kind: input, shape index: {}]
  %s6 = inlined_call_operand.hbm [shape: bf16[32,32], index: 6, kind: input, shape index: {}]
  %s7 = inlined_call_operand.hbm [shape: f32[1,32], index: 7, kind: input, shape index: {}]
  %s8 = inlined_call_operand.hbm [shape: f32[1,32], index: 8, kind: input, shape index: {}]
  %s9 = inlined_call_operand.hbm [shape: f32[1,32], index: 9, kind: input, shape index: {}]
  %s10 = inlined_call_operand.vmem [shape: bf16[2,8,32], index: 10, kind: output, shape index: {}]
  %s11 = sld [smem:[#allocation0]]
  $region97: #{transformer_forward.13} parent=0
    _
  %s13 = ssub.s32 1, %s11
  %s14 = scalar_select 0, %s13, %s11
  $region1: #{transformer_forward.13} parent=0
    #allocation2 [shape = 'u8[512]{0}', space=vmem, size = 0x400, scoped, tag = 'input window, operand 3, single buffered']
    #allocation3 [shape = 's32[2]{0}', space=sflag, size = 0x8, scoped, tag = 'scoped memory for transformer_forward.13']
    #allocation4 [shape = 'u8[512]{0}', space=vmem, size = 0x400, scoped, tag = 'input window, operand 5, single buffered']
    #allocation5 [shape = 's32[1]{0}', space=sflag, size = 0x4, scoped, tag = 'scoped memory for transformer_forward.13']
    #allocation6 [shape = 'u8[8192]{0}', space=vmem, size = 0x2000, scoped, tag = 'input window, operand 6, single buffered']
    #allocation7 [shape = 'u8[512]{0}', space=vmem, size = 0x400, scoped, tag = 'input window, operand 7, single buffered']
    #allocation8 [shape = 's32[1]{0}', space=sflag, size = 0x4, scoped, tag = 'scoped memory for transformer_forward.13']
    #allocation9 [shape = 'u8[512]{0}', space=vmem, size = 0x400, scoped, tag = 'input window, operand 8, single buffered']
    #allocation10 [shape = 'u8[512]{0}', space=vmem, size = 0x400, scoped, tag = 'input window, operand 9, single buffered']
    #allocation11 [shape = 's32[1]{0}', space=sflag, size = 0x4, scoped, tag = 'scoped memory for transformer_forward.13']
    %15 = vsyncpa [#allocation3], 0
    %16 = vsyncpa [#allocation5], 0
    %17 = vsyncpa [#allocation8], 0
    %18 = vsyncpa [#allocation11], 0
    loop: start=0, step=1, limit=4
    $region2: #{transformer_forward.13} parent=1 // loop_pre_header
      _
    $region3: #{transformer_forward.13} parent=1 // loop_header
      %s20 = sphi 0, %s24
      %p21 = scmp.ge.s32.totalorder %s20, 4
      %s30 = sphi 0, %s32
      %s33 = sphi 0, %s30
      %s34 = sphi 0, %s33
      %s50 = sphi 0, %s34
      %s56 = sphi 0, %s58
      %s59 = sphi 0, %s56
      %s60 = sphi 0, %s59
      %s76 = sphi 0, %s60
      %s80 = sphi 0, %s80
      %s82 = sphi 0, %s80
      %s83 = sphi 0, %s82
      %s97 = sphi 0, %s83
      %s101 = sphi 0, %s101
      %s103 = sphi 0, %s101
      %s104 = sphi 0, %s103
      %s118 = sphi 0, %s104
      %s122 = sphi 0, %s122
      %s124 = sphi 0, %s122
      %s125 = sphi 0, %s124
      %s139 = sphi 0, %s125
      %s143 = sphi 0, %s143
      %s145 = sphi 0, %s143
      %s146 = sphi 0, %s145
      %s160 = sphi 0, %s146
      %s164 = sphi 0, %s164
      %s166 = sphi 0, %s164
      %s167 = sphi 0, %s166
      %s181 = sphi 0, %s167
      %s185 = sphi 0, %s185
      %s187 = sphi 0, %s185
      %s188 = sphi 0, %s187
      %s202 = sphi 0, %s188
      %s206 = sphi 0, %s206
      %s208 = sphi 0, %s206
      %s209 = sphi 0, %s208
      %s223 = sphi 0, %s209
      %s227 = sphi 0, %s227
      %s229 = sphi 0, %s227
      %s230 = sphi 0, %s229
      %s244 = sphi 0, %s230
      %s250 = sphi 0, %s252
      %s253 = sphi 0, %s250
      %s254 = sphi 0, %s253
      %s270 = sphi 0, %s254
    $region4: #{transformer_forward.13} parent=1 // loop_header_branch
      %23 = sbr.rel (%p21) target = $region8
    $region5: #{transformer_forward.13} parent=1 // loop_body
      %s25 = ssub.s32 %s20, 1
      %s26 = ssub.s32 %s20, 2
      %s27 = sadd.s32 %s20, 1
      %s28 = ssub.s32 %s20, %s27
      %p29 = scmp.eq.s32.totalorder %s28, 0
      %s31 = sadd.s32 %s30, 1
      %s32 = scalar_select %p29, %s30, %s31
      %p35 = pneg %p29
      %p36 = scmp.eq.s32.totalorder %s20, 1
      %p37 = por %p35, %p36
      %p38 = scmp.ne.s32.totalorder %s30, %s33
      %p39 = scmp.eq.s32.totalorder %s20, 0
      %p40 = por %p38, %p39
      %p41 = scmp.ne.s32.totalorder %s30, %s33
      %p42 = scmp.eq.s32.totalorder %s25, 1
      %p43 = por %p41, %p42
      %p44 = scmp.ne.s32.totalorder %s33, %s34
      %p45 = scmp.eq.s32.totalorder %s25, 0
      %p46 = por %p44, %p45
      %p47 = scmp.ne.s32.totalorder %s33, %s34
      %p48 = scmp.eq.s32.totalorder %s26, 1
      %p49 = por %p47, %p48
      %p51 = scmp.ne.s32.totalorder %s34, %s50
      %p52 = scmp.eq.s32.totalorder %s26, 0
      %p53 = por %p51, %p52
      %s54 = ssub.s32 %s20, %s27
      %p55 = scmp.eq.s32.totalorder %s54, 0
      %s57 = sadd.s32 %s56, 1
      %s58 = scalar_select %p55, %s56, %s57
      %p61 = pneg %p55
      %p62 = scmp.eq.s32.totalorder %s20, 1
      %p63 = por %p61, %p62
      %p64 = scmp.ne.s32.totalorder %s56, %s59
      %p65 = scmp.eq.s32.totalorder %s20, 0
      %p66 = por %p64, %p65
      %p67 = scmp.ne.s32.totalorder %s56, %s59
      %p68 = scmp.eq.s32.totalorder %s25, 1
      %p69 = por %p67, %p68
      %p70 = scmp.ne.s32.totalorder %s59, %s60
      %p71 = scmp.eq.s32.totalorder %s25, 0
      %p72 = por %p70, %p71
      %p73 = scmp.ne.s32.totalorder %s59, %s60
      %p74 = scmp.eq.s32.totalorder %s26, 1
      %p75 = por %p73, %p74
      %p77 = scmp.ne.s32.totalorder %s60, %s76
      %p78 = scmp.eq.s32.totalorder %s26, 0
      %p79 = por %p77, %p78
      %s81 = sadd.s32 %s80, 1
      %p84 = scmp.eq.s32.totalorder %s20, 1
      %p85 = scmp.ne.s32.totalorder %s80, %s82
      %p86 = scmp.eq.s32.totalorder %s20, 0
      %p87 = por %p85, %p86
      %p88 = scmp.ne.s32.totalorder %s80, %s82
      %p89 = scmp.eq.s32.totalorder %s25, 1
      %p90 = por %p88, %p89
      %p91 = scmp.ne.s32.totalorder %s82, %s83
      %p92 = scmp.eq.s32.totalorder %s25, 0
      %p93 = por %p91, %p92
      %p94 = scmp.ne.s32.totalorder %s82, %s83
      %p95 = scmp.eq.s32.totalorder %s26, 1
      %p96 = por %p94, %p95
      %p98 = scmp.ne.s32.totalorder %s83, %s97
      %p99 = scmp.eq.s32.totalorder %s26, 0
      %p100 = por %p98, %p99
      %s102 = sadd.s32 %s101, 1
      %p105 = scmp.eq.s32.totalorder %s20, 1
      %p106 = scmp.ne.s32.totalorder %s101, %s103
      %p107 = scmp.eq.s32.totalorder %s20, 0
      %p108 = por %p106, %p107
      %p109 = scmp.ne.s32.totalorder %s101, %s103
      %p110 = scmp.eq.s32.totalorder %s25, 1
      %p111 = por %p109, %p110
      %p112 = scmp.ne.s32.totalorder %s103, %s104
      %p113 = scmp.eq.s32.totalorder %s25, 0
      %p114 = por %p112, %p113
      %p115 = scmp.ne.s32.totalorder %s103, %s104
      %p116 = scmp.eq.s32.totalorder %s26, 1
      %p117 = por %p115, %p116
      %p119 = scmp.ne.s32.totalorder %s104, %s118
      %p120 = scmp.eq.s32.totalorder %s26, 0
      %p121 = por %p119, %p120
      %s123 = sadd.s32 %s122, 1
      %p126 = scmp.eq.s32.totalorder %s20, 1
      %p127 = scmp.ne.s32.totalorder %s122, %s124
      %p128 = scmp.eq.s32.totalorder %s20, 0
      %p129 = por %p127, %p128
      %p130 = scmp.ne.s32.totalorder %s122, %s124
      %p131 = scmp.eq.s32.totalorder %s25, 1
      %p132 = por %p130, %p131
      %p133 = scmp.ne.s32.totalorder %s124, %s125
      %p134 = scmp.eq.s32.totalorder %s25, 0
      %p135 = por %p133, %p134
      %p136 = scmp.ne.s32.totalorder %s124, %s125
      %p137 = scmp.eq.s32.totalorder %s26, 1
      %p138 = por %p136, %p137
      %p140 = scmp.ne.s32.totalorder %s125, %s139
      %p141 = scmp.eq.s32.totalorder %s26, 0
      %p142 = por %p140, %p141
      %s144 = sadd.s32 %s143, 1
      %p147 = scmp.eq.s32.totalorder %s20, 1
      %p148 = scmp.ne.s32.totalorder %s143, %s145
      %p149 = scmp.eq.s32.totalorder %s20, 0
      %p150 = por %p148, %p149
      %p151 = scmp.ne.s32.totalorder %s143, %s145
      %p152 = scmp.eq.s32.totalorder %s25, 1
      %p153 = por %p151, %p152
      %p154 = scmp.ne.s32.totalorder %s145, %s146
      %p155 = scmp.eq.s32.totalorder %s25, 0
      %p156 = por %p154, %p155
      %p157 = scmp.ne.s32.totalorder %s145, %s146
      %p158 = scmp.eq.s32.totalorder %s26, 1
      %p159 = por %p157, %p158
      %p161 = scmp.ne.s32.totalorder %s146, %s160
      %p162 = scmp.eq.s32.totalorder %s26, 0
      %p163 = por %p161, %p162
      %s165 = sadd.s32 %s164, 1
      %p168 = scmp.eq.s32.totalorder %s20, 1
      %p169 = scmp.ne.s32.totalorder %s164, %s166
      %p170 = scmp.eq.s32.totalorder %s20, 0
      %p171 = por %p169, %p170
      %p172 = scmp.ne.s32.totalorder %s164, %s166
      %p173 = scmp.eq.s32.totalorder %s25, 1
      %p174 = por %p172, %p173
      %p175 = scmp.ne.s32.totalorder %s166, %s167
      %p176 = scmp.eq.s32.totalorder %s25, 0
      %p177 = por %p175, %p176
      %p178 = scmp.ne.s32.totalorder %s166, %s167
      %p179 = scmp.eq.s32.totalorder %s26, 1
      %p180 = por %p178, %p179
      %p182 = scmp.ne.s32.totalorder %s167, %s181
      %p183 = scmp.eq.s32.totalorder %s26, 0
      %p184 = por %p182, %p183
      %s186 = sadd.s32 %s185, 1
      %p189 = scmp.eq.s32.totalorder %s20, 1
      %p190 = scmp.ne.s32.totalorder %s185, %s187
      %p191 = scmp.eq.s32.totalorder %s20, 0
      %p192 = por %p190, %p191
      %p193 = scmp.ne.s32.totalorder %s185, %s187
      %p194 = scmp.eq.s32.totalorder %s25, 1
      %p195 = por %p193, %p194
      %p196 = scmp.ne.s32.totalorder %s187, %s188
      %p197 = scmp.eq.s32.totalorder %s25, 0
      %p198 = por %p196, %p197
      %p199 = scmp.ne.s32.totalorder %s187, %s188
      %p200 = scmp.eq.s32.totalorder %s26, 1
      %p201 = por %p199, %p200
      %p203 = scmp.ne.s32.totalorder %s188, %s202
      %p204 = scmp.eq.s32.totalorder %s26, 0
      %p205 = por %p203, %p204
      %s207 = sadd.s32 %s206, 1
      %p210 = scmp.eq.s32.totalorder %s20, 1
      %p211 = scmp.ne.s32.totalorder %s206, %s208
      %p212 = scmp.eq.s32.totalorder %s20, 0
      %p213 = por %p211, %p212
      %p214 = scmp.ne.s32.totalorder %s206, %s208
      %p215 = scmp.eq.s32.totalorder %s25, 1
      %p216 = por %p214, %p215
      %p217 = scmp.ne.s32.totalorder %s208, %s209
      %p218 = scmp.eq.s32.totalorder %s25, 0
      %p219 = por %p217, %p218
      %p220 = scmp.ne.s32.totalorder %s208, %s209
      %p221 = scmp.eq.s32.totalorder %s26, 1
      %p222 = por %p220, %p221
      %p224 = scmp.ne.s32.totalorder %s209, %s223
      %p225 = scmp.eq.s32.totalorder %s26, 0
      %p226 = por %p224, %p225
      %s228 = sadd.s32 %s227, 1
      %p231 = scmp.eq.s32.totalorder %s20, 1
      %p232 = scmp.ne.s32.totalorder %s227, %s229
      %p233 = scmp.eq.s32.totalorder %s20, 0
      %p234 = por %p232, %p233
      %p235 = scmp.ne.s32.totalorder %s227, %s229
      %p236 = scmp.eq.s32.totalorder %s25, 1
      %p237 = por %p235, %p236
      %p238 = scmp.ne.s32.totalorder %s229, %s230
      %p239 = scmp.eq.s32.totalorder %s25, 0
      %p240 = por %p238, %p239
      %p241 = scmp.ne.s32.totalorder %s229, %s230
      %p242 = scmp.eq.s32.totalorder %s26, 1
      %p243 = por %p241, %p242
      %p245 = scmp.ne.s32.totalorder %s230, %s244
      %p246 = scmp.eq.s32.totalorder %s26, 0
      %p247 = por %p245, %p246
      %s248 = ssub.s32 %s20, %s27
      %p249 = scmp.eq.s32.totalorder %s248, 0
      %s251 = sadd.s32 %s250, 1
      %s252 = scalar_select %p249, %s250, %s251
      %p255 = pneg %p249
      %p256 = scmp.eq.s32.totalorder %s20, 1
      %p257 = por %p255, %p256
      %p258 = scmp.ne.s32.totalorder %s250, %s253
      %p259 = scmp.eq.s32.totalorder %s20, 0
      %p260 = por %p258, %p259
      %p261 = scmp.ne.s32.totalorder %s250, %s253
      %p262 = scmp.eq.s32.totalorder %s25, 1
      %p263 = por %p261, %p262
      %p264 = scmp.ne.s32.totalorder %s253, %s254
      %p265 = scmp.eq.s32.totalorder %s25, 0
      %p266 = por %p264, %p265
      %p267 = scmp.ne.s32.totalorder %s253, %s254
      %p268 = scmp.eq.s32.totalorder %s26, 1
      %p269 = por %p267, %p268
      %p271 = scmp.ne.s32.totalorder %s254, %s270
      %p272 = scmp.eq.s32.totalorder %s26, 0
      %p273 = por %p271, %p272
      %p274 = scmp.le.s32.totalorder 1, %s20
      %p275 = scmp.lt.s32.totalorder %s20, 3
      %p276 = pnand %p274, %p275
      %p277 = pneg %p276
      // Predicated region
      $region9: #{transformer_forward.13} parent=5 // pred_check
        _
      $region10: #{transformer_forward.13} parent=5 // pred_check_branch
        %279 = sbr.rel (%p276) target = $region12
      $region11: #{transformer_forward.13} parent=5 // pred_region
        %s280 = ssub.s32 %s20, 1
        // Predicated region
        $region13: #{transformer_forward.13} parent=11 // pred_check
          %p281 = pneg %p93
        $region14: #{transformer_forward.13} parent=11 // pred_check_branch
          %283 = sbr.rel (%p281) target = $region16
        $region15: #{transformer_forward.13} parent=11 // pred_region
          _
        $region16: #{transformer_forward.13} parent=11 // pred_fallthru
          _
        // Predicated region
        $region17: #{transformer_forward.13} parent=11 // pred_check
          %p284 = pneg %p114
        $region18: #{transformer_forward.13} parent=11 // pred_check_branch
          %286 = sbr.rel (%p284) target = $region20
        $region19: #{transformer_forward.13} parent=11 // pred_region
          %288 = vsyncadd [#allocation3], 0
          %s290 = sshll.u32 %s3, 4
          %s291 = int_to_ptr.hbm [resolvable:$true] %s290
          %s292 = sshll.u32 [#allocation2], 4
          %s293 = int_to_ptr.vmem [resolvable:$true] %s292
          %295 = dma.hbm_to_vmem [thread:$0]  %s291, 16, %s293, [#allocation3]
        $region20: #{transformer_forward.13} parent=11 // pred_fallthru
          _
        // Predicated region
        $region21: #{transformer_forward.13} parent=11 // pred_check
          %p296 = pneg %p135
        $region22: #{transformer_forward.13} parent=11 // pred_check_branch
          %298 = sbr.rel (%p296) target = $region24
        $region23: #{transformer_forward.13} parent=11 // pred_region
          _
        $region24: #{transformer_forward.13} parent=11 // pred_fallthru
          _
        // Predicated region
        $region25: #{transformer_forward.13} parent=11 // pred_check
          %p299 = pneg %p156
        $region26: #{transformer_forward.13} parent=11 // pred_check_branch
          %301 = sbr.rel (%p299) target = $region28
        $region27: #{transformer_forward.13} parent=11 // pred_region
          %303 = vsyncadd [#allocation5], 0
          %s305 = sshll.u32 %s5, 4
          %s306 = int_to_ptr.hbm [resolvable:$true] %s305
          %s307 = sshll.u32 [#allocation4], 4
          %s308 = int_to_ptr.vmem [resolvable:$true] %s307
          %310 = dma.hbm_to_vmem [thread:$0]  %s306, 16, %s308, [#allocation5]
        $region28: #{transformer_forward.13} parent=11 // pred_fallthru
          _
        // Predicated region
        $region29: #{transformer_forward.13} parent=11 // pred_check
          %p311 = pneg %p177
        $region30: #{transformer_forward.13} parent=11 // pred_check_branch
          %313 = sbr.rel (%p311) target = $region32
        $region31: #{transformer_forward.13} parent=11 // pred_region
          %315 = vsyncadd [#allocation5], 0
          %s316 = sshll.u32 %s6, 4
          %s317 = int_to_ptr.hbm [resolvable:$true] %s316
          %s318 = sshll.u32 [#allocation6], 4
          %s319 = int_to_ptr.vmem [resolvable:$true] %s318
          %324 = dma.hbm_to_vmem [thread:$0]  %s317, 256, %s319, [#allocation5], 64, 64, 4
        $region32: #{transformer_forward.13} parent=11 // pred_fallthru
          _
        // Predicated region
        $region33: #{transformer_forward.13} parent=11 // pred_check
          %p325 = pneg %p198
        $region34: #{transformer_forward.13} parent=11 // pred_check_branch
          %327 = sbr.rel (%p325) target = $region36
        $region35: #{transformer_forward.13} parent=11 // pred_region
          %329 = vsyncadd [#allocation8], 0
          %s331 = sshll.u32 %s7, 4
          %s332 = int_to_ptr.hbm [resolvable:$true] %s331
          %s333 = sshll.u32 [#allocation7], 4
          %s334 = int_to_ptr.vmem [resolvable:$true] %s333
          %336 = dma.hbm_to_vmem [thread:$0]  %s332, 16, %s334, [#allocation8]
        $region36: #{transformer_forward.13} parent=11 // pred_fallthru
          _
        // Predicated region
        $region37: #{transformer_forward.13} parent=11 // pred_check
          %p337 = pneg %p219
        $region38: #{transformer_forward.13} parent=11 // pred_check_branch
          %339 = sbr.rel (%p337) target = $region40
        $region39: #{transformer_forward.13} parent=11 // pred_region
          %341 = vsyncadd [#allocation8], 0
          %s343 = sshll.u32 %s8, 4
          %s344 = int_to_ptr.hbm [resolvable:$true] %s343
          %s345 = sshll.u32 [#allocation9], 4
          %s346 = int_to_ptr.vmem [resolvable:$true] %s345
          %348 = dma.hbm_to_vmem [thread:$0]  %s344, 16, %s346, [#allocation8]
        $region40: #{transformer_forward.13} parent=11 // pred_fallthru
          _
        // Predicated region
        $region41: #{transformer_forward.13} parent=11 // pred_check
          %p349 = pneg %p240
        $region42: #{transformer_forward.13} parent=11 // pred_check_branch
          %351 = sbr.rel (%p349) target = $region44
        $region43: #{transformer_forward.13} parent=11 // pred_region
          %353 = vsyncadd [#allocation11], 0
          %s355 = sshll.u32 %s9, 4
          %s356 = int_to_ptr.hbm [resolvable:$true] %s355
          %s357 = sshll.u32 [#allocation10], 4
          %s358 = int_to_ptr.vmem [resolvable:$true] %s357
          %360 = dma.hbm_to_vmem [thread:$0]  %s356, 16, %s358, [#allocation11]
        $region44: #{transformer_forward.13} parent=11 // pred_fallthru
          _
      $region12: #{transformer_forward.13} parent=5 // pred_fallthru
        _
      %p361 = scmp.lt.s32.totalorder %s20, 2
      // Predicated region
      $region45: #{transformer_forward.13} parent=5 // pred_check
        %p362 = pneg %p361
      $region46: #{transformer_forward.13} parent=5 // pred_check_branch
        %364 = sbr.rel (%p362) target = $region48
      $region47: #{transformer_forward.13} parent=5 // pred_region
        // Predicated region
        $region49: #{transformer_forward.13} parent=47 // pred_check
          %p365 = pneg %p40
        $region50: #{transformer_forward.13} parent=47 // pred_check_branch
          %367 = sbr.rel (%p365) target = $region52
        $region51: #{transformer_forward.13} parent=47 // pred_region
          %p368 = scmp.lt.s32.totalorder %s20, 1
          %s369 = scalar_select %p368, %s20, 1
          %s370 = smul.addr %s369, 4
          %s371 = scalar_lea.vmem %s0, %s370
        $region52: #{transformer_forward.13} parent=47 // pred_fallthru
          _
        // Predicated region
        $region53: #{transformer_forward.13} parent=47 // pred_check
          %p372 = pneg %p66
        $region54: #{transformer_forward.13} parent=47 // pred_check_branch
          %374 = sbr.rel (%p372) target = $region56
        $region55: #{transformer_forward.13} parent=47 // pred_region
          %p375 = scmp.lt.s32.totalorder %s20, 1
          %s376 = scalar_select %p375, %s20, 1
          %s377 = smul.addr %s376, 4
          %s378 = scalar_lea.vmem %s1, %s377
        $region56: #{transformer_forward.13} parent=47 // pred_fallthru
          _
      $region48: #{transformer_forward.13} parent=5 // pred_fallthru
        _
      %p379 = scmp.le.s32.totalorder 1, %s20
      %p380 = scmp.lt.s32.totalorder %s20, 3
      %p381 = pnand %p379, %p380
      %p382 = pneg %p381
      // Predicated region
      $region57: #{transformer_forward.13} parent=5 // pred_check
        _
      $region58: #{transformer_forward.13} parent=5 // pred_check_branch
        %384 = sbr.rel (%p381) target = $region60
      $region59: #{transformer_forward.13} parent=5 // pred_region
        %s385 = ssub.s32 %s20, 1
        // Predicated region
        $region61: #{transformer_forward.13} parent=59 // pred_check
          %p386 = pneg %p114
        $region62: #{transformer_forward.13} parent=59 // pred_check_branch
          %388 = sbr.rel (%p386) target = $region64
        $region63: #{transformer_forward.13} parent=59 // pred_region
          %390 = dma.done [#allocation3], 16
        $region64: #{transformer_forward.13} parent=59 // pred_fallthru
          _
        // Predicated region
        $region65: #{transformer_forward.13} parent=59 // pred_check
          %p391 = pneg %p156
        $region66: #{transformer_forward.13} parent=59 // pred_check_branch
          %393 = sbr.rel (%p391) target = $region68
        $region67: #{transformer_forward.13} parent=59 // pred_region
          %395 = dma.done [#allocation5], 16
        $region68: #{transformer_forward.13} parent=59 // pred_fallthru
          _
        // Predicated region
        $region69: #{transformer_forward.13} parent=59 // pred_check
          %p396 = pneg %p177
        $region70: #{transformer_forward.13} parent=59 // pred_check_branch
          %398 = sbr.rel (%p396) target = $region72
        $region71: #{transformer_forward.13} parent=59 // pred_region
          %400 = dma.done [#allocation5], 256
        $region72: #{transformer_forward.13} parent=59 // pred_fallthru
          _
        // Predicated region
        $region73: #{transformer_forward.13} parent=59 // pred_check
          %p401 = pneg %p198
        $region74: #{transformer_forward.13} parent=59 // pred_check_branch
          %403 = sbr.rel (%p401) target = $region76
        $region75: #{transformer_forward.13} parent=59 // pred_region
          %405 = dma.done [#allocation8], 16
        $region76: #{transformer_forward.13} parent=59 // pred_fallthru
          _
        // Predicated region
        $region77: #{transformer_forward.13} parent=59 // pred_check
          %p406 = pneg %p219
        $region78: #{transformer_forward.13} parent=59 // pred_check_branch
          %408 = sbr.rel (%p406) target = $region80
        $region79: #{transformer_forward.13} parent=59 // pred_region
          %410 = dma.done [#allocation8], 16
        $region80: #{transformer_forward.13} parent=59 // pred_fallthru
          _
        // Predicated region
        $region81: #{transformer_forward.13} parent=59 // pred_check
          %p411 = pneg %p240
        $region82: #{transformer_forward.13} parent=59 // pred_check_branch
          %413 = sbr.rel (%p411) target = $region84
        $region83: #{transformer_forward.13} parent=59 // pred_region
          %415 = dma.done [#allocation11], 16
        $region84: #{transformer_forward.13} parent=59 // pred_fallthru
          _
        %p416 = scmp.lt.s32.totalorder %s25, 1
        %s417 = scalar_select %p416, %s25, 1
        %s418 = smul.addr %s417, 4
        %s419 = scalar_lea.vmem %s0, %s418
        %p420 = pneg %p46
        %p421 = pneg %p43
        %p422 = scmp.lt.s32.totalorder %s25, 1
        %s423 = scalar_select %p422, %s25, 1
        %s424 = smul.addr %s423, 4
        %s425 = scalar_lea.vmem %s1, %s424
        %p426 = pneg %p72
        %p427 = pneg %p69
        %p428 = pneg %p93
        %p429 = pneg %p90
        %p430 = pneg %p114
        %p431 = pneg %p111
        %p432 = pneg %p135
        %p433 = pneg %p132
        %p434 = pneg %p156
        %p435 = pneg %p153
        %p436 = pneg %p177
        %p437 = pneg %p174
        %p438 = pneg %p198
        %p439 = pneg %p195
        %p440 = pneg %p219
        %p441 = pneg %p216
        %p442 = pneg %p240
        %p443 = pneg %p237
        %p444 = pneg %p266
        %p445 = pneg %p263
        %p446 = scmp.lt.s32.totalorder %s25, 1
        %s447 = scalar_select %p446, %s25, 1
        %s448 = smul.addr %s447, 4
        %s449 = scalar_lea.vmem %s10, %s448
        %p450 = scmp.lt.s32.totalorder %s25, 1
        %s451 = scalar_select %p450, %s25, 1
        %s452 = smul.addr %s451, 4
        %s453 = scalar_lea.vmem %s0, %s452
        %p454 = scmp.lt.s32.totalorder %s25, 1
        %s455 = scalar_select %p454, %s25, 1
        %s456 = smul.addr %s455, 4
        %s457 = scalar_lea.vmem %s1, %s456
        %p458 = scmp.lt.s32.totalorder %s25, 1
        %s459 = scalar_select %p458, %s25, 1
        %s460 = smul.addr %s459, 4
        %s461 = scalar_lea.vmem %s10, %s460
        %v463 = vld [vmem:[%s453] sm:$0xf]
        %v464 = vld [vmem:[%s457] sm:$0xf]
        %v465 = vld [vmem:[%s2] sm:$0xf]
        %v466 = vld [vmem:[%s2 + $0x4] sm:$0xf]
        %v467 = vld [vmem:[%s2 + $0x8] sm:$0xf]
        %v468 = vld [vmem:[%s2 + $0xc] sm:$0xf]
        %v469 = vld [vmem:[#allocation2] sm:$0x1]
        %v471 = vperm.slane %v469, 0
        %v477 = vunpack.c.l.b16 %v465
        %v478 = vunpack.c.l.b16 %v466
        %v479 = vunpack.c.l.b16 %v467
        %v480 = vunpack.c.l.b16 %v468
        %v481 = vpack.c.b16 %v478, %v477
        %v482 = vpack.c.b16 %v480, %v479
        %vm485 = vcmask 261120
        %v487 = vsel %vm485, %v463, 0
        %489 = vmatpush.bf16.msra.mxu0 0
        %490 = vmatpush.bf16.msra.mxu0 0
        %491 = vmatpush.bf16.msra.mxu0 0
        %492 = vmatpush.bf16.msra.mxu0 0
        %493 = vmatpush.bf16.msra.mxu0 0
        %494 = vmatpush.bf16.msra.mxu0 0
        %495 = vmatpush.bf16.msra.mxu0 %v482
        %496 = vmatpush.bf16.msra.mxu0 %v481
        %497 = vmatmul.bf16.gmra.mxu0 %v487
        %v498 = vpop.f32.mrf.mxu0
        %v499 = vadd.f32 %v471, %v498
        %v500 = vpop.f32.mrf.mxu0
        %501 = vdwg.mxu0
        %v502 = vld [vmem:[%s4] sm:$0xf]
        %v503 = vld [vmem:[%s4 + $0x4] sm:$0xf]
        %v504 = vld [vmem:[%s4 + $0x8] sm:$0xf]
        %v505 = vld [vmem:[%s4 + $0xc] sm:$0xf]
        %v506 = vld [vmem:[#allocation4] sm:$0x1]
        %v508 = vperm.slane %v506, 0
        %v514 = vunpack.c.l.b16 %v502
        %v515 = vunpack.c.l.b16 %v503
        %v516 = vunpack.c.l.b16 %v504
        %v517 = vunpack.c.l.b16 %v505
        %v518 = vpack.c.b16 %v515, %v514
        %v519 = vpack.c.b16 %v517, %v516
        %v523 = vsel %vm485, %v464, 0
        %525 = vmatpush.bf16.msra.mxu0 0
        %526 = vmatpush.bf16.msra.mxu0 0
        %527 = vmatpush.bf16.msra.mxu0 0
        %528 = vmatpush.bf16.msra.mxu0 0
        %529 = vmatpush.bf16.msra.mxu0 0
        %530 = vmatpush.bf16.msra.mxu0 0
        %531 = vmatpush.bf16.msra.mxu0 %v519
        %532 = vmatpush.bf16.msra.mxu0 %v518
        %533 = vmatmul.bf16.gmra.mxu0 %v523
        %v534 = vpop.f32.mrf.mxu0
        %v535 = vadd.f32 %v508, %v534
        %v536 = vpop.f32.mrf.mxu0
        %537 = vdwg.mxu0
        %v538 = vpack.c.bf16 %v499, %v499
        %v539 = vpack.c.bf16 %v535, %v535
        %vm540 = vcmask 64512
        %v542 = vsel %vm540, %v538, 0
        %v545 = vsel %vm540, %v539, 0
        %547 = vmatpush.bf16.xpose.msra.mxu0 0
        %548 = vmatpush.bf16.xpose.msra.mxu0 0
        %549 = vmatpush.bf16.xpose.msra.mxu0 0
        %550 = vmatpush.bf16.xpose.msra.mxu0 0
        %551 = vmatpush.bf16.xpose.msra.mxu0 0
        %552 = vmatpush.bf16.xpose.msra.mxu0 0
        %553 = vmatpush.bf16.xpose.msra.mxu0 0
        %554 = vmatpush.bf16.xpose.msra.mxu0 %v545
        %555 = vmatmul.bf16.gmra.mxu0 %v542
        %v556 = vpop.f32.mrf.mxu0
        %v557 = vadd.f32 0.0, %v556
        %v558 = vpop.f32.mrf.mxu0
        %559 = vdwg.mxu0
        %v560 = vmul.f32 %v557, 0.35355338
        %v561 = vsel %vm540, %v560, -inf
        %562 = vmax.xlane.f32.xlu0 %v561
        %v563 = vpop.xlane.xlu0 %562
        %v564 = vsub.f32 %v560, %v563
        %v565 = vmul.f32 %v564, 1.442695
        %v566 = vpow.pop %v565
        %v567 = vsel %vm540, %v566, 0.0
        %568 = vadd.xlane.f32.xlu0 %v567
        %v569 = vpop.xlane.xlu0 %568
        %v570 = vrcp.pop %v569
        %v571 = vmul.f32 %v566, %v570
        %v572 = vpack.c.bf16 %v571, %v571
        %574 = vrot.lane.b32.xlu0 %v539, 96
        %v575 = vpop.permute.xlu0 %574
        %v577 = vsel %vm540, %v572, 0
        %vm579 = vcmask 1043456
        %v581 = vsel %vm579, %v575, 0
        %583 = vmatpush.bf16.msra.mxu0 0
        %584 = vmatpush.bf16.msra.mxu0 0
        %585 = vmatpush.bf16.msra.mxu0 0
        %586 = vmatpush.bf16.msra.mxu0 0
        %587 = vmatpush.bf16.msra.mxu0 0
        %588 = vmatpush.bf16.msra.mxu0 0
        %589 = vmatpush.bf16.msra.mxu0 0
        %590 = vmatpush.bf16.msra.mxu0 %v581
        %591 = vmatmul.bf16.gmra.mxu0 %v577
        %v592 = vpop.f32.mrf.mxu0
        %v593 = vadd.f32 0.0, %v592
        %v594 = vpop.f32.mrf.mxu0
        %595 = vdwg.mxu0
        %597 = vrot.lane.b32.xlu0 %v538, 120
        %v598 = vpop.permute.xlu0 %597
        %599 = vrot.lane.b32.xlu0 %v539, 120
        %v600 = vpop.permute.xlu0 %599
        %v602 = vsel %vm540, %v598, 0
        %v605 = vsel %vm540, %v600, 0
        %607 = vmatpush.bf16.xpose.msra.mxu0 0
        %608 = vmatpush.bf16.xpose.msra.mxu0 0
        %609 = vmatpush.bf16.xpose.msra.mxu0 0
        %610 = vmatpush.bf16.xpose.msra.mxu0 0
        %611 = vmatpush.bf16.xpose.msra.mxu0 0
        %612 = vmatpush.bf16.xpose.msra.mxu0 0
        %613 = vmatpush.bf16.xpose.msra.mxu0 0
        %614 = vmatpush.bf16.xpose.msra.mxu0 %v605
        %615 = vmatmul.bf16.gmra.mxu0 %v602
        %v616 = vpop.f32.mrf.mxu0
        %v617 = vadd.f32 0.0, %v616
        %v618 = vpop.f32.mrf.mxu0
        %619 = vdwg.mxu0
        %v620 = vmul.f32 %v617, 0.35355338
        %v621 = vsel %vm540, %v620, -inf
        %622 = vmax.xlane.f32.xlu0 %v621
        %v623 = vpop.xlane.xlu0 %622
        %v624 = vsub.f32 %v620, %v623
        %v625 = vmul.f32 %v624, 1.442695
        %v626 = vpow.pop %v625
        %v627 = vsel %vm540, %v626, 0.0
        %628 = vadd.xlane.f32.xlu0 %v627
        %v629 = vpop.xlane.xlu0 %628
        %v630 = vrcp.pop %v629
        %v631 = vmul.f32 %v626, %v630
        %v632 = vpack.c.bf16 %v631, %v631
        %633 = vrot.lane.b32.xlu0 %v539, 88
        %v634 = vpop.permute.xlu0 %633
        %v636 = vsel %vm540, %v632, 0
        %v639 = vsel %vm579, %v634, 0
        %641 = vmatpush.bf16.msra.mxu0 0
        %642 = vmatpush.bf16.msra.mxu0 0
        %643 = vmatpush.bf16.msra.mxu0 0
        %644 = vmatpush.bf16.msra.mxu0 0
        %645 = vmatpush.bf16.msra.mxu0 0
        %646 = vmatpush.bf16.msra.mxu0 0
        %647 = vmatpush.bf16.msra.mxu0 0
        %648 = vmatpush.bf16.msra.mxu0 %v639
        %649 = vmatmul.bf16.gmra.mxu0 %v636
        %v650 = vpop.f32.mrf.mxu0
        %v651 = vadd.f32 0.0, %v650
        %v652 = vpop.f32.mrf.mxu0
        %653 = vdwg.mxu0
        %654 = vrot.lane.b32.xlu0 %v538, 112
        %v655 = vpop.permute.xlu0 %654
        %656 = vrot.lane.b32.xlu0 %v539, 112
        %v657 = vpop.permute.xlu0 %656
        %v659 = vsel %vm540, %v655, 0
        %v662 = vsel %vm540, %v657, 0
        %664 = vmatpush.bf16.xpose.msra.mxu0 0
        %665 = vmatpush.bf16.xpose.msra.mxu0 0
        %666 = vmatpush.bf16.xpose.msra.mxu0 0
        %667 = vmatpush.bf16.xpose.msra.mxu0 0
        %668 = vmatpush.bf16.xpose.msra.mxu0 0
        %669 = vmatpush.bf16.xpose.msra.mxu0 0
        %670 = vmatpush.bf16.xpose.msra.mxu0 0
        %671 = vmatpush.bf16.xpose.msra.mxu0 %v662
        %672 = vmatmul.bf16.gmra.mxu0 %v659
        %v673 = vpop.f32.mrf.mxu0
        %v674 = vadd.f32 0.0, %v673
        %v675 = vpop.f32.mrf.mxu0
        %676 = vdwg.mxu0
        %v677 = vmul.f32 %v674, 0.35355338
        %v678 = vsel %vm540, %v677, -inf
        %679 = vmax.xlane.f32.xlu0 %v678
        %v680 = vpop.xlane.xlu0 %679
        %v681 = vsub.f32 %v677, %v680
        %v682 = vmul.f32 %v681, 1.442695
        %v683 = vpow.pop %v682
        %v684 = vsel %vm540, %v683, 0.0
        %685 = vadd.xlane.f32.xlu0 %v684
        %v686 = vpop.xlane.xlu0 %685
        %v687 = vrcp.pop %v686
        %v688 = vmul.f32 %v683, %v687
        %v689 = vpack.c.bf16 %v688, %v688
        %690 = vrot.lane.b32.xlu0 %v539, 80
        %v691 = vpop.permute.xlu0 %690
        %v693 = vsel %vm540, %v689, 0
        %v696 = vsel %vm579, %v691, 0
        %698 = vmatpush.bf16.msra.mxu0 0
        %699 = vmatpush.bf16.msra.mxu0 0
        %700 = vmatpush.bf16.msra.mxu0 0
        %701 = vmatpush.bf16.msra.mxu0 0
        %702 = vmatpush.bf16.msra.mxu0 0
        %703 = vmatpush.bf16.msra.mxu0 0
        %704 = vmatpush.bf16.msra.mxu0 0
        %705 = vmatpush.bf16.msra.mxu0 %v696
        %706 = vmatmul.bf16.gmra.mxu0 %v693
        %v707 = vpop.f32.mrf.mxu0
        %v708 = vadd.f32 0.0, %v707
        %v709 = vpop.f32.mrf.mxu0
        %710 = vdwg.mxu0
        %711 = vrot.lane.b32.xlu0 %v538, 104
        %v712 = vpop.permute.xlu0 %711
        %713 = vrot.lane.b32.xlu0 %v539, 104
        %v714 = vpop.permute.xlu0 %713
        %v716 = vsel %vm540, %v712, 0
        %v719 = vsel %vm540, %v714, 0
        %721 = vmatpush.bf16.xpose.msra.mxu0 0
        %722 = vmatpush.bf16.xpose.msra.mxu0 0
        %723 = vmatpush.bf16.xpose.msra.mxu0 0
        %724 = vmatpush.bf16.xpose.msra.mxu0 0
        %725 = vmatpush.bf16.xpose.msra.mxu0 0
        %726 = vmatpush.bf16.xpose.msra.mxu0 0
        %727 = vmatpush.bf16.xpose.msra.mxu0 0
        %728 = vmatpush.bf16.xpose.msra.mxu0 %v719
        %729 = vmatmul.bf16.gmra.mxu0 %v716
        %v730 = vpop.f32.mrf.mxu0
        %v731 = vadd.f32 0.0, %v730
        %v732 = vpop.f32.mrf.mxu0
        %733 = vdwg.mxu0
        %v734 = vmul.f32 %v731, 0.35355338
        %v735 = vsel %vm540, %v734, -inf
        %736 = vmax.xlane.f32.xlu0 %v735
        %v737 = vpop.xlane.xlu0 %736
        %v738 = vsub.f32 %v734, %v737
        %v739 = vmul.f32 %v738, 1.442695
        %v740 = vpow.pop %v739
        %v741 = vsel %vm540, %v740, 0.0
        %742 = vadd.xlane.f32.xlu0 %v741
        %v743 = vpop.xlane.xlu0 %742
        %v744 = vrcp.pop %v743
        %v745 = vmul.f32 %v740, %v744
        %v746 = vpack.c.bf16 %v745, %v745
        %747 = vrot.lane.b32.xlu0 %v539, 72
        %v748 = vpop.permute.xlu0 %747
        %v750 = vsel %vm540, %v746, 0
        %v753 = vsel %vm579, %v748, 0
        %755 = vmatpush.bf16.msra.mxu0 0
        %756 = vmatpush.bf16.msra.mxu0 0
        %757 = vmatpush.bf16.msra.mxu0 0
        %758 = vmatpush.bf16.msra.mxu0 0
        %759 = vmatpush.bf16.msra.mxu0 0
        %760 = vmatpush.bf16.msra.mxu0 0
        %761 = vmatpush.bf16.msra.mxu0 0
        %762 = vmatpush.bf16.msra.mxu0 %v753
        %763 = vmatmul.bf16.gmra.mxu0 %v750
        %v764 = vpop.f32.mrf.mxu0
        %v765 = vadd.f32 0.0, %v764
        %v766 = vpop.f32.mrf.mxu0
        %767 = vdwg.mxu0
        %769 = vrot.lane.b32.xlu0 %v651, 8
        %v770 = vpop.permute.xlu0 %769
        %773 = vrot.lane.b32.xlu0 %v708, 16
        %v774 = vpop.permute.xlu0 %773
        %777 = vrot.lane.b32.xlu0 %v765, 24
        %v778 = vpop.permute.xlu0 %777
        %v780 = vsel %vm540, %v593, %v770
        %vm781 = vcmask 130048
        %v782 = vsel %vm781, %v780, %v774
        %vm783 = vcmask 195584
        %v784 = vsel %vm783, %v782, %v778
        %v785 = vpack.c.bf16 %v784, %v784
        %v786 = vld [vmem:[#allocation6] sm:$0xf]
        %v787 = vld [vmem:[#allocation6 + $0x4] sm:$0xf]
        %v788 = vld [vmem:[#allocation6 + $0x8] sm:$0xf]
        %v789 = vld [vmem:[#allocation6 + $0xc] sm:$0xf]
        %v790 = vld [vmem:[#allocation7] sm:$0x1]
        %v792 = vperm.slane %v790, 0
        %v798 = vunpack.c.l.b16 %v786
        %v799 = vunpack.c.l.b16 %v787
        %v800 = vunpack.c.l.b16 %v788
        %v801 = vunpack.c.l.b16 %v789
        %v802 = vpack.c.b16 %v799, %v798
        %v803 = vpack.c.b16 %v801, %v800
        %v807 = vsel %vm485, %v785, 0
        %809 = vmatpush.bf16.msra.mxu0 0
        %810 = vmatpush.bf16.msra.mxu0 0
        %811 = vmatpush.bf16.msra.mxu0 0
        %812 = vmatpush.bf16.msra.mxu0 0
        %813 = vmatpush.bf16.msra.mxu0 0
        %814 = vmatpush.bf16.msra.mxu0 0
        %815 = vmatpush.bf16.msra.mxu0 %v803
        %816 = vmatpush.bf16.msra.mxu0 %v802
        %817 = vmatmul.bf16.gmra.mxu0 %v807
        %v818 = vpop.f32.mrf.mxu0
        %v819 = vadd.f32 %v792, %v818
        %v820 = vpop.f32.mrf.mxu0
        %821 = vdwg.mxu0
        %v822 = vunpack.c.l.bf16 %v463
        %v823 = vadd.f32 %v822, %v819
        %v824 = vsel %vm485, %v823, 0.0
        %825 = vadd.xlane.f32.xlu0 %v824
        %v826 = vpop.xlane.xlu0 %825
        %v827 = vrcp.pop 32.0
        %v828 = vmul.f32 32.0, %v827
        %v829 = vsub.f32 1.0, %v828
        %v830 = vmul.f32 %v827, %v829
        %v831 = vadd.f32 %v827, %v830
        %vm832 = vweird.f32 %v827
        %v833 = vsel %vm832, %v827, %v831
        %v834 = vmul.f32 %v826, %v833
        %v835 = vsub.f32 %v823, %v834
        %v836 = vmul.f32 %v835, %v835
        %v837 = vsel %vm485, %v836, 0.0
        %838 = vadd.xlane.f32.xlu0 %v837
        %v839 = vpop.xlane.xlu0 %838
        %v840 = vmul.f32 %v839, %v833
        %v841 = vadd.f32 %v840, 1e-05
        %v842 = vrsqrt.pop %v841
        %v843 = vmul.f32 %v842, %v841
        %v844 = vmul.f32 %v843, %v842
        %v845 = vmul.f32 0.5, %v844
        %v846 = vsub.f32 1.5, %v845
        %v847 = vmul.f32 %v842, %v846
        %vm848 = vweird.f32 %v841
        %vm849 = vweird.f32 %v842
        %vm850 = vmor %vm848, %vm849
        %v851 = vsel %vm850, %v842, %v847
        %v852 = vmul.f32 %v835, %v851
        %v853 = vld [vmem:[#allocation9] sm:$0x1]
        %v855 = vperm.slane %v853, 0
        %v857 = vmul.f32 %v852, %v855
        %v858 = vld [vmem:[#allocation10] sm:$0x1]
        %v860 = vperm.slane %v858, 0
        %v862 = vadd.f32 %v857, %v860
        %v863 = vpack.c.bf16 %v862, %v862
        %vm864 = vcmask 257024
        %865 = vst.msk [vmem:[%s461] sm:$0xf] %vm864, %v863
        %p866 = scmp.lt.s32.totalorder %s25, 1
        %s867 = scalar_select %p866, %s25, 1
        %s868 = smul.addr %s867, 4
        %s869 = scalar_lea.vmem %s10, %s868
        // Predicated region
        $region85: #{transformer_forward.13} parent=59 // pred_check
          %p870 = pneg %p263
        $region86: #{transformer_forward.13} parent=59 // pred_check_branch
          %872 = sbr.rel (%p870) target = $region88
        $region87: #{transformer_forward.13} parent=59 // pred_region
          _
        $region88: #{transformer_forward.13} parent=59 // pred_fallthru
          _
      $region60: #{transformer_forward.13} parent=5 // pred_fallthru
        _
      %p873 = scmp.le.s32.totalorder 2, %s20
      // Predicated region
      $region89: #{transformer_forward.13} parent=5 // pred_check
        %p874 = pneg %p873
      $region90: #{transformer_forward.13} parent=5 // pred_check_branch
        %876 = sbr.rel (%p874) target = $region92
      $region91: #{transformer_forward.13} parent=5 // pred_region
        %s877 = ssub.s32 %s20, 2
        // Predicated region
        $region93: #{transformer_forward.13} parent=91 // pred_check
          %p878 = pneg %p269
        $region94: #{transformer_forward.13} parent=91 // pred_check_branch
          %880 = sbr.rel (%p878) target = $region96
        $region95: #{transformer_forward.13} parent=91 // pred_region
          %p881 = scmp.lt.s32.totalorder %s26, 1
          %s882 = scalar_select %p881, %s26, 1
          %s883 = smul.addr %s882, 4
          %s884 = scalar_lea.vmem %s10, %s883
        $region96: #{transformer_forward.13} parent=91 // pred_fallthru
          _
      $region92: #{transformer_forward.13} parent=5 // pred_fallthru
        _
    $region6: #{transformer_forward.13} parent=1 // loop_footer
      %s24 = sadd.s32 1, %s20
    $region7: #{transformer_forward.13} parent=1 // loop_footer_branch
      %19 = sbr.rel target = $region3
    $region8: #{transformer_forward.13} parent=1 // loop_exit
      _
    %885 = vsyncpa [#allocation3], 1
    %s886 = scalar_lea.sflag [#allocation3], 1
    %887 = vsyncpa %s886, 1
    %888 = vsyncpa [#allocation5], 1
    %889 = vsyncpa [#allocation8], 1
    %890 = vsyncpa [#allocation11], 1

// kernel: transformer_forward.11
$region0: #{transformer_forward.11}
  #allocation0 [shape = 'u32[]', space=smem, size = 0x4, offset = 0x4, fixed_abs, tag = 'smem constant byte address 0x4 - core index']
  #allocation1 [shape = 'u32[72,128]{1,0:T(1,128)}', space=vmem, size = 0x9000, scoped, tag = 'internal scratch']
  %s0 = inlined_call_operand.vmem [shape: bf16[2,8,32], index: 0, kind: input, shape index: {}, may-alias: {0,1}]
  %s1 = inlined_call_operand.vmem [shape: bf16[2,8,32], index: 1, kind: input, shape index: {}, may-alias: {0,1}]
  %s2 = inlined_call_operand.vmem [shape: bf16[32,32], index: 2, kind: input, shape index: {}]
  %s3 = inlined_call_operand.vmem [shape: f32[1,32], index: 3, kind: input, shape index: {}]
  %s4 = inlined_call_operand.vmem [shape: bf16[32,64], index: 4, kind: input, shape index: {}]
  %s5 = inlined_call_operand.vmem [shape: f32[1,64], index: 5, kind: input, shape index: {}]
  %s6 = inlined_call_operand.hbm [shape: bf16[32,32], index: 6, kind: input, shape index: {}]
  %s7 = inlined_call_operand.hbm [shape: f32[1,32], index: 7, kind: input, shape index: {}]
  %s8 = inlined_call_operand.hbm [shape: f32[1,32], index: 8, kind: input, shape index: {}]
  %s9 = inlined_call_operand.hbm [shape: f32[1,32], index: 9, kind: input, shape index: {}]
  %s10 = inlined_call_operand.vmem [shape: bf16[2,8,32], index: 10, kind: output, shape index: {}]
  %s11 = sld [smem:[#allocation0]]
  $region89: #{transformer_forward.11} parent=0
    _
  %s13 = ssub.s32 1, %s11
  %s14 = scalar_select 0, %s13, %s11
  $region1: #{transformer_forward.11} parent=0
    #allocation2 [shape = 'u8[8192]{0}', space=vmem, size = 0x2000, scoped, tag = 'input window, operand 6, single buffered']
    #allocation3 [shape = 's32[2]{0}', space=sflag, size = 0x8, scoped, tag = 'scoped memory for transformer_forward.11']
    #allocation4 [shape = 'u8[512]{0}', space=vmem, size = 0x400, scoped, tag = 'input window, operand 7, single buffered']
    #allocation5 [shape = 's32[1]{0}', space=sflag, size = 0x4, scoped, tag = 'scoped memory for transformer_forward.11']
    #allocation6 [shape = 'u8[512]{0}', space=vmem, size = 0x400, scoped, tag = 'input window, operand 8, single buffered']
    #allocation7 [shape = 'u8[512]{0}', space=vmem, size = 0x400, scoped, tag = 'input window, operand 9, single buffered']
    #allocation8 [shape = 's32[1]{0}', space=sflag, size = 0x4, scoped, tag = 'scoped memory for transformer_forward.11']
    %15 = vsyncpa [#allocation3], 0
    %16 = vsyncpa [#allocation5], 0
    %17 = vsyncpa [#allocation8], 0
    loop: start=0, step=1, limit=4
    $region2: #{transformer_forward.11} parent=1 // loop_pre_header
      _
    $region3: #{transformer_forward.11} parent=1 // loop_header
      %s19 = sphi 0, %s23
      %p20 = scmp.ge.s32.totalorder %s19, 4
      %s29 = sphi 0, %s31
      %s32 = sphi 0, %s29
      %s33 = sphi 0, %s32
      %s49 = sphi 0, %s33
      %s55 = sphi 0, %s57
      %s58 = sphi 0, %s55
      %s59 = sphi 0, %s58
      %s75 = sphi 0, %s59
      %s79 = sphi 0, %s79
      %s81 = sphi 0, %s79
      %s82 = sphi 0, %s81
      %s96 = sphi 0, %s82
      %s100 = sphi 0, %s100
      %s102 = sphi 0, %s100
      %s103 = sphi 0, %s102
      %s117 = sphi 0, %s103
      %s121 = sphi 0, %s121
      %s123 = sphi 0, %s121
      %s124 = sphi 0, %s123
      %s138 = sphi 0, %s124
      %s142 = sphi 0, %s142
      %s144 = sphi 0, %s142
      %s145 = sphi 0, %s144
      %s159 = sphi 0, %s145
      %s163 = sphi 0, %s163
      %s165 = sphi 0, %s163
      %s166 = sphi 0, %s165
      %s180 = sphi 0, %s166
      %s184 = sphi 0, %s184
      %s186 = sphi 0, %s184
      %s187 = sphi 0, %s186
      %s201 = sphi 0, %s187
      %s205 = sphi 0, %s205
      %s207 = sphi 0, %s205
      %s208 = sphi 0, %s207
      %s222 = sphi 0, %s208
      %s226 = sphi 0, %s226
      %s228 = sphi 0, %s226
      %s229 = sphi 0, %s228
      %s243 = sphi 0, %s229
      %s249 = sphi 0, %s251
      %s252 = sphi 0, %s249
      %s253 = sphi 0, %s252
      %s269 = sphi 0, %s253
    $region4: #{transformer_forward.11} parent=1 // loop_header_branch
      %22 = sbr.rel (%p20) target = $region8
    $region5: #{transformer_forward.11} parent=1 // loop_body
      %s24 = ssub.s32 %s19, 1
      %s25 = ssub.s32 %s19, 2
      %s26 = sadd.s32 %s19, 1
      %s27 = ssub.s32 %s19, %s26
      %p28 = scmp.eq.s32.totalorder %s27, 0
      %s30 = sadd.s32 %s29, 1
      %s31 = scalar_select %p28, %s29, %s30
      %p34 = pneg %p28
      %p35 = scmp.eq.s32.totalorder %s19, 1
      %p36 = por %p34, %p35
      %p37 = scmp.ne.s32.totalorder %s29, %s32
      %p38 = scmp.eq.s32.totalorder %s19, 0
      %p39 = por %p37, %p38
      %p40 = scmp.ne.s32.totalorder %s29, %s32
      %p41 = scmp.eq.s32.totalorder %s24, 1
      %p42 = por %p40, %p41
      %p43 = scmp.ne.s32.totalorder %s32, %s33
      %p44 = scmp.eq.s32.totalorder %s24, 0
      %p45 = por %p43, %p44
      %p46 = scmp.ne.s32.totalorder %s32, %s33
      %p47 = scmp.eq.s32.totalorder %s25, 1
      %p48 = por %p46, %p47
      %p50 = scmp.ne.s32.totalorder %s33, %s49
      %p51 = scmp.eq.s32.totalorder %s25, 0
      %p52 = por %p50, %p51
      %s53 = ssub.s32 %s19, %s26
      %p54 = scmp.eq.s32.totalorder %s53, 0
      %s56 = sadd.s32 %s55, 1
      %s57 = scalar_select %p54, %s55, %s56
      %p60 = pneg %p54
      %p61 = scmp.eq.s32.totalorder %s19, 1
      %p62 = por %p60, %p61
      %p63 = scmp.ne.s32.totalorder %s55, %s58
      %p64 = scmp.eq.s32.totalorder %s19, 0
      %p65 = por %p63, %p64
      %p66 = scmp.ne.s32.totalorder %s55, %s58
      %p67 = scmp.eq.s32.totalorder %s24, 1
      %p68 = por %p66, %p67
      %p69 = scmp.ne.s32.totalorder %s58, %s59
      %p70 = scmp.eq.s32.totalorder %s24, 0
      %p71 = por %p69, %p70
      %p72 = scmp.ne.s32.totalorder %s58, %s59
      %p73 = scmp.eq.s32.totalorder %s25, 1
      %p74 = por %p72, %p73
      %p76 = scmp.ne.s32.totalorder %s59, %s75
      %p77 = scmp.eq.s32.totalorder %s25, 0
      %p78 = por %p76, %p77
      %s80 = sadd.s32 %s79, 1
      %p83 = scmp.eq.s32.totalorder %s19, 1
      %p84 = scmp.ne.s32.totalorder %s79, %s81
      %p85 = scmp.eq.s32.totalorder %s19, 0
      %p86 = por %p84, %p85
      %p87 = scmp.ne.s32.totalorder %s79, %s81
      %p88 = scmp.eq.s32.totalorder %s24, 1
      %p89 = por %p87, %p88
      %p90 = scmp.ne.s32.totalorder %s81, %s82
      %p91 = scmp.eq.s32.totalorder %s24, 0
      %p92 = por %p90, %p91
      %p93 = scmp.ne.s32.totalorder %s81, %s82
      %p94 = scmp.eq.s32.totalorder %s25, 1
      %p95 = por %p93, %p94
      %p97 = scmp.ne.s32.totalorder %s82, %s96
      %p98 = scmp.eq.s32.totalorder %s25, 0
      %p99 = por %p97, %p98
      %s101 = sadd.s32 %s100, 1
      %p104 = scmp.eq.s32.totalorder %s19, 1
      %p105 = scmp.ne.s32.totalorder %s100, %s102
      %p106 = scmp.eq.s32.totalorder %s19, 0
      %p107 = por %p105, %p106
      %p108 = scmp.ne.s32.totalorder %s100, %s102
      %p109 = scmp.eq.s32.totalorder %s24, 1
      %p110 = por %p108, %p109
      %p111 = scmp.ne.s32.totalorder %s102, %s103
      %p112 = scmp.eq.s32.totalorder %s24, 0
      %p113 = por %p111, %p112
      %p114 = scmp.ne.s32.totalorder %s102, %s103
      %p115 = scmp.eq.s32.totalorder %s25, 1
      %p116 = por %p114, %p115
      %p118 = scmp.ne.s32.totalorder %s103, %s117
      %p119 = scmp.eq.s32.totalorder %s25, 0
      %p120 = por %p118, %p119
      %s122 = sadd.s32 %s121, 1
      %p125 = scmp.eq.s32.totalorder %s19, 1
      %p126 = scmp.ne.s32.totalorder %s121, %s123
      %p127 = scmp.eq.s32.totalorder %s19, 0
      %p128 = por %p126, %p127
      %p129 = scmp.ne.s32.totalorder %s121, %s123
      %p130 = scmp.eq.s32.totalorder %s24, 1
      %p131 = por %p129, %p130
      %p132 = scmp.ne.s32.totalorder %s123, %s124
      %p133 = scmp.eq.s32.totalorder %s24, 0
      %p134 = por %p132, %p133
      %p135 = scmp.ne.s32.totalorder %s123, %s124
      %p136 = scmp.eq.s32.totalorder %s25, 1
      %p137 = por %p135, %p136
      %p139 = scmp.ne.s32.totalorder %s124, %s138
      %p140 = scmp.eq.s32.totalorder %s25, 0
      %p141 = por %p139, %p140
      %s143 = sadd.s32 %s142, 1
      %p146 = scmp.eq.s32.totalorder %s19, 1
      %p147 = scmp.ne.s32.totalorder %s142, %s144
      %p148 = scmp.eq.s32.totalorder %s19, 0
      %p149 = por %p147, %p148
      %p150 = scmp.ne.s32.totalorder %s142, %s144
      %p151 = scmp.eq.s32.totalorder %s24, 1
      %p152 = por %p150, %p151
      %p153 = scmp.ne.s32.totalorder %s144, %s145
      %p154 = scmp.eq.s32.totalorder %s24, 0
      %p155 = por %p153, %p154
      %p156 = scmp.ne.s32.totalorder %s144, %s145
      %p157 = scmp.eq.s32.totalorder %s25, 1
      %p158 = por %p156, %p157
      %p160 = scmp.ne.s32.totalorder %s145, %s159
      %p161 = scmp.eq.s32.totalorder %s25, 0
      %p162 = por %p160, %p161
      %s164 = sadd.s32 %s163, 1
      %p167 = scmp.eq.s32.totalorder %s19, 1
      %p168 = scmp.ne.s32.totalorder %s163, %s165
      %p169 = scmp.eq.s32.totalorder %s19, 0
      %p170 = por %p168, %p169
      %p171 = scmp.ne.s32.totalorder %s163, %s165
      %p172 = scmp.eq.s32.totalorder %s24, 1
      %p173 = por %p171, %p172
      %p174 = scmp.ne.s32.totalorder %s165, %s166
      %p175 = scmp.eq.s32.totalorder %s24, 0
      %p176 = por %p174, %p175
      %p177 = scmp.ne.s32.totalorder %s165, %s166
      %p178 = scmp.eq.s32.totalorder %s25, 1
      %p179 = por %p177, %p178
      %p181 = scmp.ne.s32.totalorder %s166, %s180
      %p182 = scmp.eq.s32.totalorder %s25, 0
      %p183 = por %p181, %p182
      %s185 = sadd.s32 %s184, 1
      %p188 = scmp.eq.s32.totalorder %s19, 1
      %p189 = scmp.ne.s32.totalorder %s184, %s186
      %p190 = scmp.eq.s32.totalorder %s19, 0
      %p191 = por %p189, %p190
      %p192 = scmp.ne.s32.totalorder %s184, %s186
      %p193 = scmp.eq.s32.totalorder %s24, 1
      %p194 = por %p192, %p193
      %p195 = scmp.ne.s32.totalorder %s186, %s187
      %p196 = scmp.eq.s32.totalorder %s24, 0
      %p197 = por %p195, %p196
      %p198 = scmp.ne.s32.totalorder %s186, %s187
      %p199 = scmp.eq.s32.totalorder %s25, 1
      %p200 = por %p198, %p199
      %p202 = scmp.ne.s32.totalorder %s187, %s201
      %p203 = scmp.eq.s32.totalorder %s25, 0
      %p204 = por %p202, %p203
      %s206 = sadd.s32 %s205, 1
      %p209 = scmp.eq.s32.totalorder %s19, 1
      %p210 = scmp.ne.s32.totalorder %s205, %s207
      %p211 = scmp.eq.s32.totalorder %s19, 0
      %p212 = por %p210, %p211
      %p213 = scmp.ne.s32.totalorder %s205, %s207
      %p214 = scmp.eq.s32.totalorder %s24, 1
      %p215 = por %p213, %p214
      %p216 = scmp.ne.s32.totalorder %s207, %s208
      %p217 = scmp.eq.s32.totalorder %s24, 0
      %p218 = por %p216, %p217
      %p219 = scmp.ne.s32.totalorder %s207, %s208
      %p220 = scmp.eq.s32.totalorder %s25, 1
      %p221 = por %p219, %p220
      %p223 = scmp.ne.s32.totalorder %s208, %s222
      %p224 = scmp.eq.s32.totalorder %s25, 0
      %p225 = por %p223, %p224
      %s227 = sadd.s32 %s226, 1
      %p230 = scmp.eq.s32.totalorder %s19, 1
      %p231 = scmp.ne.s32.totalorder %s226, %s228
      %p232 = scmp.eq.s32.totalorder %s19, 0
      %p233 = por %p231, %p232
      %p234 = scmp.ne.s32.totalorder %s226, %s228
      %p235 = scmp.eq.s32.totalorder %s24, 1
      %p236 = por %p234, %p235
      %p237 = scmp.ne.s32.totalorder %s228, %s229
      %p238 = scmp.eq.s32.totalorder %s24, 0
      %p239 = por %p237, %p238
      %p240 = scmp.ne.s32.totalorder %s228, %s229
      %p241 = scmp.eq.s32.totalorder %s25, 1
      %p242 = por %p240, %p241
      %p244 = scmp.ne.s32.totalorder %s229, %s243
      %p245 = scmp.eq.s32.totalorder %s25, 0
      %p246 = por %p244, %p245
      %s247 = ssub.s32 %s19, %s26
      %p248 = scmp.eq.s32.totalorder %s247, 0
      %s250 = sadd.s32 %s249, 1
      %s251 = scalar_select %p248, %s249, %s250
      %p254 = pneg %p248
      %p255 = scmp.eq.s32.totalorder %s19, 1
      %p256 = por %p254, %p255
      %p257 = scmp.ne.s32.totalorder %s249, %s252
      %p258 = scmp.eq.s32.totalorder %s19, 0
      %p259 = por %p257, %p258
      %p260 = scmp.ne.s32.totalorder %s249, %s252
      %p261 = scmp.eq.s32.totalorder %s24, 1
      %p262 = por %p260, %p261
      %p263 = scmp.ne.s32.totalorder %s252, %s253
      %p264 = scmp.eq.s32.totalorder %s24, 0
      %p265 = por %p263, %p264
      %p266 = scmp.ne.s32.totalorder %s252, %s253
      %p267 = scmp.eq.s32.totalorder %s25, 1
      %p268 = por %p266, %p267
      %p270 = scmp.ne.s32.totalorder %s253, %s269
      %p271 = scmp.eq.s32.totalorder %s25, 0
      %p272 = por %p270, %p271
      %p273 = scmp.le.s32.totalorder 1, %s19
      %p274 = scmp.lt.s32.totalorder %s19, 3
      %p275 = pnand %p273, %p274
      %p276 = pneg %p275
      // Predicated region
      $region9: #{transformer_forward.11} parent=5 // pred_check
        _
      $region10: #{transformer_forward.11} parent=5 // pred_check_branch
        %278 = sbr.rel (%p275) target = $region12
      $region11: #{transformer_forward.11} parent=5 // pred_region
        %s279 = ssub.s32 %s19, 1
        // Predicated region
        $region13: #{transformer_forward.11} parent=11 // pred_check
          %p280 = pneg %p92
        $region14: #{transformer_forward.11} parent=11 // pred_check_branch
          %282 = sbr.rel (%p280) target = $region16
        $region15: #{transformer_forward.11} parent=11 // pred_region
          _
        $region16: #{transformer_forward.11} parent=11 // pred_fallthru
          _
        // Predicated region
        $region17: #{transformer_forward.11} parent=11 // pred_check
          %p283 = pneg %p113
        $region18: #{transformer_forward.11} parent=11 // pred_check_branch
          %285 = sbr.rel (%p283) target = $region20
        $region19: #{transformer_forward.11} parent=11 // pred_region
          _
        $region20: #{transformer_forward.11} parent=11 // pred_fallthru
          _
        // Predicated region
        $region21: #{transformer_forward.11} parent=11 // pred_check
          %p286 = pneg %p134
        $region22: #{transformer_forward.11} parent=11 // pred_check_branch
          %288 = sbr.rel (%p286) target = $region24
        $region23: #{transformer_forward.11} parent=11 // pred_region
          _
        $region24: #{transformer_forward.11} parent=11 // pred_fallthru
          _
        // Predicated region
        $region25: #{transformer_forward.11} parent=11 // pred_check
          %p289 = pneg %p155
        $region26: #{transformer_forward.11} parent=11 // pred_check_branch
          %291 = sbr.rel (%p289) target = $region28
        $region27: #{transformer_forward.11} parent=11 // pred_region
          _
        $region28: #{transformer_forward.11} parent=11 // pred_fallthru
          _
        // Predicated region
        $region29: #{transformer_forward.11} parent=11 // pred_check
          %p292 = pneg %p176
        $region30: #{transformer_forward.11} parent=11 // pred_check_branch
          %294 = sbr.rel (%p292) target = $region32
        $region31: #{transformer_forward.11} parent=11 // pred_region
          %296 = vsyncadd [#allocation3], 0
          %s297 = sshll.u32 %s6, 4
          %s298 = int_to_ptr.hbm [resolvable:$true] %s297
          %s299 = sshll.u32 [#allocation2], 4
          %s300 = int_to_ptr.vmem [resolvable:$true] %s299
          %305 = dma.hbm_to_vmem [thread:$0]  %s298, 256, %s300, [#allocation3], 64, 64, 4
        $region32: #{transformer_forward.11} parent=11 // pred_fallthru
          _
        // Predicated region
        $region33: #{transformer_forward.11} parent=11 // pred_check
          %p306 = pneg %p197
        $region34: #{transformer_forward.11} parent=11 // pred_check_branch
          %308 = sbr.rel (%p306) target = $region36
        $region35: #{transformer_forward.11} parent=11 // pred_region
          %310 = vsyncadd [#allocation5], 0
          %s312 = sshll.u32 %s7, 4
          %s313 = int_to_ptr.hbm [resolvable:$true] %s312
          %s314 = sshll.u32 [#allocation4], 4
          %s315 = int_to_ptr.vmem [resolvable:$true] %s314
          %317 = dma.hbm_to_vmem [thread:$0]  %s313, 16, %s315, [#allocation5]
        $region36: #{transformer_forward.11} parent=11 // pred_fallthru
          _
        // Predicated region
        $region37: #{transformer_forward.11} parent=11 // pred_check
          %p318 = pneg %p218
        $region38: #{transformer_forward.11} parent=11 // pred_check_branch
          %320 = sbr.rel (%p318) target = $region40
        $region39: #{transformer_forward.11} parent=11 // pred_region
          %322 = vsyncadd [#allocation5], 0
          %s324 = sshll.u32 %s8, 4
          %s325 = int_to_ptr.hbm [resolvable:$true] %s324
          %s326 = sshll.u32 [#allocation6], 4
          %s327 = int_to_ptr.vmem [resolvable:$true] %s326
          %329 = dma.hbm_to_vmem [thread:$0]  %s325, 16, %s327, [#allocation5]
        $region40: #{transformer_forward.11} parent=11 // pred_fallthru
          _
        // Predicated region
        $region41: #{transformer_forward.11} parent=11 // pred_check
          %p330 = pneg %p239
        $region42: #{transformer_forward.11} parent=11 // pred_check_branch
          %332 = sbr.rel (%p330) target = $region44
        $region43: #{transformer_forward.11} parent=11 // pred_region
          %334 = vsyncadd [#allocation8], 0
          %s336 = sshll.u32 %s9, 4
          %s337 = int_to_ptr.hbm [resolvable:$true] %s336
          %s338 = sshll.u32 [#allocation7], 4
          %s339 = int_to_ptr.vmem [resolvable:$true] %s338
          %341 = dma.hbm_to_vmem [thread:$0]  %s337, 16, %s339, [#allocation8]
        $region44: #{transformer_forward.11} parent=11 // pred_fallthru
          _
      $region12: #{transformer_forward.11} parent=5 // pred_fallthru
        _
      %p342 = scmp.lt.s32.totalorder %s19, 2
      // Predicated region
      $region45: #{transformer_forward.11} parent=5 // pred_check
        %p343 = pneg %p342
      $region46: #{transformer_forward.11} parent=5 // pred_check_branch
        %345 = sbr.rel (%p343) target = $region48
      $region47: #{transformer_forward.11} parent=5 // pred_region
        // Predicated region
        $region49: #{transformer_forward.11} parent=47 // pred_check
          %p346 = pneg %p39
        $region50: #{transformer_forward.11} parent=47 // pred_check_branch
          %348 = sbr.rel (%p346) target = $region52
        $region51: #{transformer_forward.11} parent=47 // pred_region
          %p349 = scmp.lt.s32.totalorder %s19, 1
          %s350 = scalar_select %p349, %s19, 1
          %s351 = smul.addr %s350, 4
          %s352 = scalar_lea.vmem %s0, %s351
        $region52: #{transformer_forward.11} parent=47 // pred_fallthru
          _
        // Predicated region
        $region53: #{transformer_forward.11} parent=47 // pred_check
          %p353 = pneg %p65
        $region54: #{transformer_forward.11} parent=47 // pred_check_branch
          %355 = sbr.rel (%p353) target = $region56
        $region55: #{transformer_forward.11} parent=47 // pred_region
          %p356 = scmp.lt.s32.totalorder %s19, 1
          %s357 = scalar_select %p356, %s19, 1
          %s358 = smul.addr %s357, 4
          %s359 = scalar_lea.vmem %s1, %s358
        $region56: #{transformer_forward.11} parent=47 // pred_fallthru
          _
      $region48: #{transformer_forward.11} parent=5 // pred_fallthru
        _
      %p360 = scmp.le.s32.totalorder 1, %s19
      %p361 = scmp.lt.s32.totalorder %s19, 3
      %p362 = pnand %p360, %p361
      %p363 = pneg %p362
      // Predicated region
      $region57: #{transformer_forward.11} parent=5 // pred_check
        _
      $region58: #{transformer_forward.11} parent=5 // pred_check_branch
        %365 = sbr.rel (%p362) target = $region60
      $region59: #{transformer_forward.11} parent=5 // pred_region
        %s366 = ssub.s32 %s19, 1
        // Predicated region
        $region61: #{transformer_forward.11} parent=59 // pred_check
          %p367 = pneg %p176
        $region62: #{transformer_forward.11} parent=59 // pred_check_branch
          %369 = sbr.rel (%p367) target = $region64
        $region63: #{transformer_forward.11} parent=59 // pred_region
          %371 = dma.done [#allocation3], 256
        $region64: #{transformer_forward.11} parent=59 // pred_fallthru
          _
        // Predicated region
        $region65: #{transformer_forward.11} parent=59 // pred_check
          %p372 = pneg %p197
        $region66: #{transformer_forward.11} parent=59 // pred_check_branch
          %374 = sbr.rel (%p372) target = $region68
        $region67: #{transformer_forward.11} parent=59 // pred_region
          %376 = dma.done [#allocation5], 16
        $region68: #{transformer_forward.11} parent=59 // pred_fallthru
          _
        // Predicated region
        $region69: #{transformer_forward.11} parent=59 // pred_check
          %p377 = pneg %p218
        $region70: #{transformer_forward.11} parent=59 // pred_check_branch
          %379 = sbr.rel (%p377) target = $region72
        $region71: #{transformer_forward.11} parent=59 // pred_region
          %381 = dma.done [#allocation5], 16
        $region72: #{transformer_forward.11} parent=59 // pred_fallthru
          _
        // Predicated region
        $region73: #{transformer_forward.11} parent=59 // pred_check
          %p382 = pneg %p239
        $region74: #{transformer_forward.11} parent=59 // pred_check_branch
          %384 = sbr.rel (%p382) target = $region76
        $region75: #{transformer_forward.11} parent=59 // pred_region
          %386 = dma.done [#allocation8], 16
        $region76: #{transformer_forward.11} parent=59 // pred_fallthru
          _
        %p387 = scmp.lt.s32.totalorder %s24, 1
        %s388 = scalar_select %p387, %s24, 1
        %s389 = smul.addr %s388, 4
        %s390 = scalar_lea.vmem %s0, %s389
        %p391 = pneg %p45
        %p392 = pneg %p42
        %p393 = scmp.lt.s32.totalorder %s24, 1
        %s394 = scalar_select %p393, %s24, 1
        %s395 = smul.addr %s394, 4
        %s396 = scalar_lea.vmem %s1, %s395
        %p397 = pneg %p71
        %p398 = pneg %p68
        %p399 = pneg %p92
        %p400 = pneg %p89
        %p401 = pneg %p113
        %p402 = pneg %p110
        %p403 = pneg %p134
        %p404 = pneg %p131
        %p405 = pneg %p155
        %p406 = pneg %p152
        %p407 = pneg %p176
        %p408 = pneg %p173
        %p409 = pneg %p197
        %p410 = pneg %p194
        %p411 = pneg %p218
        %p412 = pneg %p215
        %p413 = pneg %p239
        %p414 = pneg %p236
        %p415 = pneg %p265
        %p416 = pneg %p262
        %p417 = scmp.lt.s32.totalorder %s24, 1
        %s418 = scalar_select %p417, %s24, 1
        %s419 = smul.addr %s418, 4
        %s420 = scalar_lea.vmem %s10, %s419
        %p421 = scmp.lt.s32.totalorder %s24, 1
        %s422 = scalar_select %p421, %s24, 1
        %s423 = smul.addr %s422, 4
        %s424 = scalar_lea.vmem %s0, %s423
        %p425 = scmp.lt.s32.totalorder %s24, 1
        %s426 = scalar_select %p425, %s24, 1
        %s427 = smul.addr %s426, 4
        %s428 = scalar_lea.vmem %s1, %s427
        %p429 = scmp.lt.s32.totalorder %s24, 1
        %s430 = scalar_select %p429, %s24, 1
        %s431 = smul.addr %s430, 4
        %s432 = scalar_lea.vmem %s10, %s431
        %v434 = vld [vmem:[%s424] sm:$0xf]
        %v435 = vld [vmem:[%s428] sm:$0xf]
        %v436 = vld [vmem:[%s2] sm:$0xf]
        %v437 = vld [vmem:[%s2 + $0x4] sm:$0xf]
        %v438 = vld [vmem:[%s2 + $0x8] sm:$0xf]
        %v439 = vld [vmem:[%s2 + $0xc] sm:$0xf]
        %v440 = vld [vmem:[%s3] sm:$0x1]
        %v442 = vperm.slane %v440, 0
        %v448 = vunpack.c.l.b16 %v436
        %v449 = vunpack.c.l.b16 %v437
        %v450 = vunpack.c.l.b16 %v438
        %v451 = vunpack.c.l.b16 %v439
        %v452 = vpack.c.b16 %v449, %v448
        %v453 = vpack.c.b16 %v451, %v450
        %vm456 = vcmask 261120
        %v458 = vsel %vm456, %v434, 0
        %460 = vmatpush.bf16.msra.mxu0 0
        %461 = vmatpush.bf16.msra.mxu0 0
        %462 = vmatpush.bf16.msra.mxu0 0
        %463 = vmatpush.bf16.msra.mxu0 0
        %464 = vmatpush.bf16.msra.mxu0 0
        %465 = vmatpush.bf16.msra.mxu0 0
        %466 = vmatpush.bf16.msra.mxu0 %v453
        %467 = vmatpush.bf16.msra.mxu0 %v452
        %468 = vmatmul.bf16.gmra.mxu0 %v458
        %v469 = vpop.f32.mrf.mxu0
        %v470 = vadd.f32 %v442, %v469
        %v471 = vpop.f32.mrf.mxu0
        %472 = vdwg.mxu0
        %v473 = vld [vmem:[%s4] sm:$0xf]
        %v474 = vld [vmem:[%s4 + $0x4] sm:$0xf]
        %v475 = vld [vmem:[%s4 + $0x8] sm:$0xf]
        %v476 = vld [vmem:[%s4 + $0xc] sm:$0xf]
        %v477 = vld [vmem:[%s5] sm:$0x1]
        %v479 = vperm.slane %v477, 0
        %v485 = vunpack.c.l.b16 %v473
        %v486 = vunpack.c.l.b16 %v474
        %v487 = vunpack.c.l.b16 %v475
        %v488 = vunpack.c.l.b16 %v476
        %v489 = vpack.c.b16 %v486, %v485
        %v490 = vpack.c.b16 %v488, %v487
        %v494 = vsel %vm456, %v435, 0
        %496 = vmatpush.bf16.msra.mxu0 0
        %497 = vmatpush.bf16.msra.mxu0 0
        %498 = vmatpush.bf16.msra.mxu0 0
        %499 = vmatpush.bf16.msra.mxu0 0
        %500 = vmatpush.bf16.msra.mxu0 0
        %501 = vmatpush.bf16.msra.mxu0 0
        %502 = vmatpush.bf16.msra.mxu0 %v490
        %503 = vmatpush.bf16.msra.mxu0 %v489
        %504 = vmatmul.bf16.gmra.mxu0 %v494
        %v505 = vpop.f32.mrf.mxu0
        %v506 = vadd.f32 %v479, %v505
        %v507 = vpop.f32.mrf.mxu0
        %508 = vdwg.mxu0
        %v509 = vpack.c.bf16 %v470, %v470
        %v510 = vpack.c.bf16 %v506, %v506
        %vm511 = vcmask 64512
        %v513 = vsel %vm511, %v509, 0
        %v516 = vsel %vm511, %v510, 0
        %518 = vmatpush.bf16.xpose.msra.mxu0 0
        %519 = vmatpush.bf16.xpose.msra.mxu0 0
        %520 = vmatpush.bf16.xpose.msra.mxu0 0
        %521 = vmatpush.bf16.xpose.msra.mxu0 0
        %522 = vmatpush.bf16.xpose.msra.mxu0 0
        %523 = vmatpush.bf16.xpose.msra.mxu0 0
        %524 = vmatpush.bf16.xpose.msra.mxu0 0
        %525 = vmatpush.bf16.xpose.msra.mxu0 %v516
        %526 = vmatmul.bf16.gmra.mxu0 %v513
        %v527 = vpop.f32.mrf.mxu0
        %v528 = vadd.f32 0.0, %v527
        %v529 = vpop.f32.mrf.mxu0
        %530 = vdwg.mxu0
        %v531 = vmul.f32 %v528, 0.35355338
        %v532 = vsel %vm511, %v531, -inf
        %533 = vmax.xlane.f32.xlu0 %v532
        %v534 = vpop.xlane.xlu0 %533
        %v535 = vsub.f32 %v531, %v534
        %v536 = vmul.f32 %v535, 1.442695
        %v537 = vpow.pop %v536
        %v538 = vsel %vm511, %v537, 0.0
        %539 = vadd.xlane.f32.xlu0 %v538
        %v540 = vpop.xlane.xlu0 %539
        %v541 = vrcp.pop %v540
        %v542 = vmul.f32 %v537, %v541
        %v543 = vpack.c.bf16 %v542, %v542
        %545 = vrot.lane.b32.xlu0 %v510, 96
        %v546 = vpop.permute.xlu0 %545
        %v548 = vsel %vm511, %v543, 0
        %vm550 = vcmask 1043456
        %v552 = vsel %vm550, %v546, 0
        %554 = vmatpush.bf16.msra.mxu0 0
        %555 = vmatpush.bf16.msra.mxu0 0
        %556 = vmatpush.bf16.msra.mxu0 0
        %557 = vmatpush.bf16.msra.mxu0 0
        %558 = vmatpush.bf16.msra.mxu0 0
        %559 = vmatpush.bf16.msra.mxu0 0
        %560 = vmatpush.bf16.msra.mxu0 0
        %561 = vmatpush.bf16.msra.mxu0 %v552
        %562 = vmatmul.bf16.gmra.mxu0 %v548
        %v563 = vpop.f32.mrf.mxu0
        %v564 = vadd.f32 0.0, %v563
        %v565 = vpop.f32.mrf.mxu0
        %566 = vdwg.mxu0
        %568 = vrot.lane.b32.xlu0 %v509, 120
        %v569 = vpop.permute.xlu0 %568
        %570 = vrot.lane.b32.xlu0 %v510, 120
        %v571 = vpop.permute.xlu0 %570
        %v573 = vsel %vm511, %v569, 0
        %v576 = vsel %vm511, %v571, 0
        %578 = vmatpush.bf16.xpose.msra.mxu0 0
        %579 = vmatpush.bf16.xpose.msra.mxu0 0
        %580 = vmatpush.bf16.xpose.msra.mxu0 0
        %581 = vmatpush.bf16.xpose.msra.mxu0 0
        %582 = vmatpush.bf16.xpose.msra.mxu0 0
        %583 = vmatpush.bf16.xpose.msra.mxu0 0
        %584 = vmatpush.bf16.xpose.msra.mxu0 0
        %585 = vmatpush.bf16.xpose.msra.mxu0 %v576
        %586 = vmatmul.bf16.gmra.mxu0 %v573
        %v587 = vpop.f32.mrf.mxu0
        %v588 = vadd.f32 0.0, %v587
        %v589 = vpop.f32.mrf.mxu0
        %590 = vdwg.mxu0
        %v591 = vmul.f32 %v588, 0.35355338
        %v592 = vsel %vm511, %v591, -inf
        %593 = vmax.xlane.f32.xlu0 %v592
        %v594 = vpop.xlane.xlu0 %593
        %v595 = vsub.f32 %v591, %v594
        %v596 = vmul.f32 %v595, 1.442695
        %v597 = vpow.pop %v596
        %v598 = vsel %vm511, %v597, 0.0
        %599 = vadd.xlane.f32.xlu0 %v598
        %v600 = vpop.xlane.xlu0 %599
        %v601 = vrcp.pop %v600
        %v602 = vmul.f32 %v597, %v601
        %v603 = vpack.c.bf16 %v602, %v602
        %604 = vrot.lane.b32.xlu0 %v510, 88
        %v605 = vpop.permute.xlu0 %604
        %v607 = vsel %vm511, %v603, 0
        %v610 = vsel %vm550, %v605, 0
        %612 = vmatpush.bf16.msra.mxu0 0
        %613 = vmatpush.bf16.msra.mxu0 0
        %614 = vmatpush.bf16.msra.mxu0 0
        %615 = vmatpush.bf16.msra.mxu0 0
        %616 = vmatpush.bf16.msra.mxu0 0
        %617 = vmatpush.bf16.msra.mxu0 0
        %618 = vmatpush.bf16.msra.mxu0 0
        %619 = vmatpush.bf16.msra.mxu0 %v610
        %620 = vmatmul.bf16.gmra.mxu0 %v607
        %v621 = vpop.f32.mrf.mxu0
        %v622 = vadd.f32 0.0, %v621
        %v623 = vpop.f32.mrf.mxu0
        %624 = vdwg.mxu0
        %625 = vrot.lane.b32.xlu0 %v509, 112
        %v626 = vpop.permute.xlu0 %625
        %627 = vrot.lane.b32.xlu0 %v510, 112
        %v628 = vpop.permute.xlu0 %627
        %v630 = vsel %vm511, %v626, 0
        %v633 = vsel %vm511, %v628, 0
        %635 = vmatpush.bf16.xpose.msra.mxu0 0
        %636 = vmatpush.bf16.xpose.msra.mxu0 0
        %637 = vmatpush.bf16.xpose.msra.mxu0 0
        %638 = vmatpush.bf16.xpose.msra.mxu0 0
        %639 = vmatpush.bf16.xpose.msra.mxu0 0
        %640 = vmatpush.bf16.xpose.msra.mxu0 0
        %641 = vmatpush.bf16.xpose.msra.mxu0 0
        %642 = vmatpush.bf16.xpose.msra.mxu0 %v633
        %643 = vmatmul.bf16.gmra.mxu0 %v630
        %v644 = vpop.f32.mrf.mxu0
        %v645 = vadd.f32 0.0, %v644
        %v646 = vpop.f32.mrf.mxu0
        %647 = vdwg.mxu0
        %v648 = vmul.f32 %v645, 0.35355338
        %v649 = vsel %vm511, %v648, -inf
        %650 = vmax.xlane.f32.xlu0 %v649
        %v651 = vpop.xlane.xlu0 %650
        %v652 = vsub.f32 %v648, %v651
        %v653 = vmul.f32 %v652, 1.442695
        %v654 = vpow.pop %v653
        %v655 = vsel %vm511, %v654, 0.0
        %656 = vadd.xlane.f32.xlu0 %v655
        %v657 = vpop.xlane.xlu0 %656
        %v658 = vrcp.pop %v657
        %v659 = vmul.f32 %v654, %v658
        %v660 = vpack.c.bf16 %v659, %v659
        %661 = vrot.lane.b32.xlu0 %v510, 80
        %v662 = vpop.permute.xlu0 %661
        %v664 = vsel %vm511, %v660, 0
        %v667 = vsel %vm550, %v662, 0
        %669 = vmatpush.bf16.msra.mxu0 0
        %670 = vmatpush.bf16.msra.mxu0 0
        %671 = vmatpush.bf16.msra.mxu0 0
        %672 = vmatpush.bf16.msra.mxu0 0
        %673 = vmatpush.bf16.msra.mxu0 0
        %674 = vmatpush.bf16.msra.mxu0 0
        %675 = vmatpush.bf16.msra.mxu0 0
        %676 = vmatpush.bf16.msra.mxu0 %v667
        %677 = vmatmul.bf16.gmra.mxu0 %v664
        %v678 = vpop.f32.mrf.mxu0
        %v679 = vadd.f32 0.0, %v678
        %v680 = vpop.f32.mrf.mxu0
        %681 = vdwg.mxu0
        %682 = vrot.lane.b32.xlu0 %v509, 104
        %v683 = vpop.permute.xlu0 %682
        %684 = vrot.lane.b32.xlu0 %v510, 104
        %v685 = vpop.permute.xlu0 %684
        %v687 = vsel %vm511, %v683, 0
        %v690 = vsel %vm511, %v685, 0
        %692 = vmatpush.bf16.xpose.msra.mxu0 0
        %693 = vmatpush.bf16.xpose.msra.mxu0 0
        %694 = vmatpush.bf16.xpose.msra.mxu0 0
        %695 = vmatpush.bf16.xpose.msra.mxu0 0
        %696 = vmatpush.bf16.xpose.msra.mxu0 0
        %697 = vmatpush.bf16.xpose.msra.mxu0 0
        %698 = vmatpush.bf16.xpose.msra.mxu0 0
        %699 = vmatpush.bf16.xpose.msra.mxu0 %v690
        %700 = vmatmul.bf16.gmra.mxu0 %v687
        %v701 = vpop.f32.mrf.mxu0
        %v702 = vadd.f32 0.0, %v701
        %v703 = vpop.f32.mrf.mxu0
        %704 = vdwg.mxu0
        %v705 = vmul.f32 %v702, 0.35355338
        %v706 = vsel %vm511, %v705, -inf
        %707 = vmax.xlane.f32.xlu0 %v706
        %v708 = vpop.xlane.xlu0 %707
        %v709 = vsub.f32 %v705, %v708
        %v710 = vmul.f32 %v709, 1.442695
        %v711 = vpow.pop %v710
        %v712 = vsel %vm511, %v711, 0.0
        %713 = vadd.xlane.f32.xlu0 %v712
        %v714 = vpop.xlane.xlu0 %713
        %v715 = vrcp.pop %v714
        %v716 = vmul.f32 %v711, %v715
        %v717 = vpack.c.bf16 %v716, %v716
        %718 = vrot.lane.b32.xlu0 %v510, 72
        %v719 = vpop.permute.xlu0 %718
        %v721 = vsel %vm511, %v717, 0
        %v724 = vsel %vm550, %v719, 0
        %726 = vmatpush.bf16.msra.mxu0 0
        %727 = vmatpush.bf16.msra.mxu0 0
        %728 = vmatpush.bf16.msra.mxu0 0
        %729 = vmatpush.bf16.msra.mxu0 0
        %730 = vmatpush.bf16.msra.mxu0 0
        %731 = vmatpush.bf16.msra.mxu0 0
        %732 = vmatpush.bf16.msra.mxu0 0
        %733 = vmatpush.bf16.msra.mxu0 %v724
        %734 = vmatmul.bf16.gmra.mxu0 %v721
        %v735 = vpop.f32.mrf.mxu0
        %v736 = vadd.f32 0.0, %v735
        %v737 = vpop.f32.mrf.mxu0
        %738 = vdwg.mxu0
        %740 = vrot.lane.b32.xlu0 %v622, 8
        %v741 = vpop.permute.xlu0 %740
        %744 = vrot.lane.b32.xlu0 %v679, 16
        %v745 = vpop.permute.xlu0 %744
        %748 = vrot.lane.b32.xlu0 %v736, 24
        %v749 = vpop.permute.xlu0 %748
        %v751 = vsel %vm511, %v564, %v741
        %vm752 = vcmask 130048
        %v753 = vsel %vm752, %v751, %v745
        %vm754 = vcmask 195584
        %v755 = vsel %vm754, %v753, %v749
        %v756 = vpack.c.bf16 %v755, %v755
        %v757 = vld [vmem:[#allocation2] sm:$0xf]
        %v758 = vld [vmem:[#allocation2 + $0x4] sm:$0xf]
        %v759 = vld [vmem:[#allocation2 + $0x8] sm:$0xf]
        %v760 = vld [vmem:[#allocation2 + $0xc] sm:$0xf]
        %v761 = vld [vmem:[#allocation4] sm:$0x1]
        %v763 = vperm.slane %v761, 0
        %v769 = vunpack.c.l.b16 %v757
        %v770 = vunpack.c.l.b16 %v758
        %v771 = vunpack.c.l.b16 %v759
        %v772 = vunpack.c.l.b16 %v760
        %v773 = vpack.c.b16 %v770, %v769
        %v774 = vpack.c.b16 %v772, %v771
        %v778 = vsel %vm456, %v756, 0
        %780 = vmatpush.bf16.msra.mxu0 0
        %781 = vmatpush.bf16.msra.mxu0 0
        %782 = vmatpush.bf16.msra.mxu0 0
        %783 = vmatpush.bf16.msra.mxu0 0
        %784 = vmatpush.bf16.msra.mxu0 0
        %785 = vmatpush.bf16.msra.mxu0 0
        %786 = vmatpush.bf16.msra.mxu0 %v774
        %787 = vmatpush.bf16.msra.mxu0 %v773
        %788 = vmatmul.bf16.gmra.mxu0 %v778
        %v789 = vpop.f32.mrf.mxu0
        %v790 = vadd.f32 %v763, %v789
        %v791 = vpop.f32.mrf.mxu0
        %792 = vdwg.mxu0
        %v793 = vunpack.c.l.bf16 %v434
        %v794 = vadd.f32 %v793, %v790
        %v795 = vsel %vm456, %v794, 0.0
        %796 = vadd.xlane.f32.xlu0 %v795
        %v797 = vpop.xlane.xlu0 %796
        %v798 = vrcp.pop 32.0
        %v799 = vmul.f32 32.0, %v798
        %v800 = vsub.f32 1.0, %v799
        %v801 = vmul.f32 %v798, %v800
        %v802 = vadd.f32 %v798, %v801
        %vm803 = vweird.f32 %v798
        %v804 = vsel %vm803, %v798, %v802
        %v805 = vmul.f32 %v797, %v804
        %v806 = vsub.f32 %v794, %v805
        %v807 = vmul.f32 %v806, %v806
        %v808 = vsel %vm456, %v807, 0.0
        %809 = vadd.xlane.f32.xlu0 %v808
        %v810 = vpop.xlane.xlu0 %809
        %v811 = vmul.f32 %v810, %v804
        %v812 = vadd.f32 %v811, 1e-05
        %v813 = vrsqrt.pop %v812
        %v814 = vmul.f32 %v813, %v812
        %v815 = vmul.f32 %v814, %v813
        %v816 = vmul.f32 0.5, %v815
        %v817 = vsub.f32 1.5, %v816
        %v818 = vmul.f32 %v813, %v817
        %vm819 = vweird.f32 %v812
        %vm820 = vweird.f32 %v813
        %vm821 = vmor %vm819, %vm820
        %v822 = vsel %vm821, %v813, %v818
        %v823 = vmul.f32 %v806, %v822
        %v824 = vld [vmem:[#allocation6] sm:$0x1]
        %v826 = vperm.slane %v824, 0
        %v828 = vmul.f32 %v823, %v826
        %v829 = vld [vmem:[#allocation7] sm:$0x1]
        %v831 = vperm.slane %v829, 0
        %v833 = vadd.f32 %v828, %v831
        %v834 = vpack.c.bf16 %v833, %v833
        %vm835 = vcmask 257024
        %836 = vst.msk [vmem:[%s432] sm:$0xf] %vm835, %v834
        %p837 = scmp.lt.s32.totalorder %s24, 1
        %s838 = scalar_select %p837, %s24, 1
        %s839 = smul.addr %s838, 4
        %s840 = scalar_lea.vmem %s10, %s839
        // Predicated region
        $region77: #{transformer_forward.11} parent=59 // pred_check
          %p841 = pneg %p262
        $region78: #{transformer_forward.11} parent=59 // pred_check_branch
          %843 = sbr.rel (%p841) target = $region80
        $region79: #{transformer_forward.11} parent=59 // pred_region
          _
        $region80: #{transformer_forward.11} parent=59 // pred_fallthru
          _
      $region60: #{transformer_forward.11} parent=5 // pred_fallthru
        _
      %p844 = scmp.le.s32.totalorder 2, %s19
      // Predicated region
      $region81: #{transformer_forward.11} parent=5 // pred_check
        %p845 = pneg %p844
      $region82: #{transformer_forward.11} parent=5 // pred_check_branch
        %847 = sbr.rel (%p845) target = $region84
      $region83: #{transformer_forward.11} parent=5 // pred_region
        %s848 = ssub.s32 %s19, 2
        // Predicated region
        $region85: #{transformer_forward.11} parent=83 // pred_check
          %p849 = pneg %p268
        $region86: #{transformer_forward.11} parent=83 // pred_check_branch
          %851 = sbr.rel (%p849) target = $region88
        $region87: #{transformer_forward.11} parent=83 // pred_region
          %p852 = scmp.lt.s32.totalorder %s25, 1
          %s853 = scalar_select %p852, %s25, 1
          %s854 = smul.addr %s853, 4
          %s855 = scalar_lea.vmem %s10, %s854
        $region88: #{transformer_forward.11} parent=83 // pred_fallthru
          _
      $region84: #{transformer_forward.11} parent=5 // pred_fallthru
        _
    $region6: #{transformer_forward.11} parent=1 // loop_footer
      %s23 = sadd.s32 1, %s19
    $region7: #{transformer_forward.11} parent=1 // loop_footer_branch
      %18 = sbr.rel target = $region3
    $region8: #{transformer_forward.11} parent=1 // loop_exit
      _
    %856 = vsyncpa [#allocation3], 1
    %s857 = scalar_lea.sflag [#allocation3], 1
    %858 = vsyncpa %s857, 1
    %859 = vsyncpa [#allocation5], 1
    %860 = vsyncpa [#allocation8], 1

// kernel: transformer_forward.16
$region0: #{transformer_forward.16}
  #allocation0 [shape = 'u32[]', space=smem, size = 0x4, offset = 0x4, fixed_abs, tag = 'smem constant byte address 0x4 - core index']
  #allocation1 [shape = 'u32[72,128]{1,0:T(1,128)}', space=vmem, size = 0x9000, scoped, tag = 'internal scratch']
  %s0 = inlined_call_operand.vmem [shape: bf16[2,8,32], index: 0, kind: input, shape index: {}]
  %s1 = inlined_call_operand.vmem [shape: bf16[2,8,32], index: 1, kind: input, shape index: {}]
  %s2 = inlined_call_operand.vmem [shape: bf16[32,32], index: 2, kind: input, shape index: {}]
  %s3 = inlined_call_operand.vmem [shape: f32[1,32], index: 3, kind: input, shape index: {}]
  %s4 = inlined_call_operand.hbm [shape: bf16[32,64], index: 4, kind: input, shape index: {}]
  %s5 = inlined_call_operand.vmem [shape: f32[1,64], index: 5, kind: input, shape index: {}]
  %s6 = inlined_call_operand.hbm [shape: bf16[32,32], index: 6, kind: input, shape index: {}]
  %s7 = inlined_call_operand.vmem [shape: f32[1,32], index: 7, kind: input, shape index: {}]
  %s8 = inlined_call_operand.vmem [shape: f32[1,32], index: 8, kind: input, shape index: {}]
  %s9 = inlined_call_operand.vmem [shape: f32[1,32], index: 9, kind: input, shape index: {}]
  %s10 = inlined_call_operand.vmem [shape: bf16[2,8,32], index: 10, kind: output, shape index: {}]
  %s11 = sld [smem:[#allocation0]]
  $region81: #{transformer_forward.16} parent=0
    _
  %s13 = ssub.s32 1, %s11
  %s14 = scalar_select 0, %s13, %s11
  $region1: #{transformer_forward.16} parent=0
    #allocation2 [shape = 'u8[8192]{0}', space=vmem, size = 0x2000, scoped, tag = 'input window, operand 4, single buffered']
    #allocation3 [shape = 's32[2]{0}', space=sflag, size = 0x8, scoped, tag = 'scoped memory for transformer_forward.16']
    #allocation4 [shape = 'u8[8192]{0}', space=vmem, size = 0x2000, scoped, tag = 'input window, operand 6, single buffered']
    #allocation5 [shape = 's32[1]{0}', space=sflag, size = 0x4, scoped, tag = 'scoped memory for transformer_forward.16']
    %15 = vsyncpa [#allocation3], 0
    %16 = vsyncpa [#allocation5], 0
    loop: start=0, step=1, limit=4
    $region2: #{transformer_forward.16} parent=1 // loop_pre_header
      _
    $region3: #{transformer_forward.16} parent=1 // loop_header
      %s18 = sphi 0, %s22
      %p19 = scmp.ge.s32.totalorder %s18, 4
      %s28 = sphi 0, %s30
      %s31 = sphi 0, %s28
      %s32 = sphi 0, %s31
      %s48 = sphi 0, %s32
      %s54 = sphi 0, %s56
      %s57 = sphi 0, %s54
      %s58 = sphi 0, %s57
      %s74 = sphi 0, %s58
      %s78 = sphi 0, %s78
      %s80 = sphi 0, %s78
      %s81 = sphi 0, %s80
      %s95 = sphi 0, %s81
      %s99 = sphi 0, %s99
      %s101 = sphi 0, %s99
      %s102 = sphi 0, %s101
      %s116 = sphi 0, %s102
      %s120 = sphi 0, %s120
      %s122 = sphi 0, %s120
      %s123 = sphi 0, %s122
      %s137 = sphi 0, %s123
      %s141 = sphi 0, %s141
      %s143 = sphi 0, %s141
      %s144 = sphi 0, %s143
      %s158 = sphi 0, %s144
      %s162 = sphi 0, %s162
      %s164 = sphi 0, %s162
      %s165 = sphi 0, %s164
      %s179 = sphi 0, %s165
      %s183 = sphi 0, %s183
      %s185 = sphi 0, %s183
      %s186 = sphi 0, %s185
      %s200 = sphi 0, %s186
      %s204 = sphi 0, %s204
      %s206 = sphi 0, %s204
      %s207 = sphi 0, %s206
      %s221 = sphi 0, %s207
      %s225 = sphi 0, %s225
      %s227 = sphi 0, %s225
      %s228 = sphi 0, %s227
      %s242 = sphi 0, %s228
      %s248 = sphi 0, %s250
      %s251 = sphi 0, %s248
      %s252 = sphi 0, %s251
      %s268 = sphi 0, %s252
    $region4: #{transformer_forward.16} parent=1 // loop_header_branch
      %21 = sbr.rel (%p19) target = $region8
    $region5: #{transformer_forward.16} parent=1 // loop_body
      %s23 = ssub.s32 %s18, 1
      %s24 = ssub.s32 %s18, 2
      %s25 = sadd.s32 %s18, 1
      %s26 = ssub.s32 %s18, %s25
      %p27 = scmp.eq.s32.totalorder %s26, 0
      %s29 = sadd.s32 %s28, 1
      %s30 = scalar_select %p27, %s28, %s29
      %p33 = pneg %p27
      %p34 = scmp.eq.s32.totalorder %s18, 1
      %p35 = por %p33, %p34
      %p36 = scmp.ne.s32.totalorder %s28, %s31
      %p37 = scmp.eq.s32.totalorder %s18, 0
      %p38 = por %p36, %p37
      %p39 = scmp.ne.s32.totalorder %s28, %s31
      %p40 = scmp.eq.s32.totalorder %s23, 1
      %p41 = por %p39, %p40
      %p42 = scmp.ne.s32.totalorder %s31, %s32
      %p43 = scmp.eq.s32.totalorder %s23, 0
      %p44 = por %p42, %p43
      %p45 = scmp.ne.s32.totalorder %s31, %s32
      %p46 = scmp.eq.s32.totalorder %s24, 1
      %p47 = por %p45, %p46
      %p49 = scmp.ne.s32.totalorder %s32, %s48
      %p50 = scmp.eq.s32.totalorder %s24, 0
      %p51 = por %p49, %p50
      %s52 = ssub.s32 %s18, %s25
      %p53 = scmp.eq.s32.totalorder %s52, 0
      %s55 = sadd.s32 %s54, 1
      %s56 = scalar_select %p53, %s54, %s55
      %p59 = pneg %p53
      %p60 = scmp.eq.s32.totalorder %s18, 1
      %p61 = por %p59, %p60
      %p62 = scmp.ne.s32.totalorder %s54, %s57
      %p63 = scmp.eq.s32.totalorder %s18, 0
      %p64 = por %p62, %p63
      %p65 = scmp.ne.s32.totalorder %s54, %s57
      %p66 = scmp.eq.s32.totalorder %s23, 1
      %p67 = por %p65, %p66
      %p68 = scmp.ne.s32.totalorder %s57, %s58
      %p69 = scmp.eq.s32.totalorder %s23, 0
      %p70 = por %p68, %p69
      %p71 = scmp.ne.s32.totalorder %s57, %s58
      %p72 = scmp.eq.s32.totalorder %s24, 1
      %p73 = por %p71, %p72
      %p75 = scmp.ne.s32.totalorder %s58, %s74
      %p76 = scmp.eq.s32.totalorder %s24, 0
      %p77 = por %p75, %p76
      %s79 = sadd.s32 %s78, 1
      %p82 = scmp.eq.s32.totalorder %s18, 1
      %p83 = scmp.ne.s32.totalorder %s78, %s80
      %p84 = scmp.eq.s32.totalorder %s18, 0
      %p85 = por %p83, %p84
      %p86 = scmp.ne.s32.totalorder %s78, %s80
      %p87 = scmp.eq.s32.totalorder %s23, 1
      %p88 = por %p86, %p87
      %p89 = scmp.ne.s32.totalorder %s80, %s81
      %p90 = scmp.eq.s32.totalorder %s23, 0
      %p91 = por %p89, %p90
      %p92 = scmp.ne.s32.totalorder %s80, %s81
      %p93 = scmp.eq.s32.totalorder %s24, 1
      %p94 = por %p92, %p93
      %p96 = scmp.ne.s32.totalorder %s81, %s95
      %p97 = scmp.eq.s32.totalorder %s24, 0
      %p98 = por %p96, %p97
      %s100 = sadd.s32 %s99, 1
      %p103 = scmp.eq.s32.totalorder %s18, 1
      %p104 = scmp.ne.s32.totalorder %s99, %s101
      %p105 = scmp.eq.s32.totalorder %s18, 0
      %p106 = por %p104, %p105
      %p107 = scmp.ne.s32.totalorder %s99, %s101
      %p108 = scmp.eq.s32.totalorder %s23, 1
      %p109 = por %p107, %p108
      %p110 = scmp.ne.s32.totalorder %s101, %s102
      %p111 = scmp.eq.s32.totalorder %s23, 0
      %p112 = por %p110, %p111
      %p113 = scmp.ne.s32.totalorder %s101, %s102
      %p114 = scmp.eq.s32.totalorder %s24, 1
      %p115 = por %p113, %p114
      %p117 = scmp.ne.s32.totalorder %s102, %s116
      %p118 = scmp.eq.s32.totalorder %s24, 0
      %p119 = por %p117, %p118
      %s121 = sadd.s32 %s120, 1
      %p124 = scmp.eq.s32.totalorder %s18, 1
      %p125 = scmp.ne.s32.totalorder %s120, %s122
      %p126 = scmp.eq.s32.totalorder %s18, 0
      %p127 = por %p125, %p126
      %p128 = scmp.ne.s32.totalorder %s120, %s122
      %p129 = scmp.eq.s32.totalorder %s23, 1
      %p130 = por %p128, %p129
      %p131 = scmp.ne.s32.totalorder %s122, %s123
      %p132 = scmp.eq.s32.totalorder %s23, 0
      %p133 = por %p131, %p132
      %p134 = scmp.ne.s32.totalorder %s122, %s123
      %p135 = scmp.eq.s32.totalorder %s24, 1
      %p136 = por %p134, %p135
      %p138 = scmp.ne.s32.totalorder %s123, %s137
      %p139 = scmp.eq.s32.totalorder %s24, 0
      %p140 = por %p138, %p139
      %s142 = sadd.s32 %s141, 1
      %p145 = scmp.eq.s32.totalorder %s18, 1
      %p146 = scmp.ne.s32.totalorder %s141, %s143
      %p147 = scmp.eq.s32.totalorder %s18, 0
      %p148 = por %p146, %p147
      %p149 = scmp.ne.s32.totalorder %s141, %s143
      %p150 = scmp.eq.s32.totalorder %s23, 1
      %p151 = por %p149, %p150
      %p152 = scmp.ne.s32.totalorder %s143, %s144
      %p153 = scmp.eq.s32.totalorder %s23, 0
      %p154 = por %p152, %p153
      %p155 = scmp.ne.s32.totalorder %s143, %s144
      %p156 = scmp.eq.s32.totalorder %s24, 1
      %p157 = por %p155, %p156
      %p159 = scmp.ne.s32.totalorder %s144, %s158
      %p160 = scmp.eq.s32.totalorder %s24, 0
      %p161 = por %p159, %p160
      %s163 = sadd.s32 %s162, 1
      %p166 = scmp.eq.s32.totalorder %s18, 1
      %p167 = scmp.ne.s32.totalorder %s162, %s164
      %p168 = scmp.eq.s32.totalorder %s18, 0
      %p169 = por %p167, %p168
      %p170 = scmp.ne.s32.totalorder %s162, %s164
      %p171 = scmp.eq.s32.totalorder %s23, 1
      %p172 = por %p170, %p171
      %p173 = scmp.ne.s32.totalorder %s164, %s165
      %p174 = scmp.eq.s32.totalorder %s23, 0
      %p175 = por %p173, %p174
      %p176 = scmp.ne.s32.totalorder %s164, %s165
      %p177 = scmp.eq.s32.totalorder %s24, 1
      %p178 = por %p176, %p177
      %p180 = scmp.ne.s32.totalorder %s165, %s179
      %p181 = scmp.eq.s32.totalorder %s24, 0
      %p182 = por %p180, %p181
      %s184 = sadd.s32 %s183, 1
      %p187 = scmp.eq.s32.totalorder %s18, 1
      %p188 = scmp.ne.s32.totalorder %s183, %s185
      %p189 = scmp.eq.s32.totalorder %s18, 0
      %p190 = por %p188, %p189
      %p191 = scmp.ne.s32.totalorder %s183, %s185
      %p192 = scmp.eq.s32.totalorder %s23, 1
      %p193 = por %p191, %p192
      %p194 = scmp.ne.s32.totalorder %s185, %s186
      %p195 = scmp.eq.s32.totalorder %s23, 0
      %p196 = por %p194, %p195
      %p197 = scmp.ne.s32.totalorder %s185, %s186
      %p198 = scmp.eq.s32.totalorder %s24, 1
      %p199 = por %p197, %p198
      %p201 = scmp.ne.s32.totalorder %s186, %s200
      %p202 = scmp.eq.s32.totalorder %s24, 0
      %p203 = por %p201, %p202
      %s205 = sadd.s32 %s204, 1
      %p208 = scmp.eq.s32.totalorder %s18, 1
      %p209 = scmp.ne.s32.totalorder %s204, %s206
      %p210 = scmp.eq.s32.totalorder %s18, 0
      %p211 = por %p209, %p210
      %p212 = scmp.ne.s32.totalorder %s204, %s206
      %p213 = scmp.eq.s32.totalorder %s23, 1
      %p214 = por %p212, %p213
      %p215 = scmp.ne.s32.totalorder %s206, %s207
      %p216 = scmp.eq.s32.totalorder %s23, 0
      %p217 = por %p215, %p216
      %p218 = scmp.ne.s32.totalorder %s206, %s207
      %p219 = scmp.eq.s32.totalorder %s24, 1
      %p220 = por %p218, %p219
      %p222 = scmp.ne.s32.totalorder %s207, %s221
      %p223 = scmp.eq.s32.totalorder %s24, 0
      %p224 = por %p222, %p223
      %s226 = sadd.s32 %s225, 1
      %p229 = scmp.eq.s32.totalorder %s18, 1
      %p230 = scmp.ne.s32.totalorder %s225, %s227
      %p231 = scmp.eq.s32.totalorder %s18, 0
      %p232 = por %p230, %p231
      %p233 = scmp.ne.s32.totalorder %s225, %s227
      %p234 = scmp.eq.s32.totalorder %s23, 1
      %p235 = por %p233, %p234
      %p236 = scmp.ne.s32.totalorder %s227, %s228
      %p237 = scmp.eq.s32.totalorder %s23, 0
      %p238 = por %p236, %p237
      %p239 = scmp.ne.s32.totalorder %s227, %s228
      %p240 = scmp.eq.s32.totalorder %s24, 1
      %p241 = por %p239, %p240
      %p243 = scmp.ne.s32.totalorder %s228, %s242
      %p244 = scmp.eq.s32.totalorder %s24, 0
      %p245 = por %p243, %p244
      %s246 = ssub.s32 %s18, %s25
      %p247 = scmp.eq.s32.totalorder %s246, 0
      %s249 = sadd.s32 %s248, 1
      %s250 = scalar_select %p247, %s248, %s249
      %p253 = pneg %p247
      %p254 = scmp.eq.s32.totalorder %s18, 1
      %p255 = por %p253, %p254
      %p256 = scmp.ne.s32.totalorder %s248, %s251
      %p257 = scmp.eq.s32.totalorder %s18, 0
      %p258 = por %p256, %p257
      %p259 = scmp.ne.s32.totalorder %s248, %s251
      %p260 = scmp.eq.s32.totalorder %s23, 1
      %p261 = por %p259, %p260
      %p262 = scmp.ne.s32.totalorder %s251, %s252
      %p263 = scmp.eq.s32.totalorder %s23, 0
      %p264 = por %p262, %p263
      %p265 = scmp.ne.s32.totalorder %s251, %s252
      %p266 = scmp.eq.s32.totalorder %s24, 1
      %p267 = por %p265, %p266
      %p269 = scmp.ne.s32.totalorder %s252, %s268
      %p270 = scmp.eq.s32.totalorder %s24, 0
      %p271 = por %p269, %p270
      %p272 = scmp.le.s32.totalorder 1, %s18
      %p273 = scmp.lt.s32.totalorder %s18, 3
      %p274 = pnand %p272, %p273
      %p275 = pneg %p274
      // Predicated region
      $region9: #{transformer_forward.16} parent=5 // pred_check
        _
      $region10: #{transformer_forward.16} parent=5 // pred_check_branch
        %277 = sbr.rel (%p274) target = $region12
      $region11: #{transformer_forward.16} parent=5 // pred_region
        %s278 = ssub.s32 %s18, 1
        // Predicated region
        $region13: #{transformer_forward.16} parent=11 // pred_check
          %p279 = pneg %p91
        $region14: #{transformer_forward.16} parent=11 // pred_check_branch
          %281 = sbr.rel (%p279) target = $region16
        $region15: #{transformer_forward.16} parent=11 // pred_region
          _
        $region16: #{transformer_forward.16} parent=11 // pred_fallthru
          _
        // Predicated region
        $region17: #{transformer_forward.16} parent=11 // pred_check
          %p282 = pneg %p112
        $region18: #{transformer_forward.16} parent=11 // pred_check_branch
          %284 = sbr.rel (%p282) target = $region20
        $region19: #{transformer_forward.16} parent=11 // pred_region
          _
        $region20: #{transformer_forward.16} parent=11 // pred_fallthru
          _
        // Predicated region
        $region21: #{transformer_forward.16} parent=11 // pred_check
          %p285 = pneg %p133
        $region22: #{transformer_forward.16} parent=11 // pred_check_branch
          %287 = sbr.rel (%p285) target = $region24
        $region23: #{transformer_forward.16} parent=11 // pred_region
          %289 = vsyncadd [#allocation3], 0
          %s290 = sshll.u32 %s4, 4
          %s291 = int_to_ptr.hbm [resolvable:$true] %s290
          %s292 = sshll.u32 [#allocation2], 4
          %s293 = int_to_ptr.vmem [resolvable:$true] %s292
          %298 = dma.hbm_to_vmem [thread:$0]  %s291, 256, %s293, [#allocation3], 64, 64, 4
        $region24: #{transformer_forward.16} parent=11 // pred_fallthru
          _
        // Predicated region
        $region25: #{transformer_forward.16} parent=11 // pred_check
          %p299 = pneg %p154
        $region26: #{transformer_forward.16} parent=11 // pred_check_branch
          %301 = sbr.rel (%p299) target = $region28
        $region27: #{transformer_forward.16} parent=11 // pred_region
          _
        $region28: #{transformer_forward.16} parent=11 // pred_fallthru
          _
        // Predicated region
        $region29: #{transformer_forward.16} parent=11 // pred_check
          %p302 = pneg %p175
        $region30: #{transformer_forward.16} parent=11 // pred_check_branch
          %304 = sbr.rel (%p302) target = $region32
        $region31: #{transformer_forward.16} parent=11 // pred_region
          %306 = vsyncadd [#allocation5], 0
          %s307 = sshll.u32 %s6, 4
          %s308 = int_to_ptr.hbm [resolvable:$true] %s307
          %s309 = sshll.u32 [#allocation4], 4
          %s310 = int_to_ptr.vmem [resolvable:$true] %s309
          %315 = dma.hbm_to_vmem [thread:$0]  %s308, 256, %s310, [#allocation5], 64, 64, 4
        $region32: #{transformer_forward.16} parent=11 // pred_fallthru
          _
        // Predicated region
        $region33: #{transformer_forward.16} parent=11 // pred_check
          %p316 = pneg %p196
        $region34: #{transformer_forward.16} parent=11 // pred_check_branch
          %318 = sbr.rel (%p316) target = $region36
        $region35: #{transformer_forward.16} parent=11 // pred_region
          _
        $region36: #{transformer_forward.16} parent=11 // pred_fallthru
          _
        // Predicated region
        $region37: #{transformer_forward.16} parent=11 // pred_check
          %p319 = pneg %p217
        $region38: #{transformer_forward.16} parent=11 // pred_check_branch
          %321 = sbr.rel (%p319) target = $region40
        $region39: #{transformer_forward.16} parent=11 // pred_region
          _
        $region40: #{transformer_forward.16} parent=11 // pred_fallthru
          _
        // Predicated region
        $region41: #{transformer_forward.16} parent=11 // pred_check
          %p322 = pneg %p238
        $region42: #{transformer_forward.16} parent=11 // pred_check_branch
          %324 = sbr.rel (%p322) target = $region44
        $region43: #{transformer_forward.16} parent=11 // pred_region
          _
        $region44: #{transformer_forward.16} parent=11 // pred_fallthru
          _
      $region12: #{transformer_forward.16} parent=5 // pred_fallthru
        _
      %p325 = scmp.lt.s32.totalorder %s18, 2
      // Predicated region
      $region45: #{transformer_forward.16} parent=5 // pred_check
        %p326 = pneg %p325
      $region46: #{transformer_forward.16} parent=5 // pred_check_branch
        %328 = sbr.rel (%p326) target = $region48
      $region47: #{transformer_forward.16} parent=5 // pred_region
        // Predicated region
        $region49: #{transformer_forward.16} parent=47 // pred_check
          %p329 = pneg %p38
        $region50: #{transformer_forward.16} parent=47 // pred_check_branch
          %331 = sbr.rel (%p329) target = $region52
        $region51: #{transformer_forward.16} parent=47 // pred_region
          %p332 = scmp.lt.s32.totalorder %s18, 1
          %s333 = scalar_select %p332, %s18, 1
          %s334 = smul.addr %s333, 4
          %s335 = scalar_lea.vmem %s0, %s334
        $region52: #{transformer_forward.16} parent=47 // pred_fallthru
          _
        // Predicated region
        $region53: #{transformer_forward.16} parent=47 // pred_check
          %p336 = pneg %p64
        $region54: #{transformer_forward.16} parent=47 // pred_check_branch
          %338 = sbr.rel (%p336) target = $region56
        $region55: #{transformer_forward.16} parent=47 // pred_region
          %p339 = scmp.lt.s32.totalorder %s18, 1
          %s340 = scalar_select %p339, %s18, 1
          %s341 = smul.addr %s340, 4
          %s342 = scalar_lea.vmem %s1, %s341
        $region56: #{transformer_forward.16} parent=47 // pred_fallthru
          _
      $region48: #{transformer_forward.16} parent=5 // pred_fallthru
        _
      %p343 = scmp.le.s32.totalorder 1, %s18
      %p344 = scmp.lt.s32.totalorder %s18, 3
      %p345 = pnand %p343, %p344
      %p346 = pneg %p345
      // Predicated region
      $region57: #{transformer_forward.16} parent=5 // pred_check
        _
      $region58: #{transformer_forward.16} parent=5 // pred_check_branch
        %348 = sbr.rel (%p345) target = $region60
      $region59: #{transformer_forward.16} parent=5 // pred_region
        %s349 = ssub.s32 %s18, 1
        // Predicated region
        $region61: #{transformer_forward.16} parent=59 // pred_check
          %p350 = pneg %p133
        $region62: #{transformer_forward.16} parent=59 // pred_check_branch
          %352 = sbr.rel (%p350) target = $region64
        $region63: #{transformer_forward.16} parent=59 // pred_region
          %354 = dma.done [#allocation3], 256
        $region64: #{transformer_forward.16} parent=59 // pred_fallthru
          _
        // Predicated region
        $region65: #{transformer_forward.16} parent=59 // pred_check
          %p355 = pneg %p175
        $region66: #{transformer_forward.16} parent=59 // pred_check_branch
          %357 = sbr.rel (%p355) target = $region68
        $region67: #{transformer_forward.16} parent=59 // pred_region
          %359 = dma.done [#allocation5], 256
        $region68: #{transformer_forward.16} parent=59 // pred_fallthru
          _
        %p360 = scmp.lt.s32.totalorder %s23, 1
        %s361 = scalar_select %p360, %s23, 1
        %s362 = smul.addr %s361, 4
        %s363 = scalar_lea.vmem %s0, %s362
        %p364 = pneg %p44
        %p365 = pneg %p41
        %p366 = scmp.lt.s32.totalorder %s23, 1
        %s367 = scalar_select %p366, %s23, 1
        %s368 = smul.addr %s367, 4
        %s369 = scalar_lea.vmem %s1, %s368
        %p370 = pneg %p70
        %p371 = pneg %p67
        %p372 = pneg %p91
        %p373 = pneg %p88
        %p374 = pneg %p112
        %p375 = pneg %p109
        %p376 = pneg %p133
        %p377 = pneg %p130
        %p378 = pneg %p154
        %p379 = pneg %p151
        %p380 = pneg %p175
        %p381 = pneg %p172
        %p382 = pneg %p196
        %p383 = pneg %p193
        %p384 = pneg %p217
        %p385 = pneg %p214
        %p386 = pneg %p238
        %p387 = pneg %p235
        %p388 = pneg %p264
        %p389 = pneg %p261
        %p390 = scmp.lt.s32.totalorder %s23, 1
        %s391 = scalar_select %p390, %s23, 1
        %s392 = smul.addr %s391, 4
        %s393 = scalar_lea.vmem %s10, %s392
        %p394 = scmp.lt.s32.totalorder %s23, 1
        %s395 = scalar_select %p394, %s23, 1
        %s396 = smul.addr %s395, 4
        %s397 = scalar_lea.vmem %s0, %s396
        %p398 = scmp.lt.s32.totalorder %s23, 1
        %s399 = scalar_select %p398, %s23, 1
        %s400 = smul.addr %s399, 4
        %s401 = scalar_lea.vmem %s1, %s400
        %p402 = scmp.lt.s32.totalorder %s23, 1
        %s403 = scalar_select %p402, %s23, 1
        %s404 = smul.addr %s403, 4
        %s405 = scalar_lea.vmem %s10, %s404
        %v407 = vld [vmem:[%s397] sm:$0xf]
        %v408 = vld [vmem:[%s401] sm:$0xf]
        %v409 = vld [vmem:[%s2] sm:$0xf]
        %v410 = vld [vmem:[%s2 + $0x4] sm:$0xf]
        %v411 = vld [vmem:[%s2 + $0x8] sm:$0xf]
        %v412 = vld [vmem:[%s2 + $0xc] sm:$0xf]
        %v413 = vld [vmem:[%s3] sm:$0x1]
        %v415 = vperm.slane %v413, 0
        %v421 = vunpack.c.l.b16 %v409
        %v422 = vunpack.c.l.b16 %v410
        %v423 = vunpack.c.l.b16 %v411
        %v424 = vunpack.c.l.b16 %v412
        %v425 = vpack.c.b16 %v422, %v421
        %v426 = vpack.c.b16 %v424, %v423
        %vm429 = vcmask 261120
        %v431 = vsel %vm429, %v407, 0
        %433 = vmatpush.bf16.msra.mxu0 0
        %434 = vmatpush.bf16.msra.mxu0 0
        %435 = vmatpush.bf16.msra.mxu0 0
        %436 = vmatpush.bf16.msra.mxu0 0
        %437 = vmatpush.bf16.msra.mxu0 0
        %438 = vmatpush.bf16.msra.mxu0 0
        %439 = vmatpush.bf16.msra.mxu0 %v426
        %440 = vmatpush.bf16.msra.mxu0 %v425
        %441 = vmatmul.bf16.gmra.mxu0 %v431
        %v442 = vpop.f32.mrf.mxu0
        %v443 = vadd.f32 %v415, %v442
        %v444 = vpop.f32.mrf.mxu0
        %445 = vdwg.mxu0
        %v446 = vld [vmem:[#allocation2] sm:$0xf]
        %v447 = vld [vmem:[#allocation2 + $0x4] sm:$0xf]
        %v448 = vld [vmem:[#allocation2 + $0x8] sm:$0xf]
        %v449 = vld [vmem:[#allocation2 + $0xc] sm:$0xf]
        %v450 = vld [vmem:[%s5] sm:$0x1]
        %v452 = vperm.slane %v450, 0
        %v458 = vunpack.c.l.b16 %v446
        %v459 = vunpack.c.l.b16 %v447
        %v460 = vunpack.c.l.b16 %v448
        %v461 = vunpack.c.l.b16 %v449
        %v462 = vpack.c.b16 %v459, %v458
        %v463 = vpack.c.b16 %v461, %v460
        %v467 = vsel %vm429, %v408, 0
        %469 = vmatpush.bf16.msra.mxu0 0
        %470 = vmatpush.bf16.msra.mxu0 0
        %471 = vmatpush.bf16.msra.mxu0 0
        %472 = vmatpush.bf16.msra.mxu0 0
        %473 = vmatpush.bf16.msra.mxu0 0
        %474 = vmatpush.bf16.msra.mxu0 0
        %475 = vmatpush.bf16.msra.mxu0 %v463
        %476 = vmatpush.bf16.msra.mxu0 %v462
        %477 = vmatmul.bf16.gmra.mxu0 %v467
        %v478 = vpop.f32.mrf.mxu0
        %v479 = vadd.f32 %v452, %v478
        %v480 = vpop.f32.mrf.mxu0
        %481 = vdwg.mxu0
        %v482 = vpack.c.bf16 %v443, %v443
        %v483 = vpack.c.bf16 %v479, %v479
        %vm484 = vcmask 64512
        %v486 = vsel %vm484, %v482, 0
        %v489 = vsel %vm484, %v483, 0
        %491 = vmatpush.bf16.xpose.msra.mxu0 0
        %492 = vmatpush.bf16.xpose.msra.mxu0 0
        %493 = vmatpush.bf16.xpose.msra.mxu0 0
        %494 = vmatpush.bf16.xpose.msra.mxu0 0
        %495 = vmatpush.bf16.xpose.msra.mxu0 0
        %496 = vmatpush.bf16.xpose.msra.mxu0 0
        %497 = vmatpush.bf16.xpose.msra.mxu0 0
        %498 = vmatpush.bf16.xpose.msra.mxu0 %v489
        %499 = vmatmul.bf16.gmra.mxu0 %v486
        %v500 = vpop.f32.mrf.mxu0
        %v501 = vadd.f32 0.0, %v500
        %v502 = vpop.f32.mrf.mxu0
        %503 = vdwg.mxu0
        %v504 = vmul.f32 %v501, 0.35355338
        %v505 = vsel %vm484, %v504, -inf
        %506 = vmax.xlane.f32.xlu0 %v505
        %v507 = vpop.xlane.xlu0 %506
        %v508 = vsub.f32 %v504, %v507
        %v509 = vmul.f32 %v508, 1.442695
        %v510 = vpow.pop %v509
        %v511 = vsel %vm484, %v510, 0.0
        %512 = vadd.xlane.f32.xlu0 %v511
        %v513 = vpop.xlane.xlu0 %512
        %v514 = vrcp.pop %v513
        %v515 = vmul.f32 %v510, %v514
        %v516 = vpack.c.bf16 %v515, %v515
        %518 = vrot.lane.b32.xlu0 %v483, 96
        %v519 = vpop.permute.xlu0 %518
        %v521 = vsel %vm484, %v516, 0
        %vm523 = vcmask 1043456
        %v525 = vsel %vm523, %v519, 0
        %527 = vmatpush.bf16.msra.mxu0 0
        %528 = vmatpush.bf16.msra.mxu0 0
        %529 = vmatpush.bf16.msra.mxu0 0
        %530 = vmatpush.bf16.msra.mxu0 0
        %531 = vmatpush.bf16.msra.mxu0 0
        %532 = vmatpush.bf16.msra.mxu0 0
        %533 = vmatpush.bf16.msra.mxu0 0
        %534 = vmatpush.bf16.msra.mxu0 %v525
        %535 = vmatmul.bf16.gmra.mxu0 %v521
        %v536 = vpop.f32.mrf.mxu0
        %v537 = vadd.f32 0.0, %v536
        %v538 = vpop.f32.mrf.mxu0
        %539 = vdwg.mxu0
        %541 = vrot.lane.b32.xlu0 %v482, 120
        %v542 = vpop.permute.xlu0 %541
        %543 = vrot.lane.b32.xlu0 %v483, 120
        %v544 = vpop.permute.xlu0 %543
        %v546 = vsel %vm484, %v542, 0
        %v549 = vsel %vm484, %v544, 0
        %551 = vmatpush.bf16.xpose.msra.mxu0 0
        %552 = vmatpush.bf16.xpose.msra.mxu0 0
        %553 = vmatpush.bf16.xpose.msra.mxu0 0
        %554 = vmatpush.bf16.xpose.msra.mxu0 0
        %555 = vmatpush.bf16.xpose.msra.mxu0 0
        %556 = vmatpush.bf16.xpose.msra.mxu0 0
        %557 = vmatpush.bf16.xpose.msra.mxu0 0
        %558 = vmatpush.bf16.xpose.msra.mxu0 %v549
        %559 = vmatmul.bf16.gmra.mxu0 %v546
        %v560 = vpop.f32.mrf.mxu0
        %v561 = vadd.f32 0.0, %v560
        %v562 = vpop.f32.mrf.mxu0
        %563 = vdwg.mxu0
        %v564 = vmul.f32 %v561, 0.35355338
        %v565 = vsel %vm484, %v564, -inf
        %566 = vmax.xlane.f32.xlu0 %v565
        %v567 = vpop.xlane.xlu0 %566
        %v568 = vsub.f32 %v564, %v567
        %v569 = vmul.f32 %v568, 1.442695
        %v570 = vpow.pop %v569
        %v571 = vsel %vm484, %v570, 0.0
        %572 = vadd.xlane.f32.xlu0 %v571
        %v573 = vpop.xlane.xlu0 %572
        %v574 = vrcp.pop %v573
        %v575 = vmul.f32 %v570, %v574
        %v576 = vpack.c.bf16 %v575, %v575
        %577 = vrot.lane.b32.xlu0 %v483, 88
        %v578 = vpop.permute.xlu0 %577
        %v580 = vsel %vm484, %v576, 0
        %v583 = vsel %vm523, %v578, 0
        %585 = vmatpush.bf16.msra.mxu0 0
        %586 = vmatpush.bf16.msra.mxu0 0
        %587 = vmatpush.bf16.msra.mxu0 0
        %588 = vmatpush.bf16.msra.mxu0 0
        %589 = vmatpush.bf16.msra.mxu0 0
        %590 = vmatpush.bf16.msra.mxu0 0
        %591 = vmatpush.bf16.msra.mxu0 0
        %592 = vmatpush.bf16.msra.mxu0 %v583
        %593 = vmatmul.bf16.gmra.mxu0 %v580
        %v594 = vpop.f32.mrf.mxu0
        %v595 = vadd.f32 0.0, %v594
        %v596 = vpop.f32.mrf.mxu0
        %597 = vdwg.mxu0
        %598 = vrot.lane.b32.xlu0 %v482, 112
        %v599 = vpop.permute.xlu0 %598
        %600 = vrot.lane.b32.xlu0 %v483, 112
        %v601 = vpop.permute.xlu0 %600
        %v603 = vsel %vm484, %v599, 0
        %v606 = vsel %vm484, %v601, 0
        %608 = vmatpush.bf16.xpose.msra.mxu0 0
        %609 = vmatpush.bf16.xpose.msra.mxu0 0
        %610 = vmatpush.bf16.xpose.msra.mxu0 0
        %611 = vmatpush.bf16.xpose.msra.mxu0 0
        %612 = vmatpush.bf16.xpose.msra.mxu0 0
        %613 = vmatpush.bf16.xpose.msra.mxu0 0
        %614 = vmatpush.bf16.xpose.msra.mxu0 0
        %615 = vmatpush.bf16.xpose.msra.mxu0 %v606
        %616 = vmatmul.bf16.gmra.mxu0 %v603
        %v617 = vpop.f32.mrf.mxu0
        %v618 = vadd.f32 0.0, %v617
        %v619 = vpop.f32.mrf.mxu0
        %620 = vdwg.mxu0
        %v621 = vmul.f32 %v618, 0.35355338
        %v622 = vsel %vm484, %v621, -inf
        %623 = vmax.xlane.f32.xlu0 %v622
        %v624 = vpop.xlane.xlu0 %623
        %v625 = vsub.f32 %v621, %v624
        %v626 = vmul.f32 %v625, 1.442695
        %v627 = vpow.pop %v626
        %v628 = vsel %vm484, %v627, 0.0
        %629 = vadd.xlane.f32.xlu0 %v628
        %v630 = vpop.xlane.xlu0 %629
        %v631 = vrcp.pop %v630
        %v632 = vmul.f32 %v627, %v631
        %v633 = vpack.c.bf16 %v632, %v632
        %634 = vrot.lane.b32.xlu0 %v483, 80
        %v635 = vpop.permute.xlu0 %634
        %v637 = vsel %vm484, %v633, 0
        %v640 = vsel %vm523, %v635, 0
        %642 = vmatpush.bf16.msra.mxu0 0
        %643 = vmatpush.bf16.msra.mxu0 0
        %644 = vmatpush.bf16.msra.mxu0 0
        %645 = vmatpush.bf16.msra.mxu0 0
        %646 = vmatpush.bf16.msra.mxu0 0
        %647 = vmatpush.bf16.msra.mxu0 0
        %648 = vmatpush.bf16.msra.mxu0 0
        %649 = vmatpush.bf16.msra.mxu0 %v640
        %650 = vmatmul.bf16.gmra.mxu0 %v637
        %v651 = vpop.f32.mrf.mxu0
        %v652 = vadd.f32 0.0, %v651
        %v653 = vpop.f32.mrf.mxu0
        %654 = vdwg.mxu0
        %655 = vrot.lane.b32.xlu0 %v482, 104
        %v656 = vpop.permute.xlu0 %655
        %657 = vrot.lane.b32.xlu0 %v483, 104
        %v658 = vpop.permute.xlu0 %657
        %v660 = vsel %vm484, %v656, 0
        %v663 = vsel %vm484, %v658, 0
        %665 = vmatpush.bf16.xpose.msra.mxu0 0
        %666 = vmatpush.bf16.xpose.msra.mxu0 0
        %667 = vmatpush.bf16.xpose.msra.mxu0 0
        %668 = vmatpush.bf16.xpose.msra.mxu0 0
        %669 = vmatpush.bf16.xpose.msra.mxu0 0
        %670 = vmatpush.bf16.xpose.msra.mxu0 0
        %671 = vmatpush.bf16.xpose.msra.mxu0 0
        %672 = vmatpush.bf16.xpose.msra.mxu0 %v663
        %673 = vmatmul.bf16.gmra.mxu0 %v660
        %v674 = vpop.f32.mrf.mxu0
        %v675 = vadd.f32 0.0, %v674
        %v676 = vpop.f32.mrf.mxu0
        %677 = vdwg.mxu0
        %v678 = vmul.f32 %v675, 0.35355338
        %v679 = vsel %vm484, %v678, -inf
        %680 = vmax.xlane.f32.xlu0 %v679
        %v681 = vpop.xlane.xlu0 %680
        %v682 = vsub.f32 %v678, %v681
        %v683 = vmul.f32 %v682, 1.442695
        %v684 = vpow.pop %v683
        %v685 = vsel %vm484, %v684, 0.0
        %686 = vadd.xlane.f32.xlu0 %v685
        %v687 = vpop.xlane.xlu0 %686
        %v688 = vrcp.pop %v687
        %v689 = vmul.f32 %v684, %v688
        %v690 = vpack.c.bf16 %v689, %v689
        %691 = vrot.lane.b32.xlu0 %v483, 72
        %v692 = vpop.permute.xlu0 %691
        %v694 = vsel %vm484, %v690, 0
        %v697 = vsel %vm523, %v692, 0
        %699 = vmatpush.bf16.msra.mxu0 0
        %700 = vmatpush.bf16.msra.mxu0 0
        %701 = vmatpush.bf16.msra.mxu0 0
        %702 = vmatpush.bf16.msra.mxu0 0
        %703 = vmatpush.bf16.msra.mxu0 0
        %704 = vmatpush.bf16.msra.mxu0 0
        %705 = vmatpush.bf16.msra.mxu0 0
        %706 = vmatpush.bf16.msra.mxu0 %v697
        %707 = vmatmul.bf16.gmra.mxu0 %v694
        %v708 = vpop.f32.mrf.mxu0
        %v709 = vadd.f32 0.0, %v708
        %v710 = vpop.f32.mrf.mxu0
        %711 = vdwg.mxu0
        %713 = vrot.lane.b32.xlu0 %v595, 8
        %v714 = vpop.permute.xlu0 %713
        %717 = vrot.lane.b32.xlu0 %v652, 16
        %v718 = vpop.permute.xlu0 %717
        %721 = vrot.lane.b32.xlu0 %v709, 24
        %v722 = vpop.permute.xlu0 %721
        %v724 = vsel %vm484, %v537, %v714
        %vm725 = vcmask 130048
        %v726 = vsel %vm725, %v724, %v718
        %vm727 = vcmask 195584
        %v728 = vsel %vm727, %v726, %v722
        %v729 = vpack.c.bf16 %v728, %v728
        %v730 = vld [vmem:[#allocation4] sm:$0xf]
        %v731 = vld [vmem:[#allocation4 + $0x4] sm:$0xf]
        %v732 = vld [vmem:[#allocation4 + $0x8] sm:$0xf]
        %v733 = vld [vmem:[#allocation4 + $0xc] sm:$0xf]
        %v734 = vld [vmem:[%s7] sm:$0x1]
        %v736 = vperm.slane %v734, 0
        %v742 = vunpack.c.l.b16 %v730
        %v743 = vunpack.c.l.b16 %v731
        %v744 = vunpack.c.l.b16 %v732
        %v745 = vunpack.c.l.b16 %v733
        %v746 = vpack.c.b16 %v743, %v742
        %v747 = vpack.c.b16 %v745, %v744
        %v751 = vsel %vm429, %v729, 0
        %753 = vmatpush.bf16.msra.mxu0 0
        %754 = vmatpush.bf16.msra.mxu0 0
        %755 = vmatpush.bf16.msra.mxu0 0
        %756 = vmatpush.bf16.msra.mxu0 0
        %757 = vmatpush.bf16.msra.mxu0 0
        %758 = vmatpush.bf16.msra.mxu0 0
        %759 = vmatpush.bf16.msra.mxu0 %v747
        %760 = vmatpush.bf16.msra.mxu0 %v746
        %761 = vmatmul.bf16.gmra.mxu0 %v751
        %v762 = vpop.f32.mrf.mxu0
        %v763 = vadd.f32 %v736, %v762
        %v764 = vpop.f32.mrf.mxu0
        %765 = vdwg.mxu0
        %v766 = vunpack.c.l.bf16 %v407
        %v767 = vadd.f32 %v766, %v763
        %v768 = vsel %vm429, %v767, 0.0
        %769 = vadd.xlane.f32.xlu0 %v768
        %v770 = vpop.xlane.xlu0 %769
        %v771 = vrcp.pop 32.0
        %v772 = vmul.f32 32.0, %v771
        %v773 = vsub.f32 1.0, %v772
        %v774 = vmul.f32 %v771, %v773
        %v775 = vadd.f32 %v771, %v774
        %vm776 = vweird.f32 %v771
        %v777 = vsel %vm776, %v771, %v775
        %v778 = vmul.f32 %v770, %v777
        %v779 = vsub.f32 %v767, %v778
        %v780 = vmul.f32 %v779, %v779
        %v781 = vsel %vm429, %v780, 0.0
        %782 = vadd.xlane.f32.xlu0 %v781
        %v783 = vpop.xlane.xlu0 %782
        %v784 = vmul.f32 %v783, %v777
        %v785 = vadd.f32 %v784, 1e-05
        %v786 = vrsqrt.pop %v785
        %v787 = vmul.f32 %v786, %v785
        %v788 = vmul.f32 %v787, %v786
        %v789 = vmul.f32 0.5, %v788
        %v790 = vsub.f32 1.5, %v789
        %v791 = vmul.f32 %v786, %v790
        %vm792 = vweird.f32 %v785
        %vm793 = vweird.f32 %v786
        %vm794 = vmor %vm792, %vm793
        %v795 = vsel %vm794, %v786, %v791
        %v796 = vmul.f32 %v779, %v795
        %v797 = vld [vmem:[%s8] sm:$0x1]
        %v799 = vperm.slane %v797, 0
        %v801 = vmul.f32 %v796, %v799
        %v802 = vld [vmem:[%s9] sm:$0x1]
        %v804 = vperm.slane %v802, 0
        %v806 = vadd.f32 %v801, %v804
        %v807 = vpack.c.bf16 %v806, %v806
        %vm808 = vcmask 257024
        %809 = vst.msk [vmem:[%s405] sm:$0xf] %vm808, %v807
        %p810 = scmp.lt.s32.totalorder %s23, 1
        %s811 = scalar_select %p810, %s23, 1
        %s812 = smul.addr %s811, 4
        %s813 = scalar_lea.vmem %s10, %s812
        // Predicated region
        $region69: #{transformer_forward.16} parent=59 // pred_check
          %p814 = pneg %p261
        $region70: #{transformer_forward.16} parent=59 // pred_check_branch
          %816 = sbr.rel (%p814) target = $region72
        $region71: #{transformer_forward.16} parent=59 // pred_region
          _
        $region72: #{transformer_forward.16} parent=59 // pred_fallthru
          _
      $region60: #{transformer_forward.16} parent=5 // pred_fallthru
        _
      %p817 = scmp.le.s32.totalorder 2, %s18
      // Predicated region
      $region73: #{transformer_forward.16} parent=5 // pred_check
        %p818 = pneg %p817
      $region74: #{transformer_forward.16} parent=5 // pred_check_branch
        %820 = sbr.rel (%p818) target = $region76
      $region75: #{transformer_forward.16} parent=5 // pred_region
        %s821 = ssub.s32 %s18, 2
        // Predicated region
        $region77: #{transformer_forward.16} parent=75 // pred_check
          %p822 = pneg %p267
        $region78: #{transformer_forward.16} parent=75 // pred_check_branch
          %824 = sbr.rel (%p822) target = $region80
        $region79: #{transformer_forward.16} parent=75 // pred_region
          %p825 = scmp.lt.s32.totalorder %s24, 1
          %s826 = scalar_select %p825, %s24, 1
          %s827 = smul.addr %s826, 4
          %s828 = scalar_lea.vmem %s10, %s827
        $region80: #{transformer_forward.16} parent=75 // pred_fallthru
          _
      $region76: #{transformer_forward.16} parent=5 // pred_fallthru
        _
    $region6: #{transformer_forward.16} parent=1 // loop_footer
      %s22 = sadd.s32 1, %s18
    $region7: #{transformer_forward.16} parent=1 // loop_footer_branch
      %17 = sbr.rel target = $region3
    $region8: #{transformer_forward.16} parent=1 // loop_exit
      _
    %829 = vsyncpa [#allocation3], 1
    %s830 = scalar_lea.sflag [#allocation3], 1
    %831 = vsyncpa %s830, 1
    %832 = vsyncpa [#allocation5], 1

// kernel: transformer_forward.14
$region0: #{transformer_forward.14}
  #allocation0 [shape = 'u32[]', space=smem, size = 0x4, offset = 0x4, fixed_abs, tag = 'smem constant byte address 0x4 - core index']
  #allocation1 [shape = 'u32[72,128]{1,0:T(1,128)}', space=vmem, size = 0x9000, scoped, tag = 'internal scratch']
  %s0 = inlined_call_operand.vmem [shape: bf16[16,32], index: 0, kind: input, shape index: {}]
  %s1 = inlined_call_operand.vmem [shape: bf16[32,64], index: 1, kind: input, shape index: {}]
  %s2 = inlined_call_operand.vmem [shape: f32[1,64], index: 2, kind: input, shape index: {}]
  %s3 = inlined_call_operand.vmem [shape: bf16[64,32], index: 3, kind: input, shape index: {}]
  %s4 = inlined_call_operand.vmem [shape: f32[1,32], index: 4, kind: input, shape index: {}]
  %s5 = inlined_call_operand.vmem [shape: f32[1,32], index: 5, kind: input, shape index: {}]
  %s6 = inlined_call_operand.vmem [shape: f32[1,32], index: 6, kind: input, shape index: {}]
  %s7 = inlined_call_operand.vmem [shape: bf16[16,32], index: 7, kind: output, shape index: {}]
  %s8 = sld [smem:[#allocation0]]
  $region38: #{transformer_forward.14} parent=0
    _
  %s10 = ssub.s32 1, %s8
  %s11 = scalar_select 0, %s10, %s8
  // Predicated region
  $region2: #{transformer_forward.14} parent=0 // pred_check
    _
  $region3: #{transformer_forward.14} parent=0 // pred_check_branch
    %13 = sbr.rel (0) target = $region5
  $region4: #{transformer_forward.14} parent=0 // pred_region
    _
  $region5: #{transformer_forward.14} parent=0 // pred_fallthru
    _
  // Predicated region
  $region6: #{transformer_forward.14} parent=0 // pred_check
    _
  $region7: #{transformer_forward.14} parent=0 // pred_check_branch
    %15 = sbr.rel (0) target = $region9
  $region8: #{transformer_forward.14} parent=0 // pred_region
    _
  $region9: #{transformer_forward.14} parent=0 // pred_fallthru
    _
  // Predicated region
  $region10: #{transformer_forward.14} parent=0 // pred_check
    _
  $region11: #{transformer_forward.14} parent=0 // pred_check_branch
    %17 = sbr.rel (0) target = $region13
  $region12: #{transformer_forward.14} parent=0 // pred_region
    _
  $region13: #{transformer_forward.14} parent=0 // pred_fallthru
    _
  // Predicated region
  $region14: #{transformer_forward.14} parent=0 // pred_check
    _
  $region15: #{transformer_forward.14} parent=0 // pred_check_branch
    %19 = sbr.rel (0) target = $region17
  $region16: #{transformer_forward.14} parent=0 // pred_region
    _
  $region17: #{transformer_forward.14} parent=0 // pred_fallthru
    _
  // Predicated region
  $region18: #{transformer_forward.14} parent=0 // pred_check
    _
  $region19: #{transformer_forward.14} parent=0 // pred_check_branch
    %21 = sbr.rel (0) target = $region21
  $region20: #{transformer_forward.14} parent=0 // pred_region
    _
  $region21: #{transformer_forward.14} parent=0 // pred_fallthru
    _
  // Predicated region
  $region22: #{transformer_forward.14} parent=0 // pred_check
    _
  $region23: #{transformer_forward.14} parent=0 // pred_check_branch
    %23 = sbr.rel (0) target = $region25
  $region24: #{transformer_forward.14} parent=0 // pred_region
    _
  $region25: #{transformer_forward.14} parent=0 // pred_fallthru
    _
  // Predicated region
  $region26: #{transformer_forward.14} parent=0 // pred_check
    _
  $region27: #{transformer_forward.14} parent=0 // pred_check_branch
    %25 = sbr.rel (0) target = $region29
  $region28: #{transformer_forward.14} parent=0 // pred_region
    _
  $region29: #{transformer_forward.14} parent=0 // pred_fallthru
    _
  %v27 = vld [vmem:[%s0] sm:$0xf]
  %v28 = vld [vmem:[%s0 + $0x4] sm:$0xf]
  %v29 = vld [vmem:[%s1] sm:$0xf]
  %v30 = vld [vmem:[%s1 + $0x4] sm:$0xf]
  %v31 = vld [vmem:[%s1 + $0x8] sm:$0xf]
  %v32 = vld [vmem:[%s1 + $0xc] sm:$0xf]
  %v33 = vld [vmem:[%s2] sm:$0x1]
  %v35 = vperm.slane %v33, 0
  %v39 = vunpack.c.l.b16 %v27
  %v40 = vunpack.c.l.b16 %v28
  %v41 = vpack.c.b16 %v40, %v39
  %v46 = vunpack.c.l.b16 %v29
  %v47 = vunpack.c.l.b16 %v30
  %v48 = vunpack.c.l.b16 %v31
  %v49 = vunpack.c.l.b16 %v32
  %v50 = vpack.c.b16 %v47, %v46
  %v51 = vpack.c.b16 %v49, %v48
  %vm54 = vcmask 261120
  %v56 = vsel %vm54, %v41, 0
  %58 = vmatpush.bf16.msra.mxu0 0
  %59 = vmatpush.bf16.msra.mxu0 0
  %60 = vmatpush.bf16.msra.mxu0 0
  %61 = vmatpush.bf16.msra.mxu0 0
  %62 = vmatpush.bf16.msra.mxu0 0
  %63 = vmatpush.bf16.msra.mxu0 0
  %64 = vmatpush.bf16.msra.mxu0 %v51
  %65 = vmatpush.bf16.msra.mxu0 %v50
  %66 = vmatmul.bf16.gmra.mxu0 %v56
  %v67 = vpop.f32.mrf.mxu0
  %v68 = vadd.f32 %v35, %v67
  %v69 = vpop.f32.mrf.mxu0
  %v70 = vadd.f32 %v35, %v69
  %71 = vdwg.mxu0
  %v72 = vmax.f32 %v68, 0.0
  %v73 = vmax.f32 %v70, 0.0
  %v74 = vpack.c.bf16 %v73, %v72
  %v75 = vld [vmem:[%s3] sm:$0xf]
  %v76 = vld [vmem:[%s3 + $0x4] sm:$0xf]
  %v77 = vld [vmem:[%s3 + $0x8] sm:$0xf]
  %v78 = vld [vmem:[%s3 + $0xc] sm:$0xf]
  %v79 = vld [vmem:[%s3 + $0x10] sm:$0xf]
  %v80 = vld [vmem:[%s3 + $0x14] sm:$0xf]
  %v81 = vld [vmem:[%s3 + $0x18] sm:$0xf]
  %v82 = vld [vmem:[%s3 + $0x1c] sm:$0xf]
  %v83 = vld [vmem:[%s4] sm:$0x1]
  %v85 = vperm.slane %v83, 0
  %v95 = vunpack.c.l.b16 %v75
  %v96 = vunpack.c.l.b16 %v76
  %v97 = vunpack.c.l.b16 %v77
  %v98 = vunpack.c.l.b16 %v78
  %v99 = vunpack.c.l.b16 %v79
  %v100 = vunpack.c.l.b16 %v80
  %v101 = vunpack.c.l.b16 %v81
  %v102 = vunpack.c.l.b16 %v82
  %v103 = vpack.c.b16 %v96, %v95
  %v104 = vpack.c.b16 %v98, %v97
  %v105 = vpack.c.b16 %v100, %v99
  %v106 = vpack.c.b16 %v102, %v101
  %vm111 = vcmask 523264
  %v113 = vsel %vm111, %v74, 0
  %115 = vmatpush.bf16.msra.mxu0 0
  %116 = vmatpush.bf16.msra.mxu0 0
  %117 = vmatpush.bf16.msra.mxu0 0
  %118 = vmatpush.bf16.msra.mxu0 0
  %119 = vmatpush.bf16.msra.mxu0 %v106
  %120 = vmatpush.bf16.msra.mxu0 %v105
  %121 = vmatpush.bf16.msra.mxu0 %v104
  %122 = vmatpush.bf16.msra.mxu0 %v103
  %123 = vmatmul.bf16.gmra.mxu0 %v113
  %v124 = vpop.f32.mrf.mxu0
  %v125 = vadd.f32 %v85, %v124
  %v126 = vpop.f32.mrf.mxu0
  %v127 = vadd.f32 %v85, %v126
  %128 = vdwg.mxu0
  %v129 = vunpack.c.l.bf16 %v27
  %v130 = vunpack.c.l.bf16 %v28
  %v131 = vadd.f32 %v129, %v125
  %v132 = vadd.f32 %v130, %v127
  %v133 = vsel %vm54, %v131, 0.0
  %134 = vadd.xlane.f32.xlu0 %v133
  %v135 = vpop.xlane.xlu0 %134
  %v136 = vsel %vm54, %v132, 0.0
  %137 = vadd.xlane.f32.xlu0 %v136
  %v138 = vpop.xlane.xlu0 %137
  %v139 = vrcp.pop 32.0
  %v140 = vmul.f32 32.0, %v139
  %v141 = vsub.f32 1.0, %v140
  %v142 = vmul.f32 %v139, %v141
  %v143 = vadd.f32 %v139, %v142
  %vm144 = vweird.f32 %v139
  %v145 = vsel %vm144, %v139, %v143
  %v146 = vmul.f32 %v135, %v145
  %v147 = vmul.f32 %v138, %v145
  %v148 = vsub.f32 %v131, %v146
  %v149 = vsub.f32 %v132, %v147
  %v150 = vmul.f32 %v148, %v148
  %v151 = vmul.f32 %v149, %v149
  %v152 = vsel %vm54, %v150, 0.0
  %153 = vadd.xlane.f32.xlu0 %v152
  %v154 = vpop.xlane.xlu0 %153
  %v155 = vsel %vm54, %v151, 0.0
  %156 = vadd.xlane.f32.xlu0 %v155
  %v157 = vpop.xlane.xlu0 %156
  %v158 = vmul.f32 %v154, %v145
  %v159 = vmul.f32 %v157, %v145
  %v160 = vadd.f32 %v158, 1e-05
  %v161 = vadd.f32 %v159, 1e-05
  %v162 = vrsqrt.pop %v160
  %v163 = vmul.f32 %v162, %v160
  %v164 = vmul.f32 %v163, %v162
  %v165 = vmul.f32 0.5, %v164
  %v166 = vsub.f32 1.5, %v165
  %v167 = vmul.f32 %v162, %v166
  %vm168 = vweird.f32 %v160
  %vm169 = vweird.f32 %v162
  %vm170 = vmor %vm168, %vm169
  %v171 = vsel %vm170, %v162, %v167
  %v172 = vrsqrt.pop %v161
  %v173 = vmul.f32 %v172, %v161
  %v174 = vmul.f32 %v173, %v172
  %v175 = vmul.f32 0.5, %v174
  %v176 = vsub.f32 1.5, %v175
  %v177 = vmul.f32 %v172, %v176
  %vm178 = vweird.f32 %v161
  %vm179 = vweird.f32 %v172
  %vm180 = vmor %vm178, %vm179
  %v181 = vsel %vm180, %v172, %v177
  %v182 = vmul.f32 %v148, %v171
  %v183 = vmul.f32 %v149, %v181
  %v184 = vld [vmem:[%s5] sm:$0x1]
  %v186 = vperm.slane %v184, 0
  %v188 = vmul.f32 %v182, %v186
  %v189 = vmul.f32 %v183, %v186
  %v190 = vld [vmem:[%s6] sm:$0x1]
  %v192 = vperm.slane %v190, 0
  %v194 = vadd.f32 %v188, %v192
  %v195 = vadd.f32 %v189, %v192
  %v196 = vpack.c.bf16 %v194, %v194
  %v197 = vpack.c.bf16 %v195, %v195
  %vm198 = vcmask 257024
  %199 = vst.msk [vmem:[%s7] sm:$0xf] %vm198, %v196
  %200 = vst.msk [vmem:[%s7 + $0x4] sm:$0xf] %vm198, %v197
  // Predicated region
  $region30: #{transformer_forward.14} parent=0 // pred_check
    _
  $region31: #{transformer_forward.14} parent=0 // pred_check_branch
    %202 = sbr.rel (0) target = $region33
  $region32: #{transformer_forward.14} parent=0 // pred_region
    _
  $region33: #{transformer_forward.14} parent=0 // pred_fallthru
    _
  // Predicated region
  $region34: #{transformer_forward.14} parent=0 // pred_check
    _
  $region35: #{transformer_forward.14} parent=0 // pred_check_branch
    %204 = sbr.rel (0) target = $region37
  $region36: #{transformer_forward.14} parent=0 // pred_region
    _
  $region37: #{transformer_forward.14} parent=0 // pred_fallthru
    _

// kernel: transformer_forward.18
$region0: #{transformer_forward.18}
  #allocation0 [shape = 'u32[]', space=smem, size = 0x4, offset = 0x4, fixed_abs, tag = 'smem constant byte address 0x4 - core index']
  #allocation1 [shape = 'u32[72,128]{1,0:T(1,128)}', space=vmem, size = 0x9000, scoped, tag = 'internal scratch']
  %s0 = inlined_call_operand.vmem [shape: bf16[2,8,32], index: 0, kind: input, shape index: {}, may-alias: {0,1}]
  %s1 = inlined_call_operand.vmem [shape: bf16[2,8,32], index: 1, kind: input, shape index: {}, may-alias: {0,1}]
  %s2 = inlined_call_operand.vmem [shape: bf16[32,32], index: 2, kind: input, shape index: {}]
  %s3 = inlined_call_operand.vmem [shape: f32[1,32], index: 3, kind: input, shape index: {}]
  %s4 = inlined_call_operand.vmem [shape: bf16[32,64], index: 4, kind: input, shape index: {}]
  %s5 = inlined_call_operand.vmem [shape: f32[1,64], index: 5, kind: input, shape index: {}]
  %s6 = inlined_call_operand.hbm [shape: bf16[32,32], index: 6, kind: input, shape index: {}]
  %s7 = inlined_call_operand.vmem [shape: f32[1,32], index: 7, kind: input, shape index: {}]
  %s8 = inlined_call_operand.vmem [shape: f32[1,32], index: 8, kind: input, shape index: {}]
  %s9 = inlined_call_operand.hbm [shape: f32[1,32], index: 9, kind: input, shape index: {}]
  %s10 = inlined_call_operand.vmem [shape: bf16[2,8,32], index: 10, kind: output, shape index: {}]
  %s11 = sld [smem:[#allocation0]]
  $region81: #{transformer_forward.18} parent=0
    _
  %s13 = ssub.s32 1, %s11
  %s14 = scalar_select 0, %s13, %s11
  $region1: #{transformer_forward.18} parent=0
    #allocation2 [shape = 'u8[8192]{0}', space=vmem, size = 0x2000, scoped, tag = 'input window, operand 6, single buffered']
    #allocation3 [shape = 's32[2]{0}', space=sflag, size = 0x8, scoped, tag = 'scoped memory for transformer_forward.18']
    #allocation4 [shape = 'u8[512]{0}', space=vmem, size = 0x400, scoped, tag = 'input window, operand 9, single buffered']
    #allocation5 [shape = 's32[1]{0}', space=sflag, size = 0x4, scoped, tag = 'scoped memory for transformer_forward.18']
    %15 = vsyncpa [#allocation3], 0
    %16 = vsyncpa [#allocation5], 0
    loop: start=0, step=1, limit=4
    $region2: #{transformer_forward.18} parent=1 // loop_pre_header
      _
    $region3: #{transformer_forward.18} parent=1 // loop_header
      %s18 = sphi 0, %s22
      %p19 = scmp.ge.s32.totalorder %s18, 4
      %s28 = sphi 0, %s30
      %s31 = sphi 0, %s28
      %s32 = sphi 0, %s31
      %s48 = sphi 0, %s32
      %s54 = sphi 0, %s56
      %s57 = sphi 0, %s54
      %s58 = sphi 0, %s57
      %s74 = sphi 0, %s58
      %s78 = sphi 0, %s78
      %s80 = sphi 0, %s78
      %s81 = sphi 0, %s80
      %s95 = sphi 0, %s81
      %s99 = sphi 0, %s99
      %s101 = sphi 0, %s99
      %s102 = sphi 0, %s101
      %s116 = sphi 0, %s102
      %s120 = sphi 0, %s120
      %s122 = sphi 0, %s120
      %s123 = sphi 0, %s122
      %s137 = sphi 0, %s123
      %s141 = sphi 0, %s141
      %s143 = sphi 0, %s141
      %s144 = sphi 0, %s143
      %s158 = sphi 0, %s144
      %s162 = sphi 0, %s162
      %s164 = sphi 0, %s162
      %s165 = sphi 0, %s164
      %s179 = sphi 0, %s165
      %s183 = sphi 0, %s183
      %s185 = sphi 0, %s183
      %s186 = sphi 0, %s185
      %s200 = sphi 0, %s186
      %s204 = sphi 0, %s204
      %s206 = sphi 0, %s204
      %s207 = sphi 0, %s206
      %s221 = sphi 0, %s207
      %s225 = sphi 0, %s225
      %s227 = sphi 0, %s225
      %s228 = sphi 0, %s227
      %s242 = sphi 0, %s228
      %s248 = sphi 0, %s250
      %s251 = sphi 0, %s248
      %s252 = sphi 0, %s251
      %s268 = sphi 0, %s252
    $region4: #{transformer_forward.18} parent=1 // loop_header_branch
      %21 = sbr.rel (%p19) target = $region8
    $region5: #{transformer_forward.18} parent=1 // loop_body
      %s23 = ssub.s32 %s18, 1
      %s24 = ssub.s32 %s18, 2
      %s25 = sadd.s32 %s18, 1
      %s26 = ssub.s32 %s18, %s25
      %p27 = scmp.eq.s32.totalorder %s26, 0
      %s29 = sadd.s32 %s28, 1
      %s30 = scalar_select %p27, %s28, %s29
      %p33 = pneg %p27
      %p34 = scmp.eq.s32.totalorder %s18, 1
      %p35 = por %p33, %p34
      %p36 = scmp.ne.s32.totalorder %s28, %s31
      %p37 = scmp.eq.s32.totalorder %s18, 0
      %p38 = por %p36, %p37
      %p39 = scmp.ne.s32.totalorder %s28, %s31
      %p40 = scmp.eq.s32.totalorder %s23, 1
      %p41 = por %p39, %p40
      %p42 = scmp.ne.s32.totalorder %s31, %s32
      %p43 = scmp.eq.s32.totalorder %s23, 0
      %p44 = por %p42, %p43
      %p45 = scmp.ne.s32.totalorder %s31, %s32
      %p46 = scmp.eq.s32.totalorder %s24, 1
      %p47 = por %p45, %p46
      %p49 = scmp.ne.s32.totalorder %s32, %s48
      %p50 = scmp.eq.s32.totalorder %s24, 0
      %p51 = por %p49, %p50
      %s52 = ssub.s32 %s18, %s25
      %p53 = scmp.eq.s32.totalorder %s52, 0
      %s55 = sadd.s32 %s54, 1
      %s56 = scalar_select %p53, %s54, %s55
      %p59 = pneg %p53
      %p60 = scmp.eq.s32.totalorder %s18, 1
      %p61 = por %p59, %p60
      %p62 = scmp.ne.s32.totalorder %s54, %s57
      %p63 = scmp.eq.s32.totalorder %s18, 0
      %p64 = por %p62, %p63
      %p65 = scmp.ne.s32.totalorder %s54, %s57
      %p66 = scmp.eq.s32.totalorder %s23, 1
      %p67 = por %p65, %p66
      %p68 = scmp.ne.s32.totalorder %s57, %s58
      %p69 = scmp.eq.s32.totalorder %s23, 0
      %p70 = por %p68, %p69
      %p71 = scmp.ne.s32.totalorder %s57, %s58
      %p72 = scmp.eq.s32.totalorder %s24, 1
      %p73 = por %p71, %p72
      %p75 = scmp.ne.s32.totalorder %s58, %s74
      %p76 = scmp.eq.s32.totalorder %s24, 0
      %p77 = por %p75, %p76
      %s79 = sadd.s32 %s78, 1
      %p82 = scmp.eq.s32.totalorder %s18, 1
      %p83 = scmp.ne.s32.totalorder %s78, %s80
      %p84 = scmp.eq.s32.totalorder %s18, 0
      %p85 = por %p83, %p84
      %p86 = scmp.ne.s32.totalorder %s78, %s80
      %p87 = scmp.eq.s32.totalorder %s23, 1
      %p88 = por %p86, %p87
      %p89 = scmp.ne.s32.totalorder %s80, %s81
      %p90 = scmp.eq.s32.totalorder %s23, 0
      %p91 = por %p89, %p90
      %p92 = scmp.ne.s32.totalorder %s80, %s81
      %p93 = scmp.eq.s32.totalorder %s24, 1
      %p94 = por %p92, %p93
      %p96 = scmp.ne.s32.totalorder %s81, %s95
      %p97 = scmp.eq.s32.totalorder %s24, 0
      %p98 = por %p96, %p97
      %s100 = sadd.s32 %s99, 1
      %p103 = scmp.eq.s32.totalorder %s18, 1
      %p104 = scmp.ne.s32.totalorder %s99, %s101
      %p105 = scmp.eq.s32.totalorder %s18, 0
      %p106 = por %p104, %p105
      %p107 = scmp.ne.s32.totalorder %s99, %s101
      %p108 = scmp.eq.s32.totalorder %s23, 1
      %p109 = por %p107, %p108
      %p110 = scmp.ne.s32.totalorder %s101, %s102
      %p111 = scmp.eq.s32.totalorder %s23, 0
      %p112 = por %p110, %p111
      %p113 = scmp.ne.s32.totalorder %s101, %s102
      %p114 = scmp.eq.s32.totalorder %s24, 1
      %p115 = por %p113, %p114
      %p117 = scmp.ne.s32.totalorder %s102, %s116
      %p118 = scmp.eq.s32.totalorder %s24, 0
      %p119 = por %p117, %p118
      %s121 = sadd.s32 %s120, 1
      %p124 = scmp.eq.s32.totalorder %s18, 1
      %p125 = scmp.ne.s32.totalorder %s120, %s122
      %p126 = scmp.eq.s32.totalorder %s18, 0
      %p127 = por %p125, %p126
      %p128 = scmp.ne.s32.totalorder %s120, %s122
      %p129 = scmp.eq.s32.totalorder %s23, 1
      %p130 = por %p128, %p129
      %p131 = scmp.ne.s32.totalorder %s122, %s123
      %p132 = scmp.eq.s32.totalorder %s23, 0
      %p133 = por %p131, %p132
      %p134 = scmp.ne.s32.totalorder %s122, %s123
      %p135 = scmp.eq.s32.totalorder %s24, 1
      %p136 = por %p134, %p135
      %p138 = scmp.ne.s32.totalorder %s123, %s137
      %p139 = scmp.eq.s32.totalorder %s24, 0
      %p140 = por %p138, %p139
      %s142 = sadd.s32 %s141, 1
      %p145 = scmp.eq.s32.totalorder %s18, 1
      %p146 = scmp.ne.s32.totalorder %s141, %s143
      %p147 = scmp.eq.s32.totalorder %s18, 0
      %p148 = por %p146, %p147
      %p149 = scmp.ne.s32.totalorder %s141, %s143
      %p150 = scmp.eq.s32.totalorder %s23, 1
      %p151 = por %p149, %p150
      %p152 = scmp.ne.s32.totalorder %s143, %s144
      %p153 = scmp.eq.s32.totalorder %s23, 0
      %p154 = por %p152, %p153
      %p155 = scmp.ne.s32.totalorder %s143, %s144
      %p156 = scmp.eq.s32.totalorder %s24, 1
      %p157 = por %p155, %p156
      %p159 = scmp.ne.s32.totalorder %s144, %s158
      %p160 = scmp.eq.s32.totalorder %s24, 0
      %p161 = por %p159, %p160
      %s163 = sadd.s32 %s162, 1
      %p166 = scmp.eq.s32.totalorder %s18, 1
      %p167 = scmp.ne.s32.totalorder %s162, %s164
      %p168 = scmp.eq.s32.totalorder %s18, 0
      %p169 = por %p167, %p168
      %p170 = scmp.ne.s32.totalorder %s162, %s164
      %p171 = scmp.eq.s32.totalorder %s23, 1
      %p172 = por %p170, %p171
      %p173 = scmp.ne.s32.totalorder %s164, %s165
      %p174 = scmp.eq.s32.totalorder %s23, 0
      %p175 = por %p173, %p174
      %p176 = scmp.ne.s32.totalorder %s164, %s165
      %p177 = scmp.eq.s32.totalorder %s24, 1
      %p178 = por %p176, %p177
      %p180 = scmp.ne.s32.totalorder %s165, %s179
      %p181 = scmp.eq.s32.totalorder %s24, 0
      %p182 = por %p180, %p181
      %s184 = sadd.s32 %s183, 1
      %p187 = scmp.eq.s32.totalorder %s18, 1
      %p188 = scmp.ne.s32.totalorder %s183, %s185
      %p189 = scmp.eq.s32.totalorder %s18, 0
      %p190 = por %p188, %p189
      %p191 = scmp.ne.s32.totalorder %s183, %s185
      %p192 = scmp.eq.s32.totalorder %s23, 1
      %p193 = por %p191, %p192
      %p194 = scmp.ne.s32.totalorder %s185, %s186
      %p195 = scmp.eq.s32.totalorder %s23, 0
      %p196 = por %p194, %p195
      %p197 = scmp.ne.s32.totalorder %s185, %s186
      %p198 = scmp.eq.s32.totalorder %s24, 1
      %p199 = por %p197, %p198
      %p201 = scmp.ne.s32.totalorder %s186, %s200
      %p202 = scmp.eq.s32.totalorder %s24, 0
      %p203 = por %p201, %p202
      %s205 = sadd.s32 %s204, 1
      %p208 = scmp.eq.s32.totalorder %s18, 1
      %p209 = scmp.ne.s32.totalorder %s204, %s206
      %p210 = scmp.eq.s32.totalorder %s18, 0
      %p211 = por %p209, %p210
      %p212 = scmp.ne.s32.totalorder %s204, %s206
      %p213 = scmp.eq.s32.totalorder %s23, 1
      %p214 = por %p212, %p213
      %p215 = scmp.ne.s32.totalorder %s206, %s207
      %p216 = scmp.eq.s32.totalorder %s23, 0
      %p217 = por %p215, %p216
      %p218 = scmp.ne.s32.totalorder %s206, %s207
      %p219 = scmp.eq.s32.totalorder %s24, 1
      %p220 = por %p218, %p219
      %p222 = scmp.ne.s32.totalorder %s207, %s221
      %p223 = scmp.eq.s32.totalorder %s24, 0
      %p224 = por %p222, %p223
      %s226 = sadd.s32 %s225, 1
      %p229 = scmp.eq.s32.totalorder %s18, 1
      %p230 = scmp.ne.s32.totalorder %s225, %s227
      %p231 = scmp.eq.s32.totalorder %s18, 0
      %p232 = por %p230, %p231
      %p233 = scmp.ne.s32.totalorder %s225, %s227
      %p234 = scmp.eq.s32.totalorder %s23, 1
      %p235 = por %p233, %p234
      %p236 = scmp.ne.s32.totalorder %s227, %s228
      %p237 = scmp.eq.s32.totalorder %s23, 0
      %p238 = por %p236, %p237
      %p239 = scmp.ne.s32.totalorder %s227, %s228
      %p240 = scmp.eq.s32.totalorder %s24, 1
      %p241 = por %p239, %p240
      %p243 = scmp.ne.s32.totalorder %s228, %s242
      %p244 = scmp.eq.s32.totalorder %s24, 0
      %p245 = por %p243, %p244
      %s246 = ssub.s32 %s18, %s25
      %p247 = scmp.eq.s32.totalorder %s246, 0
      %s249 = sadd.s32 %s248, 1
      %s250 = scalar_select %p247, %s248, %s249
      %p253 = pneg %p247
      %p254 = scmp.eq.s32.totalorder %s18, 1
      %p255 = por %p253, %p254
      %p256 = scmp.ne.s32.totalorder %s248, %s251
      %p257 = scmp.eq.s32.totalorder %s18, 0
      %p258 = por %p256, %p257
      %p259 = scmp.ne.s32.totalorder %s248, %s251
      %p260 = scmp.eq.s32.totalorder %s23, 1
      %p261 = por %p259, %p260
      %p262 = scmp.ne.s32.totalorder %s251, %s252
      %p263 = scmp.eq.s32.totalorder %s23, 0
      %p264 = por %p262, %p263
      %p265 = scmp.ne.s32.totalorder %s251, %s252
      %p266 = scmp.eq.s32.totalorder %s24, 1
      %p267 = por %p265, %p266
      %p269 = scmp.ne.s32.totalorder %s252, %s268
      %p270 = scmp.eq.s32.totalorder %s24, 0
      %p271 = por %p269, %p270
      %p272 = scmp.le.s32.totalorder 1, %s18
      %p273 = scmp.lt.s32.totalorder %s18, 3
      %p274 = pnand %p272, %p273
      %p275 = pneg %p274
      // Predicated region
      $region9: #{transformer_forward.18} parent=5 // pred_check
        _
      $region10: #{transformer_forward.18} parent=5 // pred_check_branch
        %277 = sbr.rel (%p274) target = $region12
      $region11: #{transformer_forward.18} parent=5 // pred_region
        %s278 = ssub.s32 %s18, 1
        // Predicated region
        $region13: #{transformer_forward.18} parent=11 // pred_check
          %p279 = pneg %p91
        $region14: #{transformer_forward.18} parent=11 // pred_check_branch
          %281 = sbr.rel (%p279) target = $region16
        $region15: #{transformer_forward.18} parent=11 // pred_region
          _
        $region16: #{transformer_forward.18} parent=11 // pred_fallthru
          _
        // Predicated region
        $region17: #{transformer_forward.18} parent=11 // pred_check
          %p282 = pneg %p112
        $region18: #{transformer_forward.18} parent=11 // pred_check_branch
          %284 = sbr.rel (%p282) target = $region20
        $region19: #{transformer_forward.18} parent=11 // pred_region
          _
        $region20: #{transformer_forward.18} parent=11 // pred_fallthru
          _
        // Predicated region
        $region21: #{transformer_forward.18} parent=11 // pred_check
          %p285 = pneg %p133
        $region22: #{transformer_forward.18} parent=11 // pred_check_branch
          %287 = sbr.rel (%p285) target = $region24
        $region23: #{transformer_forward.18} parent=11 // pred_region
          _
        $region24: #{transformer_forward.18} parent=11 // pred_fallthru
          _
        // Predicated region
        $region25: #{transformer_forward.18} parent=11 // pred_check
          %p288 = pneg %p154
        $region26: #{transformer_forward.18} parent=11 // pred_check_branch
          %290 = sbr.rel (%p288) target = $region28
        $region27: #{transformer_forward.18} parent=11 // pred_region
          _
        $region28: #{transformer_forward.18} parent=11 // pred_fallthru
          _
        // Predicated region
        $region29: #{transformer_forward.18} parent=11 // pred_check
          %p291 = pneg %p175
        $region30: #{transformer_forward.18} parent=11 // pred_check_branch
          %293 = sbr.rel (%p291) target = $region32
        $region31: #{transformer_forward.18} parent=11 // pred_region
          %295 = vsyncadd [#allocation3], 0
          %s296 = sshll.u32 %s6, 4
          %s297 = int_to_ptr.hbm [resolvable:$true] %s296
          %s298 = sshll.u32 [#allocation2], 4
          %s299 = int_to_ptr.vmem [resolvable:$true] %s298
          %304 = dma.hbm_to_vmem [thread:$0]  %s297, 256, %s299, [#allocation3], 64, 64, 4
        $region32: #{transformer_forward.18} parent=11 // pred_fallthru
          _
        // Predicated region
        $region33: #{transformer_forward.18} parent=11 // pred_check
          %p305 = pneg %p196
        $region34: #{transformer_forward.18} parent=11 // pred_check_branch
          %307 = sbr.rel (%p305) target = $region36
        $region35: #{transformer_forward.18} parent=11 // pred_region
          _
        $region36: #{transformer_forward.18} parent=11 // pred_fallthru
          _
        // Predicated region
        $region37: #{transformer_forward.18} parent=11 // pred_check
          %p308 = pneg %p217
        $region38: #{transformer_forward.18} parent=11 // pred_check_branch
          %310 = sbr.rel (%p308) target = $region40
        $region39: #{transformer_forward.18} parent=11 // pred_region
          _
        $region40: #{transformer_forward.18} parent=11 // pred_fallthru
          _
        // Predicated region
        $region41: #{transformer_forward.18} parent=11 // pred_check
          %p311 = pneg %p238
        $region42: #{transformer_forward.18} parent=11 // pred_check_branch
          %313 = sbr.rel (%p311) target = $region44
        $region43: #{transformer_forward.18} parent=11 // pred_region
          %315 = vsyncadd [#allocation5], 0
          %s317 = sshll.u32 %s9, 4
          %s318 = int_to_ptr.hbm [resolvable:$true] %s317
          %s319 = sshll.u32 [#allocation4], 4
          %s320 = int_to_ptr.vmem [resolvable:$true] %s319
          %322 = dma.hbm_to_vmem [thread:$0]  %s318, 16, %s320, [#allocation5]
        $region44: #{transformer_forward.18} parent=11 // pred_fallthru
          _
      $region12: #{transformer_forward.18} parent=5 // pred_fallthru
        _
      %p323 = scmp.lt.s32.totalorder %s18, 2
      // Predicated region
      $region45: #{transformer_forward.18} parent=5 // pred_check
        %p324 = pneg %p323
      $region46: #{transformer_forward.18} parent=5 // pred_check_branch
        %326 = sbr.rel (%p324) target = $region48
      $region47: #{transformer_forward.18} parent=5 // pred_region
        // Predicated region
        $region49: #{transformer_forward.18} parent=47 // pred_check
          %p327 = pneg %p38
        $region50: #{transformer_forward.18} parent=47 // pred_check_branch
          %329 = sbr.rel (%p327) target = $region52
        $region51: #{transformer_forward.18} parent=47 // pred_region
          %p330 = scmp.lt.s32.totalorder %s18, 1
          %s331 = scalar_select %p330, %s18, 1
          %s332 = smul.addr %s331, 4
          %s333 = scalar_lea.vmem %s0, %s332
        $region52: #{transformer_forward.18} parent=47 // pred_fallthru
          _
        // Predicated region
        $region53: #{transformer_forward.18} parent=47 // pred_check
          %p334 = pneg %p64
        $region54: #{transformer_forward.18} parent=47 // pred_check_branch
          %336 = sbr.rel (%p334) target = $region56
        $region55: #{transformer_forward.18} parent=47 // pred_region
          %p337 = scmp.lt.s32.totalorder %s18, 1
          %s338 = scalar_select %p337, %s18, 1
          %s339 = smul.addr %s338, 4
          %s340 = scalar_lea.vmem %s1, %s339
        $region56: #{transformer_forward.18} parent=47 // pred_fallthru
          _
      $region48: #{transformer_forward.18} parent=5 // pred_fallthru
        _
      %p341 = scmp.le.s32.totalorder 1, %s18
      %p342 = scmp.lt.s32.totalorder %s18, 3
      %p343 = pnand %p341, %p342
      %p344 = pneg %p343
      // Predicated region
      $region57: #{transformer_forward.18} parent=5 // pred_check
        _
      $region58: #{transformer_forward.18} parent=5 // pred_check_branch
        %346 = sbr.rel (%p343) target = $region60
      $region59: #{transformer_forward.18} parent=5 // pred_region
        %s347 = ssub.s32 %s18, 1
        // Predicated region
        $region61: #{transformer_forward.18} parent=59 // pred_check
          %p348 = pneg %p175
        $region62: #{transformer_forward.18} parent=59 // pred_check_branch
          %350 = sbr.rel (%p348) target = $region64
        $region63: #{transformer_forward.18} parent=59 // pred_region
          %352 = dma.done [#allocation3], 256
        $region64: #{transformer_forward.18} parent=59 // pred_fallthru
          _
        // Predicated region
        $region65: #{transformer_forward.18} parent=59 // pred_check
          %p353 = pneg %p238
        $region66: #{transformer_forward.18} parent=59 // pred_check_branch
          %355 = sbr.rel (%p353) target = $region68
        $region67: #{transformer_forward.18} parent=59 // pred_region
          %357 = dma.done [#allocation5], 16
        $region68: #{transformer_forward.18} parent=59 // pred_fallthru
          _
        %p358 = scmp.lt.s32.totalorder %s23, 1
        %s359 = scalar_select %p358, %s23, 1
        %s360 = smul.addr %s359, 4
        %s361 = scalar_lea.vmem %s0, %s360
        %p362 = pneg %p44
        %p363 = pneg %p41
        %p364 = scmp.lt.s32.totalorder %s23, 1
        %s365 = scalar_select %p364, %s23, 1
        %s366 = smul.addr %s365, 4
        %s367 = scalar_lea.vmem %s1, %s366
        %p368 = pneg %p70
        %p369 = pneg %p67
        %p370 = pneg %p91
        %p371 = pneg %p88
        %p372 = pneg %p112
        %p373 = pneg %p109
        %p374 = pneg %p133
        %p375 = pneg %p130
        %p376 = pneg %p154
        %p377 = pneg %p151
        %p378 = pneg %p175
        %p379 = pneg %p172
        %p380 = pneg %p196
        %p381 = pneg %p193
        %p382 = pneg %p217
        %p383 = pneg %p214
        %p384 = pneg %p238
        %p385 = pneg %p235
        %p386 = pneg %p264
        %p387 = pneg %p261
        %p388 = scmp.lt.s32.totalorder %s23, 1
        %s389 = scalar_select %p388, %s23, 1
        %s390 = smul.addr %s389, 4
        %s391 = scalar_lea.vmem %s10, %s390
        %p392 = scmp.lt.s32.totalorder %s23, 1
        %s393 = scalar_select %p392, %s23, 1
        %s394 = smul.addr %s393, 4
        %s395 = scalar_lea.vmem %s0, %s394
        %p396 = scmp.lt.s32.totalorder %s23, 1
        %s397 = scalar_select %p396, %s23, 1
        %s398 = smul.addr %s397, 4
        %s399 = scalar_lea.vmem %s1, %s398
        %p400 = scmp.lt.s32.totalorder %s23, 1
        %s401 = scalar_select %p400, %s23, 1
        %s402 = smul.addr %s401, 4
        %s403 = scalar_lea.vmem %s10, %s402
        %v405 = vld [vmem:[%s395] sm:$0xf]
        %v406 = vld [vmem:[%s399] sm:$0xf]
        %v407 = vld [vmem:[%s2] sm:$0xf]
        %v408 = vld [vmem:[%s2 + $0x4] sm:$0xf]
        %v409 = vld [vmem:[%s2 + $0x8] sm:$0xf]
        %v410 = vld [vmem:[%s2 + $0xc] sm:$0xf]
        %v411 = vld [vmem:[%s3] sm:$0x1]
        %v413 = vperm.slane %v411, 0
        %v419 = vunpack.c.l.b16 %v407
        %v420 = vunpack.c.l.b16 %v408
        %v421 = vunpack.c.l.b16 %v409
        %v422 = vunpack.c.l.b16 %v410
        %v423 = vpack.c.b16 %v420, %v419
        %v424 = vpack.c.b16 %v422, %v421
        %vm427 = vcmask 261120
        %v429 = vsel %vm427, %v405, 0
        %431 = vmatpush.bf16.msra.mxu0 0
        %432 = vmatpush.bf16.msra.mxu0 0
        %433 = vmatpush.bf16.msra.mxu0 0
        %434 = vmatpush.bf16.msra.mxu0 0
        %435 = vmatpush.bf16.msra.mxu0 0
        %436 = vmatpush.bf16.msra.mxu0 0
        %437 = vmatpush.bf16.msra.mxu0 %v424
        %438 = vmatpush.bf16.msra.mxu0 %v423
        %439 = vmatmul.bf16.gmra.mxu0 %v429
        %v440 = vpop.f32.mrf.mxu0
        %v441 = vadd.f32 %v413, %v440
        %v442 = vpop.f32.mrf.mxu0
        %443 = vdwg.mxu0
        %v444 = vld [vmem:[%s4] sm:$0xf]
        %v445 = vld [vmem:[%s4 + $0x4] sm:$0xf]
        %v446 = vld [vmem:[%s4 + $0x8] sm:$0xf]
        %v447 = vld [vmem:[%s4 + $0xc] sm:$0xf]
        %v448 = vld [vmem:[%s5] sm:$0x1]
        %v450 = vperm.slane %v448, 0
        %v456 = vunpack.c.l.b16 %v444
        %v457 = vunpack.c.l.b16 %v445
        %v458 = vunpack.c.l.b16 %v446
        %v459 = vunpack.c.l.b16 %v447
        %v460 = vpack.c.b16 %v457, %v456
        %v461 = vpack.c.b16 %v459, %v458
        %v465 = vsel %vm427, %v406, 0
        %467 = vmatpush.bf16.msra.mxu0 0
        %468 = vmatpush.bf16.msra.mxu0 0
        %469 = vmatpush.bf16.msra.mxu0 0
        %470 = vmatpush.bf16.msra.mxu0 0
        %471 = vmatpush.bf16.msra.mxu0 0
        %472 = vmatpush.bf16.msra.mxu0 0
        %473 = vmatpush.bf16.msra.mxu0 %v461
        %474 = vmatpush.bf16.msra.mxu0 %v460
        %475 = vmatmul.bf16.gmra.mxu0 %v465
        %v476 = vpop.f32.mrf.mxu0
        %v477 = vadd.f32 %v450, %v476
        %v478 = vpop.f32.mrf.mxu0
        %479 = vdwg.mxu0
        %v480 = vpack.c.bf16 %v441, %v441
        %v481 = vpack.c.bf16 %v477, %v477
        %vm482 = vcmask 64512
        %v484 = vsel %vm482, %v480, 0
        %v487 = vsel %vm482, %v481, 0
        %489 = vmatpush.bf16.xpose.msra.mxu0 0
        %490 = vmatpush.bf16.xpose.msra.mxu0 0
        %491 = vmatpush.bf16.xpose.msra.mxu0 0
        %492 = vmatpush.bf16.xpose.msra.mxu0 0
        %493 = vmatpush.bf16.xpose.msra.mxu0 0
        %494 = vmatpush.bf16.xpose.msra.mxu0 0
        %495 = vmatpush.bf16.xpose.msra.mxu0 0
        %496 = vmatpush.bf16.xpose.msra.mxu0 %v487
        %497 = vmatmul.bf16.gmra.mxu0 %v484
        %v498 = vpop.f32.mrf.mxu0
        %v499 = vadd.f32 0.0, %v498
        %v500 = vpop.f32.mrf.mxu0
        %501 = vdwg.mxu0
        %v502 = vmul.f32 %v499, 0.35355338
        %v503 = vsel %vm482, %v502, -inf
        %504 = vmax.xlane.f32.xlu0 %v503
        %v505 = vpop.xlane.xlu0 %504
        %v506 = vsub.f32 %v502, %v505
        %v507 = vmul.f32 %v506, 1.442695
        %v508 = vpow.pop %v507
        %v509 = vsel %vm482, %v508, 0.0
        %510 = vadd.xlane.f32.xlu0 %v509
        %v511 = vpop.xlane.xlu0 %510
        %v512 = vrcp.pop %v511
        %v513 = vmul.f32 %v508, %v512
        %v514 = vpack.c.bf16 %v513, %v513
        %516 = vrot.lane.b32.xlu0 %v481, 96
        %v517 = vpop.permute.xlu0 %516
        %v519 = vsel %vm482, %v514, 0
        %vm521 = vcmask 1043456
        %v523 = vsel %vm521, %v517, 0
        %525 = vmatpush.bf16.msra.mxu0 0
        %526 = vmatpush.bf16.msra.mxu0 0
        %527 = vmatpush.bf16.msra.mxu0 0
        %528 = vmatpush.bf16.msra.mxu0 0
        %529 = vmatpush.bf16.msra.mxu0 0
        %530 = vmatpush.bf16.msra.mxu0 0
        %531 = vmatpush.bf16.msra.mxu0 0
        %532 = vmatpush.bf16.msra.mxu0 %v523
        %533 = vmatmul.bf16.gmra.mxu0 %v519
        %v534 = vpop.f32.mrf.mxu0
        %v535 = vadd.f32 0.0, %v534
        %v536 = vpop.f32.mrf.mxu0
        %537 = vdwg.mxu0
        %539 = vrot.lane.b32.xlu0 %v480, 120
        %v540 = vpop.permute.xlu0 %539
        %541 = vrot.lane.b32.xlu0 %v481, 120
        %v542 = vpop.permute.xlu0 %541
        %v544 = vsel %vm482, %v540, 0
        %v547 = vsel %vm482, %v542, 0
        %549 = vmatpush.bf16.xpose.msra.mxu0 0
        %550 = vmatpush.bf16.xpose.msra.mxu0 0
        %551 = vmatpush.bf16.xpose.msra.mxu0 0
        %552 = vmatpush.bf16.xpose.msra.mxu0 0
        %553 = vmatpush.bf16.xpose.msra.mxu0 0
        %554 = vmatpush.bf16.xpose.msra.mxu0 0
        %555 = vmatpush.bf16.xpose.msra.mxu0 0
        %556 = vmatpush.bf16.xpose.msra.mxu0 %v547
        %557 = vmatmul.bf16.gmra.mxu0 %v544
        %v558 = vpop.f32.mrf.mxu0
        %v559 = vadd.f32 0.0, %v558
        %v560 = vpop.f32.mrf.mxu0
        %561 = vdwg.mxu0
        %v562 = vmul.f32 %v559, 0.35355338
        %v563 = vsel %vm482, %v562, -inf
        %564 = vmax.xlane.f32.xlu0 %v563
        %v565 = vpop.xlane.xlu0 %564
        %v566 = vsub.f32 %v562, %v565
        %v567 = vmul.f32 %v566, 1.442695
        %v568 = vpow.pop %v567
        %v569 = vsel %vm482, %v568, 0.0
        %570 = vadd.xlane.f32.xlu0 %v569
        %v571 = vpop.xlane.xlu0 %570
        %v572 = vrcp.pop %v571
        %v573 = vmul.f32 %v568, %v572
        %v574 = vpack.c.bf16 %v573, %v573
        %575 = vrot.lane.b32.xlu0 %v481, 88
        %v576 = vpop.permute.xlu0 %575
        %v578 = vsel %vm482, %v574, 0
        %v581 = vsel %vm521, %v576, 0
        %583 = vmatpush.bf16.msra.mxu0 0
        %584 = vmatpush.bf16.msra.mxu0 0
        %585 = vmatpush.bf16.msra.mxu0 0
        %586 = vmatpush.bf16.msra.mxu0 0
        %587 = vmatpush.bf16.msra.mxu0 0
        %588 = vmatpush.bf16.msra.mxu0 0
        %589 = vmatpush.bf16.msra.mxu0 0
        %590 = vmatpush.bf16.msra.mxu0 %v581
        %591 = vmatmul.bf16.gmra.mxu0 %v578
        %v592 = vpop.f32.mrf.mxu0
        %v593 = vadd.f32 0.0, %v592
        %v594 = vpop.f32.mrf.mxu0
        %595 = vdwg.mxu0
        %596 = vrot.lane.b32.xlu0 %v480, 112
        %v597 = vpop.permute.xlu0 %596
        %598 = vrot.lane.b32.xlu0 %v481, 112
        %v599 = vpop.permute.xlu0 %598
        %v601 = vsel %vm482, %v597, 0
        %v604 = vsel %vm482, %v599, 0
        %606 = vmatpush.bf16.xpose.msra.mxu0 0
        %607 = vmatpush.bf16.xpose.msra.mxu0 0
        %608 = vmatpush.bf16.xpose.msra.mxu0 0
        %609 = vmatpush.bf16.xpose.msra.mxu0 0
        %610 = vmatpush.bf16.xpose.msra.mxu0 0
        %611 = vmatpush.bf16.xpose.msra.mxu0 0
        %612 = vmatpush.bf16.xpose.msra.mxu0 0
        %613 = vmatpush.bf16.xpose.msra.mxu0 %v604
        %614 = vmatmul.bf16.gmra.mxu0 %v601
        %v615 = vpop.f32.mrf.mxu0
        %v616 = vadd.f32 0.0, %v615
        %v617 = vpop.f32.mrf.mxu0
        %618 = vdwg.mxu0
        %v619 = vmul.f32 %v616, 0.35355338
        %v620 = vsel %vm482, %v619, -inf
        %621 = vmax.xlane.f32.xlu0 %v620
        %v622 = vpop.xlane.xlu0 %621
        %v623 = vsub.f32 %v619, %v622
        %v624 = vmul.f32 %v623, 1.442695
        %v625 = vpow.pop %v624
        %v626 = vsel %vm482, %v625, 0.0
        %627 = vadd.xlane.f32.xlu0 %v626
        %v628 = vpop.xlane.xlu0 %627
        %v629 = vrcp.pop %v628
        %v630 = vmul.f32 %v625, %v629
        %v631 = vpack.c.bf16 %v630, %v630
        %632 = vrot.lane.b32.xlu0 %v481, 80
        %v633 = vpop.permute.xlu0 %632
        %v635 = vsel %vm482, %v631, 0
        %v638 = vsel %vm521, %v633, 0
        %640 = vmatpush.bf16.msra.mxu0 0
        %641 = vmatpush.bf16.msra.mxu0 0
        %642 = vmatpush.bf16.msra.mxu0 0
        %643 = vmatpush.bf16.msra.mxu0 0
        %644 = vmatpush.bf16.msra.mxu0 0
        %645 = vmatpush.bf16.msra.mxu0 0
        %646 = vmatpush.bf16.msra.mxu0 0
        %647 = vmatpush.bf16.msra.mxu0 %v638
        %648 = vmatmul.bf16.gmra.mxu0 %v635
        %v649 = vpop.f32.mrf.mxu0
        %v650 = vadd.f32 0.0, %v649
        %v651 = vpop.f32.mrf.mxu0
        %652 = vdwg.mxu0
        %653 = vrot.lane.b32.xlu0 %v480, 104
        %v654 = vpop.permute.xlu0 %653
        %655 = vrot.lane.b32.xlu0 %v481, 104
        %v656 = vpop.permute.xlu0 %655
        %v658 = vsel %vm482, %v654, 0
        %v661 = vsel %vm482, %v656, 0
        %663 = vmatpush.bf16.xpose.msra.mxu0 0
        %664 = vmatpush.bf16.xpose.msra.mxu0 0
        %665 = vmatpush.bf16.xpose.msra.mxu0 0
        %666 = vmatpush.bf16.xpose.msra.mxu0 0
        %667 = vmatpush.bf16.xpose.msra.mxu0 0
        %668 = vmatpush.bf16.xpose.msra.mxu0 0
        %669 = vmatpush.bf16.xpose.msra.mxu0 0
        %670 = vmatpush.bf16.xpose.msra.mxu0 %v661
        %671 = vmatmul.bf16.gmra.mxu0 %v658
        %v672 = vpop.f32.mrf.mxu0
        %v673 = vadd.f32 0.0, %v672
        %v674 = vpop.f32.mrf.mxu0
        %675 = vdwg.mxu0
        %v676 = vmul.f32 %v673, 0.35355338
        %v677 = vsel %vm482, %v676, -inf
        %678 = vmax.xlane.f32.xlu0 %v677
        %v679 = vpop.xlane.xlu0 %678
        %v680 = vsub.f32 %v676, %v679
        %v681 = vmul.f32 %v680, 1.442695
        %v682 = vpow.pop %v681
        %v683 = vsel %vm482, %v682, 0.0
        %684 = vadd.xlane.f32.xlu0 %v683
        %v685 = vpop.xlane.xlu0 %684
        %v686 = vrcp.pop %v685
        %v687 = vmul.f32 %v682, %v686
        %v688 = vpack.c.bf16 %v687, %v687
        %689 = vrot.lane.b32.xlu0 %v481, 72
        %v690 = vpop.permute.xlu0 %689
        %v692 = vsel %vm482, %v688, 0
        %v695 = vsel %vm521, %v690, 0
        %697 = vmatpush.bf16.msra.mxu0 0
        %698 = vmatpush.bf16.msra.mxu0 0
        %699 = vmatpush.bf16.msra.mxu0 0
        %700 = vmatpush.bf16.msra.mxu0 0
        %701 = vmatpush.bf16.msra.mxu0 0
        %702 = vmatpush.bf16.msra.mxu0 0
        %703 = vmatpush.bf16.msra.mxu0 0
        %704 = vmatpush.bf16.msra.mxu0 %v695
        %705 = vmatmul.bf16.gmra.mxu0 %v692
        %v706 = vpop.f32.mrf.mxu0
        %v707 = vadd.f32 0.0, %v706
        %v708 = vpop.f32.mrf.mxu0
        %709 = vdwg.mxu0
        %711 = vrot.lane.b32.xlu0 %v593, 8
        %v712 = vpop.permute.xlu0 %711
        %715 = vrot.lane.b32.xlu0 %v650, 16
        %v716 = vpop.permute.xlu0 %715
        %719 = vrot.lane.b32.xlu0 %v707, 24
        %v720 = vpop.permute.xlu0 %719
        %v722 = vsel %vm482, %v535, %v712
        %vm723 = vcmask 130048
        %v724 = vsel %vm723, %v722, %v716
        %vm725 = vcmask 195584
        %v726 = vsel %vm725, %v724, %v720
        %v727 = vpack.c.bf16 %v726, %v726
        %v728 = vld [vmem:[#allocation2] sm:$0xf]
        %v729 = vld [vmem:[#allocation2 + $0x4] sm:$0xf]
        %v730 = vld [vmem:[#allocation2 + $0x8] sm:$0xf]
        %v731 = vld [vmem:[#allocation2 + $0xc] sm:$0xf]
        %v732 = vld [vmem:[%s7] sm:$0x1]
        %v734 = vperm.slane %v732, 0
        %v740 = vunpack.c.l.b16 %v728
        %v741 = vunpack.c.l.b16 %v729
        %v742 = vunpack.c.l.b16 %v730
        %v743 = vunpack.c.l.b16 %v731
        %v744 = vpack.c.b16 %v741, %v740
        %v745 = vpack.c.b16 %v743, %v742
        %v749 = vsel %vm427, %v727, 0
        %751 = vmatpush.bf16.msra.mxu0 0
        %752 = vmatpush.bf16.msra.mxu0 0
        %753 = vmatpush.bf16.msra.mxu0 0
        %754 = vmatpush.bf16.msra.mxu0 0
        %755 = vmatpush.bf16.msra.mxu0 0
        %756 = vmatpush.bf16.msra.mxu0 0
        %757 = vmatpush.bf16.msra.mxu0 %v745
        %758 = vmatpush.bf16.msra.mxu0 %v744
        %759 = vmatmul.bf16.gmra.mxu0 %v749
        %v760 = vpop.f32.mrf.mxu0
        %v761 = vadd.f32 %v734, %v760
        %v762 = vpop.f32.mrf.mxu0
        %763 = vdwg.mxu0
        %v764 = vunpack.c.l.bf16 %v405
        %v765 = vadd.f32 %v764, %v761
        %v766 = vsel %vm427, %v765, 0.0
        %767 = vadd.xlane.f32.xlu0 %v766
        %v768 = vpop.xlane.xlu0 %767
        %v769 = vrcp.pop 32.0
        %v770 = vmul.f32 32.0, %v769
        %v771 = vsub.f32 1.0, %v770
        %v772 = vmul.f32 %v769, %v771
        %v773 = vadd.f32 %v769, %v772
        %vm774 = vweird.f32 %v769
        %v775 = vsel %vm774, %v769, %v773
        %v776 = vmul.f32 %v768, %v775
        %v777 = vsub.f32 %v765, %v776
        %v778 = vmul.f32 %v777, %v777
        %v779 = vsel %vm427, %v778, 0.0
        %780 = vadd.xlane.f32.xlu0 %v779
        %v781 = vpop.xlane.xlu0 %780
        %v782 = vmul.f32 %v781, %v775
        %v783 = vadd.f32 %v782, 1e-05
        %v784 = vrsqrt.pop %v783
        %v785 = vmul.f32 %v784, %v783
        %v786 = vmul.f32 %v785, %v784
        %v787 = vmul.f32 0.5, %v786
        %v788 = vsub.f32 1.5, %v787
        %v789 = vmul.f32 %v784, %v788
        %vm790 = vweird.f32 %v783
        %vm791 = vweird.f32 %v784
        %vm792 = vmor %vm790, %vm791
        %v793 = vsel %vm792, %v784, %v789
        %v794 = vmul.f32 %v777, %v793
        %v795 = vld [vmem:[%s8] sm:$0x1]
        %v797 = vperm.slane %v795, 0
        %v799 = vmul.f32 %v794, %v797
        %v800 = vld [vmem:[#allocation4] sm:$0x1]
        %v802 = vperm.slane %v800, 0
        %v804 = vadd.f32 %v799, %v802
        %v805 = vpack.c.bf16 %v804, %v804
        %vm806 = vcmask 257024
        %807 = vst.msk [vmem:[%s403] sm:$0xf] %vm806, %v805
        %p808 = scmp.lt.s32.totalorder %s23, 1
        %s809 = scalar_select %p808, %s23, 1
        %s810 = smul.addr %s809, 4
        %s811 = scalar_lea.vmem %s10, %s810
        // Predicated region
        $region69: #{transformer_forward.18} parent=59 // pred_check
          %p812 = pneg %p261
        $region70: #{transformer_forward.18} parent=59 // pred_check_branch
          %814 = sbr.rel (%p812) target = $region72
        $region71: #{transformer_forward.18} parent=59 // pred_region
          _
        $region72: #{transformer_forward.18} parent=59 // pred_fallthru
          _
      $region60: #{transformer_forward.18} parent=5 // pred_fallthru
        _
      %p815 = scmp.le.s32.totalorder 2, %s18
      // Predicated region
      $region73: #{transformer_forward.18} parent=5 // pred_check
        %p816 = pneg %p815
      $region74: #{transformer_forward.18} parent=5 // pred_check_branch
        %818 = sbr.rel (%p816) target = $region76
      $region75: #{transformer_forward.18} parent=5 // pred_region
        %s819 = ssub.s32 %s18, 2
        // Predicated region
        $region77: #{transformer_forward.18} parent=75 // pred_check
          %p820 = pneg %p267
        $region78: #{transformer_forward.18} parent=75 // pred_check_branch
          %822 = sbr.rel (%p820) target = $region80
        $region79: #{transformer_forward.18} parent=75 // pred_region
          %p823 = scmp.lt.s32.totalorder %s24, 1
          %s824 = scalar_select %p823, %s24, 1
          %s825 = smul.addr %s824, 4
          %s826 = scalar_lea.vmem %s10, %s825
        $region80: #{transformer_forward.18} parent=75 // pred_fallthru
          _
      $region76: #{transformer_forward.18} parent=5 // pred_fallthru
        _
    $region6: #{transformer_forward.18} parent=1 // loop_footer
      %s22 = sadd.s32 1, %s18
    $region7: #{transformer_forward.18} parent=1 // loop_footer_branch
      %17 = sbr.rel target = $region3
    $region8: #{transformer_forward.18} parent=1 // loop_exit
      _
    %827 = vsyncpa [#allocation3], 1
    %s828 = scalar_lea.sflag [#allocation3], 1
    %829 = vsyncpa %s828, 1
    %830 = vsyncpa [#allocation5], 1

// kernel: transformer_forward.21
$region0: #{transformer_forward.21}
  #allocation0 [shape = 'u32[]', space=smem, size = 0x4, offset = 0x4, fixed_abs, tag = 'smem constant byte address 0x4 - core index']
  #allocation1 [shape = 'u32[72,128]{1,0:T(1,128)}', space=vmem, size = 0x9000, scoped, tag = 'internal scratch']
  %s0 = inlined_call_operand.vmem [shape: bf16[16,32], index: 0, kind: input, shape index: {}]
  %s1 = inlined_call_operand.vmem [shape: bf16[32,32], index: 1, kind: input, shape index: {}]
  %s2 = inlined_call_operand.vmem [shape: f32[1,32], index: 2, kind: input, shape index: {}]
  %s3 = inlined_call_operand.hbm [shape: f32[16,32], index: 3, kind: output, shape index: {}]
  %s4 = sld [smem:[#allocation0]]
  $region22: #{transformer_forward.21} parent=0
    _
  %s6 = ssub.s32 1, %s4
  %s7 = scalar_select 0, %s6, %s4
  $region1: #{transformer_forward.21} parent=0
    #allocation2 [shape = 'u8[8192]{0}', space=vmem, size = 0x2000, scoped, tag = 'output window, operand 0, single buffered']
    #allocation3 [shape = 's32[1]{0}', space=sflag, size = 0x4, scoped, tag = 'scoped memory for transformer_forward.21']
    %8 = vsyncpa [#allocation3], 0
    // Predicated region
    $region2: #{transformer_forward.21} parent=1 // pred_check
      _
    $region3: #{transformer_forward.21} parent=1 // pred_check_branch
      %10 = sbr.rel (0) target = $region5
    $region4: #{transformer_forward.21} parent=1 // pred_region
      _
    $region5: #{transformer_forward.21} parent=1 // pred_fallthru
      _
    // Predicated region
    $region6: #{transformer_forward.21} parent=1 // pred_check
      _
    $region7: #{transformer_forward.21} parent=1 // pred_check_branch
      %12 = sbr.rel (0) target = $region9
    $region8: #{transformer_forward.21} parent=1 // pred_region
      _
    $region9: #{transformer_forward.21} parent=1 // pred_fallthru
      _
    // Predicated region
    $region10: #{transformer_forward.21} parent=1 // pred_check
      _
    $region11: #{transformer_forward.21} parent=1 // pred_check_branch
      %14 = sbr.rel (0) target = $region13
    $region12: #{transformer_forward.21} parent=1 // pred_region
      _
    $region13: #{transformer_forward.21} parent=1 // pred_fallthru
      _
    %v16 = vld [vmem:[%s0] sm:$0xf]
    %v17 = vld [vmem:[%s0 + $0x4] sm:$0xf]
    %v18 = vld [vmem:[%s1] sm:$0xf]
    %v19 = vld [vmem:[%s1 + $0x4] sm:$0xf]
    %v20 = vld [vmem:[%s1 + $0x8] sm:$0xf]
    %v21 = vld [vmem:[%s1 + $0xc] sm:$0xf]
    %v22 = vld [vmem:[%s2] sm:$0x1]
    %v24 = vperm.slane %v22, 0
    %v28 = vunpack.c.l.b16 %v16
    %v29 = vunpack.c.l.b16 %v17
    %v30 = vpack.c.b16 %v29, %v28
    %v35 = vunpack.c.l.b16 %v18
    %v36 = vunpack.c.l.b16 %v19
    %v37 = vunpack.c.l.b16 %v20
    %v38 = vunpack.c.l.b16 %v21
    %v39 = vpack.c.b16 %v36, %v35
    %v40 = vpack.c.b16 %v38, %v37
    %vm43 = vcmask 261120
    %v45 = vsel %vm43, %v30, 0
    %47 = vmatpush.bf16.msra.mxu0 0
    %48 = vmatpush.bf16.msra.mxu0 0
    %49 = vmatpush.bf16.msra.mxu0 0
    %50 = vmatpush.bf16.msra.mxu0 0
    %51 = vmatpush.bf16.msra.mxu0 0
    %52 = vmatpush.bf16.msra.mxu0 0
    %53 = vmatpush.bf16.msra.mxu0 %v40
    %54 = vmatpush.bf16.msra.mxu0 %v39
    %55 = vmatmul.bf16.gmra.mxu0 %v45
    %v56 = vpop.f32.mrf.mxu0
    %v57 = vadd.f32 %v24, %v56
    %v58 = vpop.f32.mrf.mxu0
    %v59 = vadd.f32 %v24, %v58
    %60 = vdwg.mxu0
    %v61 = vsel %vm43, %v57, -inf
    %62 = vmax.xlane.f32.xlu0 %v61
    %v63 = vpop.xlane.xlu0 %62
    %v64 = vsel %vm43, %v59, -inf
    %65 = vmax.xlane.f32.xlu0 %v64
    %v66 = vpop.xlane.xlu0 %65
    %v67 = vsub.f32 %v57, %v63
    %v68 = vsub.f32 %v59, %v66
    %v69 = vmul.f32 %v67, 1.442695
    %v70 = vpow.pop %v69
    %v71 = vmul.f32 %v68, 1.442695
    %v72 = vpow.pop %v71
    %v73 = vsel %vm43, %v70, 0.0
    %74 = vadd.xlane.f32.xlu0 %v73
    %v75 = vpop.xlane.xlu0 %74
    %v76 = vsel %vm43, %v72, 0.0
    %77 = vadd.xlane.f32.xlu0 %v76
    %v78 = vpop.xlane.xlu0 %77
    %v79 = vrcp.pop %v75
    %v80 = vmul.f32 %v75, %v79
    %v81 = vsub.f32 1.0, %v80
    %v82 = vmul.f32 %v79, %v81
    %v83 = vadd.f32 %v79, %v82
    %vm84 = vweird.f32 %v75
    %vm85 = vweird.f32 %v79
    %vm86 = vmor %vm84, %vm85
    %v87 = vsel %vm86, %v79, %v83
    %v88 = vand.u32 2147483647, %v75
    %vm89 = vcmp.eq.f32.partialorder %v88, 8.507059e+37
    %v90 = vand.u32 %v75, 2147483648
    %v91 = vor.u32 1.1754944e-38, %v90
    %v92 = vsel %vm89, %v91, %v87
    %v93 = vmul.f32 %v70, %v92
    %v94 = vrcp.pop %v78
    %v95 = vmul.f32 %v78, %v94
    %v96 = vsub.f32 1.0, %v95
    %v97 = vmul.f32 %v94, %v96
    %v98 = vadd.f32 %v94, %v97
    %vm99 = vweird.f32 %v78
    %vm100 = vweird.f32 %v94
    %vm101 = vmor %vm99, %vm100
    %v102 = vsel %vm101, %v94, %v98
    %v103 = vand.u32 2147483647, %v78
    %vm104 = vcmp.eq.f32.partialorder %v103, 8.507059e+37
    %v105 = vand.u32 %v78, 2147483648
    %v106 = vor.u32 1.1754944e-38, %v105
    %v107 = vsel %vm104, %v106, %v102
    %v108 = vmul.f32 %v72, %v107
    %109 = vst.msk [vmem:[#allocation2] sm:$0xff] %vm43, %v93
    %110 = vst.msk [vmem:[#allocation2 + $0x8] sm:$0xff] %vm43, %v108
    // Predicated region
    $region14: #{transformer_forward.21} parent=1 // pred_check
      _
    $region15: #{transformer_forward.21} parent=1 // pred_check_branch
      %112 = sbr.rel (0) target = $region17
    $region16: #{transformer_forward.21} parent=1 // pred_region
      %114 = vsyncadd [#allocation3], 0
      %s115 = sshll.u32 [#allocation2], 4
      %s116 = int_to_ptr.vmem [resolvable:$true] %s115
      %s117 = sshll.u32 %s3, 4
      %s118 = int_to_ptr.hbm [resolvable:$true] %s117
      %123 = dma.vmem_to_hbm [thread:$0]  %s116, 256, %s118, [#allocation3], 128, 128, 8
    $region17: #{transformer_forward.21} parent=1 // pred_fallthru
      _
    // Predicated region
    $region18: #{transformer_forward.21} parent=1 // pred_check
      _
    $region19: #{transformer_forward.21} parent=1 // pred_check_branch
      %125 = sbr.rel (0) target = $region21
    $region20: #{transformer_forward.21} parent=1 // pred_region
      %127 = dma.done [#allocation3], 256
    $region21: #{transformer_forward.21} parent=1 // pred_fallthru
      _
    %128 = vsyncpa [#allocation3], 1

// kernel: transformer_forward.19
$region0: #{transformer_forward.19}
  #allocation0 [shape = 'u32[]', space=smem, size = 0x4, offset = 0x4, fixed_abs, tag = 'smem constant byte address 0x4 - core index']
  #allocation1 [shape = 'u32[72,128]{1,0:T(1,128)}', space=vmem, size = 0x9000, scoped, tag = 'internal scratch']
  %s0 = inlined_call_operand.vmem [shape: bf16[2,8,32], index: 0, kind: input, shape index: {}]
  %s1 = inlined_call_operand.vmem [shape: bf16[2,8,32], index: 1, kind: input, shape index: {}]
  %s2 = inlined_call_operand.hbm [shape: bf16[32,32], index: 2, kind: input, shape index: {}]
  %s3 = inlined_call_operand.hbm [shape: f32[1,32], index: 3, kind: input, shape index: {}]
  %s4 = inlined_call_operand.hbm [shape: bf16[32,64], index: 4, kind: input, shape index: {}]
  %s5 = inlined_call_operand.hbm [shape: f32[1,64], index: 5, kind: input, shape index: {}]
  %s6 = inlined_call_operand.hbm [shape: bf16[32,32], index: 6, kind: input, shape index: {}]
  %s7 = inlined_call_operand.hbm [shape: f32[1,32], index: 7, kind: input, shape index: {}]
  %s8 = inlined_call_operand.hbm [shape: f32[1,32], index: 8, kind: input, shape index: {}]
  %s9 = inlined_call_operand.hbm [shape: f32[1,32], index: 9, kind: input, shape index: {}]
  %s10 = inlined_call_operand.vmem [shape: bf16[2,8,32], index: 10, kind: output, shape index: {}]
  %s11 = sld [smem:[#allocation0]]
  $region105: #{transformer_forward.19} parent=0
    _
  %s13 = ssub.s32 1, %s11
  %s14 = scalar_select 0, %s13, %s11
  $region1: #{transformer_forward.19} parent=0
    #allocation2 [shape = 'u8[8192]{0}', space=vmem, size = 0x2000, scoped, tag = 'input window, operand 2, single buffered']
    #allocation3 [shape = 's32[2]{0}', space=sflag, size = 0x8, scoped, tag = 'scoped memory for transformer_forward.19']
    #allocation4 [shape = 'u8[512]{0}', space=vmem, size = 0x400, scoped, tag = 'input window, operand 3, single buffered']
    #allocation5 [shape = 's32[1]{0}', space=sflag, size = 0x4, scoped, tag = 'scoped memory for transformer_forward.19']
    #allocation6 [shape = 'u8[8192]{0}', space=vmem, size = 0x2000, scoped, tag = 'input window, operand 4, single buffered']
    #allocation7 [shape = 'u8[512]{0}', space=vmem, size = 0x400, scoped, tag = 'input window, operand 5, single buffered']
    #allocation8 [shape = 's32[1]{0}', space=sflag, size = 0x4, scoped, tag = 'scoped memory for transformer_forward.19']
    #allocation9 [shape = 'u8[8192]{0}', space=vmem, size = 0x2000, scoped, tag = 'input window, operand 6, single buffered']
    #allocation10 [shape = 'u8[512]{0}', space=vmem, size = 0x400, scoped, tag = 'input window, operand 7, single buffered']
    #allocation11 [shape = 's32[1]{0}', space=sflag, size = 0x4, scoped, tag = 'scoped memory for transformer_forward.19']
    #allocation12 [shape = 'u8[512]{0}', space=vmem, size = 0x400, scoped, tag = 'input window, operand 8, single buffered']
    #allocation13 [shape = 'u8[512]{0}', space=vmem, size = 0x400, scoped, tag = 'input window, operand 9, single buffered']
    #allocation14 [shape = 's32[1]{0}', space=sflag, size = 0x4, scoped, tag = 'scoped memory for transformer_forward.19']
    %15 = vsyncpa [#allocation3], 0
    %16 = vsyncpa [#allocation5], 0
    %17 = vsyncpa [#allocation8], 0
    %18 = vsyncpa [#allocation11], 0
    %19 = vsyncpa [#allocation14], 0
    loop: start=0, step=1, limit=4
    $region2: #{transformer_forward.19} parent=1 // loop_pre_header
      _
    $region3: #{transformer_forward.19} parent=1 // loop_header
      %s21 = sphi 0, %s25
      %p22 = scmp.ge.s32.totalorder %s21, 4
      %s31 = sphi 0, %s33
      %s34 = sphi 0, %s31
      %s35 = sphi 0, %s34
      %s51 = sphi 0, %s35
      %s57 = sphi 0, %s59
      %s60 = sphi 0, %s57
      %s61 = sphi 0, %s60
      %s77 = sphi 0, %s61
      %s81 = sphi 0, %s81
      %s83 = sphi 0, %s81
      %s84 = sphi 0, %s83
      %s98 = sphi 0, %s84
      %s102 = sphi 0, %s102
      %s104 = sphi 0, %s102
      %s105 = sphi 0, %s104
      %s119 = sphi 0, %s105
      %s123 = sphi 0, %s123
      %s125 = sphi 0, %s123
      %s126 = sphi 0, %s125
      %s140 = sphi 0, %s126
      %s144 = sphi 0, %s144
      %s146 = sphi 0, %s144
      %s147 = sphi 0, %s146
      %s161 = sphi 0, %s147
      %s165 = sphi 0, %s165
      %s167 = sphi 0, %s165
      %s168 = sphi 0, %s167
      %s182 = sphi 0, %s168
      %s186 = sphi 0, %s186
      %s188 = sphi 0, %s186
      %s189 = sphi 0, %s188
      %s203 = sphi 0, %s189
      %s207 = sphi 0, %s207
      %s209 = sphi 0, %s207
      %s210 = sphi 0, %s209
      %s224 = sphi 0, %s210
      %s228 = sphi 0, %s228
      %s230 = sphi 0, %s228
      %s231 = sphi 0, %s230
      %s245 = sphi 0, %s231
      %s251 = sphi 0, %s253
      %s254 = sphi 0, %s251
      %s255 = sphi 0, %s254
      %s271 = sphi 0, %s255
    $region4: #{transformer_forward.19} parent=1 // loop_header_branch
      %24 = sbr.rel (%p22) target = $region8
    $region5: #{transformer_forward.19} parent=1 // loop_body
      %s26 = ssub.s32 %s21, 1
      %s27 = ssub.s32 %s21, 2
      %s28 = sadd.s32 %s21, 1
      %s29 = ssub.s32 %s21, %s28
      %p30 = scmp.eq.s32.totalorder %s29, 0
      %s32 = sadd.s32 %s31, 1
      %s33 = scalar_select %p30, %s31, %s32
      %p36 = pneg %p30
      %p37 = scmp.eq.s32.totalorder %s21, 1
      %p38 = por %p36, %p37
      %p39 = scmp.ne.s32.totalorder %s31, %s34
      %p40 = scmp.eq.s32.totalorder %s21, 0
      %p41 = por %p39, %p40
      %p42 = scmp.ne.s32.totalorder %s31, %s34
      %p43 = scmp.eq.s32.totalorder %s26, 1
      %p44 = por %p42, %p43
      %p45 = scmp.ne.s32.totalorder %s34, %s35
      %p46 = scmp.eq.s32.totalorder %s26, 0
      %p47 = por %p45, %p46
      %p48 = scmp.ne.s32.totalorder %s34, %s35
      %p49 = scmp.eq.s32.totalorder %s27, 1
      %p50 = por %p48, %p49
      %p52 = scmp.ne.s32.totalorder %s35, %s51
      %p53 = scmp.eq.s32.totalorder %s27, 0
      %p54 = por %p52, %p53
      %s55 = ssub.s32 %s21, %s28
      %p56 = scmp.eq.s32.totalorder %s55, 0
      %s58 = sadd.s32 %s57, 1
      %s59 = scalar_select %p56, %s57, %s58
      %p62 = pneg %p56
      %p63 = scmp.eq.s32.totalorder %s21, 1
      %p64 = por %p62, %p63
      %p65 = scmp.ne.s32.totalorder %s57, %s60
      %p66 = scmp.eq.s32.totalorder %s21, 0
      %p67 = por %p65, %p66
      %p68 = scmp.ne.s32.totalorder %s57, %s60
      %p69 = scmp.eq.s32.totalorder %s26, 1
      %p70 = por %p68, %p69
      %p71 = scmp.ne.s32.totalorder %s60, %s61
      %p72 = scmp.eq.s32.totalorder %s26, 0
      %p73 = por %p71, %p72
      %p74 = scmp.ne.s32.totalorder %s60, %s61
      %p75 = scmp.eq.s32.totalorder %s27, 1
      %p76 = por %p74, %p75
      %p78 = scmp.ne.s32.totalorder %s61, %s77
      %p79 = scmp.eq.s32.totalorder %s27, 0
      %p80 = por %p78, %p79
      %s82 = sadd.s32 %s81, 1
      %p85 = scmp.eq.s32.totalorder %s21, 1
      %p86 = scmp.ne.s32.totalorder %s81, %s83
      %p87 = scmp.eq.s32.totalorder %s21, 0
      %p88 = por %p86, %p87
      %p89 = scmp.ne.s32.totalorder %s81, %s83
      %p90 = scmp.eq.s32.totalorder %s26, 1
      %p91 = por %p89, %p90
      %p92 = scmp.ne.s32.totalorder %s83, %s84
      %p93 = scmp.eq.s32.totalorder %s26, 0
      %p94 = por %p92, %p93
      %p95 = scmp.ne.s32.totalorder %s83, %s84
      %p96 = scmp.eq.s32.totalorder %s27, 1
      %p97 = por %p95, %p96
      %p99 = scmp.ne.s32.totalorder %s84, %s98
      %p100 = scmp.eq.s32.totalorder %s27, 0
      %p101 = por %p99, %p100
      %s103 = sadd.s32 %s102, 1
      %p106 = scmp.eq.s32.totalorder %s21, 1
      %p107 = scmp.ne.s32.totalorder %s102, %s104
      %p108 = scmp.eq.s32.totalorder %s21, 0
      %p109 = por %p107, %p108
      %p110 = scmp.ne.s32.totalorder %s102, %s104
      %p111 = scmp.eq.s32.totalorder %s26, 1
      %p112 = por %p110, %p111
      %p113 = scmp.ne.s32.totalorder %s104, %s105
      %p114 = scmp.eq.s32.totalorder %s26, 0
      %p115 = por %p113, %p114
      %p116 = scmp.ne.s32.totalorder %s104, %s105
      %p117 = scmp.eq.s32.totalorder %s27, 1
      %p118 = por %p116, %p117
      %p120 = scmp.ne.s32.totalorder %s105, %s119
      %p121 = scmp.eq.s32.totalorder %s27, 0
      %p122 = por %p120, %p121
      %s124 = sadd.s32 %s123, 1
      %p127 = scmp.eq.s32.totalorder %s21, 1
      %p128 = scmp.ne.s32.totalorder %s123, %s125
      %p129 = scmp.eq.s32.totalorder %s21, 0
      %p130 = por %p128, %p129
      %p131 = scmp.ne.s32.totalorder %s123, %s125
      %p132 = scmp.eq.s32.totalorder %s26, 1
      %p133 = por %p131, %p132
      %p134 = scmp.ne.s32.totalorder %s125, %s126
      %p135 = scmp.eq.s32.totalorder %s26, 0
      %p136 = por %p134, %p135
      %p137 = scmp.ne.s32.totalorder %s125, %s126
      %p138 = scmp.eq.s32.totalorder %s27, 1
      %p139 = por %p137, %p138
      %p141 = scmp.ne.s32.totalorder %s126, %s140
      %p142 = scmp.eq.s32.totalorder %s27, 0
      %p143 = por %p141, %p142
      %s145 = sadd.s32 %s144, 1
      %p148 = scmp.eq.s32.totalorder %s21, 1
      %p149 = scmp.ne.s32.totalorder %s144, %s146
      %p150 = scmp.eq.s32.totalorder %s21, 0
      %p151 = por %p149, %p150
      %p152 = scmp.ne.s32.totalorder %s144, %s146
      %p153 = scmp.eq.s32.totalorder %s26, 1
      %p154 = por %p152, %p153
      %p155 = scmp.ne.s32.totalorder %s146, %s147
      %p156 = scmp.eq.s32.totalorder %s26, 0
      %p157 = por %p155, %p156
      %p158 = scmp.ne.s32.totalorder %s146, %s147
      %p159 = scmp.eq.s32.totalorder %s27, 1
      %p160 = por %p158, %p159
      %p162 = scmp.ne.s32.totalorder %s147, %s161
      %p163 = scmp.eq.s32.totalorder %s27, 0
      %p164 = por %p162, %p163
      %s166 = sadd.s32 %s165, 1
      %p169 = scmp.eq.s32.totalorder %s21, 1
      %p170 = scmp.ne.s32.totalorder %s165, %s167
      %p171 = scmp.eq.s32.totalorder %s21, 0
      %p172 = por %p170, %p171
      %p173 = scmp.ne.s32.totalorder %s165, %s167
      %p174 = scmp.eq.s32.totalorder %s26, 1
      %p175 = por %p173, %p174
      %p176 = scmp.ne.s32.totalorder %s167, %s168
      %p177 = scmp.eq.s32.totalorder %s26, 0
      %p178 = por %p176, %p177
      %p179 = scmp.ne.s32.totalorder %s167, %s168
      %p180 = scmp.eq.s32.totalorder %s27, 1
      %p181 = por %p179, %p180
      %p183 = scmp.ne.s32.totalorder %s168, %s182
      %p184 = scmp.eq.s32.totalorder %s27, 0
      %p185 = por %p183, %p184
      %s187 = sadd.s32 %s186, 1
      %p190 = scmp.eq.s32.totalorder %s21, 1
      %p191 = scmp.ne.s32.totalorder %s186, %s188
      %p192 = scmp.eq.s32.totalorder %s21, 0
      %p193 = por %p191, %p192
      %p194 = scmp.ne.s32.totalorder %s186, %s188
      %p195 = scmp.eq.s32.totalorder %s26, 1
      %p196 = por %p194, %p195
      %p197 = scmp.ne.s32.totalorder %s188, %s189
      %p198 = scmp.eq.s32.totalorder %s26, 0
      %p199 = por %p197, %p198
      %p200 = scmp.ne.s32.totalorder %s188, %s189
      %p201 = scmp.eq.s32.totalorder %s27, 1
      %p202 = por %p200, %p201
      %p204 = scmp.ne.s32.totalorder %s189, %s203
      %p205 = scmp.eq.s32.totalorder %s27, 0
      %p206 = por %p204, %p205
      %s208 = sadd.s32 %s207, 1
      %p211 = scmp.eq.s32.totalorder %s21, 1
      %p212 = scmp.ne.s32.totalorder %s207, %s209
      %p213 = scmp.eq.s32.totalorder %s21, 0
      %p214 = por %p212, %p213
      %p215 = scmp.ne.s32.totalorder %s207, %s209
      %p216 = scmp.eq.s32.totalorder %s26, 1
      %p217 = por %p215, %p216
      %p218 = scmp.ne.s32.totalorder %s209, %s210
      %p219 = scmp.eq.s32.totalorder %s26, 0
      %p220 = por %p218, %p219
      %p221 = scmp.ne.s32.totalorder %s209, %s210
      %p222 = scmp.eq.s32.totalorder %s27, 1
      %p223 = por %p221, %p222
      %p225 = scmp.ne.s32.totalorder %s210, %s224
      %p226 = scmp.eq.s32.totalorder %s27, 0
      %p227 = por %p225, %p226
      %s229 = sadd.s32 %s228, 1
      %p232 = scmp.eq.s32.totalorder %s21, 1
      %p233 = scmp.ne.s32.totalorder %s228, %s230
      %p234 = scmp.eq.s32.totalorder %s21, 0
      %p235 = por %p233, %p234
      %p236 = scmp.ne.s32.totalorder %s228, %s230
      %p237 = scmp.eq.s32.totalorder %s26, 1
      %p238 = por %p236, %p237
      %p239 = scmp.ne.s32.totalorder %s230, %s231
      %p240 = scmp.eq.s32.totalorder %s26, 0
      %p241 = por %p239, %p240
      %p242 = scmp.ne.s32.totalorder %s230, %s231
      %p243 = scmp.eq.s32.totalorder %s27, 1
      %p244 = por %p242, %p243
      %p246 = scmp.ne.s32.totalorder %s231, %s245
      %p247 = scmp.eq.s32.totalorder %s27, 0
      %p248 = por %p246, %p247
      %s249 = ssub.s32 %s21, %s28
      %p250 = scmp.eq.s32.totalorder %s249, 0
      %s252 = sadd.s32 %s251, 1
      %s253 = scalar_select %p250, %s251, %s252
      %p256 = pneg %p250
      %p257 = scmp.eq.s32.totalorder %s21, 1
      %p258 = por %p256, %p257
      %p259 = scmp.ne.s32.totalorder %s251, %s254
      %p260 = scmp.eq.s32.totalorder %s21, 0
      %p261 = por %p259, %p260
      %p262 = scmp.ne.s32.totalorder %s251, %s254
      %p263 = scmp.eq.s32.totalorder %s26, 1
      %p264 = por %p262, %p263
      %p265 = scmp.ne.s32.totalorder %s254, %s255
      %p266 = scmp.eq.s32.totalorder %s26, 0
      %p267 = por %p265, %p266
      %p268 = scmp.ne.s32.totalorder %s254, %s255
      %p269 = scmp.eq.s32.totalorder %s27, 1
      %p270 = por %p268, %p269
      %p272 = scmp.ne.s32.totalorder %s255, %s271
      %p273 = scmp.eq.s32.totalorder %s27, 0
      %p274 = por %p272, %p273
      %p275 = scmp.le.s32.totalorder 1, %s21
      %p276 = scmp.lt.s32.totalorder %s21, 3
      %p277 = pnand %p275, %p276
      %p278 = pneg %p277
      // Predicated region
      $region9: #{transformer_forward.19} parent=5 // pred_check
        _
      $region10: #{transformer_forward.19} parent=5 // pred_check_branch
        %280 = sbr.rel (%p277) target = $region12
      $region11: #{transformer_forward.19} parent=5 // pred_region
        %s281 = ssub.s32 %s21, 1
        // Predicated region
        $region13: #{transformer_forward.19} parent=11 // pred_check
          %p282 = pneg %p94
        $region14: #{transformer_forward.19} parent=11 // pred_check_branch
          %284 = sbr.rel (%p282) target = $region16
        $region15: #{transformer_forward.19} parent=11 // pred_region
          %286 = vsyncadd [#allocation3], 0
          %s287 = sshll.u32 %s2, 4
          %s288 = int_to_ptr.hbm [resolvable:$true] %s287
          %s289 = sshll.u32 [#allocation2], 4
          %s290 = int_to_ptr.vmem [resolvable:$true] %s289
          %295 = dma.hbm_to_vmem [thread:$0]  %s288, 256, %s290, [#allocation3], 64, 64, 4
        $region16: #{transformer_forward.19} parent=11 // pred_fallthru
          _
        // Predicated region
        $region17: #{transformer_forward.19} parent=11 // pred_check
          %p296 = pneg %p115
        $region18: #{transformer_forward.19} parent=11 // pred_check_branch
          %298 = sbr.rel (%p296) target = $region20
        $region19: #{transformer_forward.19} parent=11 // pred_region
          %300 = vsyncadd [#allocation5], 0
          %s302 = sshll.u32 %s3, 4
          %s303 = int_to_ptr.hbm [resolvable:$true] %s302
          %s304 = sshll.u32 [#allocation4], 4
          %s305 = int_to_ptr.vmem [resolvable:$true] %s304
          %307 = dma.hbm_to_vmem [thread:$0]  %s303, 16, %s305, [#allocation5]
        $region20: #{transformer_forward.19} parent=11 // pred_fallthru
          _
        // Predicated region
        $region21: #{transformer_forward.19} parent=11 // pred_check
          %p308 = pneg %p136
        $region22: #{transformer_forward.19} parent=11 // pred_check_branch
          %310 = sbr.rel (%p308) target = $region24
        $region23: #{transformer_forward.19} parent=11 // pred_region
          %312 = vsyncadd [#allocation5], 0
          %s313 = sshll.u32 %s4, 4
          %s314 = int_to_ptr.hbm [resolvable:$true] %s313
          %s315 = sshll.u32 [#allocation6], 4
          %s316 = int_to_ptr.vmem [resolvable:$true] %s315
          %321 = dma.hbm_to_vmem [thread:$0]  %s314, 256, %s316, [#allocation5], 64, 64, 4
        $region24: #{transformer_forward.19} parent=11 // pred_fallthru
          _
        // Predicated region
        $region25: #{transformer_forward.19} parent=11 // pred_check
          %p322 = pneg %p157
        $region26: #{transformer_forward.19} parent=11 // pred_check_branch
          %324 = sbr.rel (%p322) target = $region28
        $region27: #{transformer_forward.19} parent=11 // pred_region
          %326 = vsyncadd [#allocation8], 0
          %s328 = sshll.u32 %s5, 4
          %s329 = int_to_ptr.hbm [resolvable:$true] %s328
          %s330 = sshll.u32 [#allocation7], 4
          %s331 = int_to_ptr.vmem [resolvable:$true] %s330
          %333 = dma.hbm_to_vmem [thread:$0]  %s329, 16, %s331, [#allocation8]
        $region28: #{transformer_forward.19} parent=11 // pred_fallthru
          _
        // Predicated region
        $region29: #{transformer_forward.19} parent=11 // pred_check
          %p334 = pneg %p178
        $region30: #{transformer_forward.19} parent=11 // pred_check_branch
          %336 = sbr.rel (%p334) target = $region32
        $region31: #{transformer_forward.19} parent=11 // pred_region
          %338 = vsyncadd [#allocation8], 0
          %s339 = sshll.u32 %s6, 4
          %s340 = int_to_ptr.hbm [resolvable:$true] %s339
          %s341 = sshll.u32 [#allocation9], 4
          %s342 = int_to_ptr.vmem [resolvable:$true] %s341
          %347 = dma.hbm_to_vmem [thread:$0]  %s340, 256, %s342, [#allocation8], 64, 64, 4
        $region32: #{transformer_forward.19} parent=11 // pred_fallthru
          _
        // Predicated region
        $region33: #{transformer_forward.19} parent=11 // pred_check
          %p348 = pneg %p199
        $region34: #{transformer_forward.19} parent=11 // pred_check_branch
          %350 = sbr.rel (%p348) target = $region36
        $region35: #{transformer_forward.19} parent=11 // pred_region
          %352 = vsyncadd [#allocation11], 0
          %s354 = sshll.u32 %s7, 4
          %s355 = int_to_ptr.hbm [resolvable:$true] %s354
          %s356 = sshll.u32 [#allocation10], 4
          %s357 = int_to_ptr.vmem [resolvable:$true] %s356
          %359 = dma.hbm_to_vmem [thread:$0]  %s355, 16, %s357, [#allocation11]
        $region36: #{transformer_forward.19} parent=11 // pred_fallthru
          _
        // Predicated region
        $region37: #{transformer_forward.19} parent=11 // pred_check
          %p360 = pneg %p220
        $region38: #{transformer_forward.19} parent=11 // pred_check_branch
          %362 = sbr.rel (%p360) target = $region40
        $region39: #{transformer_forward.19} parent=11 // pred_region
          %364 = vsyncadd [#allocation11], 0
          %s366 = sshll.u32 %s8, 4
          %s367 = int_to_ptr.hbm [resolvable:$true] %s366
          %s368 = sshll.u32 [#allocation12], 4
          %s369 = int_to_ptr.vmem [resolvable:$true] %s368
          %371 = dma.hbm_to_vmem [thread:$0]  %s367, 16, %s369, [#allocation11]
        $region40: #{transformer_forward.19} parent=11 // pred_fallthru
          _
        // Predicated region
        $region41: #{transformer_forward.19} parent=11 // pred_check
          %p372 = pneg %p241
        $region42: #{transformer_forward.19} parent=11 // pred_check_branch
          %374 = sbr.rel (%p372) target = $region44
        $region43: #{transformer_forward.19} parent=11 // pred_region
          %376 = vsyncadd [#allocation14], 0
          %s378 = sshll.u32 %s9, 4
          %s379 = int_to_ptr.hbm [resolvable:$true] %s378
          %s380 = sshll.u32 [#allocation13], 4
          %s381 = int_to_ptr.vmem [resolvable:$true] %s380
          %383 = dma.hbm_to_vmem [thread:$0]  %s379, 16, %s381, [#allocation14]
        $region44: #{transformer_forward.19} parent=11 // pred_fallthru
          _
      $region12: #{transformer_forward.19} parent=5 // pred_fallthru
        _
      %p384 = scmp.lt.s32.totalorder %s21, 2
      // Predicated region
      $region45: #{transformer_forward.19} parent=5 // pred_check
        %p385 = pneg %p384
      $region46: #{transformer_forward.19} parent=5 // pred_check_branch
        %387 = sbr.rel (%p385) target = $region48
      $region47: #{transformer_forward.19} parent=5 // pred_region
        // Predicated region
        $region49: #{transformer_forward.19} parent=47 // pred_check
          %p388 = pneg %p41
        $region50: #{transformer_forward.19} parent=47 // pred_check_branch
          %390 = sbr.rel (%p388) target = $region52
        $region51: #{transformer_forward.19} parent=47 // pred_region
          %p391 = scmp.lt.s32.totalorder %s21, 1
          %s392 = scalar_select %p391, %s21, 1
          %s393 = smul.addr %s392, 4
          %s394 = scalar_lea.vmem %s0, %s393
        $region52: #{transformer_forward.19} parent=47 // pred_fallthru
          _
        // Predicated region
        $region53: #{transformer_forward.19} parent=47 // pred_check
          %p395 = pneg %p67
        $region54: #{transformer_forward.19} parent=47 // pred_check_branch
          %397 = sbr.rel (%p395) target = $region56
        $region55: #{transformer_forward.19} parent=47 // pred_region
          %p398 = scmp.lt.s32.totalorder %s21, 1
          %s399 = scalar_select %p398, %s21, 1
          %s400 = smul.addr %s399, 4
          %s401 = scalar_lea.vmem %s1, %s400
        $region56: #{transformer_forward.19} parent=47 // pred_fallthru
          _
      $region48: #{transformer_forward.19} parent=5 // pred_fallthru
        _
      %p402 = scmp.le.s32.totalorder 1, %s21
      %p403 = scmp.lt.s32.totalorder %s21, 3
      %p404 = pnand %p402, %p403
      %p405 = pneg %p404
      // Predicated region
      $region57: #{transformer_forward.19} parent=5 // pred_check
        _
      $region58: #{transformer_forward.19} parent=5 // pred_check_branch
        %407 = sbr.rel (%p404) target = $region60
      $region59: #{transformer_forward.19} parent=5 // pred_region
        %s408 = ssub.s32 %s21, 1
        // Predicated region
        $region61: #{transformer_forward.19} parent=59 // pred_check
          %p409 = pneg %p94
        $region62: #{transformer_forward.19} parent=59 // pred_check_branch
          %411 = sbr.rel (%p409) target = $region64
        $region63: #{transformer_forward.19} parent=59 // pred_region
          %413 = dma.done [#allocation3], 256
        $region64: #{transformer_forward.19} parent=59 // pred_fallthru
          _
        // Predicated region
        $region65: #{transformer_forward.19} parent=59 // pred_check
          %p414 = pneg %p115
        $region66: #{transformer_forward.19} parent=59 // pred_check_branch
          %416 = sbr.rel (%p414) target = $region68
        $region67: #{transformer_forward.19} parent=59 // pred_region
          %418 = dma.done [#allocation5], 16
        $region68: #{transformer_forward.19} parent=59 // pred_fallthru
          _
        // Predicated region
        $region69: #{transformer_forward.19} parent=59 // pred_check
          %p419 = pneg %p136
        $region70: #{transformer_forward.19} parent=59 // pred_check_branch
          %421 = sbr.rel (%p419) target = $region72
        $region71: #{transformer_forward.19} parent=59 // pred_region
          %423 = dma.done [#allocation5], 256
        $region72: #{transformer_forward.19} parent=59 // pred_fallthru
          _
        // Predicated region
        $region73: #{transformer_forward.19} parent=59 // pred_check
          %p424 = pneg %p157
        $region74: #{transformer_forward.19} parent=59 // pred_check_branch
          %426 = sbr.rel (%p424) target = $region76
        $region75: #{transformer_forward.19} parent=59 // pred_region
          %428 = dma.done [#allocation8], 16
        $region76: #{transformer_forward.19} parent=59 // pred_fallthru
          _
        // Predicated region
        $region77: #{transformer_forward.19} parent=59 // pred_check
          %p429 = pneg %p178
        $region78: #{transformer_forward.19} parent=59 // pred_check_branch
          %431 = sbr.rel (%p429) target = $region80
        $region79: #{transformer_forward.19} parent=59 // pred_region
          %433 = dma.done [#allocation8], 256
        $region80: #{transformer_forward.19} parent=59 // pred_fallthru
          _
        // Predicated region
        $region81: #{transformer_forward.19} parent=59 // pred_check
          %p434 = pneg %p199
        $region82: #{transformer_forward.19} parent=59 // pred_check_branch
          %436 = sbr.rel (%p434) target = $region84
        $region83: #{transformer_forward.19} parent=59 // pred_region
          %438 = dma.done [#allocation11], 16
        $region84: #{transformer_forward.19} parent=59 // pred_fallthru
          _
        // Predicated region
        $region85: #{transformer_forward.19} parent=59 // pred_check
          %p439 = pneg %p220
        $region86: #{transformer_forward.19} parent=59 // pred_check_branch
          %441 = sbr.rel (%p439) target = $region88
        $region87: #{transformer_forward.19} parent=59 // pred_region
          %443 = dma.done [#allocation11], 16
        $region88: #{transformer_forward.19} parent=59 // pred_fallthru
          _
        // Predicated region
        $region89: #{transformer_forward.19} parent=59 // pred_check
          %p444 = pneg %p241
        $region90: #{transformer_forward.19} parent=59 // pred_check_branch
          %446 = sbr.rel (%p444) target = $region92
        $region91: #{transformer_forward.19} parent=59 // pred_region
          %448 = dma.done [#allocation14], 16
        $region92: #{transformer_forward.19} parent=59 // pred_fallthru
          _
        %p449 = scmp.lt.s32.totalorder %s26, 1
        %s450 = scalar_select %p449, %s26, 1
        %s451 = smul.addr %s450, 4
        %s452 = scalar_lea.vmem %s0, %s451
        %p453 = pneg %p47
        %p454 = pneg %p44
        %p455 = scmp.lt.s32.totalorder %s26, 1
        %s456 = scalar_select %p455, %s26, 1
        %s457 = smul.addr %s456, 4
        %s458 = scalar_lea.vmem %s1, %s457
        %p459 = pneg %p73
        %p460 = pneg %p70
        %p461 = pneg %p94
        %p462 = pneg %p91
        %p463 = pneg %p115
        %p464 = pneg %p112
        %p465 = pneg %p136
        %p466 = pneg %p133
        %p467 = pneg %p157
        %p468 = pneg %p154
        %p469 = pneg %p178
        %p470 = pneg %p175
        %p471 = pneg %p199
        %p472 = pneg %p196
        %p473 = pneg %p220
        %p474 = pneg %p217
        %p475 = pneg %p241
        %p476 = pneg %p238
        %p477 = pneg %p267
        %p478 = pneg %p264
        %p479 = scmp.lt.s32.totalorder %s26, 1
        %s480 = scalar_select %p479, %s26, 1
        %s481 = smul.addr %s480, 4
        %s482 = scalar_lea.vmem %s10, %s481
        %p483 = scmp.lt.s32.totalorder %s26, 1
        %s484 = scalar_select %p483, %s26, 1
        %s485 = smul.addr %s484, 4
        %s486 = scalar_lea.vmem %s0, %s485
        %p487 = scmp.lt.s32.totalorder %s26, 1
        %s488 = scalar_select %p487, %s26, 1
        %s489 = smul.addr %s488, 4
        %s490 = scalar_lea.vmem %s1, %s489
        %p491 = scmp.lt.s32.totalorder %s26, 1
        %s492 = scalar_select %p491, %s26, 1
        %s493 = smul.addr %s492, 4
        %s494 = scalar_lea.vmem %s10, %s493
        %v496 = vld [vmem:[%s486] sm:$0xf]
        %v497 = vld [vmem:[%s490] sm:$0xf]
        %v498 = vld [vmem:[#allocation2] sm:$0xf]
        %v499 = vld [vmem:[#allocation2 + $0x4] sm:$0xf]
        %v500 = vld [vmem:[#allocation2 + $0x8] sm:$0xf]
        %v501 = vld [vmem:[#allocation2 + $0xc] sm:$0xf]
        %v502 = vld [vmem:[#allocation4] sm:$0x1]
        %v504 = vperm.slane %v502, 0
        %v510 = vunpack.c.l.b16 %v498
        %v511 = vunpack.c.l.b16 %v499
        %v512 = vunpack.c.l.b16 %v500
        %v513 = vunpack.c.l.b16 %v501
        %v514 = vpack.c.b16 %v511, %v510
        %v515 = vpack.c.b16 %v513, %v512
        %vm518 = vcmask 261120
        %v520 = vsel %vm518, %v496, 0
        %522 = vmatpush.bf16.msra.mxu0 0
        %523 = vmatpush.bf16.msra.mxu0 0
        %524 = vmatpush.bf16.msra.mxu0 0
        %525 = vmatpush.bf16.msra.mxu0 0
        %526 = vmatpush.bf16.msra.mxu0 0
        %527 = vmatpush.bf16.msra.mxu0 0
        %528 = vmatpush.bf16.msra.mxu0 %v515
        %529 = vmatpush.bf16.msra.mxu0 %v514
        %530 = vmatmul.bf16.gmra.mxu0 %v520
        %v531 = vpop.f32.mrf.mxu0
        %v532 = vadd.f32 %v504, %v531
        %v533 = vpop.f32.mrf.mxu0
        %534 = vdwg.mxu0
        %v535 = vld [vmem:[#allocation6] sm:$0xf]
        %v536 = vld [vmem:[#allocation6 + $0x4] sm:$0xf]
        %v537 = vld [vmem:[#allocation6 + $0x8] sm:$0xf]
        %v538 = vld [vmem:[#allocation6 + $0xc] sm:$0xf]
        %v539 = vld [vmem:[#allocation7] sm:$0x1]
        %v541 = vperm.slane %v539, 0
        %v547 = vunpack.c.l.b16 %v535
        %v548 = vunpack.c.l.b16 %v536
        %v549 = vunpack.c.l.b16 %v537
        %v550 = vunpack.c.l.b16 %v538
        %v551 = vpack.c.b16 %v548, %v547
        %v552 = vpack.c.b16 %v550, %v549
        %v556 = vsel %vm518, %v497, 0
        %558 = vmatpush.bf16.msra.mxu0 0
        %559 = vmatpush.bf16.msra.mxu0 0
        %560 = vmatpush.bf16.msra.mxu0 0
        %561 = vmatpush.bf16.msra.mxu0 0
        %562 = vmatpush.bf16.msra.mxu0 0
        %563 = vmatpush.bf16.msra.mxu0 0
        %564 = vmatpush.bf16.msra.mxu0 %v552
        %565 = vmatpush.bf16.msra.mxu0 %v551
        %566 = vmatmul.bf16.gmra.mxu0 %v556
        %v567 = vpop.f32.mrf.mxu0
        %v568 = vadd.f32 %v541, %v567
        %v569 = vpop.f32.mrf.mxu0
        %570 = vdwg.mxu0
        %v571 = vpack.c.bf16 %v532, %v532
        %v572 = vpack.c.bf16 %v568, %v568
        %vm573 = vcmask 64512
        %v575 = vsel %vm573, %v571, 0
        %v578 = vsel %vm573, %v572, 0
        %580 = vmatpush.bf16.xpose.msra.mxu0 0
        %581 = vmatpush.bf16.xpose.msra.mxu0 0
        %582 = vmatpush.bf16.xpose.msra.mxu0 0
        %583 = vmatpush.bf16.xpose.msra.mxu0 0
        %584 = vmatpush.bf16.xpose.msra.mxu0 0
        %585 = vmatpush.bf16.xpose.msra.mxu0 0
        %586 = vmatpush.bf16.xpose.msra.mxu0 0
        %587 = vmatpush.bf16.xpose.msra.mxu0 %v578
        %588 = vmatmul.bf16.gmra.mxu0 %v575
        %v589 = vpop.f32.mrf.mxu0
        %v590 = vadd.f32 0.0, %v589
        %v591 = vpop.f32.mrf.mxu0
        %592 = vdwg.mxu0
        %v593 = vmul.f32 %v590, 0.35355338
        %v594 = vsel %vm573, %v593, -inf
        %595 = vmax.xlane.f32.xlu0 %v594
        %v596 = vpop.xlane.xlu0 %595
        %v597 = vsub.f32 %v593, %v596
        %v598 = vmul.f32 %v597, 1.442695
        %v599 = vpow.pop %v598
        %v600 = vsel %vm573, %v599, 0.0
        %601 = vadd.xlane.f32.xlu0 %v600
        %v602 = vpop.xlane.xlu0 %601
        %v603 = vrcp.pop %v602
        %v604 = vmul.f32 %v599, %v603
        %v605 = vpack.c.bf16 %v604, %v604
        %607 = vrot.lane.b32.xlu0 %v572, 96
        %v608 = vpop.permute.xlu0 %607
        %v610 = vsel %vm573, %v605, 0
        %vm612 = vcmask 1043456
        %v614 = vsel %vm612, %v608, 0
        %616 = vmatpush.bf16.msra.mxu0 0
        %617 = vmatpush.bf16.msra.mxu0 0
        %618 = vmatpush.bf16.msra.mxu0 0
        %619 = vmatpush.bf16.msra.mxu0 0
        %620 = vmatpush.bf16.msra.mxu0 0
        %621 = vmatpush.bf16.msra.mxu0 0
        %622 = vmatpush.bf16.msra.mxu0 0
        %623 = vmatpush.bf16.msra.mxu0 %v614
        %624 = vmatmul.bf16.gmra.mxu0 %v610
        %v625 = vpop.f32.mrf.mxu0
        %v626 = vadd.f32 0.0, %v625
        %v627 = vpop.f32.mrf.mxu0
        %628 = vdwg.mxu0
        %630 = vrot.lane.b32.xlu0 %v571, 120
        %v631 = vpop.permute.xlu0 %630
        %632 = vrot.lane.b32.xlu0 %v572, 120
        %v633 = vpop.permute.xlu0 %632
        %v635 = vsel %vm573, %v631, 0
        %v638 = vsel %vm573, %v633, 0
        %640 = vmatpush.bf16.xpose.msra.mxu0 0
        %641 = vmatpush.bf16.xpose.msra.mxu0 0
        %642 = vmatpush.bf16.xpose.msra.mxu0 0
        %643 = vmatpush.bf16.xpose.msra.mxu0 0
        %644 = vmatpush.bf16.xpose.msra.mxu0 0
        %645 = vmatpush.bf16.xpose.msra.mxu0 0
        %646 = vmatpush.bf16.xpose.msra.mxu0 0
        %647 = vmatpush.bf16.xpose.msra.mxu0 %v638
        %648 = vmatmul.bf16.gmra.mxu0 %v635
        %v649 = vpop.f32.mrf.mxu0
        %v650 = vadd.f32 0.0, %v649
        %v651 = vpop.f32.mrf.mxu0
        %652 = vdwg.mxu0
        %v653 = vmul.f32 %v650, 0.35355338
        %v654 = vsel %vm573, %v653, -inf
        %655 = vmax.xlane.f32.xlu0 %v654
        %v656 = vpop.xlane.xlu0 %655
        %v657 = vsub.f32 %v653, %v656
        %v658 = vmul.f32 %v657, 1.442695
        %v659 = vpow.pop %v658
        %v660 = vsel %vm573, %v659, 0.0
        %661 = vadd.xlane.f32.xlu0 %v660
        %v662 = vpop.xlane.xlu0 %661
        %v663 = vrcp.pop %v662
        %v664 = vmul.f32 %v659, %v663
        %v665 = vpack.c.bf16 %v664, %v664
        %666 = vrot.lane.b32.xlu0 %v572, 88
        %v667 = vpop.permute.xlu0 %666
        %v669 = vsel %vm573, %v665, 0
        %v672 = vsel %vm612, %v667, 0
        %674 = vmatpush.bf16.msra.mxu0 0
        %675 = vmatpush.bf16.msra.mxu0 0
        %676 = vmatpush.bf16.msra.mxu0 0
        %677 = vmatpush.bf16.msra.mxu0 0
        %678 = vmatpush.bf16.msra.mxu0 0
        %679 = vmatpush.bf16.msra.mxu0 0
        %680 = vmatpush.bf16.msra.mxu0 0
        %681 = vmatpush.bf16.msra.mxu0 %v672
        %682 = vmatmul.bf16.gmra.mxu0 %v669
        %v683 = vpop.f32.mrf.mxu0
        %v684 = vadd.f32 0.0, %v683
        %v685 = vpop.f32.mrf.mxu0
        %686 = vdwg.mxu0
        %687 = vrot.lane.b32.xlu0 %v571, 112
        %v688 = vpop.permute.xlu0 %687
        %689 = vrot.lane.b32.xlu0 %v572, 112
        %v690 = vpop.permute.xlu0 %689
        %v692 = vsel %vm573, %v688, 0
        %v695 = vsel %vm573, %v690, 0
        %697 = vmatpush.bf16.xpose.msra.mxu0 0
        %698 = vmatpush.bf16.xpose.msra.mxu0 0
        %699 = vmatpush.bf16.xpose.msra.mxu0 0
        %700 = vmatpush.bf16.xpose.msra.mxu0 0
        %701 = vmatpush.bf16.xpose.msra.mxu0 0
        %702 = vmatpush.bf16.xpose.msra.mxu0 0
        %703 = vmatpush.bf16.xpose.msra.mxu0 0
        %704 = vmatpush.bf16.xpose.msra.mxu0 %v695
        %705 = vmatmul.bf16.gmra.mxu0 %v692
        %v706 = vpop.f32.mrf.mxu0
        %v707 = vadd.f32 0.0, %v706
        %v708 = vpop.f32.mrf.mxu0
        %709 = vdwg.mxu0
        %v710 = vmul.f32 %v707, 0.35355338
        %v711 = vsel %vm573, %v710, -inf
        %712 = vmax.xlane.f32.xlu0 %v711
        %v713 = vpop.xlane.xlu0 %712
        %v714 = vsub.f32 %v710, %v713
        %v715 = vmul.f32 %v714, 1.442695
        %v716 = vpow.pop %v715
        %v717 = vsel %vm573, %v716, 0.0
        %718 = vadd.xlane.f32.xlu0 %v717
        %v719 = vpop.xlane.xlu0 %718
        %v720 = vrcp.pop %v719
        %v721 = vmul.f32 %v716, %v720
        %v722 = vpack.c.bf16 %v721, %v721
        %723 = vrot.lane.b32.xlu0 %v572, 80
        %v724 = vpop.permute.xlu0 %723
        %v726 = vsel %vm573, %v722, 0
        %v729 = vsel %vm612, %v724, 0
        %731 = vmatpush.bf16.msra.mxu0 0
        %732 = vmatpush.bf16.msra.mxu0 0
        %733 = vmatpush.bf16.msra.mxu0 0
        %734 = vmatpush.bf16.msra.mxu0 0
        %735 = vmatpush.bf16.msra.mxu0 0
        %736 = vmatpush.bf16.msra.mxu0 0
        %737 = vmatpush.bf16.msra.mxu0 0
        %738 = vmatpush.bf16.msra.mxu0 %v729
        %739 = vmatmul.bf16.gmra.mxu0 %v726
        %v740 = vpop.f32.mrf.mxu0
        %v741 = vadd.f32 0.0, %v740
        %v742 = vpop.f32.mrf.mxu0
        %743 = vdwg.mxu0
        %744 = vrot.lane.b32.xlu0 %v571, 104
        %v745 = vpop.permute.xlu0 %744
        %746 = vrot.lane.b32.xlu0 %v572, 104
        %v747 = vpop.permute.xlu0 %746
        %v749 = vsel %vm573, %v745, 0
        %v752 = vsel %vm573, %v747, 0
        %754 = vmatpush.bf16.xpose.msra.mxu0 0
        %755 = vmatpush.bf16.xpose.msra.mxu0 0
        %756 = vmatpush.bf16.xpose.msra.mxu0 0
        %757 = vmatpush.bf16.xpose.msra.mxu0 0
        %758 = vmatpush.bf16.xpose.msra.mxu0 0
        %759 = vmatpush.bf16.xpose.msra.mxu0 0
        %760 = vmatpush.bf16.xpose.msra.mxu0 0
        %761 = vmatpush.bf16.xpose.msra.mxu0 %v752
        %762 = vmatmul.bf16.gmra.mxu0 %v749
        %v763 = vpop.f32.mrf.mxu0
        %v764 = vadd.f32 0.0, %v763
        %v765 = vpop.f32.mrf.mxu0
        %766 = vdwg.mxu0
        %v767 = vmul.f32 %v764, 0.35355338
        %v768 = vsel %vm573, %v767, -inf
        %769 = vmax.xlane.f32.xlu0 %v768
        %v770 = vpop.xlane.xlu0 %769
        %v771 = vsub.f32 %v767, %v770
        %v772 = vmul.f32 %v771, 1.442695
        %v773 = vpow.pop %v772
        %v774 = vsel %vm573, %v773, 0.0
        %775 = vadd.xlane.f32.xlu0 %v774
        %v776 = vpop.xlane.xlu0 %775
        %v777 = vrcp.pop %v776
        %v778 = vmul.f32 %v773, %v777
        %v779 = vpack.c.bf16 %v778, %v778
        %780 = vrot.lane.b32.xlu0 %v572, 72
        %v781 = vpop.permute.xlu0 %780
        %v783 = vsel %vm573, %v779, 0
        %v786 = vsel %vm612, %v781, 0
        %788 = vmatpush.bf16.msra.mxu0 0
        %789 = vmatpush.bf16.msra.mxu0 0
        %790 = vmatpush.bf16.msra.mxu0 0
        %791 = vmatpush.bf16.msra.mxu0 0
        %792 = vmatpush.bf16.msra.mxu0 0
        %793 = vmatpush.bf16.msra.mxu0 0
        %794 = vmatpush.bf16.msra.mxu0 0
        %795 = vmatpush.bf16.msra.mxu0 %v786
        %796 = vmatmul.bf16.gmra.mxu0 %v783
        %v797 = vpop.f32.mrf.mxu0
        %v798 = vadd.f32 0.0, %v797
        %v799 = vpop.f32.mrf.mxu0
        %800 = vdwg.mxu0
        %802 = vrot.lane.b32.xlu0 %v684, 8
        %v803 = vpop.permute.xlu0 %802
        %806 = vrot.lane.b32.xlu0 %v741, 16
        %v807 = vpop.permute.xlu0 %806
        %810 = vrot.lane.b32.xlu0 %v798, 24
        %v811 = vpop.permute.xlu0 %810
        %v813 = vsel %vm573, %v626, %v803
        %vm814 = vcmask 130048
        %v815 = vsel %vm814, %v813, %v807
        %vm816 = vcmask 195584
        %v817 = vsel %vm816, %v815, %v811
        %v818 = vpack.c.bf16 %v817, %v817
        %v819 = vld [vmem:[#allocation9] sm:$0xf]
        %v820 = vld [vmem:[#allocation9 + $0x4] sm:$0xf]
        %v821 = vld [vmem:[#allocation9 + $0x8] sm:$0xf]
        %v822 = vld [vmem:[#allocation9 + $0xc] sm:$0xf]
        %v823 = vld [vmem:[#allocation10] sm:$0x1]
        %v825 = vperm.slane %v823, 0
        %v831 = vunpack.c.l.b16 %v819
        %v832 = vunpack.c.l.b16 %v820
        %v833 = vunpack.c.l.b16 %v821
        %v834 = vunpack.c.l.b16 %v822
        %v835 = vpack.c.b16 %v832, %v831
        %v836 = vpack.c.b16 %v834, %v833
        %v840 = vsel %vm518, %v818, 0
        %842 = vmatpush.bf16.msra.mxu0 0
        %843 = vmatpush.bf16.msra.mxu0 0
        %844 = vmatpush.bf16.msra.mxu0 0
        %845 = vmatpush.bf16.msra.mxu0 0
        %846 = vmatpush.bf16.msra.mxu0 0
        %847 = vmatpush.bf16.msra.mxu0 0
        %848 = vmatpush.bf16.msra.mxu0 %v836
        %849 = vmatpush.bf16.msra.mxu0 %v835
        %850 = vmatmul.bf16.gmra.mxu0 %v840
        %v851 = vpop.f32.mrf.mxu0
        %v852 = vadd.f32 %v825, %v851
        %v853 = vpop.f32.mrf.mxu0
        %854 = vdwg.mxu0
        %v855 = vunpack.c.l.bf16 %v496
        %v856 = vadd.f32 %v855, %v852
        %v857 = vsel %vm518, %v856, 0.0
        %858 = vadd.xlane.f32.xlu0 %v857
        %v859 = vpop.xlane.xlu0 %858
        %v860 = vrcp.pop 32.0
        %v861 = vmul.f32 32.0, %v860
        %v862 = vsub.f32 1.0, %v861
        %v863 = vmul.f32 %v860, %v862
        %v864 = vadd.f32 %v860, %v863
        %vm865 = vweird.f32 %v860
        %v866 = vsel %vm865, %v860, %v864
        %v867 = vmul.f32 %v859, %v866
        %v868 = vsub.f32 %v856, %v867
        %v869 = vmul.f32 %v868, %v868
        %v870 = vsel %vm518, %v869, 0.0
        %871 = vadd.xlane.f32.xlu0 %v870
        %v872 = vpop.xlane.xlu0 %871
        %v873 = vmul.f32 %v872, %v866
        %v874 = vadd.f32 %v873, 1e-05
        %v875 = vrsqrt.pop %v874
        %v876 = vmul.f32 %v875, %v874
        %v877 = vmul.f32 %v876, %v875
        %v878 = vmul.f32 0.5, %v877
        %v879 = vsub.f32 1.5, %v878
        %v880 = vmul.f32 %v875, %v879
        %vm881 = vweird.f32 %v874
        %vm882 = vweird.f32 %v875
        %vm883 = vmor %vm881, %vm882
        %v884 = vsel %vm883, %v875, %v880
        %v885 = vmul.f32 %v868, %v884
        %v886 = vld [vmem:[#allocation12] sm:$0x1]
        %v888 = vperm.slane %v886, 0
        %v890 = vmul.f32 %v885, %v888
        %v891 = vld [vmem:[#allocation13] sm:$0x1]
        %v893 = vperm.slane %v891, 0
        %v895 = vadd.f32 %v890, %v893
        %v896 = vpack.c.bf16 %v895, %v895
        %vm897 = vcmask 257024
        %898 = vst.msk [vmem:[%s494] sm:$0xf] %vm897, %v896
        %p899 = scmp.lt.s32.totalorder %s26, 1
        %s900 = scalar_select %p899, %s26, 1
        %s901 = smul.addr %s900, 4
        %s902 = scalar_lea.vmem %s10, %s901
        // Predicated region
        $region93: #{transformer_forward.19} parent=59 // pred_check
          %p903 = pneg %p264
        $region94: #{transformer_forward.19} parent=59 // pred_check_branch
          %905 = sbr.rel (%p903) target = $region96
        $region95: #{transformer_forward.19} parent=59 // pred_region
          _
        $region96: #{transformer_forward.19} parent=59 // pred_fallthru
          _
      $region60: #{transformer_forward.19} parent=5 // pred_fallthru
        _
      %p906 = scmp.le.s32.totalorder 2, %s21
      // Predicated region
      $region97: #{transformer_forward.19} parent=5 // pred_check
        %p907 = pneg %p906
      $region98: #{transformer_forward.19} parent=5 // pred_check_branch
        %909 = sbr.rel (%p907) target = $region100
      $region99: #{transformer_forward.19} parent=5 // pred_region
        %s910 = ssub.s32 %s21, 2
        // Predicated region
        $region101: #{transformer_forward.19} parent=99 // pred_check
          %p911 = pneg %p270
        $region102: #{transformer_forward.19} parent=99 // pred_check_branch
          %913 = sbr.rel (%p911) target = $region104
        $region103: #{transformer_forward.19} parent=99 // pred_region
          %p914 = scmp.lt.s32.totalorder %s27, 1
          %s915 = scalar_select %p914, %s27, 1
          %s916 = smul.addr %s915, 4
          %s917 = scalar_lea.vmem %s10, %s916
        $region104: #{transformer_forward.19} parent=99 // pred_fallthru
          _
      $region100: #{transformer_forward.19} parent=5 // pred_fallthru
        _
    $region6: #{transformer_forward.19} parent=1 // loop_footer
      %s25 = sadd.s32 1, %s21
    $region7: #{transformer_forward.19} parent=1 // loop_footer_branch
      %20 = sbr.rel target = $region3
    $region8: #{transformer_forward.19} parent=1 // loop_exit
      _
    %918 = vsyncpa [#allocation3], 1
    %s919 = scalar_lea.sflag [#allocation3], 1
    %920 = vsyncpa %s919, 1
    %921 = vsyncpa [#allocation5], 1
    %922 = vsyncpa [#allocation8], 1
    %923 = vsyncpa [#allocation11], 1
    %924 = vsyncpa [#allocation14], 1

</llo_original>
